<compile_context>
chip_gen: v5e
topology: v5e:2x2
jax: 0.10.0
libtpu: 0.0.40
codegen_flags: <defaults>
</compile_context>

<pallas_src>
import functools

import jax
import jax.numpy as jnp
from jax.experimental import pallas as pl
from jax.experimental.pallas import tpu as pltpu

CNN_DEPTH = 48
CNN_KERNELS = (4, 4, 4, 4)
STRIDE = 2


def _round_up(x, m):
    return ((x + m - 1) // m) * m


def _gemm_bias_elu_kernel(scale, x_ref, w_ref, b_ref, o_ref):
    """o = ELU(scale * x @ w + b) for one (TM, K) row tile; w/b stay VMEM-resident."""
    x = x_ref[...]
    if scale != 1.0:                     # static python constant -> folded at trace time
        x = x * scale
    y = jnp.dot(x, w_ref[...], preferred_element_type=jnp.float32) + b_ref[...]
    # ELU (alpha=1): y if y > 0 else exp(y) - 1   (clamp exp argument for safety)
    o_ref[...] = jnp.where(y > 0.0, y, jnp.exp(jnp.minimum(y, 0.0)) - 1.0)


def _conv_as_gemm(patches2d, w2d, b2d, scale):
    """patches2d: (M, K) f32, w2d: (K, Cout) f32, b2d: (1, Cout) f32 -> (M, Cout) f32."""
    M, K = patches2d.shape
    _, cout = w2d.shape

    tm = min(512, _round_up(M, 8))
    m_pad = _round_up(M, tm)
    if m_pad != M:
        patches2d = jnp.pad(patches2d, ((0, m_pad - M), (0, 0)))

    out = pl.pallas_call(
        functools.partial(_gemm_bias_elu_kernel, scale),
        out_shape=jax.ShapeDtypeStruct((m_pad, cout), jnp.float32),
        grid_spec=pltpu.PrefetchScalarGridSpec(
            num_scalar_prefetch=0,
            grid=(m_pad // tm,),
            in_specs=[
                pl.BlockSpec((tm, K), lambda i: (i, 0)),     # row tile of im2col patches
                pl.BlockSpec((K, cout), lambda i: (0, 0)),   # weights: constant block -> VMEM-resident
                pl.BlockSpec((1, cout), lambda i: (0, 0)),   # bias:    constant block -> VMEM-resident
            ],
            out_specs=pl.BlockSpec((tm, cout), lambda i: (i, 0)),
        ),
        compiler_params=pltpu.CompilerParams(
            dimension_semantics=("parallel",),               # megacore sharding on v7x
            vmem_limit_bytes=32 * 1024 * 1024,               # headroom on v5e's smaller default
        ),
    )(patches2d, w2d, b2d)
    return out[:M]


def _extract_patches(x, kh, kw, stride):
    """(N,H,W,C) -> (N,OH,OW,kh*kw*C); patch channel order (kh, kw, c). Layout-only XLA ops."""
    n, h, w, c = x.shape
    oh = (h - kh) // stride + 1
    ow = (w - kw) // stride + 1
    cols = []
    for i in range(kh):
        for j in range(kw):
            v = jax.lax.slice(
                x,
                (0, i, j, 0),
                (n, i + stride * (oh - 1) + 1, j + stride * (ow - 1) + 1, c),
                (1, stride, stride, 1),
            )
            cols.append(v)
    return jnp.concatenate(cols, axis=-1)


def encoder_forward(inp, conv_ws, conv_bs, *, pixel_shape):
    """Encoder.forward: inp (N, H*W*C + dim_skill) -> (N, 384*Hout*Wout + dim_skill)."""
    h, w, c = pixel_shape
    n = inp.shape[0]
    pixel_dim = h * w * c

    pixel = inp[:, :pixel_dim].reshape(n, h, w, c)   # NHWC; equivalent to torch's NCHW + OIHW weights
    state = inp[:, pixel_dim:]

    x = pixel
    for li, (wk, bk) in enumerate(zip(conv_ws, conv_bs)):
        kh, kw, _, cout = wk.shape
        patches = _extract_patches(x, kh, kw, STRIDE)            # (N, OH, OW, kh*kw*Cin)
        _, oh, ow, k = patches.shape
        y = _conv_as_gemm(
            patches.reshape(n * oh * ow, k),
            wk.reshape(k, cout),
            bk.reshape(1, cout),
            scale=(1.0 / 255.0) if li == 0 else 1.0,             # /255 fused into first kernel
        )
        x = y.reshape(n, oh, ow, cout)

    # match torch's rep.reshape(N, -1) on an NCHW tensor: flatten order (C, Hout, Wout)
    rep = jnp.transpose(x, (0, 3, 1, 2)).reshape(n, -1)
    return jnp.concatenate([rep, state], axis=-1)


def encoder_reference(inp, conv_ws, conv_bs, *, pixel_shape):
    """Pure-JAX reference of the PyTorch Encoder forward."""
    h, w, c = pixel_shape
    n = inp.shape[0]
    pixel_dim = h * w * c
    x = inp[:, :pixel_dim].reshape(n, h, w, c) / 255.0
    state = inp[:, pixel_dim:]
    for wk, bk in zip(conv_ws, conv_bs):
        x = jax.lax.conv_general_dilated(
            x, wk, window_strides=(STRIDE, STRIDE), padding="VALID",
            dimension_numbers=("NHWC", "HWIO", "NHWC"),
            precision=jax.lax.Precision.HIGHEST)
        x = jax.nn.elu(x + bk.reshape(1, 1, 1, -1))
    rep = jnp.transpose(x, (0, 3, 1, 2)).reshape(n, -1)
    return jnp.concatenate([rep, state], axis=-1)


if __name__ == "__main__":
    key = jax.random.PRNGKey(0)

    # smallest spatial size accepted by 4 stacked (k=4, s=2, VALID) convs is ~46; use 64x64x3
    pixel_shape = (64, 64, 3)          # (H, W, C)
    batch = 2
    dim_skill = 8
    h, w, c = pixel_shape
    pixel_dim = h * w * c

    depths = [CNN_DEPTH * (2 ** i) for i in range(len(CNN_KERNELS))]   # 48, 96, 192, 384
    keys = jax.random.split(key, 2 * len(depths) + 2)

    conv_ws, conv_bs = [], []
    cin = c
    for i, (kk, cout) in enumerate(zip(CNN_KERNELS, depths)):
        conv_ws.append(0.05 * jax.random.normal(keys[2 * i], (kk, kk, cin, cout), jnp.float32))
        conv_bs.append(0.01 * jax.random.normal(keys[2 * i + 1], (cout,), jnp.float32))
        cin = cout

    pixels = jax.random.uniform(keys[-2], (batch, pixel_dim), jnp.float32, 0.0, 255.0)
    skill = jax.random.normal(keys[-1], (batch, dim_skill), jnp.float32)
    inp = jnp.concatenate([pixels, skill], axis=-1)      # (N, h*w*c + dim_skill)

    fwd = jax.jit(functools.partial(encoder_forward, pixel_shape=pixel_shape))
    out = fwd(inp, conv_ws, conv_bs)
    jax.block_until_ready(out)

    ref = encoder_reference(inp, conv_ws, conv_bs, pixel_shape=pixel_shape)
    assert out.shape == (batch, depths[-1] * 2 * 2 + dim_skill), out.shape
    max_err = float(jnp.max(jnp.abs(out - ref)))
    assert jnp.allclose(out, ref, rtol=5e-3, atol=5e-3), f"mismatch, max abs err={max_err}"

    print("KERNEL_OK")
</pallas_src>

<mosaic_0001>
module attributes {stable_mosaic.version = 11 : i64} {
  func.func @_gemm_bias_elu_kernel(%arg0: i32, %arg1: memref<512x48xf32, #tpu.memory_space<vmem>>, %arg2: memref<48x48xf32, #tpu.memory_space<vmem>>, %arg3: memref<1x48xf32, #tpu.memory_space<vmem>>, %arg4: memref<512x48xf32, #tpu.memory_space<vmem>>) attributes {dimension_semantics = [#tpu.dimension_semantics<parallel>], iteration_bounds = array<i64: 4>, scalar_prefetch = 0 : i64, scratch_operands = 0 : i64, tpu.core_type = #tpu.core_type<tc>, window_params = [{transform_indices = @transform_0, window_bounds = array<i64: 512, 48>}, {pipeline_mode = #tpu.pipeline_mode<synchronous>, transform_indices = @transform_1, window_bounds = array<i64: 48, 48>}, {pipeline_mode = #tpu.pipeline_mode<synchronous>, transform_indices = @transform_2, window_bounds = array<i64: 1, 48>}, {transform_indices = @transform_3, window_bounds = array<i64: 512, 48>}]} {
    %c0 = arith.constant 0 : index
    %c0_0 = arith.constant 0 : index
    %0 = vector.load %arg1[%c0, %c0_0] : memref<512x48xf32, #tpu.memory_space<vmem>>, vector<512x48xf32>
    %cst = arith.constant 0.00392156886 : f32
    %1 = vector.broadcast %cst : f32 to vector<512x48xf32>
    %2 = arith.mulf %0, %1 : vector<512x48xf32>
    %c0_1 = arith.constant 0 : index
    %c0_2 = arith.constant 0 : index
    %3 = vector.load %arg2[%c0_1, %c0_2] : memref<48x48xf32, #tpu.memory_space<vmem>>, vector<48x48xf32>
    %cst_3 = arith.constant dense<0.000000e+00> : vector<512x48xf32>
    %4 = tpu.matmul %2, %3, %cst_3 {dimension_numbers = #tpu.dot_dimension_numbers<[1], [0], [0], [1], [0, 0, 1, 1], [], []>} : vector<512x48xf32>, vector<48x48xf32>, vector<512x48xf32> -> vector<512x48xf32>
    %c0_4 = arith.constant 0 : index
    %c0_5 = arith.constant 0 : index
    %5 = vector.load %arg3[%c0_4, %c0_5] : memref<1x48xf32, #tpu.memory_space<vmem>>, vector<1x48xf32>
    %6 = vector.broadcast %5 : vector<1x48xf32> to vector<512x48xf32>
    %7 = arith.addf %4, %6 : vector<512x48xf32>
    %cst_6 = arith.constant 0.000000e+00 : f32
    %8 = vector.broadcast %cst_6 : f32 to vector<512x48xf32>
    %9 = arith.cmpf ogt, %7, %8 : vector<512x48xf32>
    %cst_7 = arith.constant 0.000000e+00 : f32
    %10 = vector.broadcast %cst_7 : f32 to vector<512x48xf32>
    %11 = arith.minimumf %7, %10 : vector<512x48xf32>
    %12 = math.exp %11 : vector<512x48xf32>
    %cst_8 = arith.constant 1.000000e+00 : f32
    %13 = vector.broadcast %cst_8 : f32 to vector<512x48xf32>
    %14 = arith.subf %12, %13 : vector<512x48xf32>
    %15 = arith.select %9, %7, %14 : vector<512x48xi1>, vector<512x48xf32>
    %c0_9 = arith.constant 0 : index
    %c0_10 = arith.constant 0 : index
    %16 = vector.load %arg4[%c0_9, %c0_10] : memref<512x48xf32, #tpu.memory_space<vmem>>, vector<512x48xf32>
    tpu.vector_store %arg4[%c0_9, %c0_10], %15 {strides = array<i32>} : memref<512x48xf32, #tpu.memory_space<vmem>>, vector<512x48xf32>,
    return
  }
  func.func @transform_0(%arg0: i32) -> (i32, i32) {
    %c0_i32 = arith.constant 0 : i32
    %c0_i32_0 = arith.constant 0 : i32
    return %arg0, %c0_i32 : i32, i32
  }
  func.func @transform_1(%arg0: i32) -> (i32, i32) {
    %c0_i32 = arith.constant 0 : i32
    %c0_i32_0 = arith.constant 0 : i32
    %c0_i32_1 = arith.constant 0 : i32
    return %c0_i32, %c0_i32_0 : i32, i32
  }
  func.func @transform_2(%arg0: i32) -> (i32, i32) {
    %c0_i32 = arith.constant 0 : i32
    %c0_i32_0 = arith.constant 0 : i32
    %c0_i32_1 = arith.constant 0 : i32
    return %c0_i32, %c0_i32_0 : i32, i32
  }
  func.func @transform_3(%arg0: i32) -> (i32, i32) {
    %c0_i32 = arith.constant 0 : i32
    %c0_i32_0 = arith.constant 0 : i32
    return %arg0, %c0_i32 : i32, i32
  }
}

module attributes {stable_mosaic.version = 11 : i64} {
  func.func @_gemm_bias_elu_kernel(%arg0: i32, %arg1: memref<392x768xf32, #tpu.memory_space<vmem>>, %arg2: memref<768x96xf32, #tpu.memory_space<vmem>>, %arg3: memref<1x96xf32, #tpu.memory_space<vmem>>, %arg4: memref<392x96xf32, #tpu.memory_space<vmem>>) attributes {dimension_semantics = [#tpu.dimension_semantics<parallel>], iteration_bounds = array<i64: 1>, scalar_prefetch = 0 : i64, scratch_operands = 0 : i64, tpu.core_type = #tpu.core_type<tc>, window_params = [{transform_indices = @transform_0, window_bounds = array<i64: 392, 768>}, {pipeline_mode = #tpu.pipeline_mode<synchronous>, transform_indices = @transform_1, window_bounds = array<i64: 768, 96>}, {pipeline_mode = #tpu.pipeline_mode<synchronous>, transform_indices = @transform_2, window_bounds = array<i64: 1, 96>}, {transform_indices = @transform_3, window_bounds = array<i64: 392, 96>}]} {
    %c0 = arith.constant 0 : index
    %c0_0 = arith.constant 0 : index
    %0 = vector.load %arg1[%c0, %c0_0] : memref<392x768xf32, #tpu.memory_space<vmem>>, vector<392x768xf32>
    %c0_1 = arith.constant 0 : index
    %c0_2 = arith.constant 0 : index
    %1 = vector.load %arg2[%c0_1, %c0_2] : memref<768x96xf32, #tpu.memory_space<vmem>>, vector<768x96xf32>
    %cst = arith.constant dense<0.000000e+00> : vector<392x96xf32>
    %2 = tpu.matmul %0, %1, %cst {dimension_numbers = #tpu.dot_dimension_numbers<[1], [0], [0], [1], [0, 0, 1, 1], [], []>} : vector<392x768xf32>, vector<768x96xf32>, vector<392x96xf32> -> vector<392x96xf32>
    %c0_3 = arith.constant 0 : index
    %c0_4 = arith.constant 0 : index
    %3 = vector.load %arg3[%c0_3, %c0_4] : memref<1x96xf32, #tpu.memory_space<vmem>>, vector<1x96xf32>
    %4 = vector.broadcast %3 : vector<1x96xf32> to vector<392x96xf32>
    %5 = arith.addf %2, %4 : vector<392x96xf32>
    %cst_5 = arith.constant 0.000000e+00 : f32
    %6 = vector.broadcast %cst_5 : f32 to vector<392x96xf32>
    %7 = arith.cmpf ogt, %5, %6 : vector<392x96xf32>
    %cst_6 = arith.constant 0.000000e+00 : f32
    %8 = vector.broadcast %cst_6 : f32 to vector<392x96xf32>
    %9 = arith.minimumf %5, %8 : vector<392x96xf32>
    %10 = math.exp %9 : vector<392x96xf32>
    %cst_7 = arith.constant 1.000000e+00 : f32
    %11 = vector.broadcast %cst_7 : f32 to vector<392x96xf32>
    %12 = arith.subf %10, %11 : vector<392x96xf32>
    %13 = arith.select %7, %5, %12 : vector<392x96xi1>, vector<392x96xf32>
    %c0_8 = arith.constant 0 : index
    %c0_9 = arith.constant 0 : index
    %14 = vector.load %arg4[%c0_8, %c0_9] : memref<392x96xf32, #tpu.memory_space<vmem>>, vector<392x96xf32>
    tpu.vector_store %arg4[%c0_8, %c0_9], %13 {strides = array<i32>} : memref<392x96xf32, #tpu.memory_space<vmem>>, vector<392x96xf32>,
    return
  }
  func.func @transform_0(%arg0: i32) -> (i32, i32) {
    %c0_i32 = arith.constant 0 : i32
    %c0_i32_0 = arith.constant 0 : i32
    return %arg0, %c0_i32 : i32, i32
  }
  func.func @transform_1(%arg0: i32) -> (i32, i32) {
    %c0_i32 = arith.constant 0 : i32
    %c0_i32_0 = arith.constant 0 : i32
    %c0_i32_1 = arith.constant 0 : i32
    return %c0_i32, %c0_i32_0 : i32, i32
  }
  func.func @transform_2(%arg0: i32) -> (i32, i32) {
    %c0_i32 = arith.constant 0 : i32
    %c0_i32_0 = arith.constant 0 : i32
    %c0_i32_1 = arith.constant 0 : i32
    return %c0_i32, %c0_i32_0 : i32, i32
  }
  func.func @transform_3(%arg0: i32) -> (i32, i32) {
    %c0_i32 = arith.constant 0 : i32
    %c0_i32_0 = arith.constant 0 : i32
    return %arg0, %c0_i32 : i32, i32
  }
}

module attributes {stable_mosaic.version = 11 : i64} {
  func.func @_gemm_bias_elu_kernel(%arg0: i32, %arg1: memref<72x1536xf32, #tpu.memory_space<vmem>>, %arg2: memref<1536x192xf32, #tpu.memory_space<vmem>>, %arg3: memref<1x192xf32, #tpu.memory_space<vmem>>, %arg4: memref<72x192xf32, #tpu.memory_space<vmem>>) attributes {dimension_semantics = [#tpu.dimension_semantics<parallel>], iteration_bounds = array<i64: 1>, scalar_prefetch = 0 : i64, scratch_operands = 0 : i64, tpu.core_type = #tpu.core_type<tc>, window_params = [{transform_indices = @transform_0, window_bounds = array<i64: 72, 1536>}, {pipeline_mode = #tpu.pipeline_mode<synchronous>, transform_indices = @transform_1, window_bounds = array<i64: 1536, 192>}, {pipeline_mode = #tpu.pipeline_mode<synchronous>, transform_indices = @transform_2, window_bounds = array<i64: 1, 192>}, {transform_indices = @transform_3, window_bounds = array<i64: 72, 192>}]} {
    %c0 = arith.constant 0 : index
    %c0_0 = arith.constant 0 : index
    %0 = vector.load %arg1[%c0, %c0_0] : memref<72x1536xf32, #tpu.memory_space<vmem>>, vector<72x1536xf32>
    %c0_1 = arith.constant 0 : index
    %c0_2 = arith.constant 0 : index
    %1 = vector.load %arg2[%c0_1, %c0_2] : memref<1536x192xf32, #tpu.memory_space<vmem>>, vector<1536x192xf32>
    %cst = arith.constant dense<0.000000e+00> : vector<72x192xf32>
    %2 = tpu.matmul %0, %1, %cst {dimension_numbers = #tpu.dot_dimension_numbers<[1], [0], [0], [1], [0, 0, 1, 1], [], []>} : vector<72x1536xf32>, vector<1536x192xf32>, vector<72x192xf32> -> vector<72x192xf32>
    %c0_3 = arith.constant 0 : index
    %c0_4 = arith.constant 0 : index
    %3 = vector.load %arg3[%c0_3, %c0_4] : memref<1x192xf32, #tpu.memory_space<vmem>>, vector<1x192xf32>
    %4 = vector.broadcast %3 : vector<1x192xf32> to vector<72x192xf32>
    %5 = arith.addf %2, %4 : vector<72x192xf32>
    %cst_5 = arith.constant 0.000000e+00 : f32
    %6 = vector.broadcast %cst_5 : f32 to vector<72x192xf32>
    %7 = arith.cmpf ogt, %5, %6 : vector<72x192xf32>
    %cst_6 = arith.constant 0.000000e+00 : f32
    %8 = vector.broadcast %cst_6 : f32 to vector<72x192xf32>
    %9 = arith.minimumf %5, %8 : vector<72x192xf32>
    %10 = math.exp %9 : vector<72x192xf32>
    %cst_7 = arith.constant 1.000000e+00 : f32
    %11 = vector.broadcast %cst_7 : f32 to vector<72x192xf32>
    %12 = arith.subf %10, %11 : vector<72x192xf32>
    %13 = arith.select %7, %5, %12 : vector<72x192xi1>, vector<72x192xf32>
    %c0_8 = arith.constant 0 : index
    %c0_9 = arith.constant 0 : index
    %14 = vector.load %arg4[%c0_8, %c0_9] : memref<72x192xf32, #tpu.memory_space<vmem>>, vector<72x192xf32>
    tpu.vector_store %arg4[%c0_8, %c0_9], %13 {strides = array<i32>} : memref<72x192xf32, #tpu.memory_space<vmem>>, vector<72x192xf32>,
    return
  }
  func.func @transform_0(%arg0: i32) -> (i32, i32) {
    %c0_i32 = arith.constant 0 : i32
    %c0_i32_0 = arith.constant 0 : i32
    return %arg0, %c0_i32 : i32, i32
  }
  func.func @transform_1(%arg0: i32) -> (i32, i32) {
    %c0_i32 = arith.constant 0 : i32
    %c0_i32_0 = arith.constant 0 : i32
    %c0_i32_1 = arith.constant 0 : i32
    return %c0_i32, %c0_i32_0 : i32, i32
  }
  func.func @transform_2(%arg0: i32) -> (i32, i32) {
    %c0_i32 = arith.constant 0 : i32
    %c0_i32_0 = arith.constant 0 : i32
    %c0_i32_1 = arith.constant 0 : i32
    return %c0_i32, %c0_i32_0 : i32, i32
  }
  func.func @transform_3(%arg0: i32) -> (i32, i32) {
    %c0_i32 = arith.constant 0 : i32
    %c0_i32_0 = arith.constant 0 : i32
    return %arg0, %c0_i32 : i32, i32
  }
}

module attributes {stable_mosaic.version = 11 : i64} {
  func.func @_gemm_bias_elu_kernel(%arg0: i32, %arg1: memref<8x3072xf32, #tpu.memory_space<vmem>>, %arg2: memref<3072x384xf32, #tpu.memory_space<vmem>>, %arg3: memref<1x384xf32, #tpu.memory_space<vmem>>, %arg4: memref<8x384xf32, #tpu.memory_space<vmem>>) attributes {dimension_semantics = [#tpu.dimension_semantics<parallel>], iteration_bounds = array<i64: 1>, scalar_prefetch = 0 : i64, scratch_operands = 0 : i64, tpu.core_type = #tpu.core_type<tc>, window_params = [{transform_indices = @transform_0, window_bounds = array<i64: 8, 3072>}, {pipeline_mode = #tpu.pipeline_mode<synchronous>, transform_indices = @transform_1, window_bounds = array<i64: 3072, 384>}, {pipeline_mode = #tpu.pipeline_mode<synchronous>, transform_indices = @transform_2, window_bounds = array<i64: 1, 384>}, {transform_indices = @transform_3, window_bounds = array<i64: 8, 384>}]} {
    %c0 = arith.constant 0 : index
    %c0_0 = arith.constant 0 : index
    %0 = vector.load %arg1[%c0, %c0_0] : memref<8x3072xf32, #tpu.memory_space<vmem>>, vector<8x3072xf32>
    %c0_1 = arith.constant 0 : index
    %c0_2 = arith.constant 0 : index
    %1 = vector.load %arg2[%c0_1, %c0_2] : memref<3072x384xf32, #tpu.memory_space<vmem>>, vector<3072x384xf32>
    %cst = arith.constant dense<0.000000e+00> : vector<8x384xf32>
    %2 = tpu.matmul %0, %1, %cst {dimension_numbers = #tpu.dot_dimension_numbers<[1], [0], [0], [1], [0, 0, 1, 1], [], []>} : vector<8x3072xf32>, vector<3072x384xf32>, vector<8x384xf32> -> vector<8x384xf32>
    %c0_3 = arith.constant 0 : index
    %c0_4 = arith.constant 0 : index
    %3 = vector.load %arg3[%c0_3, %c0_4] : memref<1x384xf32, #tpu.memory_space<vmem>>, vector<1x384xf32>
    %4 = vector.broadcast %3 : vector<1x384xf32> to vector<8x384xf32>
    %5 = arith.addf %2, %4 : vector<8x384xf32>
    %cst_5 = arith.constant 0.000000e+00 : f32
    %6 = vector.broadcast %cst_5 : f32 to vector<8x384xf32>
    %7 = arith.cmpf ogt, %5, %6 : vector<8x384xf32>
    %cst_6 = arith.constant 0.000000e+00 : f32
    %8 = vector.broadcast %cst_6 : f32 to vector<8x384xf32>
    %9 = arith.minimumf %5, %8 : vector<8x384xf32>
    %10 = math.exp %9 : vector<8x384xf32>
    %cst_7 = arith.constant 1.000000e+00 : f32
    %11 = vector.broadcast %cst_7 : f32 to vector<8x384xf32>
    %12 = arith.subf %10, %11 : vector<8x384xf32>
    %13 = arith.select %7, %5, %12 : vector<8x384xi1>, vector<8x384xf32>
    %c0_8 = arith.constant 0 : index
    %c0_9 = arith.constant 0 : index
    %14 = vector.load %arg4[%c0_8, %c0_9] : memref<8x384xf32, #tpu.memory_space<vmem>>, vector<8x384xf32>
    tpu.vector_store %arg4[%c0_8, %c0_9], %13 {strides = array<i32>} : memref<8x384xf32, #tpu.memory_space<vmem>>, vector<8x384xf32>,
    return
  }
  func.func @transform_0(%arg0: i32) -> (i32, i32) {
    %c0_i32 = arith.constant 0 : i32
    %c0_i32_0 = arith.constant 0 : i32
    return %arg0, %c0_i32 : i32, i32
  }
  func.func @transform_1(%arg0: i32) -> (i32, i32) {
    %c0_i32 = arith.constant 0 : i32
    %c0_i32_0 = arith.constant 0 : i32
    %c0_i32_1 = arith.constant 0 : i32
    return %c0_i32, %c0_i32_0 : i32, i32
  }
  func.func @transform_2(%arg0: i32) -> (i32, i32) {
    %c0_i32 = arith.constant 0 : i32
    %c0_i32_0 = arith.constant 0 : i32
    %c0_i32_1 = arith.constant 0 : i32
    return %c0_i32, %c0_i32_0 : i32, i32
  }
  func.func @transform_3(%arg0: i32) -> (i32, i32) {
    %c0_i32 = arith.constant 0 : i32
    %c0_i32_0 = arith.constant 0 : i32
    return %arg0, %c0_i32 : i32, i32
  }
}

</mosaic_0001>

<llo_original>
// kernel: encoder_forward.4
$region0: #{encoder_forward.4}
  #allocation0 [shape = 'u32[]', space=smem, size = 0x4, offset = 0x4, fixed_abs, tag = 'smem constant byte address 0x4 - core index']
  #allocation1 [shape = 'u32[72,128]{1,0:T(1,128)}', space=vmem, size = 0x9000, scoped, tag = 'internal scratch']
  %s0 = inlined_call_operand.vmem [shape: f32[2048,48], index: 0, kind: input, shape index: {}]
  %s1 = inlined_call_operand.vmem [shape: f32[48,48], index: 1, kind: input, shape index: {}]
  %s2 = inlined_call_operand.vmem [shape: f32[1,48], index: 2, kind: input, shape index: {}]
  %s3 = inlined_call_operand.vmem [shape: f32[2048,48], index: 3, kind: output, shape index: {}]
  %s4 = sld [smem:[#allocation0]]
  $region45: #{encoder_forward.4} parent=0
    _
  %s6 = ssub.s32 1, %s4
  %s7 = scalar_select 0, %s6, %s4
  loop: start=0, step=1, limit=6
  $region2: #{encoder_forward.4} parent=0 // loop_pre_header
    _
  $region3: #{encoder_forward.4} parent=0 // loop_header
    %s9 = sphi 0, %s13
    %p10 = scmp.ge.s32.totalorder %s9, 6
    %s19 = sphi 0, %s21
    %s22 = sphi 0, %s19
    %s23 = sphi 0, %s22
    %s39 = sphi 0, %s23
    %s43 = sphi 0, %s43
    %s45 = sphi 0, %s43
    %s46 = sphi 0, %s45
    %s60 = sphi 0, %s46
    %s64 = sphi 0, %s64
    %s66 = sphi 0, %s64
    %s67 = sphi 0, %s66
    %s81 = sphi 0, %s67
    %s87 = sphi 0, %s89
    %s90 = sphi 0, %s87
    %s91 = sphi 0, %s90
    %s107 = sphi 0, %s91
  $region4: #{encoder_forward.4} parent=0 // loop_header_branch
    %12 = sbr.rel (%p10) target = $region8
  $region5: #{encoder_forward.4} parent=0 // loop_body
    %s14 = ssub.s32 %s9, 1
    %s15 = ssub.s32 %s9, 2
    %s16 = sadd.s32 %s9, 1
    %s17 = ssub.s32 %s9, %s16
    %p18 = scmp.eq.s32.totalorder %s17, 0
    %s20 = sadd.s32 %s19, 1
    %s21 = scalar_select %p18, %s19, %s20
    %p24 = pneg %p18
    %p25 = scmp.eq.s32.totalorder %s9, 3
    %p26 = por %p24, %p25
    %p27 = scmp.ne.s32.totalorder %s19, %s22
    %p28 = scmp.eq.s32.totalorder %s9, 0
    %p29 = por %p27, %p28
    %p30 = scmp.ne.s32.totalorder %s19, %s22
    %p31 = scmp.eq.s32.totalorder %s14, 3
    %p32 = por %p30, %p31
    %p33 = scmp.ne.s32.totalorder %s22, %s23
    %p34 = scmp.eq.s32.totalorder %s14, 0
    %p35 = por %p33, %p34
    %p36 = scmp.ne.s32.totalorder %s22, %s23
    %p37 = scmp.eq.s32.totalorder %s15, 3
    %p38 = por %p36, %p37
    %p40 = scmp.ne.s32.totalorder %s23, %s39
    %p41 = scmp.eq.s32.totalorder %s15, 0
    %p42 = por %p40, %p41
    %s44 = sadd.s32 %s43, 1
    %p47 = scmp.eq.s32.totalorder %s9, 3
    %p48 = scmp.ne.s32.totalorder %s43, %s45
    %p49 = scmp.eq.s32.totalorder %s9, 0
    %p50 = por %p48, %p49
    %p51 = scmp.ne.s32.totalorder %s43, %s45
    %p52 = scmp.eq.s32.totalorder %s14, 3
    %p53 = por %p51, %p52
    %p54 = scmp.ne.s32.totalorder %s45, %s46
    %p55 = scmp.eq.s32.totalorder %s14, 0
    %p56 = por %p54, %p55
    %p57 = scmp.ne.s32.totalorder %s45, %s46
    %p58 = scmp.eq.s32.totalorder %s15, 3
    %p59 = por %p57, %p58
    %p61 = scmp.ne.s32.totalorder %s46, %s60
    %p62 = scmp.eq.s32.totalorder %s15, 0
    %p63 = por %p61, %p62
    %s65 = sadd.s32 %s64, 1
    %p68 = scmp.eq.s32.totalorder %s9, 3
    %p69 = scmp.ne.s32.totalorder %s64, %s66
    %p70 = scmp.eq.s32.totalorder %s9, 0
    %p71 = por %p69, %p70
    %p72 = scmp.ne.s32.totalorder %s64, %s66
    %p73 = scmp.eq.s32.totalorder %s14, 3
    %p74 = por %p72, %p73
    %p75 = scmp.ne.s32.totalorder %s66, %s67
    %p76 = scmp.eq.s32.totalorder %s14, 0
    %p77 = por %p75, %p76
    %p78 = scmp.ne.s32.totalorder %s66, %s67
    %p79 = scmp.eq.s32.totalorder %s15, 3
    %p80 = por %p78, %p79
    %p82 = scmp.ne.s32.totalorder %s67, %s81
    %p83 = scmp.eq.s32.totalorder %s15, 0
    %p84 = por %p82, %p83
    %s85 = ssub.s32 %s9, %s16
    %p86 = scmp.eq.s32.totalorder %s85, 0
    %s88 = sadd.s32 %s87, 1
    %s89 = scalar_select %p86, %s87, %s88
    %p92 = pneg %p86
    %p93 = scmp.eq.s32.totalorder %s9, 3
    %p94 = por %p92, %p93
    %p95 = scmp.ne.s32.totalorder %s87, %s90
    %p96 = scmp.eq.s32.totalorder %s9, 0
    %p97 = por %p95, %p96
    %p98 = scmp.ne.s32.totalorder %s87, %s90
    %p99 = scmp.eq.s32.totalorder %s14, 3
    %p100 = por %p98, %p99
    %p101 = scmp.ne.s32.totalorder %s90, %s91
    %p102 = scmp.eq.s32.totalorder %s14, 0
    %p103 = por %p101, %p102
    %p104 = scmp.ne.s32.totalorder %s90, %s91
    %p105 = scmp.eq.s32.totalorder %s15, 3
    %p106 = por %p104, %p105
    %p108 = scmp.ne.s32.totalorder %s91, %s107
    %p109 = scmp.eq.s32.totalorder %s15, 0
    %p110 = por %p108, %p109
    %p111 = scmp.le.s32.totalorder 1, %s9
    %p112 = scmp.lt.s32.totalorder %s9, 5
    %p113 = pnand %p111, %p112
    %p114 = pneg %p113
    // Predicated region
    $region9: #{encoder_forward.4} parent=5 // pred_check
      _
    $region10: #{encoder_forward.4} parent=5 // pred_check_branch
      %116 = sbr.rel (%p113) target = $region12
    $region11: #{encoder_forward.4} parent=5 // pred_region
      %s117 = ssub.s32 %s9, 1
      // Predicated region
      $region13: #{encoder_forward.4} parent=11 // pred_check
        %p118 = pneg %p56
      $region14: #{encoder_forward.4} parent=11 // pred_check_branch
        %120 = sbr.rel (%p118) target = $region16
      $region15: #{encoder_forward.4} parent=11 // pred_region
        _
      $region16: #{encoder_forward.4} parent=11 // pred_fallthru
        _
      // Predicated region
      $region17: #{encoder_forward.4} parent=11 // pred_check
        %p121 = pneg %p77
      $region18: #{encoder_forward.4} parent=11 // pred_check_branch
        %123 = sbr.rel (%p121) target = $region20
      $region19: #{encoder_forward.4} parent=11 // pred_region
        _
      $region20: #{encoder_forward.4} parent=11 // pred_fallthru
        _
    $region12: #{encoder_forward.4} parent=5 // pred_fallthru
      _
    %p124 = scmp.lt.s32.totalorder %s9, 4
    // Predicated region
    $region21: #{encoder_forward.4} parent=5 // pred_check
      %p125 = pneg %p124
    $region22: #{encoder_forward.4} parent=5 // pred_check_branch
      %127 = sbr.rel (%p125) target = $region24
    $region23: #{encoder_forward.4} parent=5 // pred_region
      // Predicated region
      $region25: #{encoder_forward.4} parent=23 // pred_check
        %p128 = pneg %p29
      $region26: #{encoder_forward.4} parent=23 // pred_check_branch
        %130 = sbr.rel (%p128) target = $region28
      $region27: #{encoder_forward.4} parent=23 // pred_region
        %s131 = smul.u32 64, %s9
        %p132 = scmp.lt.s32.totalorder %s131, 255
        %s133 = scalar_select %p132, %s131, 255
        %s134 = smul.addr %s133, 8
        %s135 = scalar_lea.vmem %s0, %s134
        %s136 = smul.u32 64, %s9
      $region28: #{encoder_forward.4} parent=23 // pred_fallthru
        _
    $region24: #{encoder_forward.4} parent=5 // pred_fallthru
      _
    %p137 = scmp.le.s32.totalorder 1, %s9
    %p138 = scmp.lt.s32.totalorder %s9, 5
    %p139 = pnand %p137, %p138
    %p140 = pneg %p139
    // Predicated region
    $region29: #{encoder_forward.4} parent=5 // pred_check
      _
    $region30: #{encoder_forward.4} parent=5 // pred_check_branch
      %142 = sbr.rel (%p139) target = $region32
    $region31: #{encoder_forward.4} parent=5 // pred_region
      %s143 = ssub.s32 %s9, 1
      %s144 = smul.u32 64, %s14
      %p145 = scmp.lt.s32.totalorder %s144, 255
      %s146 = scalar_select %p145, %s144, 255
      %s147 = smul.addr %s146, 8
      %s148 = scalar_lea.vmem %s0, %s147
      %p149 = pneg %p35
      %p150 = pneg %p32
      %p151 = pneg %p56
      %p152 = pneg %p53
      %p153 = pneg %p77
      %p154 = pneg %p74
      %p155 = pneg %p103
      %p156 = pneg %p100
      %s157 = smul.u32 64, %s14
      %p158 = scmp.lt.s32.totalorder %s157, 255
      %s159 = scalar_select %p158, %s157, 255
      %s160 = smul.addr %s159, 8
      %s161 = scalar_lea.vmem %s3, %s160
      %s162 = smul.u32 64, %s14
      %p163 = scmp.lt.s32.totalorder %s162, 255
      %s164 = scalar_select %p163, %s162, 255
      %s165 = smul.addr %s164, 8
      %s166 = scalar_lea.vmem %s0, %s165
      %s167 = smul.u32 64, %s14
      %s168 = smul.u32 64, %s14
      %p169 = scmp.lt.s32.totalorder %s168, 255
      %s170 = scalar_select %p169, %s168, 255
      %s171 = smul.addr %s170, 8
      %s172 = scalar_lea.vmem %s3, %s171
      %s173 = smul.u32 64, %s14
      %v174 = vld [vmem:[%s166] sm:$0xff]
      %v175 = vld [vmem:[%s166 + $0x8] sm:$0xff]
      %v176 = vld [vmem:[%s166 + $0x10] sm:$0xff]
      %v177 = vld [vmem:[%s166 + $0x18] sm:$0xff]
      %v178 = vld [vmem:[%s166 + $0x20] sm:$0xff]
      %v179 = vld [vmem:[%s166 + $0x28] sm:$0xff]
      %v180 = vld [vmem:[%s166 + $0x30] sm:$0xff]
      %v181 = vld [vmem:[%s166 + $0x38] sm:$0xff]
      %v182 = vld [vmem:[%s166 + $0x40] sm:$0xff]
      %v183 = vld [vmem:[%s166 + $0x48] sm:$0xff]
      %v184 = vld [vmem:[%s166 + $0x50] sm:$0xff]
      %v185 = vld [vmem:[%s166 + $0x58] sm:$0xff]
      %v186 = vld [vmem:[%s166 + $0x60] sm:$0xff]
      %v187 = vld [vmem:[%s166 + $0x68] sm:$0xff]
      %v188 = vld [vmem:[%s166 + $0x70] sm:$0xff]
      %v189 = vld [vmem:[%s166 + $0x78] sm:$0xff]
      %v190 = vld [vmem:[%s166 + $0x80] sm:$0xff]
      %v191 = vld [vmem:[%s166 + $0x88] sm:$0xff]
      %v192 = vld [vmem:[%s166 + $0x90] sm:$0xff]
      %v193 = vld [vmem:[%s166 + $0x98] sm:$0xff]
      %v194 = vld [vmem:[%s166 + $0xa0] sm:$0xff]
      %v195 = vld [vmem:[%s166 + $0xa8] sm:$0xff]
      %v196 = vld [vmem:[%s166 + $0xb0] sm:$0xff]
      %v197 = vld [vmem:[%s166 + $0xb8] sm:$0xff]
      %v198 = vld [vmem:[%s166 + $0xc0] sm:$0xff]
      %v199 = vld [vmem:[%s166 + $0xc8] sm:$0xff]
      %v200 = vld [vmem:[%s166 + $0xd0] sm:$0xff]
      %v201 = vld [vmem:[%s166 + $0xd8] sm:$0xff]
      %v202 = vld [vmem:[%s166 + $0xe0] sm:$0xff]
      %v203 = vld [vmem:[%s166 + $0xe8] sm:$0xff]
      %v204 = vld [vmem:[%s166 + $0xf0] sm:$0xff]
      %v205 = vld [vmem:[%s166 + $0xf8] sm:$0xff]
      %v206 = vld [vmem:[%s166 + $0x100] sm:$0xff]
      %v207 = vld [vmem:[%s166 + $0x108] sm:$0xff]
      %v208 = vld [vmem:[%s166 + $0x110] sm:$0xff]
      %v209 = vld [vmem:[%s166 + $0x118] sm:$0xff]
      %v210 = vld [vmem:[%s166 + $0x120] sm:$0xff]
      %v211 = vld [vmem:[%s166 + $0x128] sm:$0xff]
      %v212 = vld [vmem:[%s166 + $0x130] sm:$0xff]
      %v213 = vld [vmem:[%s166 + $0x138] sm:$0xff]
      %v214 = vld [vmem:[%s166 + $0x140] sm:$0xff]
      %v215 = vld [vmem:[%s166 + $0x148] sm:$0xff]
      %v216 = vld [vmem:[%s166 + $0x150] sm:$0xff]
      %v217 = vld [vmem:[%s166 + $0x158] sm:$0xff]
      %v218 = vld [vmem:[%s166 + $0x160] sm:$0xff]
      %v219 = vld [vmem:[%s166 + $0x168] sm:$0xff]
      %v220 = vld [vmem:[%s166 + $0x170] sm:$0xff]
      %v221 = vld [vmem:[%s166 + $0x178] sm:$0xff]
      %v222 = vld [vmem:[%s166 + $0x180] sm:$0xff]
      %v223 = vld [vmem:[%s166 + $0x188] sm:$0xff]
      %v224 = vld [vmem:[%s166 + $0x190] sm:$0xff]
      %v225 = vld [vmem:[%s166 + $0x198] sm:$0xff]
      %v226 = vld [vmem:[%s166 + $0x1a0] sm:$0xff]
      %v227 = vld [vmem:[%s166 + $0x1a8] sm:$0xff]
      %v228 = vld [vmem:[%s166 + $0x1b0] sm:$0xff]
      %v229 = vld [vmem:[%s166 + $0x1b8] sm:$0xff]
      %v230 = vld [vmem:[%s166 + $0x1c0] sm:$0xff]
      %v231 = vld [vmem:[%s166 + $0x1c8] sm:$0xff]
      %v232 = vld [vmem:[%s166 + $0x1d0] sm:$0xff]
      %v233 = vld [vmem:[%s166 + $0x1d8] sm:$0xff]
      %v234 = vld [vmem:[%s166 + $0x1e0] sm:$0xff]
      %v235 = vld [vmem:[%s166 + $0x1e8] sm:$0xff]
      %v236 = vld [vmem:[%s166 + $0x1f0] sm:$0xff]
      %v237 = vld [vmem:[%s166 + $0x1f8] sm:$0xff]
      %v238 = vmul.f32 %v174, 0.003921569
      %v239 = vmul.f32 %v175, 0.003921569
      %v240 = vmul.f32 %v176, 0.003921569
      %v241 = vmul.f32 %v177, 0.003921569
      %v242 = vmul.f32 %v178, 0.003921569
      %v243 = vmul.f32 %v179, 0.003921569
      %v244 = vmul.f32 %v180, 0.003921569
      %v245 = vmul.f32 %v181, 0.003921569
      %v246 = vmul.f32 %v182, 0.003921569
      %v247 = vmul.f32 %v183, 0.003921569
      %v248 = vmul.f32 %v184, 0.003921569
      %v249 = vmul.f32 %v185, 0.003921569
      %v250 = vmul.f32 %v186, 0.003921569
      %v251 = vmul.f32 %v187, 0.003921569
      %v252 = vmul.f32 %v188, 0.003921569
      %v253 = vmul.f32 %v189, 0.003921569
      %v254 = vmul.f32 %v190, 0.003921569
      %v255 = vmul.f32 %v191, 0.003921569
      %v256 = vmul.f32 %v192, 0.003921569
      %v257 = vmul.f32 %v193, 0.003921569
      %v258 = vmul.f32 %v194, 0.003921569
      %v259 = vmul.f32 %v195, 0.003921569
      %v260 = vmul.f32 %v196, 0.003921569
      %v261 = vmul.f32 %v197, 0.003921569
      %v262 = vmul.f32 %v198, 0.003921569
      %v263 = vmul.f32 %v199, 0.003921569
      %v264 = vmul.f32 %v200, 0.003921569
      %v265 = vmul.f32 %v201, 0.003921569
      %v266 = vmul.f32 %v202, 0.003921569
      %v267 = vmul.f32 %v203, 0.003921569
      %v268 = vmul.f32 %v204, 0.003921569
      %v269 = vmul.f32 %v205, 0.003921569
      %v270 = vmul.f32 %v206, 0.003921569
      %v271 = vmul.f32 %v207, 0.003921569
      %v272 = vmul.f32 %v208, 0.003921569
      %v273 = vmul.f32 %v209, 0.003921569
      %v274 = vmul.f32 %v210, 0.003921569
      %v275 = vmul.f32 %v211, 0.003921569
      %v276 = vmul.f32 %v212, 0.003921569
      %v277 = vmul.f32 %v213, 0.003921569
      %v278 = vmul.f32 %v214, 0.003921569
      %v279 = vmul.f32 %v215, 0.003921569
      %v280 = vmul.f32 %v216, 0.003921569
      %v281 = vmul.f32 %v217, 0.003921569
      %v282 = vmul.f32 %v218, 0.003921569
      %v283 = vmul.f32 %v219, 0.003921569
      %v284 = vmul.f32 %v220, 0.003921569
      %v285 = vmul.f32 %v221, 0.003921569
      %v286 = vmul.f32 %v222, 0.003921569
      %v287 = vmul.f32 %v223, 0.003921569
      %v288 = vmul.f32 %v224, 0.003921569
      %v289 = vmul.f32 %v225, 0.003921569
      %v290 = vmul.f32 %v226, 0.003921569
      %v291 = vmul.f32 %v227, 0.003921569
      %v292 = vmul.f32 %v228, 0.003921569
      %v293 = vmul.f32 %v229, 0.003921569
      %v294 = vmul.f32 %v230, 0.003921569
      %v295 = vmul.f32 %v231, 0.003921569
      %v296 = vmul.f32 %v232, 0.003921569
      %v297 = vmul.f32 %v233, 0.003921569
      %v298 = vmul.f32 %v234, 0.003921569
      %v299 = vmul.f32 %v235, 0.003921569
      %v300 = vmul.f32 %v236, 0.003921569
      %v301 = vmul.f32 %v237, 0.003921569
      %v302 = vld [vmem:[%s1] sm:$0xff]
      %v303 = vld [vmem:[%s1 + $0x8] sm:$0xff]
      %v304 = vld [vmem:[%s1 + $0x10] sm:$0xff]
      %v305 = vld [vmem:[%s1 + $0x18] sm:$0xff]
      %v306 = vld [vmem:[%s1 + $0x20] sm:$0xff]
      %v307 = vld [vmem:[%s1 + $0x28] sm:$0xff]
      %v308 = vld [vmem:[%s2] sm:$0x1]
      %v310 = vperm.slane %v308, 0
      %vm312 = vcmask 392192
      %v314 = vsel %vm312, %v238, 0
      %v317 = vsel %vm312, %v239, 0
      %v320 = vsel %vm312, %v240, 0
      %v323 = vsel %vm312, %v241, 0
      %v326 = vsel %vm312, %v242, 0
      %v329 = vsel %vm312, %v243, 0
      %v332 = vsel %vm312, %v244, 0
      %v335 = vsel %vm312, %v245, 0
      %v338 = vsel %vm312, %v246, 0
      %v341 = vsel %vm312, %v247, 0
      %v344 = vsel %vm312, %v248, 0
      %v347 = vsel %vm312, %v249, 0
      %v350 = vsel %vm312, %v250, 0
      %v353 = vsel %vm312, %v251, 0
      %v356 = vsel %vm312, %v252, 0
      %v359 = vsel %vm312, %v253, 0
      %v362 = vsel %vm312, %v254, 0
      %v365 = vsel %vm312, %v255, 0
      %v368 = vsel %vm312, %v256, 0
      %v371 = vsel %vm312, %v257, 0
      %v374 = vsel %vm312, %v258, 0
      %v377 = vsel %vm312, %v259, 0
      %v380 = vsel %vm312, %v260, 0
      %v383 = vsel %vm312, %v261, 0
      %v386 = vsel %vm312, %v262, 0
      %v389 = vsel %vm312, %v263, 0
      %v392 = vsel %vm312, %v264, 0
      %v395 = vsel %vm312, %v265, 0
      %v398 = vsel %vm312, %v266, 0
      %v401 = vsel %vm312, %v267, 0
      %v404 = vsel %vm312, %v268, 0
      %v407 = vsel %vm312, %v269, 0
      %v410 = vsel %vm312, %v270, 0
      %v413 = vsel %vm312, %v271, 0
      %v416 = vsel %vm312, %v272, 0
      %v419 = vsel %vm312, %v273, 0
      %v422 = vsel %vm312, %v274, 0
      %v425 = vsel %vm312, %v275, 0
      %v428 = vsel %vm312, %v276, 0
      %v431 = vsel %vm312, %v277, 0
      %v434 = vsel %vm312, %v278, 0
      %v437 = vsel %vm312, %v279, 0
      %v440 = vsel %vm312, %v280, 0
      %v443 = vsel %vm312, %v281, 0
      %v446 = vsel %vm312, %v282, 0
      %v449 = vsel %vm312, %v283, 0
      %v452 = vsel %vm312, %v284, 0
      %v455 = vsel %vm312, %v285, 0
      %v458 = vsel %vm312, %v286, 0
      %v461 = vsel %vm312, %v287, 0
      %v464 = vsel %vm312, %v288, 0
      %v467 = vsel %vm312, %v289, 0
      %v470 = vsel %vm312, %v290, 0
      %v473 = vsel %vm312, %v291, 0
      %v476 = vsel %vm312, %v292, 0
      %v479 = vsel %vm312, %v293, 0
      %v482 = vsel %vm312, %v294, 0
      %v485 = vsel %vm312, %v295, 0
      %v488 = vsel %vm312, %v296, 0
      %v491 = vsel %vm312, %v297, 0
      %v494 = vsel %vm312, %v298, 0
      %v497 = vsel %vm312, %v299, 0
      %v500 = vsel %vm312, %v300, 0
      %v503 = vsel %vm312, %v301, 0
      %505 = vmatpush.msra.mxu0 0.0
      %506 = vmatpush.msra.mxu0 0.0
      %507 = vmatpush.msra.mxu0 0.0
      %508 = vmatpush.msra.mxu0 0.0
      %509 = vmatpush.msra.mxu0 0.0
      %510 = vmatpush.msra.mxu0 0.0
      %511 = vmatpush.msra.mxu0 0.0
      %512 = vmatpush.msra.mxu0 0.0
      %513 = vmatpush.msra.mxu0 0.0
      %514 = vmatpush.msra.mxu0 0.0
      %515 = vmatpush.msra.mxu0 %v307
      %516 = vmatpush.msra.mxu0 %v306
      %517 = vmatpush.msra.mxu0 %v305
      %518 = vmatpush.msra.mxu0 %v304
      %519 = vmatpush.msra.mxu0 %v303
      %520 = vmatpush.msra.mxu0 %v302
      %521 = vmatmul.f32.gmra.mxu0 %v314
      %v522 = vpop.f32.mrf.mxu0
      %v523 = vadd.f32 %v310, %v522
      %524 = vmatmul.f32.gmra.mxu0 %v317
      %v525 = vpop.f32.mrf.mxu0
      %v526 = vadd.f32 %v310, %v525
      %527 = vmatmul.f32.gmra.mxu0 %v320
      %v528 = vpop.f32.mrf.mxu0
      %v529 = vadd.f32 %v310, %v528
      %530 = vmatmul.f32.gmra.mxu0 %v323
      %v531 = vpop.f32.mrf.mxu0
      %v532 = vadd.f32 %v310, %v531
      %533 = vmatmul.f32.gmra.mxu0 %v326
      %v534 = vpop.f32.mrf.mxu0
      %v535 = vadd.f32 %v310, %v534
      %536 = vmatmul.f32.gmra.mxu0 %v329
      %v537 = vpop.f32.mrf.mxu0
      %v538 = vadd.f32 %v310, %v537
      %539 = vmatmul.f32.gmra.mxu0 %v332
      %v540 = vpop.f32.mrf.mxu0
      %v541 = vadd.f32 %v310, %v540
      %542 = vmatmul.f32.gmra.mxu0 %v335
      %v543 = vpop.f32.mrf.mxu0
      %v544 = vadd.f32 %v310, %v543
      %545 = vmatmul.f32.gmra.mxu0 %v338
      %v546 = vpop.f32.mrf.mxu0
      %v547 = vadd.f32 %v310, %v546
      %548 = vmatmul.f32.gmra.mxu0 %v341
      %v549 = vpop.f32.mrf.mxu0
      %v550 = vadd.f32 %v310, %v549
      %551 = vmatmul.f32.gmra.mxu0 %v344
      %v552 = vpop.f32.mrf.mxu0
      %v553 = vadd.f32 %v310, %v552
      %554 = vmatmul.f32.gmra.mxu0 %v347
      %v555 = vpop.f32.mrf.mxu0
      %v556 = vadd.f32 %v310, %v555
      %557 = vmatmul.f32.gmra.mxu0 %v350
      %v558 = vpop.f32.mrf.mxu0
      %v559 = vadd.f32 %v310, %v558
      %560 = vmatmul.f32.gmra.mxu0 %v353
      %v561 = vpop.f32.mrf.mxu0
      %v562 = vadd.f32 %v310, %v561
      %563 = vmatmul.f32.gmra.mxu0 %v356
      %v564 = vpop.f32.mrf.mxu0
      %v565 = vadd.f32 %v310, %v564
      %566 = vmatmul.f32.gmra.mxu0 %v359
      %v567 = vpop.f32.mrf.mxu0
      %v568 = vadd.f32 %v310, %v567
      %569 = vmatmul.f32.gmra.mxu0 %v362
      %v570 = vpop.f32.mrf.mxu0
      %v571 = vadd.f32 %v310, %v570
      %572 = vmatmul.f32.gmra.mxu0 %v365
      %v573 = vpop.f32.mrf.mxu0
      %v574 = vadd.f32 %v310, %v573
      %575 = vmatmul.f32.gmra.mxu0 %v368
      %v576 = vpop.f32.mrf.mxu0
      %v577 = vadd.f32 %v310, %v576
      %578 = vmatmul.f32.gmra.mxu0 %v371
      %v579 = vpop.f32.mrf.mxu0
      %v580 = vadd.f32 %v310, %v579
      %581 = vmatmul.f32.gmra.mxu0 %v374
      %v582 = vpop.f32.mrf.mxu0
      %v583 = vadd.f32 %v310, %v582
      %584 = vmatmul.f32.gmra.mxu0 %v377
      %v585 = vpop.f32.mrf.mxu0
      %v586 = vadd.f32 %v310, %v585
      %587 = vmatmul.f32.gmra.mxu0 %v380
      %v588 = vpop.f32.mrf.mxu0
      %v589 = vadd.f32 %v310, %v588
      %590 = vmatmul.f32.gmra.mxu0 %v383
      %v591 = vpop.f32.mrf.mxu0
      %v592 = vadd.f32 %v310, %v591
      %593 = vmatmul.f32.gmra.mxu0 %v386
      %v594 = vpop.f32.mrf.mxu0
      %v595 = vadd.f32 %v310, %v594
      %596 = vmatmul.f32.gmra.mxu0 %v389
      %v597 = vpop.f32.mrf.mxu0
      %v598 = vadd.f32 %v310, %v597
      %599 = vmatmul.f32.gmra.mxu0 %v392
      %v600 = vpop.f32.mrf.mxu0
      %v601 = vadd.f32 %v310, %v600
      %602 = vmatmul.f32.gmra.mxu0 %v395
      %v603 = vpop.f32.mrf.mxu0
      %v604 = vadd.f32 %v310, %v603
      %605 = vmatmul.f32.gmra.mxu0 %v398
      %v606 = vpop.f32.mrf.mxu0
      %v607 = vadd.f32 %v310, %v606
      %608 = vmatmul.f32.gmra.mxu0 %v401
      %v609 = vpop.f32.mrf.mxu0
      %v610 = vadd.f32 %v310, %v609
      %611 = vmatmul.f32.gmra.mxu0 %v404
      %v612 = vpop.f32.mrf.mxu0
      %v613 = vadd.f32 %v310, %v612
      %614 = vmatmul.f32.gmra.mxu0 %v407
      %v615 = vpop.f32.mrf.mxu0
      %v616 = vadd.f32 %v310, %v615
      %617 = vmatmul.f32.gmra.mxu0 %v410
      %v618 = vpop.f32.mrf.mxu0
      %v619 = vadd.f32 %v310, %v618
      %620 = vmatmul.f32.gmra.mxu0 %v413
      %v621 = vpop.f32.mrf.mxu0
      %v622 = vadd.f32 %v310, %v621
      %623 = vmatmul.f32.gmra.mxu0 %v416
      %v624 = vpop.f32.mrf.mxu0
      %v625 = vadd.f32 %v310, %v624
      %626 = vmatmul.f32.gmra.mxu0 %v419
      %v627 = vpop.f32.mrf.mxu0
      %v628 = vadd.f32 %v310, %v627
      %629 = vmatmul.f32.gmra.mxu0 %v422
      %v630 = vpop.f32.mrf.mxu0
      %v631 = vadd.f32 %v310, %v630
      %632 = vmatmul.f32.gmra.mxu0 %v425
      %v633 = vpop.f32.mrf.mxu0
      %v634 = vadd.f32 %v310, %v633
      %635 = vmatmul.f32.gmra.mxu0 %v428
      %v636 = vpop.f32.mrf.mxu0
      %v637 = vadd.f32 %v310, %v636
      %638 = vmatmul.f32.gmra.mxu0 %v431
      %v639 = vpop.f32.mrf.mxu0
      %v640 = vadd.f32 %v310, %v639
      %641 = vmatmul.f32.gmra.mxu0 %v434
      %v642 = vpop.f32.mrf.mxu0
      %v643 = vadd.f32 %v310, %v642
      %644 = vmatmul.f32.gmra.mxu0 %v437
      %v645 = vpop.f32.mrf.mxu0
      %v646 = vadd.f32 %v310, %v645
      %647 = vmatmul.f32.gmra.mxu0 %v440
      %v648 = vpop.f32.mrf.mxu0
      %v649 = vadd.f32 %v310, %v648
      %650 = vmatmul.f32.gmra.mxu0 %v443
      %v651 = vpop.f32.mrf.mxu0
      %v652 = vadd.f32 %v310, %v651
      %653 = vmatmul.f32.gmra.mxu0 %v446
      %v654 = vpop.f32.mrf.mxu0
      %v655 = vadd.f32 %v310, %v654
      %656 = vmatmul.f32.gmra.mxu0 %v449
      %v657 = vpop.f32.mrf.mxu0
      %v658 = vadd.f32 %v310, %v657
      %659 = vmatmul.f32.gmra.mxu0 %v452
      %v660 = vpop.f32.mrf.mxu0
      %v661 = vadd.f32 %v310, %v660
      %662 = vmatmul.f32.gmra.mxu0 %v455
      %v663 = vpop.f32.mrf.mxu0
      %v664 = vadd.f32 %v310, %v663
      %665 = vmatmul.f32.gmra.mxu0 %v458
      %v666 = vpop.f32.mrf.mxu0
      %v667 = vadd.f32 %v310, %v666
      %668 = vmatmul.f32.gmra.mxu0 %v461
      %v669 = vpop.f32.mrf.mxu0
      %v670 = vadd.f32 %v310, %v669
      %671 = vmatmul.f32.gmra.mxu0 %v464
      %v672 = vpop.f32.mrf.mxu0
      %v673 = vadd.f32 %v310, %v672
      %674 = vmatmul.f32.gmra.mxu0 %v467
      %v675 = vpop.f32.mrf.mxu0
      %v676 = vadd.f32 %v310, %v675
      %677 = vmatmul.f32.gmra.mxu0 %v470
      %v678 = vpop.f32.mrf.mxu0
      %v679 = vadd.f32 %v310, %v678
      %680 = vmatmul.f32.gmra.mxu0 %v473
      %v681 = vpop.f32.mrf.mxu0
      %v682 = vadd.f32 %v310, %v681
      %683 = vmatmul.f32.gmra.mxu0 %v476
      %v684 = vpop.f32.mrf.mxu0
      %v685 = vadd.f32 %v310, %v684
      %686 = vmatmul.f32.gmra.mxu0 %v479
      %v687 = vpop.f32.mrf.mxu0
      %v688 = vadd.f32 %v310, %v687
      %689 = vmatmul.f32.gmra.mxu0 %v482
      %v690 = vpop.f32.mrf.mxu0
      %v691 = vadd.f32 %v310, %v690
      %692 = vmatmul.f32.gmra.mxu0 %v485
      %v693 = vpop.f32.mrf.mxu0
      %v694 = vadd.f32 %v310, %v693
      %695 = vmatmul.f32.gmra.mxu0 %v488
      %v696 = vpop.f32.mrf.mxu0
      %v697 = vadd.f32 %v310, %v696
      %698 = vmatmul.f32.gmra.mxu0 %v491
      %v699 = vpop.f32.mrf.mxu0
      %v700 = vadd.f32 %v310, %v699
      %701 = vmatmul.f32.gmra.mxu0 %v494
      %v702 = vpop.f32.mrf.mxu0
      %v703 = vadd.f32 %v310, %v702
      %704 = vmatmul.f32.gmra.mxu0 %v497
      %v705 = vpop.f32.mrf.mxu0
      %v706 = vadd.f32 %v310, %v705
      %707 = vmatmul.f32.gmra.mxu0 %v500
      %v708 = vpop.f32.mrf.mxu0
      %v709 = vadd.f32 %v310, %v708
      %710 = vmatmul.f32.gmra.mxu0 %v503
      %v711 = vpop.f32.mrf.mxu0
      %v712 = vadd.f32 %v310, %v711
      %713 = vdwg.mxu0
      %vm714 = vcmp.gt.f32.partialorder %v523, 0.0
      %vm715 = vcmp.gt.f32.partialorder %v526, 0.0
      %vm716 = vcmp.gt.f32.partialorder %v529, 0.0
      %vm717 = vcmp.gt.f32.partialorder %v532, 0.0
      %vm718 = vcmp.gt.f32.partialorder %v535, 0.0
      %vm719 = vcmp.gt.f32.partialorder %v538, 0.0
      %vm720 = vcmp.gt.f32.partialorder %v541, 0.0
      %vm721 = vcmp.gt.f32.partialorder %v544, 0.0
      %vm722 = vcmp.gt.f32.partialorder %v547, 0.0
      %vm723 = vcmp.gt.f32.partialorder %v550, 0.0
      %vm724 = vcmp.gt.f32.partialorder %v553, 0.0
      %vm725 = vcmp.gt.f32.partialorder %v556, 0.0
      %vm726 = vcmp.gt.f32.partialorder %v559, 0.0
      %vm727 = vcmp.gt.f32.partialorder %v562, 0.0
      %vm728 = vcmp.gt.f32.partialorder %v565, 0.0
      %vm729 = vcmp.gt.f32.partialorder %v568, 0.0
      %vm730 = vcmp.gt.f32.partialorder %v571, 0.0
      %vm731 = vcmp.gt.f32.partialorder %v574, 0.0
      %vm732 = vcmp.gt.f32.partialorder %v577, 0.0
      %vm733 = vcmp.gt.f32.partialorder %v580, 0.0
      %vm734 = vcmp.gt.f32.partialorder %v583, 0.0
      %vm735 = vcmp.gt.f32.partialorder %v586, 0.0
      %vm736 = vcmp.gt.f32.partialorder %v589, 0.0
      %vm737 = vcmp.gt.f32.partialorder %v592, 0.0
      %vm738 = vcmp.gt.f32.partialorder %v595, 0.0
      %vm739 = vcmp.gt.f32.partialorder %v598, 0.0
      %vm740 = vcmp.gt.f32.partialorder %v601, 0.0
      %vm741 = vcmp.gt.f32.partialorder %v604, 0.0
      %vm742 = vcmp.gt.f32.partialorder %v607, 0.0
      %vm743 = vcmp.gt.f32.partialorder %v610, 0.0
      %vm744 = vcmp.gt.f32.partialorder %v613, 0.0
      %vm745 = vcmp.gt.f32.partialorder %v616, 0.0
      %vm746 = vcmp.gt.f32.partialorder %v619, 0.0
      %vm747 = vcmp.gt.f32.partialorder %v622, 0.0
      %vm748 = vcmp.gt.f32.partialorder %v625, 0.0
      %vm749 = vcmp.gt.f32.partialorder %v628, 0.0
      %vm750 = vcmp.gt.f32.partialorder %v631, 0.0
      %vm751 = vcmp.gt.f32.partialorder %v634, 0.0
      %vm752 = vcmp.gt.f32.partialorder %v637, 0.0
      %vm753 = vcmp.gt.f32.partialorder %v640, 0.0
      %vm754 = vcmp.gt.f32.partialorder %v643, 0.0
      %vm755 = vcmp.gt.f32.partialorder %v646, 0.0
      %vm756 = vcmp.gt.f32.partialorder %v649, 0.0
      %vm757 = vcmp.gt.f32.partialorder %v652, 0.0
      %vm758 = vcmp.gt.f32.partialorder %v655, 0.0
      %vm759 = vcmp.gt.f32.partialorder %v658, 0.0
      %vm760 = vcmp.gt.f32.partialorder %v661, 0.0
      %vm761 = vcmp.gt.f32.partialorder %v664, 0.0
      %vm762 = vcmp.gt.f32.partialorder %v667, 0.0
      %vm763 = vcmp.gt.f32.partialorder %v670, 0.0
      %vm764 = vcmp.gt.f32.partialorder %v673, 0.0
      %vm765 = vcmp.gt.f32.partialorder %v676, 0.0
      %vm766 = vcmp.gt.f32.partialorder %v679, 0.0
      %vm767 = vcmp.gt.f32.partialorder %v682, 0.0
      %vm768 = vcmp.gt.f32.partialorder %v685, 0.0
      %vm769 = vcmp.gt.f32.partialorder %v688, 0.0
      %vm770 = vcmp.gt.f32.partialorder %v691, 0.0
      %vm771 = vcmp.gt.f32.partialorder %v694, 0.0
      %vm772 = vcmp.gt.f32.partialorder %v697, 0.0
      %vm773 = vcmp.gt.f32.partialorder %v700, 0.0
      %vm774 = vcmp.gt.f32.partialorder %v703, 0.0
      %vm775 = vcmp.gt.f32.partialorder %v706, 0.0
      %vm776 = vcmp.gt.f32.partialorder %v709, 0.0
      %vm777 = vcmp.gt.f32.partialorder %v712, 0.0
      %v778 = vmin.f32 %v523, 0.0
      %v779 = vmin.f32 %v526, 0.0
      %v780 = vmin.f32 %v529, 0.0
      %v781 = vmin.f32 %v532, 0.0
      %v782 = vmin.f32 %v535, 0.0
      %v783 = vmin.f32 %v538, 0.0
      %v784 = vmin.f32 %v541, 0.0
      %v785 = vmin.f32 %v544, 0.0
      %v786 = vmin.f32 %v547, 0.0
      %v787 = vmin.f32 %v550, 0.0
      %v788 = vmin.f32 %v553, 0.0
      %v789 = vmin.f32 %v556, 0.0
      %v790 = vmin.f32 %v559, 0.0
      %v791 = vmin.f32 %v562, 0.0
      %v792 = vmin.f32 %v565, 0.0
      %v793 = vmin.f32 %v568, 0.0
      %v794 = vmin.f32 %v571, 0.0
      %v795 = vmin.f32 %v574, 0.0
      %v796 = vmin.f32 %v577, 0.0
      %v797 = vmin.f32 %v580, 0.0
      %v798 = vmin.f32 %v583, 0.0
      %v799 = vmin.f32 %v586, 0.0
      %v800 = vmin.f32 %v589, 0.0
      %v801 = vmin.f32 %v592, 0.0
      %v802 = vmin.f32 %v595, 0.0
      %v803 = vmin.f32 %v598, 0.0
      %v804 = vmin.f32 %v601, 0.0
      %v805 = vmin.f32 %v604, 0.0
      %v806 = vmin.f32 %v607, 0.0
      %v807 = vmin.f32 %v610, 0.0
      %v808 = vmin.f32 %v613, 0.0
      %v809 = vmin.f32 %v616, 0.0
      %v810 = vmin.f32 %v619, 0.0
      %v811 = vmin.f32 %v622, 0.0
      %v812 = vmin.f32 %v625, 0.0
      %v813 = vmin.f32 %v628, 0.0
      %v814 = vmin.f32 %v631, 0.0
      %v815 = vmin.f32 %v634, 0.0
      %v816 = vmin.f32 %v637, 0.0
      %v817 = vmin.f32 %v640, 0.0
      %v818 = vmin.f32 %v643, 0.0
      %v819 = vmin.f32 %v646, 0.0
      %v820 = vmin.f32 %v649, 0.0
      %v821 = vmin.f32 %v652, 0.0
      %v822 = vmin.f32 %v655, 0.0
      %v823 = vmin.f32 %v658, 0.0
      %v824 = vmin.f32 %v661, 0.0
      %v825 = vmin.f32 %v664, 0.0
      %v826 = vmin.f32 %v667, 0.0
      %v827 = vmin.f32 %v670, 0.0
      %v828 = vmin.f32 %v673, 0.0
      %v829 = vmin.f32 %v676, 0.0
      %v830 = vmin.f32 %v679, 0.0
      %v831 = vmin.f32 %v682, 0.0
      %v832 = vmin.f32 %v685, 0.0
      %v833 = vmin.f32 %v688, 0.0
      %v834 = vmin.f32 %v691, 0.0
      %v835 = vmin.f32 %v694, 0.0
      %v836 = vmin.f32 %v697, 0.0
      %v837 = vmin.f32 %v700, 0.0
      %v838 = vmin.f32 %v703, 0.0
      %v839 = vmin.f32 %v706, 0.0
      %v840 = vmin.f32 %v709, 0.0
      %v841 = vmin.f32 %v712, 0.0
      %v842 = vmul.f32 %v778, 1.442695
      %v843 = vpow.pop %v842
      %v844 = vmul.f32 %v779, 1.442695
      %v845 = vpow.pop %v844
      %v846 = vmul.f32 %v780, 1.442695
      %v847 = vpow.pop %v846
      %v848 = vmul.f32 %v781, 1.442695
      %v849 = vpow.pop %v848
      %v850 = vmul.f32 %v782, 1.442695
      %v851 = vpow.pop %v850
      %v852 = vmul.f32 %v783, 1.442695
      %v853 = vpow.pop %v852
      %v854 = vmul.f32 %v784, 1.442695
      %v855 = vpow.pop %v854
      %v856 = vmul.f32 %v785, 1.442695
      %v857 = vpow.pop %v856
      %v858 = vmul.f32 %v786, 1.442695
      %v859 = vpow.pop %v858
      %v860 = vmul.f32 %v787, 1.442695
      %v861 = vpow.pop %v860
      %v862 = vmul.f32 %v788, 1.442695
      %v863 = vpow.pop %v862
      %v864 = vmul.f32 %v789, 1.442695
      %v865 = vpow.pop %v864
      %v866 = vmul.f32 %v790, 1.442695
      %v867 = vpow.pop %v866
      %v868 = vmul.f32 %v791, 1.442695
      %v869 = vpow.pop %v868
      %v870 = vmul.f32 %v792, 1.442695
      %v871 = vpow.pop %v870
      %v872 = vmul.f32 %v793, 1.442695
      %v873 = vpow.pop %v872
      %v874 = vmul.f32 %v794, 1.442695
      %v875 = vpow.pop %v874
      %v876 = vmul.f32 %v795, 1.442695
      %v877 = vpow.pop %v876
      %v878 = vmul.f32 %v796, 1.442695
      %v879 = vpow.pop %v878
      %v880 = vmul.f32 %v797, 1.442695
      %v881 = vpow.pop %v880
      %v882 = vmul.f32 %v798, 1.442695
      %v883 = vpow.pop %v882
      %v884 = vmul.f32 %v799, 1.442695
      %v885 = vpow.pop %v884
      %v886 = vmul.f32 %v800, 1.442695
      %v887 = vpow.pop %v886
      %v888 = vmul.f32 %v801, 1.442695
      %v889 = vpow.pop %v888
      %v890 = vmul.f32 %v802, 1.442695
      %v891 = vpow.pop %v890
      %v892 = vmul.f32 %v803, 1.442695
      %v893 = vpow.pop %v892
      %v894 = vmul.f32 %v804, 1.442695
      %v895 = vpow.pop %v894
      %v896 = vmul.f32 %v805, 1.442695
      %v897 = vpow.pop %v896
      %v898 = vmul.f32 %v806, 1.442695
      %v899 = vpow.pop %v898
      %v900 = vmul.f32 %v807, 1.442695
      %v901 = vpow.pop %v900
      %v902 = vmul.f32 %v808, 1.442695
      %v903 = vpow.pop %v902
      %v904 = vmul.f32 %v809, 1.442695
      %v905 = vpow.pop %v904
      %v906 = vmul.f32 %v810, 1.442695
      %v907 = vpow.pop %v906
      %v908 = vmul.f32 %v811, 1.442695
      %v909 = vpow.pop %v908
      %v910 = vmul.f32 %v812, 1.442695
      %v911 = vpow.pop %v910
      %v912 = vmul.f32 %v813, 1.442695
      %v913 = vpow.pop %v912
      %v914 = vmul.f32 %v814, 1.442695
      %v915 = vpow.pop %v914
      %v916 = vmul.f32 %v815, 1.442695
      %v917 = vpow.pop %v916
      %v918 = vmul.f32 %v816, 1.442695
      %v919 = vpow.pop %v918
      %v920 = vmul.f32 %v817, 1.442695
      %v921 = vpow.pop %v920
      %v922 = vmul.f32 %v818, 1.442695
      %v923 = vpow.pop %v922
      %v924 = vmul.f32 %v819, 1.442695
      %v925 = vpow.pop %v924
      %v926 = vmul.f32 %v820, 1.442695
      %v927 = vpow.pop %v926
      %v928 = vmul.f32 %v821, 1.442695
      %v929 = vpow.pop %v928
      %v930 = vmul.f32 %v822, 1.442695
      %v931 = vpow.pop %v930
      %v932 = vmul.f32 %v823, 1.442695
      %v933 = vpow.pop %v932
      %v934 = vmul.f32 %v824, 1.442695
      %v935 = vpow.pop %v934
      %v936 = vmul.f32 %v825, 1.442695
      %v937 = vpow.pop %v936
      %v938 = vmul.f32 %v826, 1.442695
      %v939 = vpow.pop %v938
      %v940 = vmul.f32 %v827, 1.442695
      %v941 = vpow.pop %v940
      %v942 = vmul.f32 %v828, 1.442695
      %v943 = vpow.pop %v942
      %v944 = vmul.f32 %v829, 1.442695
      %v945 = vpow.pop %v944
      %v946 = vmul.f32 %v830, 1.442695
      %v947 = vpow.pop %v946
      %v948 = vmul.f32 %v831, 1.442695
      %v949 = vpow.pop %v948
      %v950 = vmul.f32 %v832, 1.442695
      %v951 = vpow.pop %v950
      %v952 = vmul.f32 %v833, 1.442695
      %v953 = vpow.pop %v952
      %v954 = vmul.f32 %v834, 1.442695
      %v955 = vpow.pop %v954
      %v956 = vmul.f32 %v835, 1.442695
      %v957 = vpow.pop %v956
      %v958 = vmul.f32 %v836, 1.442695
      %v959 = vpow.pop %v958
      %v960 = vmul.f32 %v837, 1.442695
      %v961 = vpow.pop %v960
      %v962 = vmul.f32 %v838, 1.442695
      %v963 = vpow.pop %v962
      %v964 = vmul.f32 %v839, 1.442695
      %v965 = vpow.pop %v964
      %v966 = vmul.f32 %v840, 1.442695
      %v967 = vpow.pop %v966
      %v968 = vmul.f32 %v841, 1.442695
      %v969 = vpow.pop %v968
      %v970 = vsub.f32 %v843, 1.0
      %v971 = vsub.f32 %v845, 1.0
      %v972 = vsub.f32 %v847, 1.0
      %v973 = vsub.f32 %v849, 1.0
      %v974 = vsub.f32 %v851, 1.0
      %v975 = vsub.f32 %v853, 1.0
      %v976 = vsub.f32 %v855, 1.0
      %v977 = vsub.f32 %v857, 1.0
      %v978 = vsub.f32 %v859, 1.0
      %v979 = vsub.f32 %v861, 1.0
      %v980 = vsub.f32 %v863, 1.0
      %v981 = vsub.f32 %v865, 1.0
      %v982 = vsub.f32 %v867, 1.0
      %v983 = vsub.f32 %v869, 1.0
      %v984 = vsub.f32 %v871, 1.0
      %v985 = vsub.f32 %v873, 1.0
      %v986 = vsub.f32 %v875, 1.0
      %v987 = vsub.f32 %v877, 1.0
      %v988 = vsub.f32 %v879, 1.0
      %v989 = vsub.f32 %v881, 1.0
      %v990 = vsub.f32 %v883, 1.0
      %v991 = vsub.f32 %v885, 1.0
      %v992 = vsub.f32 %v887, 1.0
      %v993 = vsub.f32 %v889, 1.0
      %v994 = vsub.f32 %v891, 1.0
      %v995 = vsub.f32 %v893, 1.0
      %v996 = vsub.f32 %v895, 1.0
      %v997 = vsub.f32 %v897, 1.0
      %v998 = vsub.f32 %v899, 1.0
      %v999 = vsub.f32 %v901, 1.0
      %v1000 = vsub.f32 %v903, 1.0
      %v1001 = vsub.f32 %v905, 1.0
      %v1002 = vsub.f32 %v907, 1.0
      %v1003 = vsub.f32 %v909, 1.0
      %v1004 = vsub.f32 %v911, 1.0
      %v1005 = vsub.f32 %v913, 1.0
      %v1006 = vsub.f32 %v915, 1.0
      %v1007 = vsub.f32 %v917, 1.0
      %v1008 = vsub.f32 %v919, 1.0
      %v1009 = vsub.f32 %v921, 1.0
      %v1010 = vsub.f32 %v923, 1.0
      %v1011 = vsub.f32 %v925, 1.0
      %v1012 = vsub.f32 %v927, 1.0
      %v1013 = vsub.f32 %v929, 1.0
      %v1014 = vsub.f32 %v931, 1.0
      %v1015 = vsub.f32 %v933, 1.0
      %v1016 = vsub.f32 %v935, 1.0
      %v1017 = vsub.f32 %v937, 1.0
      %v1018 = vsub.f32 %v939, 1.0
      %v1019 = vsub.f32 %v941, 1.0
      %v1020 = vsub.f32 %v943, 1.0
      %v1021 = vsub.f32 %v945, 1.0
      %v1022 = vsub.f32 %v947, 1.0
      %v1023 = vsub.f32 %v949, 1.0
      %v1024 = vsub.f32 %v951, 1.0
      %v1025 = vsub.f32 %v953, 1.0
      %v1026 = vsub.f32 %v955, 1.0
      %v1027 = vsub.f32 %v957, 1.0
      %v1028 = vsub.f32 %v959, 1.0
      %v1029 = vsub.f32 %v961, 1.0
      %v1030 = vsub.f32 %v963, 1.0
      %v1031 = vsub.f32 %v965, 1.0
      %v1032 = vsub.f32 %v967, 1.0
      %v1033 = vsub.f32 %v969, 1.0
      %v1034 = vsel %vm714, %v523, %v970
      %v1035 = vsel %vm715, %v526, %v971
      %v1036 = vsel %vm716, %v529, %v972
      %v1037 = vsel %vm717, %v532, %v973
      %v1038 = vsel %vm718, %v535, %v974
      %v1039 = vsel %vm719, %v538, %v975
      %v1040 = vsel %vm720, %v541, %v976
      %v1041 = vsel %vm721, %v544, %v977
      %v1042 = vsel %vm722, %v547, %v978
      %v1043 = vsel %vm723, %v550, %v979
      %v1044 = vsel %vm724, %v553, %v980
      %v1045 = vsel %vm725, %v556, %v981
      %v1046 = vsel %vm726, %v559, %v982
      %v1047 = vsel %vm727, %v562, %v983
      %v1048 = vsel %vm728, %v565, %v984
      %v1049 = vsel %vm729, %v568, %v985
      %v1050 = vsel %vm730, %v571, %v986
      %v1051 = vsel %vm731, %v574, %v987
      %v1052 = vsel %vm732, %v577, %v988
      %v1053 = vsel %vm733, %v580, %v989
      %v1054 = vsel %vm734, %v583, %v990
      %v1055 = vsel %vm735, %v586, %v991
      %v1056 = vsel %vm736, %v589, %v992
      %v1057 = vsel %vm737, %v592, %v993
      %v1058 = vsel %vm738, %v595, %v994
      %v1059 = vsel %vm739, %v598, %v995
      %v1060 = vsel %vm740, %v601, %v996
      %v1061 = vsel %vm741, %v604, %v997
      %v1062 = vsel %vm742, %v607, %v998
      %v1063 = vsel %vm743, %v610, %v999
      %v1064 = vsel %vm744, %v613, %v1000
      %v1065 = vsel %vm745, %v616, %v1001
      %v1066 = vsel %vm746, %v619, %v1002
      %v1067 = vsel %vm747, %v622, %v1003
      %v1068 = vsel %vm748, %v625, %v1004
      %v1069 = vsel %vm749, %v628, %v1005
      %v1070 = vsel %vm750, %v631, %v1006
      %v1071 = vsel %vm751, %v634, %v1007
      %v1072 = vsel %vm752, %v637, %v1008
      %v1073 = vsel %vm753, %v640, %v1009
      %v1074 = vsel %vm754, %v643, %v1010
      %v1075 = vsel %vm755, %v646, %v1011
      %v1076 = vsel %vm756, %v649, %v1012
      %v1077 = vsel %vm757, %v652, %v1013
      %v1078 = vsel %vm758, %v655, %v1014
      %v1079 = vsel %vm759, %v658, %v1015
      %v1080 = vsel %vm760, %v661, %v1016
      %v1081 = vsel %vm761, %v664, %v1017
      %v1082 = vsel %vm762, %v667, %v1018
      %v1083 = vsel %vm763, %v670, %v1019
      %v1084 = vsel %vm764, %v673, %v1020
      %v1085 = vsel %vm765, %v676, %v1021
      %v1086 = vsel %vm766, %v679, %v1022
      %v1087 = vsel %vm767, %v682, %v1023
      %v1088 = vsel %vm768, %v685, %v1024
      %v1089 = vsel %vm769, %v688, %v1025
      %v1090 = vsel %vm770, %v691, %v1026
      %v1091 = vsel %vm771, %v694, %v1027
      %v1092 = vsel %vm772, %v697, %v1028
      %v1093 = vsel %vm773, %v700, %v1029
      %v1094 = vsel %vm774, %v703, %v1030
      %v1095 = vsel %vm775, %v706, %v1031
      %v1096 = vsel %vm776, %v709, %v1032
      %v1097 = vsel %vm777, %v712, %v1033
      %1098 = vst.msk [vmem:[%s172] sm:$0xff] %vm312, %v1034
      %1099 = vst.msk [vmem:[%s172 + $0x8] sm:$0xff] %vm312, %v1035
      %1100 = vst.msk [vmem:[%s172 + $0x10] sm:$0xff] %vm312, %v1036
      %1101 = vst.msk [vmem:[%s172 + $0x18] sm:$0xff] %vm312, %v1037
      %1102 = vst.msk [vmem:[%s172 + $0x20] sm:$0xff] %vm312, %v1038
      %1103 = vst.msk [vmem:[%s172 + $0x28] sm:$0xff] %vm312, %v1039
      %1104 = vst.msk [vmem:[%s172 + $0x30] sm:$0xff] %vm312, %v1040
      %1105 = vst.msk [vmem:[%s172 + $0x38] sm:$0xff] %vm312, %v1041
      %1106 = vst.msk [vmem:[%s172 + $0x40] sm:$0xff] %vm312, %v1042
      %1107 = vst.msk [vmem:[%s172 + $0x48] sm:$0xff] %vm312, %v1043
      %1108 = vst.msk [vmem:[%s172 + $0x50] sm:$0xff] %vm312, %v1044
      %1109 = vst.msk [vmem:[%s172 + $0x58] sm:$0xff] %vm312, %v1045
      %1110 = vst.msk [vmem:[%s172 + $0x60] sm:$0xff] %vm312, %v1046
      %1111 = vst.msk [vmem:[%s172 + $0x68] sm:$0xff] %vm312, %v1047
      %1112 = vst.msk [vmem:[%s172 + $0x70] sm:$0xff] %vm312, %v1048
      %1113 = vst.msk [vmem:[%s172 + $0x78] sm:$0xff] %vm312, %v1049
      %1114 = vst.msk [vmem:[%s172 + $0x80] sm:$0xff] %vm312, %v1050
      %1115 = vst.msk [vmem:[%s172 + $0x88] sm:$0xff] %vm312, %v1051
      %1116 = vst.msk [vmem:[%s172 + $0x90] sm:$0xff] %vm312, %v1052
      %1117 = vst.msk [vmem:[%s172 + $0x98] sm:$0xff] %vm312, %v1053
      %1118 = vst.msk [vmem:[%s172 + $0xa0] sm:$0xff] %vm312, %v1054
      %1119 = vst.msk [vmem:[%s172 + $0xa8] sm:$0xff] %vm312, %v1055
      %1120 = vst.msk [vmem:[%s172 + $0xb0] sm:$0xff] %vm312, %v1056
      %1121 = vst.msk [vmem:[%s172 + $0xb8] sm:$0xff] %vm312, %v1057
      %1122 = vst.msk [vmem:[%s172 + $0xc0] sm:$0xff] %vm312, %v1058
      %1123 = vst.msk [vmem:[%s172 + $0xc8] sm:$0xff] %vm312, %v1059
      %1124 = vst.msk [vmem:[%s172 + $0xd0] sm:$0xff] %vm312, %v1060
      %1125 = vst.msk [vmem:[%s172 + $0xd8] sm:$0xff] %vm312, %v1061
      %1126 = vst.msk [vmem:[%s172 + $0xe0] sm:$0xff] %vm312, %v1062
      %1127 = vst.msk [vmem:[%s172 + $0xe8] sm:$0xff] %vm312, %v1063
      %1128 = vst.msk [vmem:[%s172 + $0xf0] sm:$0xff] %vm312, %v1064
      %1129 = vst.msk [vmem:[%s172 + $0xf8] sm:$0xff] %vm312, %v1065
      %1130 = vst.msk [vmem:[%s172 + $0x100] sm:$0xff] %vm312, %v1066
      %1131 = vst.msk [vmem:[%s172 + $0x108] sm:$0xff] %vm312, %v1067
      %1132 = vst.msk [vmem:[%s172 + $0x110] sm:$0xff] %vm312, %v1068
      %1133 = vst.msk [vmem:[%s172 + $0x118] sm:$0xff] %vm312, %v1069
      %1134 = vst.msk [vmem:[%s172 + $0x120] sm:$0xff] %vm312, %v1070
      %1135 = vst.msk [vmem:[%s172 + $0x128] sm:$0xff] %vm312, %v1071
      %1136 = vst.msk [vmem:[%s172 + $0x130] sm:$0xff] %vm312, %v1072
      %1137 = vst.msk [vmem:[%s172 + $0x138] sm:$0xff] %vm312, %v1073
      %1138 = vst.msk [vmem:[%s172 + $0x140] sm:$0xff] %vm312, %v1074
      %1139 = vst.msk [vmem:[%s172 + $0x148] sm:$0xff] %vm312, %v1075
      %1140 = vst.msk [vmem:[%s172 + $0x150] sm:$0xff] %vm312, %v1076
      %1141 = vst.msk [vmem:[%s172 + $0x158] sm:$0xff] %vm312, %v1077
      %1142 = vst.msk [vmem:[%s172 + $0x160] sm:$0xff] %vm312, %v1078
      %1143 = vst.msk [vmem:[%s172 + $0x168] sm:$0xff] %vm312, %v1079
      %1144 = vst.msk [vmem:[%s172 + $0x170] sm:$0xff] %vm312, %v1080
      %1145 = vst.msk [vmem:[%s172 + $0x178] sm:$0xff] %vm312, %v1081
      %1146 = vst.msk [vmem:[%s172 + $0x180] sm:$0xff] %vm312, %v1082
      %1147 = vst.msk [vmem:[%s172 + $0x188] sm:$0xff] %vm312, %v1083
      %1148 = vst.msk [vmem:[%s172 + $0x190] sm:$0xff] %vm312, %v1084
      %1149 = vst.msk [vmem:[%s172 + $0x198] sm:$0xff] %vm312, %v1085
      %1150 = vst.msk [vmem:[%s172 + $0x1a0] sm:$0xff] %vm312, %v1086
      %1151 = vst.msk [vmem:[%s172 + $0x1a8] sm:$0xff] %vm312, %v1087
      %1152 = vst.msk [vmem:[%s172 + $0x1b0] sm:$0xff] %vm312, %v1088
      %1153 = vst.msk [vmem:[%s172 + $0x1b8] sm:$0xff] %vm312, %v1089
      %1154 = vst.msk [vmem:[%s172 + $0x1c0] sm:$0xff] %vm312, %v1090
      %1155 = vst.msk [vmem:[%s172 + $0x1c8] sm:$0xff] %vm312, %v1091
      %1156 = vst.msk [vmem:[%s172 + $0x1d0] sm:$0xff] %vm312, %v1092
      %1157 = vst.msk [vmem:[%s172 + $0x1d8] sm:$0xff] %vm312, %v1093
      %1158 = vst.msk [vmem:[%s172 + $0x1e0] sm:$0xff] %vm312, %v1094
      %1159 = vst.msk [vmem:[%s172 + $0x1e8] sm:$0xff] %vm312, %v1095
      %1160 = vst.msk [vmem:[%s172 + $0x1f0] sm:$0xff] %vm312, %v1096
      %1161 = vst.msk [vmem:[%s172 + $0x1f8] sm:$0xff] %vm312, %v1097
      %s1162 = smul.u32 64, %s14
      %p1163 = scmp.lt.s32.totalorder %s1162, 255
      %s1164 = scalar_select %p1163, %s1162, 255
      %s1165 = smul.addr %s1164, 8
      %s1166 = scalar_lea.vmem %s3, %s1165
      // Predicated region
      $region33: #{encoder_forward.4} parent=31 // pred_check
        %p1167 = pneg %p100
      $region34: #{encoder_forward.4} parent=31 // pred_check_branch
        %1169 = sbr.rel (%p1167) target = $region36
      $region35: #{encoder_forward.4} parent=31 // pred_region
        %s1170 = smul.u32 64, %s14
      $region36: #{encoder_forward.4} parent=31 // pred_fallthru
        _
    $region32: #{encoder_forward.4} parent=5 // pred_fallthru
      _
    %p1171 = scmp.le.s32.totalorder 2, %s9
    // Predicated region
    $region37: #{encoder_forward.4} parent=5 // pred_check
      %p1172 = pneg %p1171
    $region38: #{encoder_forward.4} parent=5 // pred_check_branch
      %1174 = sbr.rel (%p1172) target = $region40
    $region39: #{encoder_forward.4} parent=5 // pred_region
      %s1175 = ssub.s32 %s9, 2
      // Predicated region
      $region41: #{encoder_forward.4} parent=39 // pred_check
        %p1176 = pneg %p106
      $region42: #{encoder_forward.4} parent=39 // pred_check_branch
        %1178 = sbr.rel (%p1176) target = $region44
      $region43: #{encoder_forward.4} parent=39 // pred_region
        %s1179 = smul.u32 64, %s15
        %p1180 = scmp.lt.s32.totalorder %s1179, 255
        %s1181 = scalar_select %p1180, %s1179, 255
        %s1182 = smul.addr %s1181, 8
        %s1183 = scalar_lea.vmem %s3, %s1182
      $region44: #{encoder_forward.4} parent=39 // pred_fallthru
        _
    $region40: #{encoder_forward.4} parent=5 // pred_fallthru
      _
  $region6: #{encoder_forward.4} parent=0 // loop_footer
    %s13 = sadd.s32 1, %s9
  $region7: #{encoder_forward.4} parent=0 // loop_footer_branch
    %8 = sbr.rel target = $region3
  $region8: #{encoder_forward.4} parent=0 // loop_exit
    _

// kernel: encoder_forward.5
$region0: #{encoder_forward.5}
  #allocation0 [shape = 'u32[]', space=smem, size = 0x4, offset = 0x4, fixed_abs, tag = 'smem constant byte address 0x4 - core index']
  #allocation1 [shape = 'u32[72,128]{1,0:T(1,128)}', space=vmem, size = 0x9000, scoped, tag = 'internal scratch']
  %s0 = inlined_call_operand.vmem [shape: f32[392,768], index: 0, kind: input, shape index: {}]
  %s1 = inlined_call_operand.vmem [shape: f32[768,96], index: 1, kind: input, shape index: {}]
  %s2 = inlined_call_operand.vmem [shape: f32[1,96], index: 2, kind: input, shape index: {}]
  %s3 = inlined_call_operand.vmem [shape: f32[392,96], index: 3, kind: output, shape index: {}]
  %s4 = sld [smem:[#allocation0]]
  $region22: #{encoder_forward.5} parent=0
    _
  %s6 = ssub.s32 1, %s4
  %s7 = scalar_select 0, %s6, %s4
  // Predicated region
  $region2: #{encoder_forward.5} parent=0 // pred_check
    _
  $region3: #{encoder_forward.5} parent=0 // pred_check_branch
    %9 = sbr.rel (0) target = $region5
  $region4: #{encoder_forward.5} parent=0 // pred_region
    _
  $region5: #{encoder_forward.5} parent=0 // pred_fallthru
    _
  // Predicated region
  $region6: #{encoder_forward.5} parent=0 // pred_check
    _
  $region7: #{encoder_forward.5} parent=0 // pred_check_branch
    %11 = sbr.rel (0) target = $region9
  $region8: #{encoder_forward.5} parent=0 // pred_region
    _
  $region9: #{encoder_forward.5} parent=0 // pred_fallthru
    _
  // Predicated region
  $region10: #{encoder_forward.5} parent=0 // pred_check
    _
  $region11: #{encoder_forward.5} parent=0 // pred_check_branch
    %13 = sbr.rel (0) target = $region13
  $region12: #{encoder_forward.5} parent=0 // pred_region
    _
  $region13: #{encoder_forward.5} parent=0 // pred_fallthru
    _
  %v14 = vld [vmem:[%s0] sm:$0xff]
  %v15 = vld [vmem:[%s0 + $0x8] sm:$0xff]
  %v16 = vld [vmem:[%s0 + $0x10] sm:$0xff]
  %v17 = vld [vmem:[%s0 + $0x18] sm:$0xff]
  %v18 = vld [vmem:[%s0 + $0x20] sm:$0xff]
  %v19 = vld [vmem:[%s0 + $0x28] sm:$0xff]
  %v20 = vld [vmem:[%s0 + $0x30] sm:$0xff]
  %v21 = vld [vmem:[%s0 + $0x38] sm:$0xff]
  %v22 = vld [vmem:[%s0 + $0x40] sm:$0xff]
  %v23 = vld [vmem:[%s0 + $0x48] sm:$0xff]
  %v24 = vld [vmem:[%s0 + $0x50] sm:$0xff]
  %v25 = vld [vmem:[%s0 + $0x58] sm:$0xff]
  %v26 = vld [vmem:[%s0 + $0x60] sm:$0xff]
  %v27 = vld [vmem:[%s0 + $0x68] sm:$0xff]
  %v28 = vld [vmem:[%s0 + $0x70] sm:$0xff]
  %v29 = vld [vmem:[%s0 + $0x78] sm:$0xff]
  %v30 = vld [vmem:[%s0 + $0x80] sm:$0xff]
  %v31 = vld [vmem:[%s0 + $0x88] sm:$0xff]
  %v32 = vld [vmem:[%s0 + $0x90] sm:$0xff]
  %v33 = vld [vmem:[%s0 + $0x98] sm:$0xff]
  %v34 = vld [vmem:[%s0 + $0xa0] sm:$0xff]
  %v35 = vld [vmem:[%s0 + $0xa8] sm:$0xff]
  %v36 = vld [vmem:[%s0 + $0xb0] sm:$0xff]
  %v37 = vld [vmem:[%s0 + $0xb8] sm:$0xff]
  %v38 = vld [vmem:[%s0 + $0xc0] sm:$0xff]
  %v39 = vld [vmem:[%s0 + $0xc8] sm:$0xff]
  %v40 = vld [vmem:[%s0 + $0xd0] sm:$0xff]
  %v41 = vld [vmem:[%s0 + $0xd8] sm:$0xff]
  %v42 = vld [vmem:[%s0 + $0xe0] sm:$0xff]
  %v43 = vld [vmem:[%s0 + $0xe8] sm:$0xff]
  %v44 = vld [vmem:[%s0 + $0xf0] sm:$0xff]
  %v45 = vld [vmem:[%s0 + $0xf8] sm:$0xff]
  %v46 = vld [vmem:[%s0 + $0x100] sm:$0xff]
  %v47 = vld [vmem:[%s0 + $0x108] sm:$0xff]
  %v48 = vld [vmem:[%s0 + $0x110] sm:$0xff]
  %v49 = vld [vmem:[%s0 + $0x118] sm:$0xff]
  %v50 = vld [vmem:[%s0 + $0x120] sm:$0xff]
  %v51 = vld [vmem:[%s0 + $0x128] sm:$0xff]
  %v52 = vld [vmem:[%s0 + $0x130] sm:$0xff]
  %v53 = vld [vmem:[%s0 + $0x138] sm:$0xff]
  %v54 = vld [vmem:[%s0 + $0x140] sm:$0xff]
  %v55 = vld [vmem:[%s0 + $0x148] sm:$0xff]
  %v56 = vld [vmem:[%s0 + $0x150] sm:$0xff]
  %v57 = vld [vmem:[%s0 + $0x158] sm:$0xff]
  %v58 = vld [vmem:[%s0 + $0x160] sm:$0xff]
  %v59 = vld [vmem:[%s0 + $0x168] sm:$0xff]
  %v60 = vld [vmem:[%s0 + $0x170] sm:$0xff]
  %v61 = vld [vmem:[%s0 + $0x178] sm:$0xff]
  %v62 = vld [vmem:[%s0 + $0x180] sm:$0xff]
  %v63 = vld [vmem:[%s0 + $0x188] sm:$0xff]
  %v64 = vld [vmem:[%s0 + $0x190] sm:$0xff]
  %v65 = vld [vmem:[%s0 + $0x198] sm:$0xff]
  %v66 = vld [vmem:[%s0 + $0x1a0] sm:$0xff]
  %v67 = vld [vmem:[%s0 + $0x1a8] sm:$0xff]
  %v68 = vld [vmem:[%s0 + $0x1b0] sm:$0xff]
  %v69 = vld [vmem:[%s0 + $0x1b8] sm:$0xff]
  %v70 = vld [vmem:[%s0 + $0x1c0] sm:$0xff]
  %v71 = vld [vmem:[%s0 + $0x1c8] sm:$0xff]
  %v72 = vld [vmem:[%s0 + $0x1d0] sm:$0xff]
  %v73 = vld [vmem:[%s0 + $0x1d8] sm:$0xff]
  %v74 = vld [vmem:[%s0 + $0x1e0] sm:$0xff]
  %v75 = vld [vmem:[%s0 + $0x1e8] sm:$0xff]
  %v76 = vld [vmem:[%s0 + $0x1f0] sm:$0xff]
  %v77 = vld [vmem:[%s0 + $0x1f8] sm:$0xff]
  %v78 = vld [vmem:[%s0 + $0x200] sm:$0xff]
  %v79 = vld [vmem:[%s0 + $0x208] sm:$0xff]
  %v80 = vld [vmem:[%s0 + $0x210] sm:$0xff]
  %v81 = vld [vmem:[%s0 + $0x218] sm:$0xff]
  %v82 = vld [vmem:[%s0 + $0x220] sm:$0xff]
  %v83 = vld [vmem:[%s0 + $0x228] sm:$0xff]
  %v84 = vld [vmem:[%s0 + $0x230] sm:$0xff]
  %v85 = vld [vmem:[%s0 + $0x238] sm:$0xff]
  %v86 = vld [vmem:[%s0 + $0x240] sm:$0xff]
  %v87 = vld [vmem:[%s0 + $0x248] sm:$0xff]
  %v88 = vld [vmem:[%s0 + $0x250] sm:$0xff]
  %v89 = vld [vmem:[%s0 + $0x258] sm:$0xff]
  %v90 = vld [vmem:[%s0 + $0x260] sm:$0xff]
  %v91 = vld [vmem:[%s0 + $0x268] sm:$0xff]
  %v92 = vld [vmem:[%s0 + $0x270] sm:$0xff]
  %v93 = vld [vmem:[%s0 + $0x278] sm:$0xff]
  %v94 = vld [vmem:[%s0 + $0x280] sm:$0xff]
  %v95 = vld [vmem:[%s0 + $0x288] sm:$0xff]
  %v96 = vld [vmem:[%s0 + $0x290] sm:$0xff]
  %v97 = vld [vmem:[%s0 + $0x298] sm:$0xff]
  %v98 = vld [vmem:[%s0 + $0x2a0] sm:$0xff]
  %v99 = vld [vmem:[%s0 + $0x2a8] sm:$0xff]
  %v100 = vld [vmem:[%s0 + $0x2b0] sm:$0xff]
  %v101 = vld [vmem:[%s0 + $0x2b8] sm:$0xff]
  %v102 = vld [vmem:[%s0 + $0x2c0] sm:$0xff]
  %v103 = vld [vmem:[%s0 + $0x2c8] sm:$0xff]
  %v104 = vld [vmem:[%s0 + $0x2d0] sm:$0xff]
  %v105 = vld [vmem:[%s0 + $0x2d8] sm:$0xff]
  %v106 = vld [vmem:[%s0 + $0x2e0] sm:$0xff]
  %v107 = vld [vmem:[%s0 + $0x2e8] sm:$0xff]
  %v108 = vld [vmem:[%s0 + $0x2f0] sm:$0xff]
  %v109 = vld [vmem:[%s0 + $0x2f8] sm:$0xff]
  %v110 = vld [vmem:[%s0 + $0x300] sm:$0xff]
  %v111 = vld [vmem:[%s0 + $0x308] sm:$0xff]
  %v112 = vld [vmem:[%s0 + $0x310] sm:$0xff]
  %v113 = vld [vmem:[%s0 + $0x318] sm:$0xff]
  %v114 = vld [vmem:[%s0 + $0x320] sm:$0xff]
  %v115 = vld [vmem:[%s0 + $0x328] sm:$0xff]
  %v116 = vld [vmem:[%s0 + $0x330] sm:$0xff]
  %v117 = vld [vmem:[%s0 + $0x338] sm:$0xff]
  %v118 = vld [vmem:[%s0 + $0x340] sm:$0xff]
  %v119 = vld [vmem:[%s0 + $0x348] sm:$0xff]
  %v120 = vld [vmem:[%s0 + $0x350] sm:$0xff]
  %v121 = vld [vmem:[%s0 + $0x358] sm:$0xff]
  %v122 = vld [vmem:[%s0 + $0x360] sm:$0xff]
  %v123 = vld [vmem:[%s0 + $0x368] sm:$0xff]
  %v124 = vld [vmem:[%s0 + $0x370] sm:$0xff]
  %v125 = vld [vmem:[%s0 + $0x378] sm:$0xff]
  %v126 = vld [vmem:[%s0 + $0x380] sm:$0xff]
  %v127 = vld [vmem:[%s0 + $0x388] sm:$0xff]
  %v128 = vld [vmem:[%s0 + $0x390] sm:$0xff]
  %v129 = vld [vmem:[%s0 + $0x398] sm:$0xff]
  %v130 = vld [vmem:[%s0 + $0x3a0] sm:$0xff]
  %v131 = vld [vmem:[%s0 + $0x3a8] sm:$0xff]
  %v132 = vld [vmem:[%s0 + $0x3b0] sm:$0xff]
  %v133 = vld [vmem:[%s0 + $0x3b8] sm:$0xff]
  %v134 = vld [vmem:[%s0 + $0x3c0] sm:$0xff]
  %v135 = vld [vmem:[%s0 + $0x3c8] sm:$0xff]
  %v136 = vld [vmem:[%s0 + $0x3d0] sm:$0xff]
  %v137 = vld [vmem:[%s0 + $0x3d8] sm:$0xff]
  %v138 = vld [vmem:[%s0 + $0x3e0] sm:$0xff]
  %v139 = vld [vmem:[%s0 + $0x3e8] sm:$0xff]
  %v140 = vld [vmem:[%s0 + $0x3f0] sm:$0xff]
  %v141 = vld [vmem:[%s0 + $0x3f8] sm:$0xff]
  %v142 = vld [vmem:[%s0 + $0x400] sm:$0xff]
  %v143 = vld [vmem:[%s0 + $0x408] sm:$0xff]
  %v144 = vld [vmem:[%s0 + $0x410] sm:$0xff]
  %v145 = vld [vmem:[%s0 + $0x418] sm:$0xff]
  %v146 = vld [vmem:[%s0 + $0x420] sm:$0xff]
  %v147 = vld [vmem:[%s0 + $0x428] sm:$0xff]
  %v148 = vld [vmem:[%s0 + $0x430] sm:$0xff]
  %v149 = vld [vmem:[%s0 + $0x438] sm:$0xff]
  %v150 = vld [vmem:[%s0 + $0x440] sm:$0xff]
  %v151 = vld [vmem:[%s0 + $0x448] sm:$0xff]
  %v152 = vld [vmem:[%s0 + $0x450] sm:$0xff]
  %v153 = vld [vmem:[%s0 + $0x458] sm:$0xff]
  %v154 = vld [vmem:[%s0 + $0x460] sm:$0xff]
  %v155 = vld [vmem:[%s0 + $0x468] sm:$0xff]
  %v156 = vld [vmem:[%s0 + $0x470] sm:$0xff]
  %v157 = vld [vmem:[%s0 + $0x478] sm:$0xff]
  %v158 = vld [vmem:[%s0 + $0x480] sm:$0xff]
  %v159 = vld [vmem:[%s0 + $0x488] sm:$0xff]
  %v160 = vld [vmem:[%s0 + $0x490] sm:$0xff]
  %v161 = vld [vmem:[%s0 + $0x498] sm:$0xff]
  %v162 = vld [vmem:[%s0 + $0x4a0] sm:$0xff]
  %v163 = vld [vmem:[%s0 + $0x4a8] sm:$0xff]
  %v164 = vld [vmem:[%s0 + $0x4b0] sm:$0xff]
  %v165 = vld [vmem:[%s0 + $0x4b8] sm:$0xff]
  %v166 = vld [vmem:[%s0 + $0x4c0] sm:$0xff]
  %v167 = vld [vmem:[%s0 + $0x4c8] sm:$0xff]
  %v168 = vld [vmem:[%s0 + $0x4d0] sm:$0xff]
  %v169 = vld [vmem:[%s0 + $0x4d8] sm:$0xff]
  %v170 = vld [vmem:[%s0 + $0x4e0] sm:$0xff]
  %v171 = vld [vmem:[%s0 + $0x4e8] sm:$0xff]
  %v172 = vld [vmem:[%s0 + $0x4f0] sm:$0xff]
  %v173 = vld [vmem:[%s0 + $0x4f8] sm:$0xff]
  %v174 = vld [vmem:[%s0 + $0x500] sm:$0xff]
  %v175 = vld [vmem:[%s0 + $0x508] sm:$0xff]
  %v176 = vld [vmem:[%s0 + $0x510] sm:$0xff]
  %v177 = vld [vmem:[%s0 + $0x518] sm:$0xff]
  %v178 = vld [vmem:[%s0 + $0x520] sm:$0xff]
  %v179 = vld [vmem:[%s0 + $0x528] sm:$0xff]
  %v180 = vld [vmem:[%s0 + $0x530] sm:$0xff]
  %v181 = vld [vmem:[%s0 + $0x538] sm:$0xff]
  %v182 = vld [vmem:[%s0 + $0x540] sm:$0xff]
  %v183 = vld [vmem:[%s0 + $0x548] sm:$0xff]
  %v184 = vld [vmem:[%s0 + $0x550] sm:$0xff]
  %v185 = vld [vmem:[%s0 + $0x558] sm:$0xff]
  %v186 = vld [vmem:[%s0 + $0x560] sm:$0xff]
  %v187 = vld [vmem:[%s0 + $0x568] sm:$0xff]
  %v188 = vld [vmem:[%s0 + $0x570] sm:$0xff]
  %v189 = vld [vmem:[%s0 + $0x578] sm:$0xff]
  %v190 = vld [vmem:[%s0 + $0x580] sm:$0xff]
  %v191 = vld [vmem:[%s0 + $0x588] sm:$0xff]
  %v192 = vld [vmem:[%s0 + $0x590] sm:$0xff]
  %v193 = vld [vmem:[%s0 + $0x598] sm:$0xff]
  %v194 = vld [vmem:[%s0 + $0x5a0] sm:$0xff]
  %v195 = vld [vmem:[%s0 + $0x5a8] sm:$0xff]
  %v196 = vld [vmem:[%s0 + $0x5b0] sm:$0xff]
  %v197 = vld [vmem:[%s0 + $0x5b8] sm:$0xff]
  %v198 = vld [vmem:[%s0 + $0x5c0] sm:$0xff]
  %v199 = vld [vmem:[%s0 + $0x5c8] sm:$0xff]
  %v200 = vld [vmem:[%s0 + $0x5d0] sm:$0xff]
  %v201 = vld [vmem:[%s0 + $0x5d8] sm:$0xff]
  %v202 = vld [vmem:[%s0 + $0x5e0] sm:$0xff]
  %v203 = vld [vmem:[%s0 + $0x5e8] sm:$0xff]
  %v204 = vld [vmem:[%s0 + $0x5f0] sm:$0xff]
  %v205 = vld [vmem:[%s0 + $0x5f8] sm:$0xff]
  %v206 = vld [vmem:[%s0 + $0x600] sm:$0xff]
  %v207 = vld [vmem:[%s0 + $0x608] sm:$0xff]
  %v208 = vld [vmem:[%s0 + $0x610] sm:$0xff]
  %v209 = vld [vmem:[%s0 + $0x618] sm:$0xff]
  %v210 = vld [vmem:[%s0 + $0x620] sm:$0xff]
  %v211 = vld [vmem:[%s0 + $0x628] sm:$0xff]
  %v212 = vld [vmem:[%s0 + $0x630] sm:$0xff]
  %v213 = vld [vmem:[%s0 + $0x638] sm:$0xff]
  %v214 = vld [vmem:[%s0 + $0x640] sm:$0xff]
  %v215 = vld [vmem:[%s0 + $0x648] sm:$0xff]
  %v216 = vld [vmem:[%s0 + $0x650] sm:$0xff]
  %v217 = vld [vmem:[%s0 + $0x658] sm:$0xff]
  %v218 = vld [vmem:[%s0 + $0x660] sm:$0xff]
  %v219 = vld [vmem:[%s0 + $0x668] sm:$0xff]
  %v220 = vld [vmem:[%s0 + $0x670] sm:$0xff]
  %v221 = vld [vmem:[%s0 + $0x678] sm:$0xff]
  %v222 = vld [vmem:[%s0 + $0x680] sm:$0xff]
  %v223 = vld [vmem:[%s0 + $0x688] sm:$0xff]
  %v224 = vld [vmem:[%s0 + $0x690] sm:$0xff]
  %v225 = vld [vmem:[%s0 + $0x698] sm:$0xff]
  %v226 = vld [vmem:[%s0 + $0x6a0] sm:$0xff]
  %v227 = vld [vmem:[%s0 + $0x6a8] sm:$0xff]
  %v228 = vld [vmem:[%s0 + $0x6b0] sm:$0xff]
  %v229 = vld [vmem:[%s0 + $0x6b8] sm:$0xff]
  %v230 = vld [vmem:[%s0 + $0x6c0] sm:$0xff]
  %v231 = vld [vmem:[%s0 + $0x6c8] sm:$0xff]
  %v232 = vld [vmem:[%s0 + $0x6d0] sm:$0xff]
  %v233 = vld [vmem:[%s0 + $0x6d8] sm:$0xff]
  %v234 = vld [vmem:[%s0 + $0x6e0] sm:$0xff]
  %v235 = vld [vmem:[%s0 + $0x6e8] sm:$0xff]
  %v236 = vld [vmem:[%s0 + $0x6f0] sm:$0xff]
  %v237 = vld [vmem:[%s0 + $0x6f8] sm:$0xff]
  %v238 = vld [vmem:[%s0 + $0x700] sm:$0xff]
  %v239 = vld [vmem:[%s0 + $0x708] sm:$0xff]
  %v240 = vld [vmem:[%s0 + $0x710] sm:$0xff]
  %v241 = vld [vmem:[%s0 + $0x718] sm:$0xff]
  %v242 = vld [vmem:[%s0 + $0x720] sm:$0xff]
  %v243 = vld [vmem:[%s0 + $0x728] sm:$0xff]
  %v244 = vld [vmem:[%s0 + $0x730] sm:$0xff]
  %v245 = vld [vmem:[%s0 + $0x738] sm:$0xff]
  %v246 = vld [vmem:[%s0 + $0x740] sm:$0xff]
  %v247 = vld [vmem:[%s0 + $0x748] sm:$0xff]
  %v248 = vld [vmem:[%s0 + $0x750] sm:$0xff]
  %v249 = vld [vmem:[%s0 + $0x758] sm:$0xff]
  %v250 = vld [vmem:[%s0 + $0x760] sm:$0xff]
  %v251 = vld [vmem:[%s0 + $0x768] sm:$0xff]
  %v252 = vld [vmem:[%s0 + $0x770] sm:$0xff]
  %v253 = vld [vmem:[%s0 + $0x778] sm:$0xff]
  %v254 = vld [vmem:[%s0 + $0x780] sm:$0xff]
  %v255 = vld [vmem:[%s0 + $0x788] sm:$0xff]
  %v256 = vld [vmem:[%s0 + $0x790] sm:$0xff]
  %v257 = vld [vmem:[%s0 + $0x798] sm:$0xff]
  %v258 = vld [vmem:[%s0 + $0x7a0] sm:$0xff]
  %v259 = vld [vmem:[%s0 + $0x7a8] sm:$0xff]
  %v260 = vld [vmem:[%s0 + $0x7b0] sm:$0xff]
  %v261 = vld [vmem:[%s0 + $0x7b8] sm:$0xff]
  %v262 = vld [vmem:[%s0 + $0x7c0] sm:$0xff]
  %v263 = vld [vmem:[%s0 + $0x7c8] sm:$0xff]
  %v264 = vld [vmem:[%s0 + $0x7d0] sm:$0xff]
  %v265 = vld [vmem:[%s0 + $0x7d8] sm:$0xff]
  %v266 = vld [vmem:[%s0 + $0x7e0] sm:$0xff]
  %v267 = vld [vmem:[%s0 + $0x7e8] sm:$0xff]
  %v268 = vld [vmem:[%s0 + $0x7f0] sm:$0xff]
  %v269 = vld [vmem:[%s0 + $0x7f8] sm:$0xff]
  %v270 = vld [vmem:[%s0 + $0x800] sm:$0xff]
  %v271 = vld [vmem:[%s0 + $0x808] sm:$0xff]
  %v272 = vld [vmem:[%s0 + $0x810] sm:$0xff]
  %v273 = vld [vmem:[%s0 + $0x818] sm:$0xff]
  %v274 = vld [vmem:[%s0 + $0x820] sm:$0xff]
  %v275 = vld [vmem:[%s0 + $0x828] sm:$0xff]
  %v276 = vld [vmem:[%s0 + $0x830] sm:$0xff]
  %v277 = vld [vmem:[%s0 + $0x838] sm:$0xff]
  %v278 = vld [vmem:[%s0 + $0x840] sm:$0xff]
  %v279 = vld [vmem:[%s0 + $0x848] sm:$0xff]
  %v280 = vld [vmem:[%s0 + $0x850] sm:$0xff]
  %v281 = vld [vmem:[%s0 + $0x858] sm:$0xff]
  %v282 = vld [vmem:[%s0 + $0x860] sm:$0xff]
  %v283 = vld [vmem:[%s0 + $0x868] sm:$0xff]
  %v284 = vld [vmem:[%s0 + $0x870] sm:$0xff]
  %v285 = vld [vmem:[%s0 + $0x878] sm:$0xff]
  %v286 = vld [vmem:[%s0 + $0x880] sm:$0xff]
  %v287 = vld [vmem:[%s0 + $0x888] sm:$0xff]
  %v288 = vld [vmem:[%s0 + $0x890] sm:$0xff]
  %v289 = vld [vmem:[%s0 + $0x898] sm:$0xff]
  %v290 = vld [vmem:[%s0 + $0x8a0] sm:$0xff]
  %v291 = vld [vmem:[%s0 + $0x8a8] sm:$0xff]
  %v292 = vld [vmem:[%s0 + $0x8b0] sm:$0xff]
  %v293 = vld [vmem:[%s0 + $0x8b8] sm:$0xff]
  %v294 = vld [vmem:[%s0 + $0x8c0] sm:$0xff]
  %v295 = vld [vmem:[%s0 + $0x8c8] sm:$0xff]
  %v296 = vld [vmem:[%s0 + $0x8d0] sm:$0xff]
  %v297 = vld [vmem:[%s0 + $0x8d8] sm:$0xff]
  %v298 = vld [vmem:[%s0 + $0x8e0] sm:$0xff]
  %v299 = vld [vmem:[%s0 + $0x8e8] sm:$0xff]
  %v300 = vld [vmem:[%s0 + $0x8f0] sm:$0xff]
  %v301 = vld [vmem:[%s0 + $0x8f8] sm:$0xff]
  %v302 = vld [vmem:[%s0 + $0x900] sm:$0xff]
  %v303 = vld [vmem:[%s0 + $0x908] sm:$0xff]
  %v304 = vld [vmem:[%s0 + $0x910] sm:$0xff]
  %v305 = vld [vmem:[%s0 + $0x918] sm:$0xff]
  %v306 = vld [vmem:[%s0 + $0x920] sm:$0xff]
  %v307 = vld [vmem:[%s0 + $0x928] sm:$0xff]
  %v308 = vld [vmem:[%s1] sm:$0xff]
  %v309 = vld [vmem:[%s1 + $0x8] sm:$0xff]
  %v310 = vld [vmem:[%s1 + $0x10] sm:$0xff]
  %v311 = vld [vmem:[%s1 + $0x18] sm:$0xff]
  %v312 = vld [vmem:[%s1 + $0x20] sm:$0xff]
  %v313 = vld [vmem:[%s1 + $0x28] sm:$0xff]
  %v314 = vld [vmem:[%s1 + $0x30] sm:$0xff]
  %v315 = vld [vmem:[%s1 + $0x38] sm:$0xff]
  %v316 = vld [vmem:[%s1 + $0x40] sm:$0xff]
  %v317 = vld [vmem:[%s1 + $0x48] sm:$0xff]
  %v318 = vld [vmem:[%s1 + $0x50] sm:$0xff]
  %v319 = vld [vmem:[%s1 + $0x58] sm:$0xff]
  %v320 = vld [vmem:[%s1 + $0x60] sm:$0xff]
  %v321 = vld [vmem:[%s1 + $0x68] sm:$0xff]
  %v322 = vld [vmem:[%s1 + $0x70] sm:$0xff]
  %v323 = vld [vmem:[%s1 + $0x78] sm:$0xff]
  %v324 = vld [vmem:[%s1 + $0x80] sm:$0xff]
  %v325 = vld [vmem:[%s1 + $0x88] sm:$0xff]
  %v326 = vld [vmem:[%s1 + $0x90] sm:$0xff]
  %v327 = vld [vmem:[%s1 + $0x98] sm:$0xff]
  %v328 = vld [vmem:[%s1 + $0xa0] sm:$0xff]
  %v329 = vld [vmem:[%s1 + $0xa8] sm:$0xff]
  %v330 = vld [vmem:[%s1 + $0xb0] sm:$0xff]
  %v331 = vld [vmem:[%s1 + $0xb8] sm:$0xff]
  %v332 = vld [vmem:[%s1 + $0xc0] sm:$0xff]
  %v333 = vld [vmem:[%s1 + $0xc8] sm:$0xff]
  %v334 = vld [vmem:[%s1 + $0xd0] sm:$0xff]
  %v335 = vld [vmem:[%s1 + $0xd8] sm:$0xff]
  %v336 = vld [vmem:[%s1 + $0xe0] sm:$0xff]
  %v337 = vld [vmem:[%s1 + $0xe8] sm:$0xff]
  %v338 = vld [vmem:[%s1 + $0xf0] sm:$0xff]
  %v339 = vld [vmem:[%s1 + $0xf8] sm:$0xff]
  %v340 = vld [vmem:[%s1 + $0x100] sm:$0xff]
  %v341 = vld [vmem:[%s1 + $0x108] sm:$0xff]
  %v342 = vld [vmem:[%s1 + $0x110] sm:$0xff]
  %v343 = vld [vmem:[%s1 + $0x118] sm:$0xff]
  %v344 = vld [vmem:[%s1 + $0x120] sm:$0xff]
  %v345 = vld [vmem:[%s1 + $0x128] sm:$0xff]
  %v346 = vld [vmem:[%s1 + $0x130] sm:$0xff]
  %v347 = vld [vmem:[%s1 + $0x138] sm:$0xff]
  %v348 = vld [vmem:[%s1 + $0x140] sm:$0xff]
  %v349 = vld [vmem:[%s1 + $0x148] sm:$0xff]
  %v350 = vld [vmem:[%s1 + $0x150] sm:$0xff]
  %v351 = vld [vmem:[%s1 + $0x158] sm:$0xff]
  %v352 = vld [vmem:[%s1 + $0x160] sm:$0xff]
  %v353 = vld [vmem:[%s1 + $0x168] sm:$0xff]
  %v354 = vld [vmem:[%s1 + $0x170] sm:$0xff]
  %v355 = vld [vmem:[%s1 + $0x178] sm:$0xff]
  %v356 = vld [vmem:[%s1 + $0x180] sm:$0xff]
  %v357 = vld [vmem:[%s1 + $0x188] sm:$0xff]
  %v358 = vld [vmem:[%s1 + $0x190] sm:$0xff]
  %v359 = vld [vmem:[%s1 + $0x198] sm:$0xff]
  %v360 = vld [vmem:[%s1 + $0x1a0] sm:$0xff]
  %v361 = vld [vmem:[%s1 + $0x1a8] sm:$0xff]
  %v362 = vld [vmem:[%s1 + $0x1b0] sm:$0xff]
  %v363 = vld [vmem:[%s1 + $0x1b8] sm:$0xff]
  %v364 = vld [vmem:[%s1 + $0x1c0] sm:$0xff]
  %v365 = vld [vmem:[%s1 + $0x1c8] sm:$0xff]
  %v366 = vld [vmem:[%s1 + $0x1d0] sm:$0xff]
  %v367 = vld [vmem:[%s1 + $0x1d8] sm:$0xff]
  %v368 = vld [vmem:[%s1 + $0x1e0] sm:$0xff]
  %v369 = vld [vmem:[%s1 + $0x1e8] sm:$0xff]
  %v370 = vld [vmem:[%s1 + $0x1f0] sm:$0xff]
  %v371 = vld [vmem:[%s1 + $0x1f8] sm:$0xff]
  %v372 = vld [vmem:[%s1 + $0x200] sm:$0xff]
  %v373 = vld [vmem:[%s1 + $0x208] sm:$0xff]
  %v374 = vld [vmem:[%s1 + $0x210] sm:$0xff]
  %v375 = vld [vmem:[%s1 + $0x218] sm:$0xff]
  %v376 = vld [vmem:[%s1 + $0x220] sm:$0xff]
  %v377 = vld [vmem:[%s1 + $0x228] sm:$0xff]
  %v378 = vld [vmem:[%s1 + $0x230] sm:$0xff]
  %v379 = vld [vmem:[%s1 + $0x238] sm:$0xff]
  %v380 = vld [vmem:[%s1 + $0x240] sm:$0xff]
  %v381 = vld [vmem:[%s1 + $0x248] sm:$0xff]
  %v382 = vld [vmem:[%s1 + $0x250] sm:$0xff]
  %v383 = vld [vmem:[%s1 + $0x258] sm:$0xff]
  %v384 = vld [vmem:[%s1 + $0x260] sm:$0xff]
  %v385 = vld [vmem:[%s1 + $0x268] sm:$0xff]
  %v386 = vld [vmem:[%s1 + $0x270] sm:$0xff]
  %v387 = vld [vmem:[%s1 + $0x278] sm:$0xff]
  %v388 = vld [vmem:[%s1 + $0x280] sm:$0xff]
  %v389 = vld [vmem:[%s1 + $0x288] sm:$0xff]
  %v390 = vld [vmem:[%s1 + $0x290] sm:$0xff]
  %v391 = vld [vmem:[%s1 + $0x298] sm:$0xff]
  %v392 = vld [vmem:[%s1 + $0x2a0] sm:$0xff]
  %v393 = vld [vmem:[%s1 + $0x2a8] sm:$0xff]
  %v394 = vld [vmem:[%s1 + $0x2b0] sm:$0xff]
  %v395 = vld [vmem:[%s1 + $0x2b8] sm:$0xff]
  %v396 = vld [vmem:[%s1 + $0x2c0] sm:$0xff]
  %v397 = vld [vmem:[%s1 + $0x2c8] sm:$0xff]
  %v398 = vld [vmem:[%s1 + $0x2d0] sm:$0xff]
  %v399 = vld [vmem:[%s1 + $0x2d8] sm:$0xff]
  %v400 = vld [vmem:[%s1 + $0x2e0] sm:$0xff]
  %v401 = vld [vmem:[%s1 + $0x2e8] sm:$0xff]
  %v402 = vld [vmem:[%s1 + $0x2f0] sm:$0xff]
  %v403 = vld [vmem:[%s1 + $0x2f8] sm:$0xff]
  %v404 = vld [vmem:[%s2] sm:$0x1]
  %v406 = vperm.slane %v404, 0
  %408 = vmatpush.msra.mxu0 %v323
  %409 = vmatpush.msra.mxu0 %v322
  %410 = vmatpush.msra.mxu0 %v321
  %411 = vmatpush.msra.mxu0 %v320
  %412 = vmatpush.msra.mxu0 %v319
  %413 = vmatpush.msra.mxu0 %v318
  %414 = vmatpush.msra.mxu0 %v317
  %415 = vmatpush.msra.mxu0 %v316
  %416 = vmatpush.msra.mxu0 %v315
  %417 = vmatpush.msra.mxu0 %v314
  %418 = vmatpush.msra.mxu0 %v313
  %419 = vmatpush.msra.mxu0 %v312
  %420 = vmatpush.msra.mxu0 %v311
  %421 = vmatpush.msra.mxu0 %v310
  %422 = vmatpush.msra.mxu0 %v309
  %423 = vmatpush.msra.mxu0 %v308
  %424 = vmatmul.f32.gmra.mxu0 %v14
  %v425 = vpop.f32.mrf.mxu0
  %v426 = vadd.f32 %v406, %v425
  %427 = vmatmul.f32.gmra.mxu0 %v20
  %v428 = vpop.f32.mrf.mxu0
  %v429 = vadd.f32 %v406, %v428
  %430 = vmatmul.f32.gmra.mxu0 %v26
  %v431 = vpop.f32.mrf.mxu0
  %v432 = vadd.f32 %v406, %v431
  %433 = vmatmul.f32.gmra.mxu0 %v32
  %v434 = vpop.f32.mrf.mxu0
  %v435 = vadd.f32 %v406, %v434
  %436 = vmatmul.f32.gmra.mxu0 %v38
  %v437 = vpop.f32.mrf.mxu0
  %v438 = vadd.f32 %v406, %v437
  %439 = vmatmul.f32.gmra.mxu0 %v44
  %v440 = vpop.f32.mrf.mxu0
  %v441 = vadd.f32 %v406, %v440
  %442 = vmatmul.f32.gmra.mxu0 %v50
  %v443 = vpop.f32.mrf.mxu0
  %v444 = vadd.f32 %v406, %v443
  %445 = vmatmul.f32.gmra.mxu0 %v56
  %v446 = vpop.f32.mrf.mxu0
  %v447 = vadd.f32 %v406, %v446
  %448 = vmatmul.f32.gmra.mxu0 %v62
  %v449 = vpop.f32.mrf.mxu0
  %v450 = vadd.f32 %v406, %v449
  %451 = vmatmul.f32.gmra.mxu0 %v68
  %v452 = vpop.f32.mrf.mxu0
  %v453 = vadd.f32 %v406, %v452
  %454 = vmatmul.f32.gmra.mxu0 %v74
  %v455 = vpop.f32.mrf.mxu0
  %v456 = vadd.f32 %v406, %v455
  %457 = vmatmul.f32.gmra.mxu0 %v80
  %v458 = vpop.f32.mrf.mxu0
  %v459 = vadd.f32 %v406, %v458
  %460 = vmatmul.f32.gmra.mxu0 %v86
  %v461 = vpop.f32.mrf.mxu0
  %v462 = vadd.f32 %v406, %v461
  %463 = vmatmul.f32.gmra.mxu0 %v92
  %v464 = vpop.f32.mrf.mxu0
  %v465 = vadd.f32 %v406, %v464
  %466 = vmatmul.f32.gmra.mxu0 %v98
  %v467 = vpop.f32.mrf.mxu0
  %v468 = vadd.f32 %v406, %v467
  %469 = vmatmul.f32.gmra.mxu0 %v104
  %v470 = vpop.f32.mrf.mxu0
  %v471 = vadd.f32 %v406, %v470
  %472 = vmatmul.f32.gmra.mxu0 %v110
  %v473 = vpop.f32.mrf.mxu0
  %v474 = vadd.f32 %v406, %v473
  %475 = vmatmul.f32.gmra.mxu0 %v116
  %v476 = vpop.f32.mrf.mxu0
  %v477 = vadd.f32 %v406, %v476
  %478 = vmatmul.f32.gmra.mxu0 %v122
  %v479 = vpop.f32.mrf.mxu0
  %v480 = vadd.f32 %v406, %v479
  %481 = vmatmul.f32.gmra.mxu0 %v128
  %v482 = vpop.f32.mrf.mxu0
  %v483 = vadd.f32 %v406, %v482
  %484 = vmatmul.f32.gmra.mxu0 %v134
  %v485 = vpop.f32.mrf.mxu0
  %v486 = vadd.f32 %v406, %v485
  %487 = vmatmul.f32.gmra.mxu0 %v140
  %v488 = vpop.f32.mrf.mxu0
  %v489 = vadd.f32 %v406, %v488
  %490 = vmatmul.f32.gmra.mxu0 %v146
  %v491 = vpop.f32.mrf.mxu0
  %v492 = vadd.f32 %v406, %v491
  %493 = vmatmul.f32.gmra.mxu0 %v152
  %v494 = vpop.f32.mrf.mxu0
  %v495 = vadd.f32 %v406, %v494
  %496 = vmatmul.f32.gmra.mxu0 %v158
  %v497 = vpop.f32.mrf.mxu0
  %v498 = vadd.f32 %v406, %v497
  %499 = vmatmul.f32.gmra.mxu0 %v164
  %v500 = vpop.f32.mrf.mxu0
  %v501 = vadd.f32 %v406, %v500
  %502 = vmatmul.f32.gmra.mxu0 %v170
  %v503 = vpop.f32.mrf.mxu0
  %v504 = vadd.f32 %v406, %v503
  %505 = vmatmul.f32.gmra.mxu0 %v176
  %v506 = vpop.f32.mrf.mxu0
  %v507 = vadd.f32 %v406, %v506
  %508 = vmatmul.f32.gmra.mxu0 %v182
  %v509 = vpop.f32.mrf.mxu0
  %v510 = vadd.f32 %v406, %v509
  %511 = vmatmul.f32.gmra.mxu0 %v188
  %v512 = vpop.f32.mrf.mxu0
  %v513 = vadd.f32 %v406, %v512
  %514 = vmatmul.f32.gmra.mxu0 %v194
  %v515 = vpop.f32.mrf.mxu0
  %v516 = vadd.f32 %v406, %v515
  %517 = vmatmul.f32.gmra.mxu0 %v200
  %v518 = vpop.f32.mrf.mxu0
  %v519 = vadd.f32 %v406, %v518
  %520 = vmatmul.f32.gmra.mxu0 %v206
  %v521 = vpop.f32.mrf.mxu0
  %v522 = vadd.f32 %v406, %v521
  %523 = vmatmul.f32.gmra.mxu0 %v212
  %v524 = vpop.f32.mrf.mxu0
  %v525 = vadd.f32 %v406, %v524
  %526 = vmatmul.f32.gmra.mxu0 %v218
  %v527 = vpop.f32.mrf.mxu0
  %v528 = vadd.f32 %v406, %v527
  %529 = vmatmul.f32.gmra.mxu0 %v224
  %v530 = vpop.f32.mrf.mxu0
  %v531 = vadd.f32 %v406, %v530
  %532 = vmatmul.f32.gmra.mxu0 %v230
  %v533 = vpop.f32.mrf.mxu0
  %v534 = vadd.f32 %v406, %v533
  %535 = vmatmul.f32.gmra.mxu0 %v236
  %v536 = vpop.f32.mrf.mxu0
  %v537 = vadd.f32 %v406, %v536
  %538 = vmatmul.f32.gmra.mxu0 %v242
  %v539 = vpop.f32.mrf.mxu0
  %v540 = vadd.f32 %v406, %v539
  %541 = vmatmul.f32.gmra.mxu0 %v248
  %v542 = vpop.f32.mrf.mxu0
  %v543 = vadd.f32 %v406, %v542
  %544 = vmatmul.f32.gmra.mxu0 %v254
  %v545 = vpop.f32.mrf.mxu0
  %v546 = vadd.f32 %v406, %v545
  %547 = vmatmul.f32.gmra.mxu0 %v260
  %v548 = vpop.f32.mrf.mxu0
  %v549 = vadd.f32 %v406, %v548
  %550 = vmatmul.f32.gmra.mxu0 %v266
  %v551 = vpop.f32.mrf.mxu0
  %v552 = vadd.f32 %v406, %v551
  %553 = vmatmul.f32.gmra.mxu0 %v272
  %v554 = vpop.f32.mrf.mxu0
  %v555 = vadd.f32 %v406, %v554
  %556 = vmatmul.f32.gmra.mxu0 %v278
  %v557 = vpop.f32.mrf.mxu0
  %v558 = vadd.f32 %v406, %v557
  %559 = vmatmul.f32.gmra.mxu0 %v284
  %v560 = vpop.f32.mrf.mxu0
  %v561 = vadd.f32 %v406, %v560
  %562 = vmatmul.f32.gmra.mxu0 %v290
  %v563 = vpop.f32.mrf.mxu0
  %v564 = vadd.f32 %v406, %v563
  %565 = vmatmul.f32.gmra.mxu0 %v296
  %v566 = vpop.f32.mrf.mxu0
  %v567 = vadd.f32 %v406, %v566
  %568 = vmatmul.f32.gmra.mxu0 %v302
  %v569 = vpop.f32.mrf.mxu0
  %v570 = vadd.f32 %v406, %v569
  %571 = vdwg.mxu0
  %572 = vmatpush.msra.mxu0 %v339
  %573 = vmatpush.msra.mxu0 %v338
  %574 = vmatpush.msra.mxu0 %v337
  %575 = vmatpush.msra.mxu0 %v336
  %576 = vmatpush.msra.mxu0 %v335
  %577 = vmatpush.msra.mxu0 %v334
  %578 = vmatpush.msra.mxu0 %v333
  %579 = vmatpush.msra.mxu0 %v332
  %580 = vmatpush.msra.mxu0 %v331
  %581 = vmatpush.msra.mxu0 %v330
  %582 = vmatpush.msra.mxu0 %v329
  %583 = vmatpush.msra.mxu0 %v328
  %584 = vmatpush.msra.mxu0 %v327
  %585 = vmatpush.msra.mxu0 %v326
  %586 = vmatpush.msra.mxu0 %v325
  %587 = vmatpush.msra.mxu0 %v324
  %588 = vmatmul.f32.gmra.mxu0 %v15
  %v589 = vpop.f32.mrf.mxu0
  %v590 = vadd.f32 %v426, %v589
  %591 = vmatmul.f32.gmra.mxu0 %v21
  %v592 = vpop.f32.mrf.mxu0
  %v593 = vadd.f32 %v429, %v592
  %594 = vmatmul.f32.gmra.mxu0 %v27
  %v595 = vpop.f32.mrf.mxu0
  %v596 = vadd.f32 %v432, %v595
  %597 = vmatmul.f32.gmra.mxu0 %v33
  %v598 = vpop.f32.mrf.mxu0
  %v599 = vadd.f32 %v435, %v598
  %600 = vmatmul.f32.gmra.mxu0 %v39
  %v601 = vpop.f32.mrf.mxu0
  %v602 = vadd.f32 %v438, %v601
  %603 = vmatmul.f32.gmra.mxu0 %v45
  %v604 = vpop.f32.mrf.mxu0
  %v605 = vadd.f32 %v441, %v604
  %606 = vmatmul.f32.gmra.mxu0 %v51
  %v607 = vpop.f32.mrf.mxu0
  %v608 = vadd.f32 %v444, %v607
  %609 = vmatmul.f32.gmra.mxu0 %v57
  %v610 = vpop.f32.mrf.mxu0
  %v611 = vadd.f32 %v447, %v610
  %612 = vmatmul.f32.gmra.mxu0 %v63
  %v613 = vpop.f32.mrf.mxu0
  %v614 = vadd.f32 %v450, %v613
  %615 = vmatmul.f32.gmra.mxu0 %v69
  %v616 = vpop.f32.mrf.mxu0
  %v617 = vadd.f32 %v453, %v616
  %618 = vmatmul.f32.gmra.mxu0 %v75
  %v619 = vpop.f32.mrf.mxu0
  %v620 = vadd.f32 %v456, %v619
  %621 = vmatmul.f32.gmra.mxu0 %v81
  %v622 = vpop.f32.mrf.mxu0
  %v623 = vadd.f32 %v459, %v622
  %624 = vmatmul.f32.gmra.mxu0 %v87
  %v625 = vpop.f32.mrf.mxu0
  %v626 = vadd.f32 %v462, %v625
  %627 = vmatmul.f32.gmra.mxu0 %v93
  %v628 = vpop.f32.mrf.mxu0
  %v629 = vadd.f32 %v465, %v628
  %630 = vmatmul.f32.gmra.mxu0 %v99
  %v631 = vpop.f32.mrf.mxu0
  %v632 = vadd.f32 %v468, %v631
  %633 = vmatmul.f32.gmra.mxu0 %v105
  %v634 = vpop.f32.mrf.mxu0
  %v635 = vadd.f32 %v471, %v634
  %636 = vmatmul.f32.gmra.mxu0 %v111
  %v637 = vpop.f32.mrf.mxu0
  %v638 = vadd.f32 %v474, %v637
  %639 = vmatmul.f32.gmra.mxu0 %v117
  %v640 = vpop.f32.mrf.mxu0
  %v641 = vadd.f32 %v477, %v640
  %642 = vmatmul.f32.gmra.mxu0 %v123
  %v643 = vpop.f32.mrf.mxu0
  %v644 = vadd.f32 %v480, %v643
  %645 = vmatmul.f32.gmra.mxu0 %v129
  %v646 = vpop.f32.mrf.mxu0
  %v647 = vadd.f32 %v483, %v646
  %648 = vmatmul.f32.gmra.mxu0 %v135
  %v649 = vpop.f32.mrf.mxu0
  %v650 = vadd.f32 %v486, %v649
  %651 = vmatmul.f32.gmra.mxu0 %v141
  %v652 = vpop.f32.mrf.mxu0
  %v653 = vadd.f32 %v489, %v652
  %654 = vmatmul.f32.gmra.mxu0 %v147
  %v655 = vpop.f32.mrf.mxu0
  %v656 = vadd.f32 %v492, %v655
  %657 = vmatmul.f32.gmra.mxu0 %v153
  %v658 = vpop.f32.mrf.mxu0
  %v659 = vadd.f32 %v495, %v658
  %660 = vmatmul.f32.gmra.mxu0 %v159
  %v661 = vpop.f32.mrf.mxu0
  %v662 = vadd.f32 %v498, %v661
  %663 = vmatmul.f32.gmra.mxu0 %v165
  %v664 = vpop.f32.mrf.mxu0
  %v665 = vadd.f32 %v501, %v664
  %666 = vmatmul.f32.gmra.mxu0 %v171
  %v667 = vpop.f32.mrf.mxu0
  %v668 = vadd.f32 %v504, %v667
  %669 = vmatmul.f32.gmra.mxu0 %v177
  %v670 = vpop.f32.mrf.mxu0
  %v671 = vadd.f32 %v507, %v670
  %672 = vmatmul.f32.gmra.mxu0 %v183
  %v673 = vpop.f32.mrf.mxu0
  %v674 = vadd.f32 %v510, %v673
  %675 = vmatmul.f32.gmra.mxu0 %v189
  %v676 = vpop.f32.mrf.mxu0
  %v677 = vadd.f32 %v513, %v676
  %678 = vmatmul.f32.gmra.mxu0 %v195
  %v679 = vpop.f32.mrf.mxu0
  %v680 = vadd.f32 %v516, %v679
  %681 = vmatmul.f32.gmra.mxu0 %v201
  %v682 = vpop.f32.mrf.mxu0
  %v683 = vadd.f32 %v519, %v682
  %684 = vmatmul.f32.gmra.mxu0 %v207
  %v685 = vpop.f32.mrf.mxu0
  %v686 = vadd.f32 %v522, %v685
  %687 = vmatmul.f32.gmra.mxu0 %v213
  %v688 = vpop.f32.mrf.mxu0
  %v689 = vadd.f32 %v525, %v688
  %690 = vmatmul.f32.gmra.mxu0 %v219
  %v691 = vpop.f32.mrf.mxu0
  %v692 = vadd.f32 %v528, %v691
  %693 = vmatmul.f32.gmra.mxu0 %v225
  %v694 = vpop.f32.mrf.mxu0
  %v695 = vadd.f32 %v531, %v694
  %696 = vmatmul.f32.gmra.mxu0 %v231
  %v697 = vpop.f32.mrf.mxu0
  %v698 = vadd.f32 %v534, %v697
  %699 = vmatmul.f32.gmra.mxu0 %v237
  %v700 = vpop.f32.mrf.mxu0
  %v701 = vadd.f32 %v537, %v700
  %702 = vmatmul.f32.gmra.mxu0 %v243
  %v703 = vpop.f32.mrf.mxu0
  %v704 = vadd.f32 %v540, %v703
  %705 = vmatmul.f32.gmra.mxu0 %v249
  %v706 = vpop.f32.mrf.mxu0
  %v707 = vadd.f32 %v543, %v706
  %708 = vmatmul.f32.gmra.mxu0 %v255
  %v709 = vpop.f32.mrf.mxu0
  %v710 = vadd.f32 %v546, %v709
  %711 = vmatmul.f32.gmra.mxu0 %v261
  %v712 = vpop.f32.mrf.mxu0
  %v713 = vadd.f32 %v549, %v712
  %714 = vmatmul.f32.gmra.mxu0 %v267
  %v715 = vpop.f32.mrf.mxu0
  %v716 = vadd.f32 %v552, %v715
  %717 = vmatmul.f32.gmra.mxu0 %v273
  %v718 = vpop.f32.mrf.mxu0
  %v719 = vadd.f32 %v555, %v718
  %720 = vmatmul.f32.gmra.mxu0 %v279
  %v721 = vpop.f32.mrf.mxu0
  %v722 = vadd.f32 %v558, %v721
  %723 = vmatmul.f32.gmra.mxu0 %v285
  %v724 = vpop.f32.mrf.mxu0
  %v725 = vadd.f32 %v561, %v724
  %726 = vmatmul.f32.gmra.mxu0 %v291
  %v727 = vpop.f32.mrf.mxu0
  %v728 = vadd.f32 %v564, %v727
  %729 = vmatmul.f32.gmra.mxu0 %v297
  %v730 = vpop.f32.mrf.mxu0
  %v731 = vadd.f32 %v567, %v730
  %732 = vmatmul.f32.gmra.mxu0 %v303
  %v733 = vpop.f32.mrf.mxu0
  %v734 = vadd.f32 %v570, %v733
  %735 = vdwg.mxu0
  %736 = vmatpush.msra.mxu0 %v355
  %737 = vmatpush.msra.mxu0 %v354
  %738 = vmatpush.msra.mxu0 %v353
  %739 = vmatpush.msra.mxu0 %v352
  %740 = vmatpush.msra.mxu0 %v351
  %741 = vmatpush.msra.mxu0 %v350
  %742 = vmatpush.msra.mxu0 %v349
  %743 = vmatpush.msra.mxu0 %v348
  %744 = vmatpush.msra.mxu0 %v347
  %745 = vmatpush.msra.mxu0 %v346
  %746 = vmatpush.msra.mxu0 %v345
  %747 = vmatpush.msra.mxu0 %v344
  %748 = vmatpush.msra.mxu0 %v343
  %749 = vmatpush.msra.mxu0 %v342
  %750 = vmatpush.msra.mxu0 %v341
  %751 = vmatpush.msra.mxu0 %v340
  %752 = vmatmul.f32.gmra.mxu0 %v16
  %v753 = vpop.f32.mrf.mxu0
  %v754 = vadd.f32 %v590, %v753
  %755 = vmatmul.f32.gmra.mxu0 %v22
  %v756 = vpop.f32.mrf.mxu0
  %v757 = vadd.f32 %v593, %v756
  %758 = vmatmul.f32.gmra.mxu0 %v28
  %v759 = vpop.f32.mrf.mxu0
  %v760 = vadd.f32 %v596, %v759
  %761 = vmatmul.f32.gmra.mxu0 %v34
  %v762 = vpop.f32.mrf.mxu0
  %v763 = vadd.f32 %v599, %v762
  %764 = vmatmul.f32.gmra.mxu0 %v40
  %v765 = vpop.f32.mrf.mxu0
  %v766 = vadd.f32 %v602, %v765
  %767 = vmatmul.f32.gmra.mxu0 %v46
  %v768 = vpop.f32.mrf.mxu0
  %v769 = vadd.f32 %v605, %v768
  %770 = vmatmul.f32.gmra.mxu0 %v52
  %v771 = vpop.f32.mrf.mxu0
  %v772 = vadd.f32 %v608, %v771
  %773 = vmatmul.f32.gmra.mxu0 %v58
  %v774 = vpop.f32.mrf.mxu0
  %v775 = vadd.f32 %v611, %v774
  %776 = vmatmul.f32.gmra.mxu0 %v64
  %v777 = vpop.f32.mrf.mxu0
  %v778 = vadd.f32 %v614, %v777
  %779 = vmatmul.f32.gmra.mxu0 %v70
  %v780 = vpop.f32.mrf.mxu0
  %v781 = vadd.f32 %v617, %v780
  %782 = vmatmul.f32.gmra.mxu0 %v76
  %v783 = vpop.f32.mrf.mxu0
  %v784 = vadd.f32 %v620, %v783
  %785 = vmatmul.f32.gmra.mxu0 %v82
  %v786 = vpop.f32.mrf.mxu0
  %v787 = vadd.f32 %v623, %v786
  %788 = vmatmul.f32.gmra.mxu0 %v88
  %v789 = vpop.f32.mrf.mxu0
  %v790 = vadd.f32 %v626, %v789
  %791 = vmatmul.f32.gmra.mxu0 %v94
  %v792 = vpop.f32.mrf.mxu0
  %v793 = vadd.f32 %v629, %v792
  %794 = vmatmul.f32.gmra.mxu0 %v100
  %v795 = vpop.f32.mrf.mxu0
  %v796 = vadd.f32 %v632, %v795
  %797 = vmatmul.f32.gmra.mxu0 %v106
  %v798 = vpop.f32.mrf.mxu0
  %v799 = vadd.f32 %v635, %v798
  %800 = vmatmul.f32.gmra.mxu0 %v112
  %v801 = vpop.f32.mrf.mxu0
  %v802 = vadd.f32 %v638, %v801
  %803 = vmatmul.f32.gmra.mxu0 %v118
  %v804 = vpop.f32.mrf.mxu0
  %v805 = vadd.f32 %v641, %v804
  %806 = vmatmul.f32.gmra.mxu0 %v124
  %v807 = vpop.f32.mrf.mxu0
  %v808 = vadd.f32 %v644, %v807
  %809 = vmatmul.f32.gmra.mxu0 %v130
  %v810 = vpop.f32.mrf.mxu0
  %v811 = vadd.f32 %v647, %v810
  %812 = vmatmul.f32.gmra.mxu0 %v136
  %v813 = vpop.f32.mrf.mxu0
  %v814 = vadd.f32 %v650, %v813
  %815 = vmatmul.f32.gmra.mxu0 %v142
  %v816 = vpop.f32.mrf.mxu0
  %v817 = vadd.f32 %v653, %v816
  %818 = vmatmul.f32.gmra.mxu0 %v148
  %v819 = vpop.f32.mrf.mxu0
  %v820 = vadd.f32 %v656, %v819
  %821 = vmatmul.f32.gmra.mxu0 %v154
  %v822 = vpop.f32.mrf.mxu0
  %v823 = vadd.f32 %v659, %v822
  %824 = vmatmul.f32.gmra.mxu0 %v160
  %v825 = vpop.f32.mrf.mxu0
  %v826 = vadd.f32 %v662, %v825
  %827 = vmatmul.f32.gmra.mxu0 %v166
  %v828 = vpop.f32.mrf.mxu0
  %v829 = vadd.f32 %v665, %v828
  %830 = vmatmul.f32.gmra.mxu0 %v172
  %v831 = vpop.f32.mrf.mxu0
  %v832 = vadd.f32 %v668, %v831
  %833 = vmatmul.f32.gmra.mxu0 %v178
  %v834 = vpop.f32.mrf.mxu0
  %v835 = vadd.f32 %v671, %v834
  %836 = vmatmul.f32.gmra.mxu0 %v184
  %v837 = vpop.f32.mrf.mxu0
  %v838 = vadd.f32 %v674, %v837
  %839 = vmatmul.f32.gmra.mxu0 %v190
  %v840 = vpop.f32.mrf.mxu0
  %v841 = vadd.f32 %v677, %v840
  %842 = vmatmul.f32.gmra.mxu0 %v196
  %v843 = vpop.f32.mrf.mxu0
  %v844 = vadd.f32 %v680, %v843
  %845 = vmatmul.f32.gmra.mxu0 %v202
  %v846 = vpop.f32.mrf.mxu0
  %v847 = vadd.f32 %v683, %v846
  %848 = vmatmul.f32.gmra.mxu0 %v208
  %v849 = vpop.f32.mrf.mxu0
  %v850 = vadd.f32 %v686, %v849
  %851 = vmatmul.f32.gmra.mxu0 %v214
  %v852 = vpop.f32.mrf.mxu0
  %v853 = vadd.f32 %v689, %v852
  %854 = vmatmul.f32.gmra.mxu0 %v220
  %v855 = vpop.f32.mrf.mxu0
  %v856 = vadd.f32 %v692, %v855
  %857 = vmatmul.f32.gmra.mxu0 %v226
  %v858 = vpop.f32.mrf.mxu0
  %v859 = vadd.f32 %v695, %v858
  %860 = vmatmul.f32.gmra.mxu0 %v232
  %v861 = vpop.f32.mrf.mxu0
  %v862 = vadd.f32 %v698, %v861
  %863 = vmatmul.f32.gmra.mxu0 %v238
  %v864 = vpop.f32.mrf.mxu0
  %v865 = vadd.f32 %v701, %v864
  %866 = vmatmul.f32.gmra.mxu0 %v244
  %v867 = vpop.f32.mrf.mxu0
  %v868 = vadd.f32 %v704, %v867
  %869 = vmatmul.f32.gmra.mxu0 %v250
  %v870 = vpop.f32.mrf.mxu0
  %v871 = vadd.f32 %v707, %v870
  %872 = vmatmul.f32.gmra.mxu0 %v256
  %v873 = vpop.f32.mrf.mxu0
  %v874 = vadd.f32 %v710, %v873
  %875 = vmatmul.f32.gmra.mxu0 %v262
  %v876 = vpop.f32.mrf.mxu0
  %v877 = vadd.f32 %v713, %v876
  %878 = vmatmul.f32.gmra.mxu0 %v268
  %v879 = vpop.f32.mrf.mxu0
  %v880 = vadd.f32 %v716, %v879
  %881 = vmatmul.f32.gmra.mxu0 %v274
  %v882 = vpop.f32.mrf.mxu0
  %v883 = vadd.f32 %v719, %v882
  %884 = vmatmul.f32.gmra.mxu0 %v280
  %v885 = vpop.f32.mrf.mxu0
  %v886 = vadd.f32 %v722, %v885
  %887 = vmatmul.f32.gmra.mxu0 %v286
  %v888 = vpop.f32.mrf.mxu0
  %v889 = vadd.f32 %v725, %v888
  %890 = vmatmul.f32.gmra.mxu0 %v292
  %v891 = vpop.f32.mrf.mxu0
  %v892 = vadd.f32 %v728, %v891
  %893 = vmatmul.f32.gmra.mxu0 %v298
  %v894 = vpop.f32.mrf.mxu0
  %v895 = vadd.f32 %v731, %v894
  %896 = vmatmul.f32.gmra.mxu0 %v304
  %v897 = vpop.f32.mrf.mxu0
  %v898 = vadd.f32 %v734, %v897
  %899 = vdwg.mxu0
  %900 = vmatpush.msra.mxu0 %v371
  %901 = vmatpush.msra.mxu0 %v370
  %902 = vmatpush.msra.mxu0 %v369
  %903 = vmatpush.msra.mxu0 %v368
  %904 = vmatpush.msra.mxu0 %v367
  %905 = vmatpush.msra.mxu0 %v366
  %906 = vmatpush.msra.mxu0 %v365
  %907 = vmatpush.msra.mxu0 %v364
  %908 = vmatpush.msra.mxu0 %v363
  %909 = vmatpush.msra.mxu0 %v362
  %910 = vmatpush.msra.mxu0 %v361
  %911 = vmatpush.msra.mxu0 %v360
  %912 = vmatpush.msra.mxu0 %v359
  %913 = vmatpush.msra.mxu0 %v358
  %914 = vmatpush.msra.mxu0 %v357
  %915 = vmatpush.msra.mxu0 %v356
  %916 = vmatmul.f32.gmra.mxu0 %v17
  %v917 = vpop.f32.mrf.mxu0
  %v918 = vadd.f32 %v754, %v917
  %919 = vmatmul.f32.gmra.mxu0 %v23
  %v920 = vpop.f32.mrf.mxu0
  %v921 = vadd.f32 %v757, %v920
  %922 = vmatmul.f32.gmra.mxu0 %v29
  %v923 = vpop.f32.mrf.mxu0
  %v924 = vadd.f32 %v760, %v923
  %925 = vmatmul.f32.gmra.mxu0 %v35
  %v926 = vpop.f32.mrf.mxu0
  %v927 = vadd.f32 %v763, %v926
  %928 = vmatmul.f32.gmra.mxu0 %v41
  %v929 = vpop.f32.mrf.mxu0
  %v930 = vadd.f32 %v766, %v929
  %931 = vmatmul.f32.gmra.mxu0 %v47
  %v932 = vpop.f32.mrf.mxu0
  %v933 = vadd.f32 %v769, %v932
  %934 = vmatmul.f32.gmra.mxu0 %v53
  %v935 = vpop.f32.mrf.mxu0
  %v936 = vadd.f32 %v772, %v935
  %937 = vmatmul.f32.gmra.mxu0 %v59
  %v938 = vpop.f32.mrf.mxu0
  %v939 = vadd.f32 %v775, %v938
  %940 = vmatmul.f32.gmra.mxu0 %v65
  %v941 = vpop.f32.mrf.mxu0
  %v942 = vadd.f32 %v778, %v941
  %943 = vmatmul.f32.gmra.mxu0 %v71
  %v944 = vpop.f32.mrf.mxu0
  %v945 = vadd.f32 %v781, %v944
  %946 = vmatmul.f32.gmra.mxu0 %v77
  %v947 = vpop.f32.mrf.mxu0
  %v948 = vadd.f32 %v784, %v947
  %949 = vmatmul.f32.gmra.mxu0 %v83
  %v950 = vpop.f32.mrf.mxu0
  %v951 = vadd.f32 %v787, %v950
  %952 = vmatmul.f32.gmra.mxu0 %v89
  %v953 = vpop.f32.mrf.mxu0
  %v954 = vadd.f32 %v790, %v953
  %955 = vmatmul.f32.gmra.mxu0 %v95
  %v956 = vpop.f32.mrf.mxu0
  %v957 = vadd.f32 %v793, %v956
  %958 = vmatmul.f32.gmra.mxu0 %v101
  %v959 = vpop.f32.mrf.mxu0
  %v960 = vadd.f32 %v796, %v959
  %961 = vmatmul.f32.gmra.mxu0 %v107
  %v962 = vpop.f32.mrf.mxu0
  %v963 = vadd.f32 %v799, %v962
  %964 = vmatmul.f32.gmra.mxu0 %v113
  %v965 = vpop.f32.mrf.mxu0
  %v966 = vadd.f32 %v802, %v965
  %967 = vmatmul.f32.gmra.mxu0 %v119
  %v968 = vpop.f32.mrf.mxu0
  %v969 = vadd.f32 %v805, %v968
  %970 = vmatmul.f32.gmra.mxu0 %v125
  %v971 = vpop.f32.mrf.mxu0
  %v972 = vadd.f32 %v808, %v971
  %973 = vmatmul.f32.gmra.mxu0 %v131
  %v974 = vpop.f32.mrf.mxu0
  %v975 = vadd.f32 %v811, %v974
  %976 = vmatmul.f32.gmra.mxu0 %v137
  %v977 = vpop.f32.mrf.mxu0
  %v978 = vadd.f32 %v814, %v977
  %979 = vmatmul.f32.gmra.mxu0 %v143
  %v980 = vpop.f32.mrf.mxu0
  %v981 = vadd.f32 %v817, %v980
  %982 = vmatmul.f32.gmra.mxu0 %v149
  %v983 = vpop.f32.mrf.mxu0
  %v984 = vadd.f32 %v820, %v983
  %985 = vmatmul.f32.gmra.mxu0 %v155
  %v986 = vpop.f32.mrf.mxu0
  %v987 = vadd.f32 %v823, %v986
  %988 = vmatmul.f32.gmra.mxu0 %v161
  %v989 = vpop.f32.mrf.mxu0
  %v990 = vadd.f32 %v826, %v989
  %991 = vmatmul.f32.gmra.mxu0 %v167
  %v992 = vpop.f32.mrf.mxu0
  %v993 = vadd.f32 %v829, %v992
  %994 = vmatmul.f32.gmra.mxu0 %v173
  %v995 = vpop.f32.mrf.mxu0
  %v996 = vadd.f32 %v832, %v995
  %997 = vmatmul.f32.gmra.mxu0 %v179
  %v998 = vpop.f32.mrf.mxu0
  %v999 = vadd.f32 %v835, %v998
  %1000 = vmatmul.f32.gmra.mxu0 %v185
  %v1001 = vpop.f32.mrf.mxu0
  %v1002 = vadd.f32 %v838, %v1001
  %1003 = vmatmul.f32.gmra.mxu0 %v191
  %v1004 = vpop.f32.mrf.mxu0
  %v1005 = vadd.f32 %v841, %v1004
  %1006 = vmatmul.f32.gmra.mxu0 %v197
  %v1007 = vpop.f32.mrf.mxu0
  %v1008 = vadd.f32 %v844, %v1007
  %1009 = vmatmul.f32.gmra.mxu0 %v203
  %v1010 = vpop.f32.mrf.mxu0
  %v1011 = vadd.f32 %v847, %v1010
  %1012 = vmatmul.f32.gmra.mxu0 %v209
  %v1013 = vpop.f32.mrf.mxu0
  %v1014 = vadd.f32 %v850, %v1013
  %1015 = vmatmul.f32.gmra.mxu0 %v215
  %v1016 = vpop.f32.mrf.mxu0
  %v1017 = vadd.f32 %v853, %v1016
  %1018 = vmatmul.f32.gmra.mxu0 %v221
  %v1019 = vpop.f32.mrf.mxu0
  %v1020 = vadd.f32 %v856, %v1019
  %1021 = vmatmul.f32.gmra.mxu0 %v227
  %v1022 = vpop.f32.mrf.mxu0
  %v1023 = vadd.f32 %v859, %v1022
  %1024 = vmatmul.f32.gmra.mxu0 %v233
  %v1025 = vpop.f32.mrf.mxu0
  %v1026 = vadd.f32 %v862, %v1025
  %1027 = vmatmul.f32.gmra.mxu0 %v239
  %v1028 = vpop.f32.mrf.mxu0
  %v1029 = vadd.f32 %v865, %v1028
  %1030 = vmatmul.f32.gmra.mxu0 %v245
  %v1031 = vpop.f32.mrf.mxu0
  %v1032 = vadd.f32 %v868, %v1031
  %1033 = vmatmul.f32.gmra.mxu0 %v251
  %v1034 = vpop.f32.mrf.mxu0
  %v1035 = vadd.f32 %v871, %v1034
  %1036 = vmatmul.f32.gmra.mxu0 %v257
  %v1037 = vpop.f32.mrf.mxu0
  %v1038 = vadd.f32 %v874, %v1037
  %1039 = vmatmul.f32.gmra.mxu0 %v263
  %v1040 = vpop.f32.mrf.mxu0
  %v1041 = vadd.f32 %v877, %v1040
  %1042 = vmatmul.f32.gmra.mxu0 %v269
  %v1043 = vpop.f32.mrf.mxu0
  %v1044 = vadd.f32 %v880, %v1043
  %1045 = vmatmul.f32.gmra.mxu0 %v275
  %v1046 = vpop.f32.mrf.mxu0
  %v1047 = vadd.f32 %v883, %v1046
  %1048 = vmatmul.f32.gmra.mxu0 %v281
  %v1049 = vpop.f32.mrf.mxu0
  %v1050 = vadd.f32 %v886, %v1049
  %1051 = vmatmul.f32.gmra.mxu0 %v287
  %v1052 = vpop.f32.mrf.mxu0
  %v1053 = vadd.f32 %v889, %v1052
  %1054 = vmatmul.f32.gmra.mxu0 %v293
  %v1055 = vpop.f32.mrf.mxu0
  %v1056 = vadd.f32 %v892, %v1055
  %1057 = vmatmul.f32.gmra.mxu0 %v299
  %v1058 = vpop.f32.mrf.mxu0
  %v1059 = vadd.f32 %v895, %v1058
  %1060 = vmatmul.f32.gmra.mxu0 %v305
  %v1061 = vpop.f32.mrf.mxu0
  %v1062 = vadd.f32 %v898, %v1061
  %1063 = vdwg.mxu0
  %1064 = vmatpush.msra.mxu0 %v387
  %1065 = vmatpush.msra.mxu0 %v386
  %1066 = vmatpush.msra.mxu0 %v385
  %1067 = vmatpush.msra.mxu0 %v384
  %1068 = vmatpush.msra.mxu0 %v383
  %1069 = vmatpush.msra.mxu0 %v382
  %1070 = vmatpush.msra.mxu0 %v381
  %1071 = vmatpush.msra.mxu0 %v380
  %1072 = vmatpush.msra.mxu0 %v379
  %1073 = vmatpush.msra.mxu0 %v378
  %1074 = vmatpush.msra.mxu0 %v377
  %1075 = vmatpush.msra.mxu0 %v376
  %1076 = vmatpush.msra.mxu0 %v375
  %1077 = vmatpush.msra.mxu0 %v374
  %1078 = vmatpush.msra.mxu0 %v373
  %1079 = vmatpush.msra.mxu0 %v372
  %1080 = vmatmul.f32.gmra.mxu0 %v18
  %v1081 = vpop.f32.mrf.mxu0
  %v1082 = vadd.f32 %v918, %v1081
  %1083 = vmatmul.f32.gmra.mxu0 %v24
  %v1084 = vpop.f32.mrf.mxu0
  %v1085 = vadd.f32 %v921, %v1084
  %1086 = vmatmul.f32.gmra.mxu0 %v30
  %v1087 = vpop.f32.mrf.mxu0
  %v1088 = vadd.f32 %v924, %v1087
  %1089 = vmatmul.f32.gmra.mxu0 %v36
  %v1090 = vpop.f32.mrf.mxu0
  %v1091 = vadd.f32 %v927, %v1090
  %1092 = vmatmul.f32.gmra.mxu0 %v42
  %v1093 = vpop.f32.mrf.mxu0
  %v1094 = vadd.f32 %v930, %v1093
  %1095 = vmatmul.f32.gmra.mxu0 %v48
  %v1096 = vpop.f32.mrf.mxu0
  %v1097 = vadd.f32 %v933, %v1096
  %1098 = vmatmul.f32.gmra.mxu0 %v54
  %v1099 = vpop.f32.mrf.mxu0
  %v1100 = vadd.f32 %v936, %v1099
  %1101 = vmatmul.f32.gmra.mxu0 %v60
  %v1102 = vpop.f32.mrf.mxu0
  %v1103 = vadd.f32 %v939, %v1102
  %1104 = vmatmul.f32.gmra.mxu0 %v66
  %v1105 = vpop.f32.mrf.mxu0
  %v1106 = vadd.f32 %v942, %v1105
  %1107 = vmatmul.f32.gmra.mxu0 %v72
  %v1108 = vpop.f32.mrf.mxu0
  %v1109 = vadd.f32 %v945, %v1108
  %1110 = vmatmul.f32.gmra.mxu0 %v78
  %v1111 = vpop.f32.mrf.mxu0
  %v1112 = vadd.f32 %v948, %v1111
  %1113 = vmatmul.f32.gmra.mxu0 %v84
  %v1114 = vpop.f32.mrf.mxu0
  %v1115 = vadd.f32 %v951, %v1114
  %1116 = vmatmul.f32.gmra.mxu0 %v90
  %v1117 = vpop.f32.mrf.mxu0
  %v1118 = vadd.f32 %v954, %v1117
  %1119 = vmatmul.f32.gmra.mxu0 %v96
  %v1120 = vpop.f32.mrf.mxu0
  %v1121 = vadd.f32 %v957, %v1120
  %1122 = vmatmul.f32.gmra.mxu0 %v102
  %v1123 = vpop.f32.mrf.mxu0
  %v1124 = vadd.f32 %v960, %v1123
  %1125 = vmatmul.f32.gmra.mxu0 %v108
  %v1126 = vpop.f32.mrf.mxu0
  %v1127 = vadd.f32 %v963, %v1126
  %1128 = vmatmul.f32.gmra.mxu0 %v114
  %v1129 = vpop.f32.mrf.mxu0
  %v1130 = vadd.f32 %v966, %v1129
  %1131 = vmatmul.f32.gmra.mxu0 %v120
  %v1132 = vpop.f32.mrf.mxu0
  %v1133 = vadd.f32 %v969, %v1132
  %1134 = vmatmul.f32.gmra.mxu0 %v126
  %v1135 = vpop.f32.mrf.mxu0
  %v1136 = vadd.f32 %v972, %v1135
  %1137 = vmatmul.f32.gmra.mxu0 %v132
  %v1138 = vpop.f32.mrf.mxu0
  %v1139 = vadd.f32 %v975, %v1138
  %1140 = vmatmul.f32.gmra.mxu0 %v138
  %v1141 = vpop.f32.mrf.mxu0
  %v1142 = vadd.f32 %v978, %v1141
  %1143 = vmatmul.f32.gmra.mxu0 %v144
  %v1144 = vpop.f32.mrf.mxu0
  %v1145 = vadd.f32 %v981, %v1144
  %1146 = vmatmul.f32.gmra.mxu0 %v150
  %v1147 = vpop.f32.mrf.mxu0
  %v1148 = vadd.f32 %v984, %v1147
  %1149 = vmatmul.f32.gmra.mxu0 %v156
  %v1150 = vpop.f32.mrf.mxu0
  %v1151 = vadd.f32 %v987, %v1150
  %1152 = vmatmul.f32.gmra.mxu0 %v162
  %v1153 = vpop.f32.mrf.mxu0
  %v1154 = vadd.f32 %v990, %v1153
  %1155 = vmatmul.f32.gmra.mxu0 %v168
  %v1156 = vpop.f32.mrf.mxu0
  %v1157 = vadd.f32 %v993, %v1156
  %1158 = vmatmul.f32.gmra.mxu0 %v174
  %v1159 = vpop.f32.mrf.mxu0
  %v1160 = vadd.f32 %v996, %v1159
  %1161 = vmatmul.f32.gmra.mxu0 %v180
  %v1162 = vpop.f32.mrf.mxu0
  %v1163 = vadd.f32 %v999, %v1162
  %1164 = vmatmul.f32.gmra.mxu0 %v186
  %v1165 = vpop.f32.mrf.mxu0
  %v1166 = vadd.f32 %v1002, %v1165
  %1167 = vmatmul.f32.gmra.mxu0 %v192
  %v1168 = vpop.f32.mrf.mxu0
  %v1169 = vadd.f32 %v1005, %v1168
  %1170 = vmatmul.f32.gmra.mxu0 %v198
  %v1171 = vpop.f32.mrf.mxu0
  %v1172 = vadd.f32 %v1008, %v1171
  %1173 = vmatmul.f32.gmra.mxu0 %v204
  %v1174 = vpop.f32.mrf.mxu0
  %v1175 = vadd.f32 %v1011, %v1174
  %1176 = vmatmul.f32.gmra.mxu0 %v210
  %v1177 = vpop.f32.mrf.mxu0
  %v1178 = vadd.f32 %v1014, %v1177
  %1179 = vmatmul.f32.gmra.mxu0 %v216
  %v1180 = vpop.f32.mrf.mxu0
  %v1181 = vadd.f32 %v1017, %v1180
  %1182 = vmatmul.f32.gmra.mxu0 %v222
  %v1183 = vpop.f32.mrf.mxu0
  %v1184 = vadd.f32 %v1020, %v1183
  %1185 = vmatmul.f32.gmra.mxu0 %v228
  %v1186 = vpop.f32.mrf.mxu0
  %v1187 = vadd.f32 %v1023, %v1186
  %1188 = vmatmul.f32.gmra.mxu0 %v234
  %v1189 = vpop.f32.mrf.mxu0
  %v1190 = vadd.f32 %v1026, %v1189
  %1191 = vmatmul.f32.gmra.mxu0 %v240
  %v1192 = vpop.f32.mrf.mxu0
  %v1193 = vadd.f32 %v1029, %v1192
  %1194 = vmatmul.f32.gmra.mxu0 %v246
  %v1195 = vpop.f32.mrf.mxu0
  %v1196 = vadd.f32 %v1032, %v1195
  %1197 = vmatmul.f32.gmra.mxu0 %v252
  %v1198 = vpop.f32.mrf.mxu0
  %v1199 = vadd.f32 %v1035, %v1198
  %1200 = vmatmul.f32.gmra.mxu0 %v258
  %v1201 = vpop.f32.mrf.mxu0
  %v1202 = vadd.f32 %v1038, %v1201
  %1203 = vmatmul.f32.gmra.mxu0 %v264
  %v1204 = vpop.f32.mrf.mxu0
  %v1205 = vadd.f32 %v1041, %v1204
  %1206 = vmatmul.f32.gmra.mxu0 %v270
  %v1207 = vpop.f32.mrf.mxu0
  %v1208 = vadd.f32 %v1044, %v1207
  %1209 = vmatmul.f32.gmra.mxu0 %v276
  %v1210 = vpop.f32.mrf.mxu0
  %v1211 = vadd.f32 %v1047, %v1210
  %1212 = vmatmul.f32.gmra.mxu0 %v282
  %v1213 = vpop.f32.mrf.mxu0
  %v1214 = vadd.f32 %v1050, %v1213
  %1215 = vmatmul.f32.gmra.mxu0 %v288
  %v1216 = vpop.f32.mrf.mxu0
  %v1217 = vadd.f32 %v1053, %v1216
  %1218 = vmatmul.f32.gmra.mxu0 %v294
  %v1219 = vpop.f32.mrf.mxu0
  %v1220 = vadd.f32 %v1056, %v1219
  %1221 = vmatmul.f32.gmra.mxu0 %v300
  %v1222 = vpop.f32.mrf.mxu0
  %v1223 = vadd.f32 %v1059, %v1222
  %1224 = vmatmul.f32.gmra.mxu0 %v306
  %v1225 = vpop.f32.mrf.mxu0
  %v1226 = vadd.f32 %v1062, %v1225
  %1227 = vdwg.mxu0
  %1228 = vmatpush.msra.mxu0 %v403
  %1229 = vmatpush.msra.mxu0 %v402
  %1230 = vmatpush.msra.mxu0 %v401
  %1231 = vmatpush.msra.mxu0 %v400
  %1232 = vmatpush.msra.mxu0 %v399
  %1233 = vmatpush.msra.mxu0 %v398
  %1234 = vmatpush.msra.mxu0 %v397
  %1235 = vmatpush.msra.mxu0 %v396
  %1236 = vmatpush.msra.mxu0 %v395
  %1237 = vmatpush.msra.mxu0 %v394
  %1238 = vmatpush.msra.mxu0 %v393
  %1239 = vmatpush.msra.mxu0 %v392
  %1240 = vmatpush.msra.mxu0 %v391
  %1241 = vmatpush.msra.mxu0 %v390
  %1242 = vmatpush.msra.mxu0 %v389
  %1243 = vmatpush.msra.mxu0 %v388
  %1244 = vmatmul.f32.gmra.mxu0 %v19
  %v1245 = vpop.f32.mrf.mxu0
  %v1246 = vadd.f32 %v1082, %v1245
  %1247 = vmatmul.f32.gmra.mxu0 %v25
  %v1248 = vpop.f32.mrf.mxu0
  %v1249 = vadd.f32 %v1085, %v1248
  %1250 = vmatmul.f32.gmra.mxu0 %v31
  %v1251 = vpop.f32.mrf.mxu0
  %v1252 = vadd.f32 %v1088, %v1251
  %1253 = vmatmul.f32.gmra.mxu0 %v37
  %v1254 = vpop.f32.mrf.mxu0
  %v1255 = vadd.f32 %v1091, %v1254
  %1256 = vmatmul.f32.gmra.mxu0 %v43
  %v1257 = vpop.f32.mrf.mxu0
  %v1258 = vadd.f32 %v1094, %v1257
  %1259 = vmatmul.f32.gmra.mxu0 %v49
  %v1260 = vpop.f32.mrf.mxu0
  %v1261 = vadd.f32 %v1097, %v1260
  %1262 = vmatmul.f32.gmra.mxu0 %v55
  %v1263 = vpop.f32.mrf.mxu0
  %v1264 = vadd.f32 %v1100, %v1263
  %1265 = vmatmul.f32.gmra.mxu0 %v61
  %v1266 = vpop.f32.mrf.mxu0
  %v1267 = vadd.f32 %v1103, %v1266
  %1268 = vmatmul.f32.gmra.mxu0 %v67
  %v1269 = vpop.f32.mrf.mxu0
  %v1270 = vadd.f32 %v1106, %v1269
  %1271 = vmatmul.f32.gmra.mxu0 %v73
  %v1272 = vpop.f32.mrf.mxu0
  %v1273 = vadd.f32 %v1109, %v1272
  %1274 = vmatmul.f32.gmra.mxu0 %v79
  %v1275 = vpop.f32.mrf.mxu0
  %v1276 = vadd.f32 %v1112, %v1275
  %1277 = vmatmul.f32.gmra.mxu0 %v85
  %v1278 = vpop.f32.mrf.mxu0
  %v1279 = vadd.f32 %v1115, %v1278
  %1280 = vmatmul.f32.gmra.mxu0 %v91
  %v1281 = vpop.f32.mrf.mxu0
  %v1282 = vadd.f32 %v1118, %v1281
  %1283 = vmatmul.f32.gmra.mxu0 %v97
  %v1284 = vpop.f32.mrf.mxu0
  %v1285 = vadd.f32 %v1121, %v1284
  %1286 = vmatmul.f32.gmra.mxu0 %v103
  %v1287 = vpop.f32.mrf.mxu0
  %v1288 = vadd.f32 %v1124, %v1287
  %1289 = vmatmul.f32.gmra.mxu0 %v109
  %v1290 = vpop.f32.mrf.mxu0
  %v1291 = vadd.f32 %v1127, %v1290
  %1292 = vmatmul.f32.gmra.mxu0 %v115
  %v1293 = vpop.f32.mrf.mxu0
  %v1294 = vadd.f32 %v1130, %v1293
  %1295 = vmatmul.f32.gmra.mxu0 %v121
  %v1296 = vpop.f32.mrf.mxu0
  %v1297 = vadd.f32 %v1133, %v1296
  %1298 = vmatmul.f32.gmra.mxu0 %v127
  %v1299 = vpop.f32.mrf.mxu0
  %v1300 = vadd.f32 %v1136, %v1299
  %1301 = vmatmul.f32.gmra.mxu0 %v133
  %v1302 = vpop.f32.mrf.mxu0
  %v1303 = vadd.f32 %v1139, %v1302
  %1304 = vmatmul.f32.gmra.mxu0 %v139
  %v1305 = vpop.f32.mrf.mxu0
  %v1306 = vadd.f32 %v1142, %v1305
  %1307 = vmatmul.f32.gmra.mxu0 %v145
  %v1308 = vpop.f32.mrf.mxu0
  %v1309 = vadd.f32 %v1145, %v1308
  %1310 = vmatmul.f32.gmra.mxu0 %v151
  %v1311 = vpop.f32.mrf.mxu0
  %v1312 = vadd.f32 %v1148, %v1311
  %1313 = vmatmul.f32.gmra.mxu0 %v157
  %v1314 = vpop.f32.mrf.mxu0
  %v1315 = vadd.f32 %v1151, %v1314
  %1316 = vmatmul.f32.gmra.mxu0 %v163
  %v1317 = vpop.f32.mrf.mxu0
  %v1318 = vadd.f32 %v1154, %v1317
  %1319 = vmatmul.f32.gmra.mxu0 %v169
  %v1320 = vpop.f32.mrf.mxu0
  %v1321 = vadd.f32 %v1157, %v1320
  %1322 = vmatmul.f32.gmra.mxu0 %v175
  %v1323 = vpop.f32.mrf.mxu0
  %v1324 = vadd.f32 %v1160, %v1323
  %1325 = vmatmul.f32.gmra.mxu0 %v181
  %v1326 = vpop.f32.mrf.mxu0
  %v1327 = vadd.f32 %v1163, %v1326
  %1328 = vmatmul.f32.gmra.mxu0 %v187
  %v1329 = vpop.f32.mrf.mxu0
  %v1330 = vadd.f32 %v1166, %v1329
  %1331 = vmatmul.f32.gmra.mxu0 %v193
  %v1332 = vpop.f32.mrf.mxu0
  %v1333 = vadd.f32 %v1169, %v1332
  %1334 = vmatmul.f32.gmra.mxu0 %v199
  %v1335 = vpop.f32.mrf.mxu0
  %v1336 = vadd.f32 %v1172, %v1335
  %1337 = vmatmul.f32.gmra.mxu0 %v205
  %v1338 = vpop.f32.mrf.mxu0
  %v1339 = vadd.f32 %v1175, %v1338
  %1340 = vmatmul.f32.gmra.mxu0 %v211
  %v1341 = vpop.f32.mrf.mxu0
  %v1342 = vadd.f32 %v1178, %v1341
  %1343 = vmatmul.f32.gmra.mxu0 %v217
  %v1344 = vpop.f32.mrf.mxu0
  %v1345 = vadd.f32 %v1181, %v1344
  %1346 = vmatmul.f32.gmra.mxu0 %v223
  %v1347 = vpop.f32.mrf.mxu0
  %v1348 = vadd.f32 %v1184, %v1347
  %1349 = vmatmul.f32.gmra.mxu0 %v229
  %v1350 = vpop.f32.mrf.mxu0
  %v1351 = vadd.f32 %v1187, %v1350
  %1352 = vmatmul.f32.gmra.mxu0 %v235
  %v1353 = vpop.f32.mrf.mxu0
  %v1354 = vadd.f32 %v1190, %v1353
  %1355 = vmatmul.f32.gmra.mxu0 %v241
  %v1356 = vpop.f32.mrf.mxu0
  %v1357 = vadd.f32 %v1193, %v1356
  %1358 = vmatmul.f32.gmra.mxu0 %v247
  %v1359 = vpop.f32.mrf.mxu0
  %v1360 = vadd.f32 %v1196, %v1359
  %1361 = vmatmul.f32.gmra.mxu0 %v253
  %v1362 = vpop.f32.mrf.mxu0
  %v1363 = vadd.f32 %v1199, %v1362
  %1364 = vmatmul.f32.gmra.mxu0 %v259
  %v1365 = vpop.f32.mrf.mxu0
  %v1366 = vadd.f32 %v1202, %v1365
  %1367 = vmatmul.f32.gmra.mxu0 %v265
  %v1368 = vpop.f32.mrf.mxu0
  %v1369 = vadd.f32 %v1205, %v1368
  %1370 = vmatmul.f32.gmra.mxu0 %v271
  %v1371 = vpop.f32.mrf.mxu0
  %v1372 = vadd.f32 %v1208, %v1371
  %1373 = vmatmul.f32.gmra.mxu0 %v277
  %v1374 = vpop.f32.mrf.mxu0
  %v1375 = vadd.f32 %v1211, %v1374
  %1376 = vmatmul.f32.gmra.mxu0 %v283
  %v1377 = vpop.f32.mrf.mxu0
  %v1378 = vadd.f32 %v1214, %v1377
  %1379 = vmatmul.f32.gmra.mxu0 %v289
  %v1380 = vpop.f32.mrf.mxu0
  %v1381 = vadd.f32 %v1217, %v1380
  %1382 = vmatmul.f32.gmra.mxu0 %v295
  %v1383 = vpop.f32.mrf.mxu0
  %v1384 = vadd.f32 %v1220, %v1383
  %1385 = vmatmul.f32.gmra.mxu0 %v301
  %v1386 = vpop.f32.mrf.mxu0
  %v1387 = vadd.f32 %v1223, %v1386
  %1388 = vmatmul.f32.gmra.mxu0 %v307
  %v1389 = vpop.f32.mrf.mxu0
  %v1390 = vadd.f32 %v1226, %v1389
  %1391 = vdwg.mxu0
  %vm1392 = vcmp.gt.f32.partialorder %v1246, 0.0
  %vm1393 = vcmp.gt.f32.partialorder %v1249, 0.0
  %vm1394 = vcmp.gt.f32.partialorder %v1252, 0.0
  %vm1395 = vcmp.gt.f32.partialorder %v1255, 0.0
  %vm1396 = vcmp.gt.f32.partialorder %v1258, 0.0
  %vm1397 = vcmp.gt.f32.partialorder %v1261, 0.0
  %vm1398 = vcmp.gt.f32.partialorder %v1264, 0.0
  %vm1399 = vcmp.gt.f32.partialorder %v1267, 0.0
  %vm1400 = vcmp.gt.f32.partialorder %v1270, 0.0
  %vm1401 = vcmp.gt.f32.partialorder %v1273, 0.0
  %vm1402 = vcmp.gt.f32.partialorder %v1276, 0.0
  %vm1403 = vcmp.gt.f32.partialorder %v1279, 0.0
  %vm1404 = vcmp.gt.f32.partialorder %v1282, 0.0
  %vm1405 = vcmp.gt.f32.partialorder %v1285, 0.0
  %vm1406 = vcmp.gt.f32.partialorder %v1288, 0.0
  %vm1407 = vcmp.gt.f32.partialorder %v1291, 0.0
  %vm1408 = vcmp.gt.f32.partialorder %v1294, 0.0
  %vm1409 = vcmp.gt.f32.partialorder %v1297, 0.0
  %vm1410 = vcmp.gt.f32.partialorder %v1300, 0.0
  %vm1411 = vcmp.gt.f32.partialorder %v1303, 0.0
  %vm1412 = vcmp.gt.f32.partialorder %v1306, 0.0
  %vm1413 = vcmp.gt.f32.partialorder %v1309, 0.0
  %vm1414 = vcmp.gt.f32.partialorder %v1312, 0.0
  %vm1415 = vcmp.gt.f32.partialorder %v1315, 0.0
  %vm1416 = vcmp.gt.f32.partialorder %v1318, 0.0
  %vm1417 = vcmp.gt.f32.partialorder %v1321, 0.0
  %vm1418 = vcmp.gt.f32.partialorder %v1324, 0.0
  %vm1419 = vcmp.gt.f32.partialorder %v1327, 0.0
  %vm1420 = vcmp.gt.f32.partialorder %v1330, 0.0
  %vm1421 = vcmp.gt.f32.partialorder %v1333, 0.0
  %vm1422 = vcmp.gt.f32.partialorder %v1336, 0.0
  %vm1423 = vcmp.gt.f32.partialorder %v1339, 0.0
  %vm1424 = vcmp.gt.f32.partialorder %v1342, 0.0
  %vm1425 = vcmp.gt.f32.partialorder %v1345, 0.0
  %vm1426 = vcmp.gt.f32.partialorder %v1348, 0.0
  %vm1427 = vcmp.gt.f32.partialorder %v1351, 0.0
  %vm1428 = vcmp.gt.f32.partialorder %v1354, 0.0
  %vm1429 = vcmp.gt.f32.partialorder %v1357, 0.0
  %vm1430 = vcmp.gt.f32.partialorder %v1360, 0.0
  %vm1431 = vcmp.gt.f32.partialorder %v1363, 0.0
  %vm1432 = vcmp.gt.f32.partialorder %v1366, 0.0
  %vm1433 = vcmp.gt.f32.partialorder %v1369, 0.0
  %vm1434 = vcmp.gt.f32.partialorder %v1372, 0.0
  %vm1435 = vcmp.gt.f32.partialorder %v1375, 0.0
  %vm1436 = vcmp.gt.f32.partialorder %v1378, 0.0
  %vm1437 = vcmp.gt.f32.partialorder %v1381, 0.0
  %vm1438 = vcmp.gt.f32.partialorder %v1384, 0.0
  %vm1439 = vcmp.gt.f32.partialorder %v1387, 0.0
  %vm1440 = vcmp.gt.f32.partialorder %v1390, 0.0
  %v1441 = vmin.f32 %v1246, 0.0
  %v1442 = vmin.f32 %v1249, 0.0
  %v1443 = vmin.f32 %v1252, 0.0
  %v1444 = vmin.f32 %v1255, 0.0
  %v1445 = vmin.f32 %v1258, 0.0
  %v1446 = vmin.f32 %v1261, 0.0
  %v1447 = vmin.f32 %v1264, 0.0
  %v1448 = vmin.f32 %v1267, 0.0
  %v1449 = vmin.f32 %v1270, 0.0
  %v1450 = vmin.f32 %v1273, 0.0
  %v1451 = vmin.f32 %v1276, 0.0
  %v1452 = vmin.f32 %v1279, 0.0
  %v1453 = vmin.f32 %v1282, 0.0
  %v1454 = vmin.f32 %v1285, 0.0
  %v1455 = vmin.f32 %v1288, 0.0
  %v1456 = vmin.f32 %v1291, 0.0
  %v1457 = vmin.f32 %v1294, 0.0
  %v1458 = vmin.f32 %v1297, 0.0
  %v1459 = vmin.f32 %v1300, 0.0
  %v1460 = vmin.f32 %v1303, 0.0
  %v1461 = vmin.f32 %v1306, 0.0
  %v1462 = vmin.f32 %v1309, 0.0
  %v1463 = vmin.f32 %v1312, 0.0
  %v1464 = vmin.f32 %v1315, 0.0
  %v1465 = vmin.f32 %v1318, 0.0
  %v1466 = vmin.f32 %v1321, 0.0
  %v1467 = vmin.f32 %v1324, 0.0
  %v1468 = vmin.f32 %v1327, 0.0
  %v1469 = vmin.f32 %v1330, 0.0
  %v1470 = vmin.f32 %v1333, 0.0
  %v1471 = vmin.f32 %v1336, 0.0
  %v1472 = vmin.f32 %v1339, 0.0
  %v1473 = vmin.f32 %v1342, 0.0
  %v1474 = vmin.f32 %v1345, 0.0
  %v1475 = vmin.f32 %v1348, 0.0
  %v1476 = vmin.f32 %v1351, 0.0
  %v1477 = vmin.f32 %v1354, 0.0
  %v1478 = vmin.f32 %v1357, 0.0
  %v1479 = vmin.f32 %v1360, 0.0
  %v1480 = vmin.f32 %v1363, 0.0
  %v1481 = vmin.f32 %v1366, 0.0
  %v1482 = vmin.f32 %v1369, 0.0
  %v1483 = vmin.f32 %v1372, 0.0
  %v1484 = vmin.f32 %v1375, 0.0
  %v1485 = vmin.f32 %v1378, 0.0
  %v1486 = vmin.f32 %v1381, 0.0
  %v1487 = vmin.f32 %v1384, 0.0
  %v1488 = vmin.f32 %v1387, 0.0
  %v1489 = vmin.f32 %v1390, 0.0
  %v1490 = vmul.f32 %v1441, 1.442695
  %v1491 = vpow.pop %v1490
  %v1492 = vmul.f32 %v1442, 1.442695
  %v1493 = vpow.pop %v1492
  %v1494 = vmul.f32 %v1443, 1.442695
  %v1495 = vpow.pop %v1494
  %v1496 = vmul.f32 %v1444, 1.442695
  %v1497 = vpow.pop %v1496
  %v1498 = vmul.f32 %v1445, 1.442695
  %v1499 = vpow.pop %v1498
  %v1500 = vmul.f32 %v1446, 1.442695
  %v1501 = vpow.pop %v1500
  %v1502 = vmul.f32 %v1447, 1.442695
  %v1503 = vpow.pop %v1502
  %v1504 = vmul.f32 %v1448, 1.442695
  %v1505 = vpow.pop %v1504
  %v1506 = vmul.f32 %v1449, 1.442695
  %v1507 = vpow.pop %v1506
  %v1508 = vmul.f32 %v1450, 1.442695
  %v1509 = vpow.pop %v1508
  %v1510 = vmul.f32 %v1451, 1.442695
  %v1511 = vpow.pop %v1510
  %v1512 = vmul.f32 %v1452, 1.442695
  %v1513 = vpow.pop %v1512
  %v1514 = vmul.f32 %v1453, 1.442695
  %v1515 = vpow.pop %v1514
  %v1516 = vmul.f32 %v1454, 1.442695
  %v1517 = vpow.pop %v1516
  %v1518 = vmul.f32 %v1455, 1.442695
  %v1519 = vpow.pop %v1518
  %v1520 = vmul.f32 %v1456, 1.442695
  %v1521 = vpow.pop %v1520
  %v1522 = vmul.f32 %v1457, 1.442695
  %v1523 = vpow.pop %v1522
  %v1524 = vmul.f32 %v1458, 1.442695
  %v1525 = vpow.pop %v1524
  %v1526 = vmul.f32 %v1459, 1.442695
  %v1527 = vpow.pop %v1526
  %v1528 = vmul.f32 %v1460, 1.442695
  %v1529 = vpow.pop %v1528
  %v1530 = vmul.f32 %v1461, 1.442695
  %v1531 = vpow.pop %v1530
  %v1532 = vmul.f32 %v1462, 1.442695
  %v1533 = vpow.pop %v1532
  %v1534 = vmul.f32 %v1463, 1.442695
  %v1535 = vpow.pop %v1534
  %v1536 = vmul.f32 %v1464, 1.442695
  %v1537 = vpow.pop %v1536
  %v1538 = vmul.f32 %v1465, 1.442695
  %v1539 = vpow.pop %v1538
  %v1540 = vmul.f32 %v1466, 1.442695
  %v1541 = vpow.pop %v1540
  %v1542 = vmul.f32 %v1467, 1.442695
  %v1543 = vpow.pop %v1542
  %v1544 = vmul.f32 %v1468, 1.442695
  %v1545 = vpow.pop %v1544
  %v1546 = vmul.f32 %v1469, 1.442695
  %v1547 = vpow.pop %v1546
  %v1548 = vmul.f32 %v1470, 1.442695
  %v1549 = vpow.pop %v1548
  %v1550 = vmul.f32 %v1471, 1.442695
  %v1551 = vpow.pop %v1550
  %v1552 = vmul.f32 %v1472, 1.442695
  %v1553 = vpow.pop %v1552
  %v1554 = vmul.f32 %v1473, 1.442695
  %v1555 = vpow.pop %v1554
  %v1556 = vmul.f32 %v1474, 1.442695
  %v1557 = vpow.pop %v1556
  %v1558 = vmul.f32 %v1475, 1.442695
  %v1559 = vpow.pop %v1558
  %v1560 = vmul.f32 %v1476, 1.442695
  %v1561 = vpow.pop %v1560
  %v1562 = vmul.f32 %v1477, 1.442695
  %v1563 = vpow.pop %v1562
  %v1564 = vmul.f32 %v1478, 1.442695
  %v1565 = vpow.pop %v1564
  %v1566 = vmul.f32 %v1479, 1.442695
  %v1567 = vpow.pop %v1566
  %v1568 = vmul.f32 %v1480, 1.442695
  %v1569 = vpow.pop %v1568
  %v1570 = vmul.f32 %v1481, 1.442695
  %v1571 = vpow.pop %v1570
  %v1572 = vmul.f32 %v1482, 1.442695
  %v1573 = vpow.pop %v1572
  %v1574 = vmul.f32 %v1483, 1.442695
  %v1575 = vpow.pop %v1574
  %v1576 = vmul.f32 %v1484, 1.442695
  %v1577 = vpow.pop %v1576
  %v1578 = vmul.f32 %v1485, 1.442695
  %v1579 = vpow.pop %v1578
  %v1580 = vmul.f32 %v1486, 1.442695
  %v1581 = vpow.pop %v1580
  %v1582 = vmul.f32 %v1487, 1.442695
  %v1583 = vpow.pop %v1582
  %v1584 = vmul.f32 %v1488, 1.442695
  %v1585 = vpow.pop %v1584
  %v1586 = vmul.f32 %v1489, 1.442695
  %v1587 = vpow.pop %v1586
  %v1588 = vsub.f32 %v1491, 1.0
  %v1589 = vsub.f32 %v1493, 1.0
  %v1590 = vsub.f32 %v1495, 1.0
  %v1591 = vsub.f32 %v1497, 1.0
  %v1592 = vsub.f32 %v1499, 1.0
  %v1593 = vsub.f32 %v1501, 1.0
  %v1594 = vsub.f32 %v1503, 1.0
  %v1595 = vsub.f32 %v1505, 1.0
  %v1596 = vsub.f32 %v1507, 1.0
  %v1597 = vsub.f32 %v1509, 1.0
  %v1598 = vsub.f32 %v1511, 1.0
  %v1599 = vsub.f32 %v1513, 1.0
  %v1600 = vsub.f32 %v1515, 1.0
  %v1601 = vsub.f32 %v1517, 1.0
  %v1602 = vsub.f32 %v1519, 1.0
  %v1603 = vsub.f32 %v1521, 1.0
  %v1604 = vsub.f32 %v1523, 1.0
  %v1605 = vsub.f32 %v1525, 1.0
  %v1606 = vsub.f32 %v1527, 1.0
  %v1607 = vsub.f32 %v1529, 1.0
  %v1608 = vsub.f32 %v1531, 1.0
  %v1609 = vsub.f32 %v1533, 1.0
  %v1610 = vsub.f32 %v1535, 1.0
  %v1611 = vsub.f32 %v1537, 1.0
  %v1612 = vsub.f32 %v1539, 1.0
  %v1613 = vsub.f32 %v1541, 1.0
  %v1614 = vsub.f32 %v1543, 1.0
  %v1615 = vsub.f32 %v1545, 1.0
  %v1616 = vsub.f32 %v1547, 1.0
  %v1617 = vsub.f32 %v1549, 1.0
  %v1618 = vsub.f32 %v1551, 1.0
  %v1619 = vsub.f32 %v1553, 1.0
  %v1620 = vsub.f32 %v1555, 1.0
  %v1621 = vsub.f32 %v1557, 1.0
  %v1622 = vsub.f32 %v1559, 1.0
  %v1623 = vsub.f32 %v1561, 1.0
  %v1624 = vsub.f32 %v1563, 1.0
  %v1625 = vsub.f32 %v1565, 1.0
  %v1626 = vsub.f32 %v1567, 1.0
  %v1627 = vsub.f32 %v1569, 1.0
  %v1628 = vsub.f32 %v1571, 1.0
  %v1629 = vsub.f32 %v1573, 1.0
  %v1630 = vsub.f32 %v1575, 1.0
  %v1631 = vsub.f32 %v1577, 1.0
  %v1632 = vsub.f32 %v1579, 1.0
  %v1633 = vsub.f32 %v1581, 1.0
  %v1634 = vsub.f32 %v1583, 1.0
  %v1635 = vsub.f32 %v1585, 1.0
  %v1636 = vsub.f32 %v1587, 1.0
  %v1637 = vsel %vm1392, %v1246, %v1588
  %v1638 = vsel %vm1393, %v1249, %v1589
  %v1639 = vsel %vm1394, %v1252, %v1590
  %v1640 = vsel %vm1395, %v1255, %v1591
  %v1641 = vsel %vm1396, %v1258, %v1592
  %v1642 = vsel %vm1397, %v1261, %v1593
  %v1643 = vsel %vm1398, %v1264, %v1594
  %v1644 = vsel %vm1399, %v1267, %v1595
  %v1645 = vsel %vm1400, %v1270, %v1596
  %v1646 = vsel %vm1401, %v1273, %v1597
  %v1647 = vsel %vm1402, %v1276, %v1598
  %v1648 = vsel %vm1403, %v1279, %v1599
  %v1649 = vsel %vm1404, %v1282, %v1600
  %v1650 = vsel %vm1405, %v1285, %v1601
  %v1651 = vsel %vm1406, %v1288, %v1602
  %v1652 = vsel %vm1407, %v1291, %v1603
  %v1653 = vsel %vm1408, %v1294, %v1604
  %v1654 = vsel %vm1409, %v1297, %v1605
  %v1655 = vsel %vm1410, %v1300, %v1606
  %v1656 = vsel %vm1411, %v1303, %v1607
  %v1657 = vsel %vm1412, %v1306, %v1608
  %v1658 = vsel %vm1413, %v1309, %v1609
  %v1659 = vsel %vm1414, %v1312, %v1610
  %v1660 = vsel %vm1415, %v1315, %v1611
  %v1661 = vsel %vm1416, %v1318, %v1612
  %v1662 = vsel %vm1417, %v1321, %v1613
  %v1663 = vsel %vm1418, %v1324, %v1614
  %v1664 = vsel %vm1419, %v1327, %v1615
  %v1665 = vsel %vm1420, %v1330, %v1616
  %v1666 = vsel %vm1421, %v1333, %v1617
  %v1667 = vsel %vm1422, %v1336, %v1618
  %v1668 = vsel %vm1423, %v1339, %v1619
  %v1669 = vsel %vm1424, %v1342, %v1620
  %v1670 = vsel %vm1425, %v1345, %v1621
  %v1671 = vsel %vm1426, %v1348, %v1622
  %v1672 = vsel %vm1427, %v1351, %v1623
  %v1673 = vsel %vm1428, %v1354, %v1624
  %v1674 = vsel %vm1429, %v1357, %v1625
  %v1675 = vsel %vm1430, %v1360, %v1626
  %v1676 = vsel %vm1431, %v1363, %v1627
  %v1677 = vsel %vm1432, %v1366, %v1628
  %v1678 = vsel %vm1433, %v1369, %v1629
  %v1679 = vsel %vm1434, %v1372, %v1630
  %v1680 = vsel %vm1435, %v1375, %v1631
  %v1681 = vsel %vm1436, %v1378, %v1632
  %v1682 = vsel %vm1437, %v1381, %v1633
  %v1683 = vsel %vm1438, %v1384, %v1634
  %v1684 = vsel %vm1439, %v1387, %v1635
  %v1685 = vsel %vm1440, %v1390, %v1636
  %vm1686 = vcmask 785408
  %1687 = vst.msk [vmem:[%s3] sm:$0xff] %vm1686, %v1637
  %1688 = vst.msk [vmem:[%s3 + $0x8] sm:$0xff] %vm1686, %v1638
  %1689 = vst.msk [vmem:[%s3 + $0x10] sm:$0xff] %vm1686, %v1639
  %1690 = vst.msk [vmem:[%s3 + $0x18] sm:$0xff] %vm1686, %v1640
  %1691 = vst.msk [vmem:[%s3 + $0x20] sm:$0xff] %vm1686, %v1641
  %1692 = vst.msk [vmem:[%s3 + $0x28] sm:$0xff] %vm1686, %v1642
  %1693 = vst.msk [vmem:[%s3 + $0x30] sm:$0xff] %vm1686, %v1643
  %1694 = vst.msk [vmem:[%s3 + $0x38] sm:$0xff] %vm1686, %v1644
  %1695 = vst.msk [vmem:[%s3 + $0x40] sm:$0xff] %vm1686, %v1645
  %1696 = vst.msk [vmem:[%s3 + $0x48] sm:$0xff] %vm1686, %v1646
  %1697 = vst.msk [vmem:[%s3 + $0x50] sm:$0xff] %vm1686, %v1647
  %1698 = vst.msk [vmem:[%s3 + $0x58] sm:$0xff] %vm1686, %v1648
  %1699 = vst.msk [vmem:[%s3 + $0x60] sm:$0xff] %vm1686, %v1649
  %1700 = vst.msk [vmem:[%s3 + $0x68] sm:$0xff] %vm1686, %v1650
  %1701 = vst.msk [vmem:[%s3 + $0x70] sm:$0xff] %vm1686, %v1651
  %1702 = vst.msk [vmem:[%s3 + $0x78] sm:$0xff] %vm1686, %v1652
  %1703 = vst.msk [vmem:[%s3 + $0x80] sm:$0xff] %vm1686, %v1653
  %1704 = vst.msk [vmem:[%s3 + $0x88] sm:$0xff] %vm1686, %v1654
  %1705 = vst.msk [vmem:[%s3 + $0x90] sm:$0xff] %vm1686, %v1655
  %1706 = vst.msk [vmem:[%s3 + $0x98] sm:$0xff] %vm1686, %v1656
  %1707 = vst.msk [vmem:[%s3 + $0xa0] sm:$0xff] %vm1686, %v1657
  %1708 = vst.msk [vmem:[%s3 + $0xa8] sm:$0xff] %vm1686, %v1658
  %1709 = vst.msk [vmem:[%s3 + $0xb0] sm:$0xff] %vm1686, %v1659
  %1710 = vst.msk [vmem:[%s3 + $0xb8] sm:$0xff] %vm1686, %v1660
  %1711 = vst.msk [vmem:[%s3 + $0xc0] sm:$0xff] %vm1686, %v1661
  %1712 = vst.msk [vmem:[%s3 + $0xc8] sm:$0xff] %vm1686, %v1662
  %1713 = vst.msk [vmem:[%s3 + $0xd0] sm:$0xff] %vm1686, %v1663
  %1714 = vst.msk [vmem:[%s3 + $0xd8] sm:$0xff] %vm1686, %v1664
  %1715 = vst.msk [vmem:[%s3 + $0xe0] sm:$0xff] %vm1686, %v1665
  %1716 = vst.msk [vmem:[%s3 + $0xe8] sm:$0xff] %vm1686, %v1666
  %1717 = vst.msk [vmem:[%s3 + $0xf0] sm:$0xff] %vm1686, %v1667
  %1718 = vst.msk [vmem:[%s3 + $0xf8] sm:$0xff] %vm1686, %v1668
  %1719 = vst.msk [vmem:[%s3 + $0x100] sm:$0xff] %vm1686, %v1669
  %1720 = vst.msk [vmem:[%s3 + $0x108] sm:$0xff] %vm1686, %v1670
  %1721 = vst.msk [vmem:[%s3 + $0x110] sm:$0xff] %vm1686, %v1671
  %1722 = vst.msk [vmem:[%s3 + $0x118] sm:$0xff] %vm1686, %v1672
  %1723 = vst.msk [vmem:[%s3 + $0x120] sm:$0xff] %vm1686, %v1673
  %1724 = vst.msk [vmem:[%s3 + $0x128] sm:$0xff] %vm1686, %v1674
  %1725 = vst.msk [vmem:[%s3 + $0x130] sm:$0xff] %vm1686, %v1675
  %1726 = vst.msk [vmem:[%s3 + $0x138] sm:$0xff] %vm1686, %v1676
  %1727 = vst.msk [vmem:[%s3 + $0x140] sm:$0xff] %vm1686, %v1677
  %1728 = vst.msk [vmem:[%s3 + $0x148] sm:$0xff] %vm1686, %v1678
  %1729 = vst.msk [vmem:[%s3 + $0x150] sm:$0xff] %vm1686, %v1679
  %1730 = vst.msk [vmem:[%s3 + $0x158] sm:$0xff] %vm1686, %v1680
  %1731 = vst.msk [vmem:[%s3 + $0x160] sm:$0xff] %vm1686, %v1681
  %1732 = vst.msk [vmem:[%s3 + $0x168] sm:$0xff] %vm1686, %v1682
  %1733 = vst.msk [vmem:[%s3 + $0x170] sm:$0xff] %vm1686, %v1683
  %1734 = vst.msk [vmem:[%s3 + $0x178] sm:$0xff] %vm1686, %v1684
  %1735 = vst.msk [vmem:[%s3 + $0x180] sm:$0xff] %vm1686, %v1685
  // Predicated region
  $region14: #{encoder_forward.5} parent=0 // pred_check
    _
  $region15: #{encoder_forward.5} parent=0 // pred_check_branch
    %1737 = sbr.rel (0) target = $region17
  $region16: #{encoder_forward.5} parent=0 // pred_region
    _
  $region17: #{encoder_forward.5} parent=0 // pred_fallthru
    _
  // Predicated region
  $region18: #{encoder_forward.5} parent=0 // pred_check
    _
  $region19: #{encoder_forward.5} parent=0 // pred_check_branch
    %1739 = sbr.rel (0) target = $region21
  $region20: #{encoder_forward.5} parent=0 // pred_region
    _
  $region21: #{encoder_forward.5} parent=0 // pred_fallthru
    _

// kernel: encoder_forward.6
$region0: #{encoder_forward.6}
  #allocation0 [shape = 'u32[]', space=smem, size = 0x4, offset = 0x4, fixed_abs, tag = 'smem constant byte address 0x4 - core index']
  #allocation1 [shape = 'u32[72,128]{1,0:T(1,128)}', space=vmem, size = 0x9000, scoped, tag = 'internal scratch']
  %s0 = inlined_call_operand.vmem [shape: f32[72,1536], index: 0, kind: input, shape index: {}]
  %s1 = inlined_call_operand.vmem [shape: f32[1536,192], index: 1, kind: input, shape index: {}]
  %s2 = inlined_call_operand.vmem [shape: f32[1,192], index: 2, kind: input, shape index: {}]
  %s3 = inlined_call_operand.vmem [shape: f32[72,192], index: 3, kind: output, shape index: {}]
  %s4 = sld [smem:[#allocation0]]
  $region22: #{encoder_forward.6} parent=0
    _
  %s6 = ssub.s32 1, %s4
  %s7 = scalar_select 0, %s6, %s4
  // Predicated region
  $region2: #{encoder_forward.6} parent=0 // pred_check
    _
  $region3: #{encoder_forward.6} parent=0 // pred_check_branch
    %9 = sbr.rel (0) target = $region5
  $region4: #{encoder_forward.6} parent=0 // pred_region
    _
  $region5: #{encoder_forward.6} parent=0 // pred_fallthru
    _
  // Predicated region
  $region6: #{encoder_forward.6} parent=0 // pred_check
    _
  $region7: #{encoder_forward.6} parent=0 // pred_check_branch
    %11 = sbr.rel (0) target = $region9
  $region8: #{encoder_forward.6} parent=0 // pred_region
    _
  $region9: #{encoder_forward.6} parent=0 // pred_fallthru
    _
  // Predicated region
  $region10: #{encoder_forward.6} parent=0 // pred_check
    _
  $region11: #{encoder_forward.6} parent=0 // pred_check_branch
    %13 = sbr.rel (0) target = $region13
  $region12: #{encoder_forward.6} parent=0 // pred_region
    _
  $region13: #{encoder_forward.6} parent=0 // pred_fallthru
    _
  %v14 = vld [vmem:[%s0] sm:$0xff]
  %v15 = vld [vmem:[%s0 + $0x8] sm:$0xff]
  %v16 = vld [vmem:[%s0 + $0x10] sm:$0xff]
  %v17 = vld [vmem:[%s0 + $0x18] sm:$0xff]
  %v18 = vld [vmem:[%s0 + $0x20] sm:$0xff]
  %v19 = vld [vmem:[%s0 + $0x28] sm:$0xff]
  %v20 = vld [vmem:[%s0 + $0x30] sm:$0xff]
  %v21 = vld [vmem:[%s0 + $0x38] sm:$0xff]
  %v22 = vld [vmem:[%s0 + $0x40] sm:$0xff]
  %v23 = vld [vmem:[%s0 + $0x48] sm:$0xff]
  %v24 = vld [vmem:[%s0 + $0x50] sm:$0xff]
  %v25 = vld [vmem:[%s0 + $0x58] sm:$0xff]
  %v26 = vld [vmem:[%s0 + $0x60] sm:$0xff]
  %v27 = vld [vmem:[%s0 + $0x68] sm:$0xff]
  %v28 = vld [vmem:[%s0 + $0x70] sm:$0xff]
  %v29 = vld [vmem:[%s0 + $0x78] sm:$0xff]
  %v30 = vld [vmem:[%s0 + $0x80] sm:$0xff]
  %v31 = vld [vmem:[%s0 + $0x88] sm:$0xff]
  %v32 = vld [vmem:[%s0 + $0x90] sm:$0xff]
  %v33 = vld [vmem:[%s0 + $0x98] sm:$0xff]
  %v34 = vld [vmem:[%s0 + $0xa0] sm:$0xff]
  %v35 = vld [vmem:[%s0 + $0xa8] sm:$0xff]
  %v36 = vld [vmem:[%s0 + $0xb0] sm:$0xff]
  %v37 = vld [vmem:[%s0 + $0xb8] sm:$0xff]
  %v38 = vld [vmem:[%s0 + $0xc0] sm:$0xff]
  %v39 = vld [vmem:[%s0 + $0xc8] sm:$0xff]
  %v40 = vld [vmem:[%s0 + $0xd0] sm:$0xff]
  %v41 = vld [vmem:[%s0 + $0xd8] sm:$0xff]
  %v42 = vld [vmem:[%s0 + $0xe0] sm:$0xff]
  %v43 = vld [vmem:[%s0 + $0xe8] sm:$0xff]
  %v44 = vld [vmem:[%s0 + $0xf0] sm:$0xff]
  %v45 = vld [vmem:[%s0 + $0xf8] sm:$0xff]
  %v46 = vld [vmem:[%s0 + $0x100] sm:$0xff]
  %v47 = vld [vmem:[%s0 + $0x108] sm:$0xff]
  %v48 = vld [vmem:[%s0 + $0x110] sm:$0xff]
  %v49 = vld [vmem:[%s0 + $0x118] sm:$0xff]
  %v50 = vld [vmem:[%s0 + $0x120] sm:$0xff]
  %v51 = vld [vmem:[%s0 + $0x128] sm:$0xff]
  %v52 = vld [vmem:[%s0 + $0x130] sm:$0xff]
  %v53 = vld [vmem:[%s0 + $0x138] sm:$0xff]
  %v54 = vld [vmem:[%s0 + $0x140] sm:$0xff]
  %v55 = vld [vmem:[%s0 + $0x148] sm:$0xff]
  %v56 = vld [vmem:[%s0 + $0x150] sm:$0xff]
  %v57 = vld [vmem:[%s0 + $0x158] sm:$0xff]
  %v58 = vld [vmem:[%s0 + $0x160] sm:$0xff]
  %v59 = vld [vmem:[%s0 + $0x168] sm:$0xff]
  %v60 = vld [vmem:[%s0 + $0x170] sm:$0xff]
  %v61 = vld [vmem:[%s0 + $0x178] sm:$0xff]
  %v62 = vld [vmem:[%s0 + $0x180] sm:$0xff]
  %v63 = vld [vmem:[%s0 + $0x188] sm:$0xff]
  %v64 = vld [vmem:[%s0 + $0x190] sm:$0xff]
  %v65 = vld [vmem:[%s0 + $0x198] sm:$0xff]
  %v66 = vld [vmem:[%s0 + $0x1a0] sm:$0xff]
  %v67 = vld [vmem:[%s0 + $0x1a8] sm:$0xff]
  %v68 = vld [vmem:[%s0 + $0x1b0] sm:$0xff]
  %v69 = vld [vmem:[%s0 + $0x1b8] sm:$0xff]
  %v70 = vld [vmem:[%s0 + $0x1c0] sm:$0xff]
  %v71 = vld [vmem:[%s0 + $0x1c8] sm:$0xff]
  %v72 = vld [vmem:[%s0 + $0x1d0] sm:$0xff]
  %v73 = vld [vmem:[%s0 + $0x1d8] sm:$0xff]
  %v74 = vld [vmem:[%s0 + $0x1e0] sm:$0xff]
  %v75 = vld [vmem:[%s0 + $0x1e8] sm:$0xff]
  %v76 = vld [vmem:[%s0 + $0x1f0] sm:$0xff]
  %v77 = vld [vmem:[%s0 + $0x1f8] sm:$0xff]
  %v78 = vld [vmem:[%s0 + $0x200] sm:$0xff]
  %v79 = vld [vmem:[%s0 + $0x208] sm:$0xff]
  %v80 = vld [vmem:[%s0 + $0x210] sm:$0xff]
  %v81 = vld [vmem:[%s0 + $0x218] sm:$0xff]
  %v82 = vld [vmem:[%s0 + $0x220] sm:$0xff]
  %v83 = vld [vmem:[%s0 + $0x228] sm:$0xff]
  %v84 = vld [vmem:[%s0 + $0x230] sm:$0xff]
  %v85 = vld [vmem:[%s0 + $0x238] sm:$0xff]
  %v86 = vld [vmem:[%s0 + $0x240] sm:$0xff]
  %v87 = vld [vmem:[%s0 + $0x248] sm:$0xff]
  %v88 = vld [vmem:[%s0 + $0x250] sm:$0xff]
  %v89 = vld [vmem:[%s0 + $0x258] sm:$0xff]
  %v90 = vld [vmem:[%s0 + $0x260] sm:$0xff]
  %v91 = vld [vmem:[%s0 + $0x268] sm:$0xff]
  %v92 = vld [vmem:[%s0 + $0x270] sm:$0xff]
  %v93 = vld [vmem:[%s0 + $0x278] sm:$0xff]
  %v94 = vld [vmem:[%s0 + $0x280] sm:$0xff]
  %v95 = vld [vmem:[%s0 + $0x288] sm:$0xff]
  %v96 = vld [vmem:[%s0 + $0x290] sm:$0xff]
  %v97 = vld [vmem:[%s0 + $0x298] sm:$0xff]
  %v98 = vld [vmem:[%s0 + $0x2a0] sm:$0xff]
  %v99 = vld [vmem:[%s0 + $0x2a8] sm:$0xff]
  %v100 = vld [vmem:[%s0 + $0x2b0] sm:$0xff]
  %v101 = vld [vmem:[%s0 + $0x2b8] sm:$0xff]
  %v102 = vld [vmem:[%s0 + $0x2c0] sm:$0xff]
  %v103 = vld [vmem:[%s0 + $0x2c8] sm:$0xff]
  %v104 = vld [vmem:[%s0 + $0x2d0] sm:$0xff]
  %v105 = vld [vmem:[%s0 + $0x2d8] sm:$0xff]
  %v106 = vld [vmem:[%s0 + $0x2e0] sm:$0xff]
  %v107 = vld [vmem:[%s0 + $0x2e8] sm:$0xff]
  %v108 = vld [vmem:[%s0 + $0x2f0] sm:$0xff]
  %v109 = vld [vmem:[%s0 + $0x2f8] sm:$0xff]
  %v110 = vld [vmem:[%s0 + $0x300] sm:$0xff]
  %v111 = vld [vmem:[%s0 + $0x308] sm:$0xff]
  %v112 = vld [vmem:[%s0 + $0x310] sm:$0xff]
  %v113 = vld [vmem:[%s0 + $0x318] sm:$0xff]
  %v114 = vld [vmem:[%s0 + $0x320] sm:$0xff]
  %v115 = vld [vmem:[%s0 + $0x328] sm:$0xff]
  %v116 = vld [vmem:[%s0 + $0x330] sm:$0xff]
  %v117 = vld [vmem:[%s0 + $0x338] sm:$0xff]
  %v118 = vld [vmem:[%s0 + $0x340] sm:$0xff]
  %v119 = vld [vmem:[%s0 + $0x348] sm:$0xff]
  %v120 = vld [vmem:[%s0 + $0x350] sm:$0xff]
  %v121 = vld [vmem:[%s0 + $0x358] sm:$0xff]
  %v122 = vld [vmem:[%s1] sm:$0xff]
  %v123 = vld [vmem:[%s1 + $0x8] sm:$0xff]
  %v124 = vld [vmem:[%s1 + $0x10] sm:$0xff]
  %v125 = vld [vmem:[%s1 + $0x18] sm:$0xff]
  %v126 = vld [vmem:[%s1 + $0x20] sm:$0xff]
  %v127 = vld [vmem:[%s1 + $0x28] sm:$0xff]
  %v128 = vld [vmem:[%s1 + $0x30] sm:$0xff]
  %v129 = vld [vmem:[%s1 + $0x38] sm:$0xff]
  %v130 = vld [vmem:[%s1 + $0x40] sm:$0xff]
  %v131 = vld [vmem:[%s1 + $0x48] sm:$0xff]
  %v132 = vld [vmem:[%s1 + $0x50] sm:$0xff]
  %v133 = vld [vmem:[%s1 + $0x58] sm:$0xff]
  %v134 = vld [vmem:[%s1 + $0x60] sm:$0xff]
  %v135 = vld [vmem:[%s1 + $0x68] sm:$0xff]
  %v136 = vld [vmem:[%s1 + $0x70] sm:$0xff]
  %v137 = vld [vmem:[%s1 + $0x78] sm:$0xff]
  %v138 = vld [vmem:[%s1 + $0x80] sm:$0xff]
  %v139 = vld [vmem:[%s1 + $0x88] sm:$0xff]
  %v140 = vld [vmem:[%s1 + $0x90] sm:$0xff]
  %v141 = vld [vmem:[%s1 + $0x98] sm:$0xff]
  %v142 = vld [vmem:[%s1 + $0xa0] sm:$0xff]
  %v143 = vld [vmem:[%s1 + $0xa8] sm:$0xff]
  %v144 = vld [vmem:[%s1 + $0xb0] sm:$0xff]
  %v145 = vld [vmem:[%s1 + $0xb8] sm:$0xff]
  %v146 = vld [vmem:[%s1 + $0xc0] sm:$0xff]
  %v147 = vld [vmem:[%s1 + $0xc8] sm:$0xff]
  %v148 = vld [vmem:[%s1 + $0xd0] sm:$0xff]
  %v149 = vld [vmem:[%s1 + $0xd8] sm:$0xff]
  %v150 = vld [vmem:[%s1 + $0xe0] sm:$0xff]
  %v151 = vld [vmem:[%s1 + $0xe8] sm:$0xff]
  %v152 = vld [vmem:[%s1 + $0xf0] sm:$0xff]
  %v153 = vld [vmem:[%s1 + $0xf8] sm:$0xff]
  %v154 = vld [vmem:[%s1 + $0x100] sm:$0xff]
  %v155 = vld [vmem:[%s1 + $0x108] sm:$0xff]
  %v156 = vld [vmem:[%s1 + $0x110] sm:$0xff]
  %v157 = vld [vmem:[%s1 + $0x118] sm:$0xff]
  %v158 = vld [vmem:[%s1 + $0x120] sm:$0xff]
  %v159 = vld [vmem:[%s1 + $0x128] sm:$0xff]
  %v160 = vld [vmem:[%s1 + $0x130] sm:$0xff]
  %v161 = vld [vmem:[%s1 + $0x138] sm:$0xff]
  %v162 = vld [vmem:[%s1 + $0x140] sm:$0xff]
  %v163 = vld [vmem:[%s1 + $0x148] sm:$0xff]
  %v164 = vld [vmem:[%s1 + $0x150] sm:$0xff]
  %v165 = vld [vmem:[%s1 + $0x158] sm:$0xff]
  %v166 = vld [vmem:[%s1 + $0x160] sm:$0xff]
  %v167 = vld [vmem:[%s1 + $0x168] sm:$0xff]
  %v168 = vld [vmem:[%s1 + $0x170] sm:$0xff]
  %v169 = vld [vmem:[%s1 + $0x178] sm:$0xff]
  %v170 = vld [vmem:[%s1 + $0x180] sm:$0xff]
  %v171 = vld [vmem:[%s1 + $0x188] sm:$0xff]
  %v172 = vld [vmem:[%s1 + $0x190] sm:$0xff]
  %v173 = vld [vmem:[%s1 + $0x198] sm:$0xff]
  %v174 = vld [vmem:[%s1 + $0x1a0] sm:$0xff]
  %v175 = vld [vmem:[%s1 + $0x1a8] sm:$0xff]
  %v176 = vld [vmem:[%s1 + $0x1b0] sm:$0xff]
  %v177 = vld [vmem:[%s1 + $0x1b8] sm:$0xff]
  %v178 = vld [vmem:[%s1 + $0x1c0] sm:$0xff]
  %v179 = vld [vmem:[%s1 + $0x1c8] sm:$0xff]
  %v180 = vld [vmem:[%s1 + $0x1d0] sm:$0xff]
  %v181 = vld [vmem:[%s1 + $0x1d8] sm:$0xff]
  %v182 = vld [vmem:[%s1 + $0x1e0] sm:$0xff]
  %v183 = vld [vmem:[%s1 + $0x1e8] sm:$0xff]
  %v184 = vld [vmem:[%s1 + $0x1f0] sm:$0xff]
  %v185 = vld [vmem:[%s1 + $0x1f8] sm:$0xff]
  %v186 = vld [vmem:[%s1 + $0x200] sm:$0xff]
  %v187 = vld [vmem:[%s1 + $0x208] sm:$0xff]
  %v188 = vld [vmem:[%s1 + $0x210] sm:$0xff]
  %v189 = vld [vmem:[%s1 + $0x218] sm:$0xff]
  %v190 = vld [vmem:[%s1 + $0x220] sm:$0xff]
  %v191 = vld [vmem:[%s1 + $0x228] sm:$0xff]
  %v192 = vld [vmem:[%s1 + $0x230] sm:$0xff]
  %v193 = vld [vmem:[%s1 + $0x238] sm:$0xff]
  %v194 = vld [vmem:[%s1 + $0x240] sm:$0xff]
  %v195 = vld [vmem:[%s1 + $0x248] sm:$0xff]
  %v196 = vld [vmem:[%s1 + $0x250] sm:$0xff]
  %v197 = vld [vmem:[%s1 + $0x258] sm:$0xff]
  %v198 = vld [vmem:[%s1 + $0x260] sm:$0xff]
  %v199 = vld [vmem:[%s1 + $0x268] sm:$0xff]
  %v200 = vld [vmem:[%s1 + $0x270] sm:$0xff]
  %v201 = vld [vmem:[%s1 + $0x278] sm:$0xff]
  %v202 = vld [vmem:[%s1 + $0x280] sm:$0xff]
  %v203 = vld [vmem:[%s1 + $0x288] sm:$0xff]
  %v204 = vld [vmem:[%s1 + $0x290] sm:$0xff]
  %v205 = vld [vmem:[%s1 + $0x298] sm:$0xff]
  %v206 = vld [vmem:[%s1 + $0x2a0] sm:$0xff]
  %v207 = vld [vmem:[%s1 + $0x2a8] sm:$0xff]
  %v208 = vld [vmem:[%s1 + $0x2b0] sm:$0xff]
  %v209 = vld [vmem:[%s1 + $0x2b8] sm:$0xff]
  %v210 = vld [vmem:[%s1 + $0x2c0] sm:$0xff]
  %v211 = vld [vmem:[%s1 + $0x2c8] sm:$0xff]
  %v212 = vld [vmem:[%s1 + $0x2d0] sm:$0xff]
  %v213 = vld [vmem:[%s1 + $0x2d8] sm:$0xff]
  %v214 = vld [vmem:[%s1 + $0x2e0] sm:$0xff]
  %v215 = vld [vmem:[%s1 + $0x2e8] sm:$0xff]
  %v216 = vld [vmem:[%s1 + $0x2f0] sm:$0xff]
  %v217 = vld [vmem:[%s1 + $0x2f8] sm:$0xff]
  %v218 = vld [vmem:[%s1 + $0x300] sm:$0xff]
  %v219 = vld [vmem:[%s1 + $0x308] sm:$0xff]
  %v220 = vld [vmem:[%s1 + $0x310] sm:$0xff]
  %v221 = vld [vmem:[%s1 + $0x318] sm:$0xff]
  %v222 = vld [vmem:[%s1 + $0x320] sm:$0xff]
  %v223 = vld [vmem:[%s1 + $0x328] sm:$0xff]
  %v224 = vld [vmem:[%s1 + $0x330] sm:$0xff]
  %v225 = vld [vmem:[%s1 + $0x338] sm:$0xff]
  %v226 = vld [vmem:[%s1 + $0x340] sm:$0xff]
  %v227 = vld [vmem:[%s1 + $0x348] sm:$0xff]
  %v228 = vld [vmem:[%s1 + $0x350] sm:$0xff]
  %v229 = vld [vmem:[%s1 + $0x358] sm:$0xff]
  %v230 = vld [vmem:[%s1 + $0x360] sm:$0xff]
  %v231 = vld [vmem:[%s1 + $0x368] sm:$0xff]
  %v232 = vld [vmem:[%s1 + $0x370] sm:$0xff]
  %v233 = vld [vmem:[%s1 + $0x378] sm:$0xff]
  %v234 = vld [vmem:[%s1 + $0x380] sm:$0xff]
  %v235 = vld [vmem:[%s1 + $0x388] sm:$0xff]
  %v236 = vld [vmem:[%s1 + $0x390] sm:$0xff]
  %v237 = vld [vmem:[%s1 + $0x398] sm:$0xff]
  %v238 = vld [vmem:[%s1 + $0x3a0] sm:$0xff]
  %v239 = vld [vmem:[%s1 + $0x3a8] sm:$0xff]
  %v240 = vld [vmem:[%s1 + $0x3b0] sm:$0xff]
  %v241 = vld [vmem:[%s1 + $0x3b8] sm:$0xff]
  %v242 = vld [vmem:[%s1 + $0x3c0] sm:$0xff]
  %v243 = vld [vmem:[%s1 + $0x3c8] sm:$0xff]
  %v244 = vld [vmem:[%s1 + $0x3d0] sm:$0xff]
  %v245 = vld [vmem:[%s1 + $0x3d8] sm:$0xff]
  %v246 = vld [vmem:[%s1 + $0x3e0] sm:$0xff]
  %v247 = vld [vmem:[%s1 + $0x3e8] sm:$0xff]
  %v248 = vld [vmem:[%s1 + $0x3f0] sm:$0xff]
  %v249 = vld [vmem:[%s1 + $0x3f8] sm:$0xff]
  %v250 = vld [vmem:[%s1 + $0x400] sm:$0xff]
  %v251 = vld [vmem:[%s1 + $0x408] sm:$0xff]
  %v252 = vld [vmem:[%s1 + $0x410] sm:$0xff]
  %v253 = vld [vmem:[%s1 + $0x418] sm:$0xff]
  %v254 = vld [vmem:[%s1 + $0x420] sm:$0xff]
  %v255 = vld [vmem:[%s1 + $0x428] sm:$0xff]
  %v256 = vld [vmem:[%s1 + $0x430] sm:$0xff]
  %v257 = vld [vmem:[%s1 + $0x438] sm:$0xff]
  %v258 = vld [vmem:[%s1 + $0x440] sm:$0xff]
  %v259 = vld [vmem:[%s1 + $0x448] sm:$0xff]
  %v260 = vld [vmem:[%s1 + $0x450] sm:$0xff]
  %v261 = vld [vmem:[%s1 + $0x458] sm:$0xff]
  %v262 = vld [vmem:[%s1 + $0x460] sm:$0xff]
  %v263 = vld [vmem:[%s1 + $0x468] sm:$0xff]
  %v264 = vld [vmem:[%s1 + $0x470] sm:$0xff]
  %v265 = vld [vmem:[%s1 + $0x478] sm:$0xff]
  %v266 = vld [vmem:[%s1 + $0x480] sm:$0xff]
  %v267 = vld [vmem:[%s1 + $0x488] sm:$0xff]
  %v268 = vld [vmem:[%s1 + $0x490] sm:$0xff]
  %v269 = vld [vmem:[%s1 + $0x498] sm:$0xff]
  %v270 = vld [vmem:[%s1 + $0x4a0] sm:$0xff]
  %v271 = vld [vmem:[%s1 + $0x4a8] sm:$0xff]
  %v272 = vld [vmem:[%s1 + $0x4b0] sm:$0xff]
  %v273 = vld [vmem:[%s1 + $0x4b8] sm:$0xff]
  %v274 = vld [vmem:[%s1 + $0x4c0] sm:$0xff]
  %v275 = vld [vmem:[%s1 + $0x4c8] sm:$0xff]
  %v276 = vld [vmem:[%s1 + $0x4d0] sm:$0xff]
  %v277 = vld [vmem:[%s1 + $0x4d8] sm:$0xff]
  %v278 = vld [vmem:[%s1 + $0x4e0] sm:$0xff]
  %v279 = vld [vmem:[%s1 + $0x4e8] sm:$0xff]
  %v280 = vld [vmem:[%s1 + $0x4f0] sm:$0xff]
  %v281 = vld [vmem:[%s1 + $0x4f8] sm:$0xff]
  %v282 = vld [vmem:[%s1 + $0x500] sm:$0xff]
  %v283 = vld [vmem:[%s1 + $0x508] sm:$0xff]
  %v284 = vld [vmem:[%s1 + $0x510] sm:$0xff]
  %v285 = vld [vmem:[%s1 + $0x518] sm:$0xff]
  %v286 = vld [vmem:[%s1 + $0x520] sm:$0xff]
  %v287 = vld [vmem:[%s1 + $0x528] sm:$0xff]
  %v288 = vld [vmem:[%s1 + $0x530] sm:$0xff]
  %v289 = vld [vmem:[%s1 + $0x538] sm:$0xff]
  %v290 = vld [vmem:[%s1 + $0x540] sm:$0xff]
  %v291 = vld [vmem:[%s1 + $0x548] sm:$0xff]
  %v292 = vld [vmem:[%s1 + $0x550] sm:$0xff]
  %v293 = vld [vmem:[%s1 + $0x558] sm:$0xff]
  %v294 = vld [vmem:[%s1 + $0x560] sm:$0xff]
  %v295 = vld [vmem:[%s1 + $0x568] sm:$0xff]
  %v296 = vld [vmem:[%s1 + $0x570] sm:$0xff]
  %v297 = vld [vmem:[%s1 + $0x578] sm:$0xff]
  %v298 = vld [vmem:[%s1 + $0x580] sm:$0xff]
  %v299 = vld [vmem:[%s1 + $0x588] sm:$0xff]
  %v300 = vld [vmem:[%s1 + $0x590] sm:$0xff]
  %v301 = vld [vmem:[%s1 + $0x598] sm:$0xff]
  %v302 = vld [vmem:[%s1 + $0x5a0] sm:$0xff]
  %v303 = vld [vmem:[%s1 + $0x5a8] sm:$0xff]
  %v304 = vld [vmem:[%s1 + $0x5b0] sm:$0xff]
  %v305 = vld [vmem:[%s1 + $0x5b8] sm:$0xff]
  %v306 = vld [vmem:[%s1 + $0x5c0] sm:$0xff]
  %v307 = vld [vmem:[%s1 + $0x5c8] sm:$0xff]
  %v308 = vld [vmem:[%s1 + $0x5d0] sm:$0xff]
  %v309 = vld [vmem:[%s1 + $0x5d8] sm:$0xff]
  %v310 = vld [vmem:[%s1 + $0x5e0] sm:$0xff]
  %v311 = vld [vmem:[%s1 + $0x5e8] sm:$0xff]
  %v312 = vld [vmem:[%s1 + $0x5f0] sm:$0xff]
  %v313 = vld [vmem:[%s1 + $0x5f8] sm:$0xff]
  %v314 = vld [vmem:[%s1 + $0x600] sm:$0xff]
  %v315 = vld [vmem:[%s1 + $0x608] sm:$0xff]
  %v316 = vld [vmem:[%s1 + $0x610] sm:$0xff]
  %v317 = vld [vmem:[%s1 + $0x618] sm:$0xff]
  %v318 = vld [vmem:[%s1 + $0x620] sm:$0xff]
  %v319 = vld [vmem:[%s1 + $0x628] sm:$0xff]
  %v320 = vld [vmem:[%s1 + $0x630] sm:$0xff]
  %v321 = vld [vmem:[%s1 + $0x638] sm:$0xff]
  %v322 = vld [vmem:[%s1 + $0x640] sm:$0xff]
  %v323 = vld [vmem:[%s1 + $0x648] sm:$0xff]
  %v324 = vld [vmem:[%s1 + $0x650] sm:$0xff]
  %v325 = vld [vmem:[%s1 + $0x658] sm:$0xff]
  %v326 = vld [vmem:[%s1 + $0x660] sm:$0xff]
  %v327 = vld [vmem:[%s1 + $0x668] sm:$0xff]
  %v328 = vld [vmem:[%s1 + $0x670] sm:$0xff]
  %v329 = vld [vmem:[%s1 + $0x678] sm:$0xff]
  %v330 = vld [vmem:[%s1 + $0x680] sm:$0xff]
  %v331 = vld [vmem:[%s1 + $0x688] sm:$0xff]
  %v332 = vld [vmem:[%s1 + $0x690] sm:$0xff]
  %v333 = vld [vmem:[%s1 + $0x698] sm:$0xff]
  %v334 = vld [vmem:[%s1 + $0x6a0] sm:$0xff]
  %v335 = vld [vmem:[%s1 + $0x6a8] sm:$0xff]
  %v336 = vld [vmem:[%s1 + $0x6b0] sm:$0xff]
  %v337 = vld [vmem:[%s1 + $0x6b8] sm:$0xff]
  %v338 = vld [vmem:[%s1 + $0x6c0] sm:$0xff]
  %v339 = vld [vmem:[%s1 + $0x6c8] sm:$0xff]
  %v340 = vld [vmem:[%s1 + $0x6d0] sm:$0xff]
  %v341 = vld [vmem:[%s1 + $0x6d8] sm:$0xff]
  %v342 = vld [vmem:[%s1 + $0x6e0] sm:$0xff]
  %v343 = vld [vmem:[%s1 + $0x6e8] sm:$0xff]
  %v344 = vld [vmem:[%s1 + $0x6f0] sm:$0xff]
  %v345 = vld [vmem:[%s1 + $0x6f8] sm:$0xff]
  %v346 = vld [vmem:[%s1 + $0x700] sm:$0xff]
  %v347 = vld [vmem:[%s1 + $0x708] sm:$0xff]
  %v348 = vld [vmem:[%s1 + $0x710] sm:$0xff]
  %v349 = vld [vmem:[%s1 + $0x718] sm:$0xff]
  %v350 = vld [vmem:[%s1 + $0x720] sm:$0xff]
  %v351 = vld [vmem:[%s1 + $0x728] sm:$0xff]
  %v352 = vld [vmem:[%s1 + $0x730] sm:$0xff]
  %v353 = vld [vmem:[%s1 + $0x738] sm:$0xff]
  %v354 = vld [vmem:[%s1 + $0x740] sm:$0xff]
  %v355 = vld [vmem:[%s1 + $0x748] sm:$0xff]
  %v356 = vld [vmem:[%s1 + $0x750] sm:$0xff]
  %v357 = vld [vmem:[%s1 + $0x758] sm:$0xff]
  %v358 = vld [vmem:[%s1 + $0x760] sm:$0xff]
  %v359 = vld [vmem:[%s1 + $0x768] sm:$0xff]
  %v360 = vld [vmem:[%s1 + $0x770] sm:$0xff]
  %v361 = vld [vmem:[%s1 + $0x778] sm:$0xff]
  %v362 = vld [vmem:[%s1 + $0x780] sm:$0xff]
  %v363 = vld [vmem:[%s1 + $0x788] sm:$0xff]
  %v364 = vld [vmem:[%s1 + $0x790] sm:$0xff]
  %v365 = vld [vmem:[%s1 + $0x798] sm:$0xff]
  %v366 = vld [vmem:[%s1 + $0x7a0] sm:$0xff]
  %v367 = vld [vmem:[%s1 + $0x7a8] sm:$0xff]
  %v368 = vld [vmem:[%s1 + $0x7b0] sm:$0xff]
  %v369 = vld [vmem:[%s1 + $0x7b8] sm:$0xff]
  %v370 = vld [vmem:[%s1 + $0x7c0] sm:$0xff]
  %v371 = vld [vmem:[%s1 + $0x7c8] sm:$0xff]
  %v372 = vld [vmem:[%s1 + $0x7d0] sm:$0xff]
  %v373 = vld [vmem:[%s1 + $0x7d8] sm:$0xff]
  %v374 = vld [vmem:[%s1 + $0x7e0] sm:$0xff]
  %v375 = vld [vmem:[%s1 + $0x7e8] sm:$0xff]
  %v376 = vld [vmem:[%s1 + $0x7f0] sm:$0xff]
  %v377 = vld [vmem:[%s1 + $0x7f8] sm:$0xff]
  %v378 = vld [vmem:[%s1 + $0x800] sm:$0xff]
  %v379 = vld [vmem:[%s1 + $0x808] sm:$0xff]
  %v380 = vld [vmem:[%s1 + $0x810] sm:$0xff]
  %v381 = vld [vmem:[%s1 + $0x818] sm:$0xff]
  %v382 = vld [vmem:[%s1 + $0x820] sm:$0xff]
  %v383 = vld [vmem:[%s1 + $0x828] sm:$0xff]
  %v384 = vld [vmem:[%s1 + $0x830] sm:$0xff]
  %v385 = vld [vmem:[%s1 + $0x838] sm:$0xff]
  %v386 = vld [vmem:[%s1 + $0x840] sm:$0xff]
  %v387 = vld [vmem:[%s1 + $0x848] sm:$0xff]
  %v388 = vld [vmem:[%s1 + $0x850] sm:$0xff]
  %v389 = vld [vmem:[%s1 + $0x858] sm:$0xff]
  %v390 = vld [vmem:[%s1 + $0x860] sm:$0xff]
  %v391 = vld [vmem:[%s1 + $0x868] sm:$0xff]
  %v392 = vld [vmem:[%s1 + $0x870] sm:$0xff]
  %v393 = vld [vmem:[%s1 + $0x878] sm:$0xff]
  %v394 = vld [vmem:[%s1 + $0x880] sm:$0xff]
  %v395 = vld [vmem:[%s1 + $0x888] sm:$0xff]
  %v396 = vld [vmem:[%s1 + $0x890] sm:$0xff]
  %v397 = vld [vmem:[%s1 + $0x898] sm:$0xff]
  %v398 = vld [vmem:[%s1 + $0x8a0] sm:$0xff]
  %v399 = vld [vmem:[%s1 + $0x8a8] sm:$0xff]
  %v400 = vld [vmem:[%s1 + $0x8b0] sm:$0xff]
  %v401 = vld [vmem:[%s1 + $0x8b8] sm:$0xff]
  %v402 = vld [vmem:[%s1 + $0x8c0] sm:$0xff]
  %v403 = vld [vmem:[%s1 + $0x8c8] sm:$0xff]
  %v404 = vld [vmem:[%s1 + $0x8d0] sm:$0xff]
  %v405 = vld [vmem:[%s1 + $0x8d8] sm:$0xff]
  %v406 = vld [vmem:[%s1 + $0x8e0] sm:$0xff]
  %v407 = vld [vmem:[%s1 + $0x8e8] sm:$0xff]
  %v408 = vld [vmem:[%s1 + $0x8f0] sm:$0xff]
  %v409 = vld [vmem:[%s1 + $0x8f8] sm:$0xff]
  %v410 = vld [vmem:[%s1 + $0x900] sm:$0xff]
  %v411 = vld [vmem:[%s1 + $0x908] sm:$0xff]
  %v412 = vld [vmem:[%s1 + $0x910] sm:$0xff]
  %v413 = vld [vmem:[%s1 + $0x918] sm:$0xff]
  %v414 = vld [vmem:[%s1 + $0x920] sm:$0xff]
  %v415 = vld [vmem:[%s1 + $0x928] sm:$0xff]
  %v416 = vld [vmem:[%s1 + $0x930] sm:$0xff]
  %v417 = vld [vmem:[%s1 + $0x938] sm:$0xff]
  %v418 = vld [vmem:[%s1 + $0x940] sm:$0xff]
  %v419 = vld [vmem:[%s1 + $0x948] sm:$0xff]
  %v420 = vld [vmem:[%s1 + $0x950] sm:$0xff]
  %v421 = vld [vmem:[%s1 + $0x958] sm:$0xff]
  %v422 = vld [vmem:[%s1 + $0x960] sm:$0xff]
  %v423 = vld [vmem:[%s1 + $0x968] sm:$0xff]
  %v424 = vld [vmem:[%s1 + $0x970] sm:$0xff]
  %v425 = vld [vmem:[%s1 + $0x978] sm:$0xff]
  %v426 = vld [vmem:[%s1 + $0x980] sm:$0xff]
  %v427 = vld [vmem:[%s1 + $0x988] sm:$0xff]
  %v428 = vld [vmem:[%s1 + $0x990] sm:$0xff]
  %v429 = vld [vmem:[%s1 + $0x998] sm:$0xff]
  %v430 = vld [vmem:[%s1 + $0x9a0] sm:$0xff]
  %v431 = vld [vmem:[%s1 + $0x9a8] sm:$0xff]
  %v432 = vld [vmem:[%s1 + $0x9b0] sm:$0xff]
  %v433 = vld [vmem:[%s1 + $0x9b8] sm:$0xff]
  %v434 = vld [vmem:[%s1 + $0x9c0] sm:$0xff]
  %v435 = vld [vmem:[%s1 + $0x9c8] sm:$0xff]
  %v436 = vld [vmem:[%s1 + $0x9d0] sm:$0xff]
  %v437 = vld [vmem:[%s1 + $0x9d8] sm:$0xff]
  %v438 = vld [vmem:[%s1 + $0x9e0] sm:$0xff]
  %v439 = vld [vmem:[%s1 + $0x9e8] sm:$0xff]
  %v440 = vld [vmem:[%s1 + $0x9f0] sm:$0xff]
  %v441 = vld [vmem:[%s1 + $0x9f8] sm:$0xff]
  %v442 = vld [vmem:[%s1 + $0xa00] sm:$0xff]
  %v443 = vld [vmem:[%s1 + $0xa08] sm:$0xff]
  %v444 = vld [vmem:[%s1 + $0xa10] sm:$0xff]
  %v445 = vld [vmem:[%s1 + $0xa18] sm:$0xff]
  %v446 = vld [vmem:[%s1 + $0xa20] sm:$0xff]
  %v447 = vld [vmem:[%s1 + $0xa28] sm:$0xff]
  %v448 = vld [vmem:[%s1 + $0xa30] sm:$0xff]
  %v449 = vld [vmem:[%s1 + $0xa38] sm:$0xff]
  %v450 = vld [vmem:[%s1 + $0xa40] sm:$0xff]
  %v451 = vld [vmem:[%s1 + $0xa48] sm:$0xff]
  %v452 = vld [vmem:[%s1 + $0xa50] sm:$0xff]
  %v453 = vld [vmem:[%s1 + $0xa58] sm:$0xff]
  %v454 = vld [vmem:[%s1 + $0xa60] sm:$0xff]
  %v455 = vld [vmem:[%s1 + $0xa68] sm:$0xff]
  %v456 = vld [vmem:[%s1 + $0xa70] sm:$0xff]
  %v457 = vld [vmem:[%s1 + $0xa78] sm:$0xff]
  %v458 = vld [vmem:[%s1 + $0xa80] sm:$0xff]
  %v459 = vld [vmem:[%s1 + $0xa88] sm:$0xff]
  %v460 = vld [vmem:[%s1 + $0xa90] sm:$0xff]
  %v461 = vld [vmem:[%s1 + $0xa98] sm:$0xff]
  %v462 = vld [vmem:[%s1 + $0xaa0] sm:$0xff]
  %v463 = vld [vmem:[%s1 + $0xaa8] sm:$0xff]
  %v464 = vld [vmem:[%s1 + $0xab0] sm:$0xff]
  %v465 = vld [vmem:[%s1 + $0xab8] sm:$0xff]
  %v466 = vld [vmem:[%s1 + $0xac0] sm:$0xff]
  %v467 = vld [vmem:[%s1 + $0xac8] sm:$0xff]
  %v468 = vld [vmem:[%s1 + $0xad0] sm:$0xff]
  %v469 = vld [vmem:[%s1 + $0xad8] sm:$0xff]
  %v470 = vld [vmem:[%s1 + $0xae0] sm:$0xff]
  %v471 = vld [vmem:[%s1 + $0xae8] sm:$0xff]
  %v472 = vld [vmem:[%s1 + $0xaf0] sm:$0xff]
  %v473 = vld [vmem:[%s1 + $0xaf8] sm:$0xff]
  %v474 = vld [vmem:[%s1 + $0xb00] sm:$0xff]
  %v475 = vld [vmem:[%s1 + $0xb08] sm:$0xff]
  %v476 = vld [vmem:[%s1 + $0xb10] sm:$0xff]
  %v477 = vld [vmem:[%s1 + $0xb18] sm:$0xff]
  %v478 = vld [vmem:[%s1 + $0xb20] sm:$0xff]
  %v479 = vld [vmem:[%s1 + $0xb28] sm:$0xff]
  %v480 = vld [vmem:[%s1 + $0xb30] sm:$0xff]
  %v481 = vld [vmem:[%s1 + $0xb38] sm:$0xff]
  %v482 = vld [vmem:[%s1 + $0xb40] sm:$0xff]
  %v483 = vld [vmem:[%s1 + $0xb48] sm:$0xff]
  %v484 = vld [vmem:[%s1 + $0xb50] sm:$0xff]
  %v485 = vld [vmem:[%s1 + $0xb58] sm:$0xff]
  %v486 = vld [vmem:[%s1 + $0xb60] sm:$0xff]
  %v487 = vld [vmem:[%s1 + $0xb68] sm:$0xff]
  %v488 = vld [vmem:[%s1 + $0xb70] sm:$0xff]
  %v489 = vld [vmem:[%s1 + $0xb78] sm:$0xff]
  %v490 = vld [vmem:[%s1 + $0xb80] sm:$0xff]
  %v491 = vld [vmem:[%s1 + $0xb88] sm:$0xff]
  %v492 = vld [vmem:[%s1 + $0xb90] sm:$0xff]
  %v493 = vld [vmem:[%s1 + $0xb98] sm:$0xff]
  %v494 = vld [vmem:[%s1 + $0xba0] sm:$0xff]
  %v495 = vld [vmem:[%s1 + $0xba8] sm:$0xff]
  %v496 = vld [vmem:[%s1 + $0xbb0] sm:$0xff]
  %v497 = vld [vmem:[%s1 + $0xbb8] sm:$0xff]
  %v498 = vld [vmem:[%s1 + $0xbc0] sm:$0xff]
  %v499 = vld [vmem:[%s1 + $0xbc8] sm:$0xff]
  %v500 = vld [vmem:[%s1 + $0xbd0] sm:$0xff]
  %v501 = vld [vmem:[%s1 + $0xbd8] sm:$0xff]
  %v502 = vld [vmem:[%s1 + $0xbe0] sm:$0xff]
  %v503 = vld [vmem:[%s1 + $0xbe8] sm:$0xff]
  %v504 = vld [vmem:[%s1 + $0xbf0] sm:$0xff]
  %v505 = vld [vmem:[%s1 + $0xbf8] sm:$0xff]
  %v506 = vld [vmem:[%s2] sm:$0x3]
  %v508 = vperm.slane %v506, 0
  %v509 = vperm.slane %v506, 1
  %512 = vmatpush.msra.mxu0 %v152
  %513 = vmatpush.msra.mxu0 %v150
  %514 = vmatpush.msra.mxu0 %v148
  %515 = vmatpush.msra.mxu0 %v146
  %516 = vmatpush.msra.mxu0 %v144
  %517 = vmatpush.msra.mxu0 %v142
  %518 = vmatpush.msra.mxu0 %v140
  %519 = vmatpush.msra.mxu0 %v138
  %520 = vmatpush.msra.mxu0 %v136
  %521 = vmatpush.msra.mxu0 %v134
  %522 = vmatpush.msra.mxu0 %v132
  %523 = vmatpush.msra.mxu0 %v130
  %524 = vmatpush.msra.mxu0 %v128
  %525 = vmatpush.msra.mxu0 %v126
  %526 = vmatpush.msra.mxu0 %v124
  %527 = vmatpush.msra.mxu0 %v122
  %528 = vmatmul.f32.gmra.mxu0 %v14
  %v529 = vpop.f32.mrf.mxu0
  %v530 = vadd.f32 %v508, %v529
  %531 = vmatmul.f32.gmra.mxu0 %v26
  %v532 = vpop.f32.mrf.mxu0
  %v533 = vadd.f32 %v508, %v532
  %534 = vmatmul.f32.gmra.mxu0 %v38
  %v535 = vpop.f32.mrf.mxu0
  %v536 = vadd.f32 %v508, %v535
  %537 = vmatmul.f32.gmra.mxu0 %v50
  %v538 = vpop.f32.mrf.mxu0
  %v539 = vadd.f32 %v508, %v538
  %540 = vmatmul.f32.gmra.mxu0 %v62
  %v541 = vpop.f32.mrf.mxu0
  %v542 = vadd.f32 %v508, %v541
  %543 = vmatmul.f32.gmra.mxu0 %v74
  %v544 = vpop.f32.mrf.mxu0
  %v545 = vadd.f32 %v508, %v544
  %546 = vmatmul.f32.gmra.mxu0 %v86
  %v547 = vpop.f32.mrf.mxu0
  %v548 = vadd.f32 %v508, %v547
  %549 = vmatmul.f32.gmra.mxu0 %v98
  %v550 = vpop.f32.mrf.mxu0
  %v551 = vadd.f32 %v508, %v550
  %552 = vmatmul.f32.gmra.mxu0 %v110
  %v553 = vpop.f32.mrf.mxu0
  %v554 = vadd.f32 %v508, %v553
  %555 = vdwg.mxu0
  %556 = vmatpush.msra.mxu0 %v184
  %557 = vmatpush.msra.mxu0 %v182
  %558 = vmatpush.msra.mxu0 %v180
  %559 = vmatpush.msra.mxu0 %v178
  %560 = vmatpush.msra.mxu0 %v176
  %561 = vmatpush.msra.mxu0 %v174
  %562 = vmatpush.msra.mxu0 %v172
  %563 = vmatpush.msra.mxu0 %v170
  %564 = vmatpush.msra.mxu0 %v168
  %565 = vmatpush.msra.mxu0 %v166
  %566 = vmatpush.msra.mxu0 %v164
  %567 = vmatpush.msra.mxu0 %v162
  %568 = vmatpush.msra.mxu0 %v160
  %569 = vmatpush.msra.mxu0 %v158
  %570 = vmatpush.msra.mxu0 %v156
  %571 = vmatpush.msra.mxu0 %v154
  %572 = vmatmul.f32.gmra.mxu0 %v15
  %v573 = vpop.f32.mrf.mxu0
  %v574 = vadd.f32 %v530, %v573
  %575 = vmatmul.f32.gmra.mxu0 %v27
  %v576 = vpop.f32.mrf.mxu0
  %v577 = vadd.f32 %v533, %v576
  %578 = vmatmul.f32.gmra.mxu0 %v39
  %v579 = vpop.f32.mrf.mxu0
  %v580 = vadd.f32 %v536, %v579
  %581 = vmatmul.f32.gmra.mxu0 %v51
  %v582 = vpop.f32.mrf.mxu0
  %v583 = vadd.f32 %v539, %v582
  %584 = vmatmul.f32.gmra.mxu0 %v63
  %v585 = vpop.f32.mrf.mxu0
  %v586 = vadd.f32 %v542, %v585
  %587 = vmatmul.f32.gmra.mxu0 %v75
  %v588 = vpop.f32.mrf.mxu0
  %v589 = vadd.f32 %v545, %v588
  %590 = vmatmul.f32.gmra.mxu0 %v87
  %v591 = vpop.f32.mrf.mxu0
  %v592 = vadd.f32 %v548, %v591
  %593 = vmatmul.f32.gmra.mxu0 %v99
  %v594 = vpop.f32.mrf.mxu0
  %v595 = vadd.f32 %v551, %v594
  %596 = vmatmul.f32.gmra.mxu0 %v111
  %v597 = vpop.f32.mrf.mxu0
  %v598 = vadd.f32 %v554, %v597
  %599 = vdwg.mxu0
  %600 = vmatpush.msra.mxu0 %v216
  %601 = vmatpush.msra.mxu0 %v214
  %602 = vmatpush.msra.mxu0 %v212
  %603 = vmatpush.msra.mxu0 %v210
  %604 = vmatpush.msra.mxu0 %v208
  %605 = vmatpush.msra.mxu0 %v206
  %606 = vmatpush.msra.mxu0 %v204
  %607 = vmatpush.msra.mxu0 %v202
  %608 = vmatpush.msra.mxu0 %v200
  %609 = vmatpush.msra.mxu0 %v198
  %610 = vmatpush.msra.mxu0 %v196
  %611 = vmatpush.msra.mxu0 %v194
  %612 = vmatpush.msra.mxu0 %v192
  %613 = vmatpush.msra.mxu0 %v190
  %614 = vmatpush.msra.mxu0 %v188
  %615 = vmatpush.msra.mxu0 %v186
  %616 = vmatmul.f32.gmra.mxu0 %v16
  %v617 = vpop.f32.mrf.mxu0
  %v618 = vadd.f32 %v574, %v617
  %619 = vmatmul.f32.gmra.mxu0 %v28
  %v620 = vpop.f32.mrf.mxu0
  %v621 = vadd.f32 %v577, %v620
  %622 = vmatmul.f32.gmra.mxu0 %v40
  %v623 = vpop.f32.mrf.mxu0
  %v624 = vadd.f32 %v580, %v623
  %625 = vmatmul.f32.gmra.mxu0 %v52
  %v626 = vpop.f32.mrf.mxu0
  %v627 = vadd.f32 %v583, %v626
  %628 = vmatmul.f32.gmra.mxu0 %v64
  %v629 = vpop.f32.mrf.mxu0
  %v630 = vadd.f32 %v586, %v629
  %631 = vmatmul.f32.gmra.mxu0 %v76
  %v632 = vpop.f32.mrf.mxu0
  %v633 = vadd.f32 %v589, %v632
  %634 = vmatmul.f32.gmra.mxu0 %v88
  %v635 = vpop.f32.mrf.mxu0
  %v636 = vadd.f32 %v592, %v635
  %637 = vmatmul.f32.gmra.mxu0 %v100
  %v638 = vpop.f32.mrf.mxu0
  %v639 = vadd.f32 %v595, %v638
  %640 = vmatmul.f32.gmra.mxu0 %v112
  %v641 = vpop.f32.mrf.mxu0
  %v642 = vadd.f32 %v598, %v641
  %643 = vdwg.mxu0
  %644 = vmatpush.msra.mxu0 %v248
  %645 = vmatpush.msra.mxu0 %v246
  %646 = vmatpush.msra.mxu0 %v244
  %647 = vmatpush.msra.mxu0 %v242
  %648 = vmatpush.msra.mxu0 %v240
  %649 = vmatpush.msra.mxu0 %v238
  %650 = vmatpush.msra.mxu0 %v236
  %651 = vmatpush.msra.mxu0 %v234
  %652 = vmatpush.msra.mxu0 %v232
  %653 = vmatpush.msra.mxu0 %v230
  %654 = vmatpush.msra.mxu0 %v228
  %655 = vmatpush.msra.mxu0 %v226
  %656 = vmatpush.msra.mxu0 %v224
  %657 = vmatpush.msra.mxu0 %v222
  %658 = vmatpush.msra.mxu0 %v220
  %659 = vmatpush.msra.mxu0 %v218
  %660 = vmatmul.f32.gmra.mxu0 %v17
  %v661 = vpop.f32.mrf.mxu0
  %v662 = vadd.f32 %v618, %v661
  %663 = vmatmul.f32.gmra.mxu0 %v29
  %v664 = vpop.f32.mrf.mxu0
  %v665 = vadd.f32 %v621, %v664
  %666 = vmatmul.f32.gmra.mxu0 %v41
  %v667 = vpop.f32.mrf.mxu0
  %v668 = vadd.f32 %v624, %v667
  %669 = vmatmul.f32.gmra.mxu0 %v53
  %v670 = vpop.f32.mrf.mxu0
  %v671 = vadd.f32 %v627, %v670
  %672 = vmatmul.f32.gmra.mxu0 %v65
  %v673 = vpop.f32.mrf.mxu0
  %v674 = vadd.f32 %v630, %v673
  %675 = vmatmul.f32.gmra.mxu0 %v77
  %v676 = vpop.f32.mrf.mxu0
  %v677 = vadd.f32 %v633, %v676
  %678 = vmatmul.f32.gmra.mxu0 %v89
  %v679 = vpop.f32.mrf.mxu0
  %v680 = vadd.f32 %v636, %v679
  %681 = vmatmul.f32.gmra.mxu0 %v101
  %v682 = vpop.f32.mrf.mxu0
  %v683 = vadd.f32 %v639, %v682
  %684 = vmatmul.f32.gmra.mxu0 %v113
  %v685 = vpop.f32.mrf.mxu0
  %v686 = vadd.f32 %v642, %v685
  %687 = vdwg.mxu0
  %688 = vmatpush.msra.mxu0 %v280
  %689 = vmatpush.msra.mxu0 %v278
  %690 = vmatpush.msra.mxu0 %v276
  %691 = vmatpush.msra.mxu0 %v274
  %692 = vmatpush.msra.mxu0 %v272
  %693 = vmatpush.msra.mxu0 %v270
  %694 = vmatpush.msra.mxu0 %v268
  %695 = vmatpush.msra.mxu0 %v266
  %696 = vmatpush.msra.mxu0 %v264
  %697 = vmatpush.msra.mxu0 %v262
  %698 = vmatpush.msra.mxu0 %v260
  %699 = vmatpush.msra.mxu0 %v258
  %700 = vmatpush.msra.mxu0 %v256
  %701 = vmatpush.msra.mxu0 %v254
  %702 = vmatpush.msra.mxu0 %v252
  %703 = vmatpush.msra.mxu0 %v250
  %704 = vmatmul.f32.gmra.mxu0 %v18
  %v705 = vpop.f32.mrf.mxu0
  %v706 = vadd.f32 %v662, %v705
  %707 = vmatmul.f32.gmra.mxu0 %v30
  %v708 = vpop.f32.mrf.mxu0
  %v709 = vadd.f32 %v665, %v708
  %710 = vmatmul.f32.gmra.mxu0 %v42
  %v711 = vpop.f32.mrf.mxu0
  %v712 = vadd.f32 %v668, %v711
  %713 = vmatmul.f32.gmra.mxu0 %v54
  %v714 = vpop.f32.mrf.mxu0
  %v715 = vadd.f32 %v671, %v714
  %716 = vmatmul.f32.gmra.mxu0 %v66
  %v717 = vpop.f32.mrf.mxu0
  %v718 = vadd.f32 %v674, %v717
  %719 = vmatmul.f32.gmra.mxu0 %v78
  %v720 = vpop.f32.mrf.mxu0
  %v721 = vadd.f32 %v677, %v720
  %722 = vmatmul.f32.gmra.mxu0 %v90
  %v723 = vpop.f32.mrf.mxu0
  %v724 = vadd.f32 %v680, %v723
  %725 = vmatmul.f32.gmra.mxu0 %v102
  %v726 = vpop.f32.mrf.mxu0
  %v727 = vadd.f32 %v683, %v726
  %728 = vmatmul.f32.gmra.mxu0 %v114
  %v729 = vpop.f32.mrf.mxu0
  %v730 = vadd.f32 %v686, %v729
  %731 = vdwg.mxu0
  %732 = vmatpush.msra.mxu0 %v312
  %733 = vmatpush.msra.mxu0 %v310
  %734 = vmatpush.msra.mxu0 %v308
  %735 = vmatpush.msra.mxu0 %v306
  %736 = vmatpush.msra.mxu0 %v304
  %737 = vmatpush.msra.mxu0 %v302
  %738 = vmatpush.msra.mxu0 %v300
  %739 = vmatpush.msra.mxu0 %v298
  %740 = vmatpush.msra.mxu0 %v296
  %741 = vmatpush.msra.mxu0 %v294
  %742 = vmatpush.msra.mxu0 %v292
  %743 = vmatpush.msra.mxu0 %v290
  %744 = vmatpush.msra.mxu0 %v288
  %745 = vmatpush.msra.mxu0 %v286
  %746 = vmatpush.msra.mxu0 %v284
  %747 = vmatpush.msra.mxu0 %v282
  %748 = vmatmul.f32.gmra.mxu0 %v19
  %v749 = vpop.f32.mrf.mxu0
  %v750 = vadd.f32 %v706, %v749
  %751 = vmatmul.f32.gmra.mxu0 %v31
  %v752 = vpop.f32.mrf.mxu0
  %v753 = vadd.f32 %v709, %v752
  %754 = vmatmul.f32.gmra.mxu0 %v43
  %v755 = vpop.f32.mrf.mxu0
  %v756 = vadd.f32 %v712, %v755
  %757 = vmatmul.f32.gmra.mxu0 %v55
  %v758 = vpop.f32.mrf.mxu0
  %v759 = vadd.f32 %v715, %v758
  %760 = vmatmul.f32.gmra.mxu0 %v67
  %v761 = vpop.f32.mrf.mxu0
  %v762 = vadd.f32 %v718, %v761
  %763 = vmatmul.f32.gmra.mxu0 %v79
  %v764 = vpop.f32.mrf.mxu0
  %v765 = vadd.f32 %v721, %v764
  %766 = vmatmul.f32.gmra.mxu0 %v91
  %v767 = vpop.f32.mrf.mxu0
  %v768 = vadd.f32 %v724, %v767
  %769 = vmatmul.f32.gmra.mxu0 %v103
  %v770 = vpop.f32.mrf.mxu0
  %v771 = vadd.f32 %v727, %v770
  %772 = vmatmul.f32.gmra.mxu0 %v115
  %v773 = vpop.f32.mrf.mxu0
  %v774 = vadd.f32 %v730, %v773
  %775 = vdwg.mxu0
  %776 = vmatpush.msra.mxu0 %v344
  %777 = vmatpush.msra.mxu0 %v342
  %778 = vmatpush.msra.mxu0 %v340
  %779 = vmatpush.msra.mxu0 %v338
  %780 = vmatpush.msra.mxu0 %v336
  %781 = vmatpush.msra.mxu0 %v334
  %782 = vmatpush.msra.mxu0 %v332
  %783 = vmatpush.msra.mxu0 %v330
  %784 = vmatpush.msra.mxu0 %v328
  %785 = vmatpush.msra.mxu0 %v326
  %786 = vmatpush.msra.mxu0 %v324
  %787 = vmatpush.msra.mxu0 %v322
  %788 = vmatpush.msra.mxu0 %v320
  %789 = vmatpush.msra.mxu0 %v318
  %790 = vmatpush.msra.mxu0 %v316
  %791 = vmatpush.msra.mxu0 %v314
  %792 = vmatmul.f32.gmra.mxu0 %v20
  %v793 = vpop.f32.mrf.mxu0
  %v794 = vadd.f32 %v750, %v793
  %795 = vmatmul.f32.gmra.mxu0 %v32
  %v796 = vpop.f32.mrf.mxu0
  %v797 = vadd.f32 %v753, %v796
  %798 = vmatmul.f32.gmra.mxu0 %v44
  %v799 = vpop.f32.mrf.mxu0
  %v800 = vadd.f32 %v756, %v799
  %801 = vmatmul.f32.gmra.mxu0 %v56
  %v802 = vpop.f32.mrf.mxu0
  %v803 = vadd.f32 %v759, %v802
  %804 = vmatmul.f32.gmra.mxu0 %v68
  %v805 = vpop.f32.mrf.mxu0
  %v806 = vadd.f32 %v762, %v805
  %807 = vmatmul.f32.gmra.mxu0 %v80
  %v808 = vpop.f32.mrf.mxu0
  %v809 = vadd.f32 %v765, %v808
  %810 = vmatmul.f32.gmra.mxu0 %v92
  %v811 = vpop.f32.mrf.mxu0
  %v812 = vadd.f32 %v768, %v811
  %813 = vmatmul.f32.gmra.mxu0 %v104
  %v814 = vpop.f32.mrf.mxu0
  %v815 = vadd.f32 %v771, %v814
  %816 = vmatmul.f32.gmra.mxu0 %v116
  %v817 = vpop.f32.mrf.mxu0
  %v818 = vadd.f32 %v774, %v817
  %819 = vdwg.mxu0
  %820 = vmatpush.msra.mxu0 %v376
  %821 = vmatpush.msra.mxu0 %v374
  %822 = vmatpush.msra.mxu0 %v372
  %823 = vmatpush.msra.mxu0 %v370
  %824 = vmatpush.msra.mxu0 %v368
  %825 = vmatpush.msra.mxu0 %v366
  %826 = vmatpush.msra.mxu0 %v364
  %827 = vmatpush.msra.mxu0 %v362
  %828 = vmatpush.msra.mxu0 %v360
  %829 = vmatpush.msra.mxu0 %v358
  %830 = vmatpush.msra.mxu0 %v356
  %831 = vmatpush.msra.mxu0 %v354
  %832 = vmatpush.msra.mxu0 %v352
  %833 = vmatpush.msra.mxu0 %v350
  %834 = vmatpush.msra.mxu0 %v348
  %835 = vmatpush.msra.mxu0 %v346
  %836 = vmatmul.f32.gmra.mxu0 %v21
  %v837 = vpop.f32.mrf.mxu0
  %v838 = vadd.f32 %v794, %v837
  %839 = vmatmul.f32.gmra.mxu0 %v33
  %v840 = vpop.f32.mrf.mxu0
  %v841 = vadd.f32 %v797, %v840
  %842 = vmatmul.f32.gmra.mxu0 %v45
  %v843 = vpop.f32.mrf.mxu0
  %v844 = vadd.f32 %v800, %v843
  %845 = vmatmul.f32.gmra.mxu0 %v57
  %v846 = vpop.f32.mrf.mxu0
  %v847 = vadd.f32 %v803, %v846
  %848 = vmatmul.f32.gmra.mxu0 %v69
  %v849 = vpop.f32.mrf.mxu0
  %v850 = vadd.f32 %v806, %v849
  %851 = vmatmul.f32.gmra.mxu0 %v81
  %v852 = vpop.f32.mrf.mxu0
  %v853 = vadd.f32 %v809, %v852
  %854 = vmatmul.f32.gmra.mxu0 %v93
  %v855 = vpop.f32.mrf.mxu0
  %v856 = vadd.f32 %v812, %v855
  %857 = vmatmul.f32.gmra.mxu0 %v105
  %v858 = vpop.f32.mrf.mxu0
  %v859 = vadd.f32 %v815, %v858
  %860 = vmatmul.f32.gmra.mxu0 %v117
  %v861 = vpop.f32.mrf.mxu0
  %v862 = vadd.f32 %v818, %v861
  %863 = vdwg.mxu0
  %864 = vmatpush.msra.mxu0 %v408
  %865 = vmatpush.msra.mxu0 %v406
  %866 = vmatpush.msra.mxu0 %v404
  %867 = vmatpush.msra.mxu0 %v402
  %868 = vmatpush.msra.mxu0 %v400
  %869 = vmatpush.msra.mxu0 %v398
  %870 = vmatpush.msra.mxu0 %v396
  %871 = vmatpush.msra.mxu0 %v394
  %872 = vmatpush.msra.mxu0 %v392
  %873 = vmatpush.msra.mxu0 %v390
  %874 = vmatpush.msra.mxu0 %v388
  %875 = vmatpush.msra.mxu0 %v386
  %876 = vmatpush.msra.mxu0 %v384
  %877 = vmatpush.msra.mxu0 %v382
  %878 = vmatpush.msra.mxu0 %v380
  %879 = vmatpush.msra.mxu0 %v378
  %880 = vmatmul.f32.gmra.mxu0 %v22
  %v881 = vpop.f32.mrf.mxu0
  %v882 = vadd.f32 %v838, %v881
  %883 = vmatmul.f32.gmra.mxu0 %v34
  %v884 = vpop.f32.mrf.mxu0
  %v885 = vadd.f32 %v841, %v884
  %886 = vmatmul.f32.gmra.mxu0 %v46
  %v887 = vpop.f32.mrf.mxu0
  %v888 = vadd.f32 %v844, %v887
  %889 = vmatmul.f32.gmra.mxu0 %v58
  %v890 = vpop.f32.mrf.mxu0
  %v891 = vadd.f32 %v847, %v890
  %892 = vmatmul.f32.gmra.mxu0 %v70
  %v893 = vpop.f32.mrf.mxu0
  %v894 = vadd.f32 %v850, %v893
  %895 = vmatmul.f32.gmra.mxu0 %v82
  %v896 = vpop.f32.mrf.mxu0
  %v897 = vadd.f32 %v853, %v896
  %898 = vmatmul.f32.gmra.mxu0 %v94
  %v899 = vpop.f32.mrf.mxu0
  %v900 = vadd.f32 %v856, %v899
  %901 = vmatmul.f32.gmra.mxu0 %v106
  %v902 = vpop.f32.mrf.mxu0
  %v903 = vadd.f32 %v859, %v902
  %904 = vmatmul.f32.gmra.mxu0 %v118
  %v905 = vpop.f32.mrf.mxu0
  %v906 = vadd.f32 %v862, %v905
  %907 = vdwg.mxu0
  %908 = vmatpush.msra.mxu0 %v440
  %909 = vmatpush.msra.mxu0 %v438
  %910 = vmatpush.msra.mxu0 %v436
  %911 = vmatpush.msra.mxu0 %v434
  %912 = vmatpush.msra.mxu0 %v432
  %913 = vmatpush.msra.mxu0 %v430
  %914 = vmatpush.msra.mxu0 %v428
  %915 = vmatpush.msra.mxu0 %v426
  %916 = vmatpush.msra.mxu0 %v424
  %917 = vmatpush.msra.mxu0 %v422
  %918 = vmatpush.msra.mxu0 %v420
  %919 = vmatpush.msra.mxu0 %v418
  %920 = vmatpush.msra.mxu0 %v416
  %921 = vmatpush.msra.mxu0 %v414
  %922 = vmatpush.msra.mxu0 %v412
  %923 = vmatpush.msra.mxu0 %v410
  %924 = vmatmul.f32.gmra.mxu0 %v23
  %v925 = vpop.f32.mrf.mxu0
  %v926 = vadd.f32 %v882, %v925
  %927 = vmatmul.f32.gmra.mxu0 %v35
  %v928 = vpop.f32.mrf.mxu0
  %v929 = vadd.f32 %v885, %v928
  %930 = vmatmul.f32.gmra.mxu0 %v47
  %v931 = vpop.f32.mrf.mxu0
  %v932 = vadd.f32 %v888, %v931
  %933 = vmatmul.f32.gmra.mxu0 %v59
  %v934 = vpop.f32.mrf.mxu0
  %v935 = vadd.f32 %v891, %v934
  %936 = vmatmul.f32.gmra.mxu0 %v71
  %v937 = vpop.f32.mrf.mxu0
  %v938 = vadd.f32 %v894, %v937
  %939 = vmatmul.f32.gmra.mxu0 %v83
  %v940 = vpop.f32.mrf.mxu0
  %v941 = vadd.f32 %v897, %v940
  %942 = vmatmul.f32.gmra.mxu0 %v95
  %v943 = vpop.f32.mrf.mxu0
  %v944 = vadd.f32 %v900, %v943
  %945 = vmatmul.f32.gmra.mxu0 %v107
  %v946 = vpop.f32.mrf.mxu0
  %v947 = vadd.f32 %v903, %v946
  %948 = vmatmul.f32.gmra.mxu0 %v119
  %v949 = vpop.f32.mrf.mxu0
  %v950 = vadd.f32 %v906, %v949
  %951 = vdwg.mxu0
  %952 = vmatpush.msra.mxu0 %v472
  %953 = vmatpush.msra.mxu0 %v470
  %954 = vmatpush.msra.mxu0 %v468
  %955 = vmatpush.msra.mxu0 %v466
  %956 = vmatpush.msra.mxu0 %v464
  %957 = vmatpush.msra.mxu0 %v462
  %958 = vmatpush.msra.mxu0 %v460
  %959 = vmatpush.msra.mxu0 %v458
  %960 = vmatpush.msra.mxu0 %v456
  %961 = vmatpush.msra.mxu0 %v454
  %962 = vmatpush.msra.mxu0 %v452
  %963 = vmatpush.msra.mxu0 %v450
  %964 = vmatpush.msra.mxu0 %v448
  %965 = vmatpush.msra.mxu0 %v446
  %966 = vmatpush.msra.mxu0 %v444
  %967 = vmatpush.msra.mxu0 %v442
  %968 = vmatmul.f32.gmra.mxu0 %v24
  %v969 = vpop.f32.mrf.mxu0
  %v970 = vadd.f32 %v926, %v969
  %971 = vmatmul.f32.gmra.mxu0 %v36
  %v972 = vpop.f32.mrf.mxu0
  %v973 = vadd.f32 %v929, %v972
  %974 = vmatmul.f32.gmra.mxu0 %v48
  %v975 = vpop.f32.mrf.mxu0
  %v976 = vadd.f32 %v932, %v975
  %977 = vmatmul.f32.gmra.mxu0 %v60
  %v978 = vpop.f32.mrf.mxu0
  %v979 = vadd.f32 %v935, %v978
  %980 = vmatmul.f32.gmra.mxu0 %v72
  %v981 = vpop.f32.mrf.mxu0
  %v982 = vadd.f32 %v938, %v981
  %983 = vmatmul.f32.gmra.mxu0 %v84
  %v984 = vpop.f32.mrf.mxu0
  %v985 = vadd.f32 %v941, %v984
  %986 = vmatmul.f32.gmra.mxu0 %v96
  %v987 = vpop.f32.mrf.mxu0
  %v988 = vadd.f32 %v944, %v987
  %989 = vmatmul.f32.gmra.mxu0 %v108
  %v990 = vpop.f32.mrf.mxu0
  %v991 = vadd.f32 %v947, %v990
  %992 = vmatmul.f32.gmra.mxu0 %v120
  %v993 = vpop.f32.mrf.mxu0
  %v994 = vadd.f32 %v950, %v993
  %995 = vdwg.mxu0
  %996 = vmatpush.msra.mxu0 %v504
  %997 = vmatpush.msra.mxu0 %v502
  %998 = vmatpush.msra.mxu0 %v500
  %999 = vmatpush.msra.mxu0 %v498
  %1000 = vmatpush.msra.mxu0 %v496
  %1001 = vmatpush.msra.mxu0 %v494
  %1002 = vmatpush.msra.mxu0 %v492
  %1003 = vmatpush.msra.mxu0 %v490
  %1004 = vmatpush.msra.mxu0 %v488
  %1005 = vmatpush.msra.mxu0 %v486
  %1006 = vmatpush.msra.mxu0 %v484
  %1007 = vmatpush.msra.mxu0 %v482
  %1008 = vmatpush.msra.mxu0 %v480
  %1009 = vmatpush.msra.mxu0 %v478
  %1010 = vmatpush.msra.mxu0 %v476
  %1011 = vmatpush.msra.mxu0 %v474
  %1012 = vmatmul.f32.gmra.mxu0 %v25
  %v1013 = vpop.f32.mrf.mxu0
  %v1014 = vadd.f32 %v970, %v1013
  %1015 = vmatmul.f32.gmra.mxu0 %v37
  %v1016 = vpop.f32.mrf.mxu0
  %v1017 = vadd.f32 %v973, %v1016
  %1018 = vmatmul.f32.gmra.mxu0 %v49
  %v1019 = vpop.f32.mrf.mxu0
  %v1020 = vadd.f32 %v976, %v1019
  %1021 = vmatmul.f32.gmra.mxu0 %v61
  %v1022 = vpop.f32.mrf.mxu0
  %v1023 = vadd.f32 %v979, %v1022
  %1024 = vmatmul.f32.gmra.mxu0 %v73
  %v1025 = vpop.f32.mrf.mxu0
  %v1026 = vadd.f32 %v982, %v1025
  %1027 = vmatmul.f32.gmra.mxu0 %v85
  %v1028 = vpop.f32.mrf.mxu0
  %v1029 = vadd.f32 %v985, %v1028
  %1030 = vmatmul.f32.gmra.mxu0 %v97
  %v1031 = vpop.f32.mrf.mxu0
  %v1032 = vadd.f32 %v988, %v1031
  %1033 = vmatmul.f32.gmra.mxu0 %v109
  %v1034 = vpop.f32.mrf.mxu0
  %v1035 = vadd.f32 %v991, %v1034
  %1036 = vmatmul.f32.gmra.mxu0 %v121
  %v1037 = vpop.f32.mrf.mxu0
  %v1038 = vadd.f32 %v994, %v1037
  %1039 = vdwg.mxu0
  %1040 = vmatpush.msra.mxu0 %v153
  %1041 = vmatpush.msra.mxu0 %v151
  %1042 = vmatpush.msra.mxu0 %v149
  %1043 = vmatpush.msra.mxu0 %v147
  %1044 = vmatpush.msra.mxu0 %v145
  %1045 = vmatpush.msra.mxu0 %v143
  %1046 = vmatpush.msra.mxu0 %v141
  %1047 = vmatpush.msra.mxu0 %v139
  %1048 = vmatpush.msra.mxu0 %v137
  %1049 = vmatpush.msra.mxu0 %v135
  %1050 = vmatpush.msra.mxu0 %v133
  %1051 = vmatpush.msra.mxu0 %v131
  %1052 = vmatpush.msra.mxu0 %v129
  %1053 = vmatpush.msra.mxu0 %v127
  %1054 = vmatpush.msra.mxu0 %v125
  %1055 = vmatpush.msra.mxu0 %v123
  %1056 = vmatmul.f32.gmra.mxu0 %v14
  %v1057 = vpop.f32.mrf.mxu0
  %v1058 = vadd.f32 %v509, %v1057
  %1059 = vmatmul.f32.gmra.mxu0 %v26
  %v1060 = vpop.f32.mrf.mxu0
  %v1061 = vadd.f32 %v509, %v1060
  %1062 = vmatmul.f32.gmra.mxu0 %v38
  %v1063 = vpop.f32.mrf.mxu0
  %v1064 = vadd.f32 %v509, %v1063
  %1065 = vmatmul.f32.gmra.mxu0 %v50
  %v1066 = vpop.f32.mrf.mxu0
  %v1067 = vadd.f32 %v509, %v1066
  %1068 = vmatmul.f32.gmra.mxu0 %v62
  %v1069 = vpop.f32.mrf.mxu0
  %v1070 = vadd.f32 %v509, %v1069
  %1071 = vmatmul.f32.gmra.mxu0 %v74
  %v1072 = vpop.f32.mrf.mxu0
  %v1073 = vadd.f32 %v509, %v1072
  %1074 = vmatmul.f32.gmra.mxu0 %v86
  %v1075 = vpop.f32.mrf.mxu0
  %v1076 = vadd.f32 %v509, %v1075
  %1077 = vmatmul.f32.gmra.mxu0 %v98
  %v1078 = vpop.f32.mrf.mxu0
  %v1079 = vadd.f32 %v509, %v1078
  %1080 = vmatmul.f32.gmra.mxu0 %v110
  %v1081 = vpop.f32.mrf.mxu0
  %v1082 = vadd.f32 %v509, %v1081
  %1083 = vdwg.mxu0
  %1084 = vmatpush.msra.mxu0 %v185
  %1085 = vmatpush.msra.mxu0 %v183
  %1086 = vmatpush.msra.mxu0 %v181
  %1087 = vmatpush.msra.mxu0 %v179
  %1088 = vmatpush.msra.mxu0 %v177
  %1089 = vmatpush.msra.mxu0 %v175
  %1090 = vmatpush.msra.mxu0 %v173
  %1091 = vmatpush.msra.mxu0 %v171
  %1092 = vmatpush.msra.mxu0 %v169
  %1093 = vmatpush.msra.mxu0 %v167
  %1094 = vmatpush.msra.mxu0 %v165
  %1095 = vmatpush.msra.mxu0 %v163
  %1096 = vmatpush.msra.mxu0 %v161
  %1097 = vmatpush.msra.mxu0 %v159
  %1098 = vmatpush.msra.mxu0 %v157
  %1099 = vmatpush.msra.mxu0 %v155
  %1100 = vmatmul.f32.gmra.mxu0 %v15
  %v1101 = vpop.f32.mrf.mxu0
  %v1102 = vadd.f32 %v1058, %v1101
  %1103 = vmatmul.f32.gmra.mxu0 %v27
  %v1104 = vpop.f32.mrf.mxu0
  %v1105 = vadd.f32 %v1061, %v1104
  %1106 = vmatmul.f32.gmra.mxu0 %v39
  %v1107 = vpop.f32.mrf.mxu0
  %v1108 = vadd.f32 %v1064, %v1107
  %1109 = vmatmul.f32.gmra.mxu0 %v51
  %v1110 = vpop.f32.mrf.mxu0
  %v1111 = vadd.f32 %v1067, %v1110
  %1112 = vmatmul.f32.gmra.mxu0 %v63
  %v1113 = vpop.f32.mrf.mxu0
  %v1114 = vadd.f32 %v1070, %v1113
  %1115 = vmatmul.f32.gmra.mxu0 %v75
  %v1116 = vpop.f32.mrf.mxu0
  %v1117 = vadd.f32 %v1073, %v1116
  %1118 = vmatmul.f32.gmra.mxu0 %v87
  %v1119 = vpop.f32.mrf.mxu0
  %v1120 = vadd.f32 %v1076, %v1119
  %1121 = vmatmul.f32.gmra.mxu0 %v99
  %v1122 = vpop.f32.mrf.mxu0
  %v1123 = vadd.f32 %v1079, %v1122
  %1124 = vmatmul.f32.gmra.mxu0 %v111
  %v1125 = vpop.f32.mrf.mxu0
  %v1126 = vadd.f32 %v1082, %v1125
  %1127 = vdwg.mxu0
  %1128 = vmatpush.msra.mxu0 %v217
  %1129 = vmatpush.msra.mxu0 %v215
  %1130 = vmatpush.msra.mxu0 %v213
  %1131 = vmatpush.msra.mxu0 %v211
  %1132 = vmatpush.msra.mxu0 %v209
  %1133 = vmatpush.msra.mxu0 %v207
  %1134 = vmatpush.msra.mxu0 %v205
  %1135 = vmatpush.msra.mxu0 %v203
  %1136 = vmatpush.msra.mxu0 %v201
  %1137 = vmatpush.msra.mxu0 %v199
  %1138 = vmatpush.msra.mxu0 %v197
  %1139 = vmatpush.msra.mxu0 %v195
  %1140 = vmatpush.msra.mxu0 %v193
  %1141 = vmatpush.msra.mxu0 %v191
  %1142 = vmatpush.msra.mxu0 %v189
  %1143 = vmatpush.msra.mxu0 %v187
  %1144 = vmatmul.f32.gmra.mxu0 %v16
  %v1145 = vpop.f32.mrf.mxu0
  %v1146 = vadd.f32 %v1102, %v1145
  %1147 = vmatmul.f32.gmra.mxu0 %v28
  %v1148 = vpop.f32.mrf.mxu0
  %v1149 = vadd.f32 %v1105, %v1148
  %1150 = vmatmul.f32.gmra.mxu0 %v40
  %v1151 = vpop.f32.mrf.mxu0
  %v1152 = vadd.f32 %v1108, %v1151
  %1153 = vmatmul.f32.gmra.mxu0 %v52
  %v1154 = vpop.f32.mrf.mxu0
  %v1155 = vadd.f32 %v1111, %v1154
  %1156 = vmatmul.f32.gmra.mxu0 %v64
  %v1157 = vpop.f32.mrf.mxu0
  %v1158 = vadd.f32 %v1114, %v1157
  %1159 = vmatmul.f32.gmra.mxu0 %v76
  %v1160 = vpop.f32.mrf.mxu0
  %v1161 = vadd.f32 %v1117, %v1160
  %1162 = vmatmul.f32.gmra.mxu0 %v88
  %v1163 = vpop.f32.mrf.mxu0
  %v1164 = vadd.f32 %v1120, %v1163
  %1165 = vmatmul.f32.gmra.mxu0 %v100
  %v1166 = vpop.f32.mrf.mxu0
  %v1167 = vadd.f32 %v1123, %v1166
  %1168 = vmatmul.f32.gmra.mxu0 %v112
  %v1169 = vpop.f32.mrf.mxu0
  %v1170 = vadd.f32 %v1126, %v1169
  %1171 = vdwg.mxu0
  %1172 = vmatpush.msra.mxu0 %v249
  %1173 = vmatpush.msra.mxu0 %v247
  %1174 = vmatpush.msra.mxu0 %v245
  %1175 = vmatpush.msra.mxu0 %v243
  %1176 = vmatpush.msra.mxu0 %v241
  %1177 = vmatpush.msra.mxu0 %v239
  %1178 = vmatpush.msra.mxu0 %v237
  %1179 = vmatpush.msra.mxu0 %v235
  %1180 = vmatpush.msra.mxu0 %v233
  %1181 = vmatpush.msra.mxu0 %v231
  %1182 = vmatpush.msra.mxu0 %v229
  %1183 = vmatpush.msra.mxu0 %v227
  %1184 = vmatpush.msra.mxu0 %v225
  %1185 = vmatpush.msra.mxu0 %v223
  %1186 = vmatpush.msra.mxu0 %v221
  %1187 = vmatpush.msra.mxu0 %v219
  %1188 = vmatmul.f32.gmra.mxu0 %v17
  %v1189 = vpop.f32.mrf.mxu0
  %v1190 = vadd.f32 %v1146, %v1189
  %1191 = vmatmul.f32.gmra.mxu0 %v29
  %v1192 = vpop.f32.mrf.mxu0
  %v1193 = vadd.f32 %v1149, %v1192
  %1194 = vmatmul.f32.gmra.mxu0 %v41
  %v1195 = vpop.f32.mrf.mxu0
  %v1196 = vadd.f32 %v1152, %v1195
  %1197 = vmatmul.f32.gmra.mxu0 %v53
  %v1198 = vpop.f32.mrf.mxu0
  %v1199 = vadd.f32 %v1155, %v1198
  %1200 = vmatmul.f32.gmra.mxu0 %v65
  %v1201 = vpop.f32.mrf.mxu0
  %v1202 = vadd.f32 %v1158, %v1201
  %1203 = vmatmul.f32.gmra.mxu0 %v77
  %v1204 = vpop.f32.mrf.mxu0
  %v1205 = vadd.f32 %v1161, %v1204
  %1206 = vmatmul.f32.gmra.mxu0 %v89
  %v1207 = vpop.f32.mrf.mxu0
  %v1208 = vadd.f32 %v1164, %v1207
  %1209 = vmatmul.f32.gmra.mxu0 %v101
  %v1210 = vpop.f32.mrf.mxu0
  %v1211 = vadd.f32 %v1167, %v1210
  %1212 = vmatmul.f32.gmra.mxu0 %v113
  %v1213 = vpop.f32.mrf.mxu0
  %v1214 = vadd.f32 %v1170, %v1213
  %1215 = vdwg.mxu0
  %1216 = vmatpush.msra.mxu0 %v281
  %1217 = vmatpush.msra.mxu0 %v279
  %1218 = vmatpush.msra.mxu0 %v277
  %1219 = vmatpush.msra.mxu0 %v275
  %1220 = vmatpush.msra.mxu0 %v273
  %1221 = vmatpush.msra.mxu0 %v271
  %1222 = vmatpush.msra.mxu0 %v269
  %1223 = vmatpush.msra.mxu0 %v267
  %1224 = vmatpush.msra.mxu0 %v265
  %1225 = vmatpush.msra.mxu0 %v263
  %1226 = vmatpush.msra.mxu0 %v261
  %1227 = vmatpush.msra.mxu0 %v259
  %1228 = vmatpush.msra.mxu0 %v257
  %1229 = vmatpush.msra.mxu0 %v255
  %1230 = vmatpush.msra.mxu0 %v253
  %1231 = vmatpush.msra.mxu0 %v251
  %1232 = vmatmul.f32.gmra.mxu0 %v18
  %v1233 = vpop.f32.mrf.mxu0
  %v1234 = vadd.f32 %v1190, %v1233
  %1235 = vmatmul.f32.gmra.mxu0 %v30
  %v1236 = vpop.f32.mrf.mxu0
  %v1237 = vadd.f32 %v1193, %v1236
  %1238 = vmatmul.f32.gmra.mxu0 %v42
  %v1239 = vpop.f32.mrf.mxu0
  %v1240 = vadd.f32 %v1196, %v1239
  %1241 = vmatmul.f32.gmra.mxu0 %v54
  %v1242 = vpop.f32.mrf.mxu0
  %v1243 = vadd.f32 %v1199, %v1242
  %1244 = vmatmul.f32.gmra.mxu0 %v66
  %v1245 = vpop.f32.mrf.mxu0
  %v1246 = vadd.f32 %v1202, %v1245
  %1247 = vmatmul.f32.gmra.mxu0 %v78
  %v1248 = vpop.f32.mrf.mxu0
  %v1249 = vadd.f32 %v1205, %v1248
  %1250 = vmatmul.f32.gmra.mxu0 %v90
  %v1251 = vpop.f32.mrf.mxu0
  %v1252 = vadd.f32 %v1208, %v1251
  %1253 = vmatmul.f32.gmra.mxu0 %v102
  %v1254 = vpop.f32.mrf.mxu0
  %v1255 = vadd.f32 %v1211, %v1254
  %1256 = vmatmul.f32.gmra.mxu0 %v114
  %v1257 = vpop.f32.mrf.mxu0
  %v1258 = vadd.f32 %v1214, %v1257
  %1259 = vdwg.mxu0
  %1260 = vmatpush.msra.mxu0 %v313
  %1261 = vmatpush.msra.mxu0 %v311
  %1262 = vmatpush.msra.mxu0 %v309
  %1263 = vmatpush.msra.mxu0 %v307
  %1264 = vmatpush.msra.mxu0 %v305
  %1265 = vmatpush.msra.mxu0 %v303
  %1266 = vmatpush.msra.mxu0 %v301
  %1267 = vmatpush.msra.mxu0 %v299
  %1268 = vmatpush.msra.mxu0 %v297
  %1269 = vmatpush.msra.mxu0 %v295
  %1270 = vmatpush.msra.mxu0 %v293
  %1271 = vmatpush.msra.mxu0 %v291
  %1272 = vmatpush.msra.mxu0 %v289
  %1273 = vmatpush.msra.mxu0 %v287
  %1274 = vmatpush.msra.mxu0 %v285
  %1275 = vmatpush.msra.mxu0 %v283
  %1276 = vmatmul.f32.gmra.mxu0 %v19
  %v1277 = vpop.f32.mrf.mxu0
  %v1278 = vadd.f32 %v1234, %v1277
  %1279 = vmatmul.f32.gmra.mxu0 %v31
  %v1280 = vpop.f32.mrf.mxu0
  %v1281 = vadd.f32 %v1237, %v1280
  %1282 = vmatmul.f32.gmra.mxu0 %v43
  %v1283 = vpop.f32.mrf.mxu0
  %v1284 = vadd.f32 %v1240, %v1283
  %1285 = vmatmul.f32.gmra.mxu0 %v55
  %v1286 = vpop.f32.mrf.mxu0
  %v1287 = vadd.f32 %v1243, %v1286
  %1288 = vmatmul.f32.gmra.mxu0 %v67
  %v1289 = vpop.f32.mrf.mxu0
  %v1290 = vadd.f32 %v1246, %v1289
  %1291 = vmatmul.f32.gmra.mxu0 %v79
  %v1292 = vpop.f32.mrf.mxu0
  %v1293 = vadd.f32 %v1249, %v1292
  %1294 = vmatmul.f32.gmra.mxu0 %v91
  %v1295 = vpop.f32.mrf.mxu0
  %v1296 = vadd.f32 %v1252, %v1295
  %1297 = vmatmul.f32.gmra.mxu0 %v103
  %v1298 = vpop.f32.mrf.mxu0
  %v1299 = vadd.f32 %v1255, %v1298
  %1300 = vmatmul.f32.gmra.mxu0 %v115
  %v1301 = vpop.f32.mrf.mxu0
  %v1302 = vadd.f32 %v1258, %v1301
  %1303 = vdwg.mxu0
  %1304 = vmatpush.msra.mxu0 %v345
  %1305 = vmatpush.msra.mxu0 %v343
  %1306 = vmatpush.msra.mxu0 %v341
  %1307 = vmatpush.msra.mxu0 %v339
  %1308 = vmatpush.msra.mxu0 %v337
  %1309 = vmatpush.msra.mxu0 %v335
  %1310 = vmatpush.msra.mxu0 %v333
  %1311 = vmatpush.msra.mxu0 %v331
  %1312 = vmatpush.msra.mxu0 %v329
  %1313 = vmatpush.msra.mxu0 %v327
  %1314 = vmatpush.msra.mxu0 %v325
  %1315 = vmatpush.msra.mxu0 %v323
  %1316 = vmatpush.msra.mxu0 %v321
  %1317 = vmatpush.msra.mxu0 %v319
  %1318 = vmatpush.msra.mxu0 %v317
  %1319 = vmatpush.msra.mxu0 %v315
  %1320 = vmatmul.f32.gmra.mxu0 %v20
  %v1321 = vpop.f32.mrf.mxu0
  %v1322 = vadd.f32 %v1278, %v1321
  %1323 = vmatmul.f32.gmra.mxu0 %v32
  %v1324 = vpop.f32.mrf.mxu0
  %v1325 = vadd.f32 %v1281, %v1324
  %1326 = vmatmul.f32.gmra.mxu0 %v44
  %v1327 = vpop.f32.mrf.mxu0
  %v1328 = vadd.f32 %v1284, %v1327
  %1329 = vmatmul.f32.gmra.mxu0 %v56
  %v1330 = vpop.f32.mrf.mxu0
  %v1331 = vadd.f32 %v1287, %v1330
  %1332 = vmatmul.f32.gmra.mxu0 %v68
  %v1333 = vpop.f32.mrf.mxu0
  %v1334 = vadd.f32 %v1290, %v1333
  %1335 = vmatmul.f32.gmra.mxu0 %v80
  %v1336 = vpop.f32.mrf.mxu0
  %v1337 = vadd.f32 %v1293, %v1336
  %1338 = vmatmul.f32.gmra.mxu0 %v92
  %v1339 = vpop.f32.mrf.mxu0
  %v1340 = vadd.f32 %v1296, %v1339
  %1341 = vmatmul.f32.gmra.mxu0 %v104
  %v1342 = vpop.f32.mrf.mxu0
  %v1343 = vadd.f32 %v1299, %v1342
  %1344 = vmatmul.f32.gmra.mxu0 %v116
  %v1345 = vpop.f32.mrf.mxu0
  %v1346 = vadd.f32 %v1302, %v1345
  %1347 = vdwg.mxu0
  %1348 = vmatpush.msra.mxu0 %v377
  %1349 = vmatpush.msra.mxu0 %v375
  %1350 = vmatpush.msra.mxu0 %v373
  %1351 = vmatpush.msra.mxu0 %v371
  %1352 = vmatpush.msra.mxu0 %v369
  %1353 = vmatpush.msra.mxu0 %v367
  %1354 = vmatpush.msra.mxu0 %v365
  %1355 = vmatpush.msra.mxu0 %v363
  %1356 = vmatpush.msra.mxu0 %v361
  %1357 = vmatpush.msra.mxu0 %v359
  %1358 = vmatpush.msra.mxu0 %v357
  %1359 = vmatpush.msra.mxu0 %v355
  %1360 = vmatpush.msra.mxu0 %v353
  %1361 = vmatpush.msra.mxu0 %v351
  %1362 = vmatpush.msra.mxu0 %v349
  %1363 = vmatpush.msra.mxu0 %v347
  %1364 = vmatmul.f32.gmra.mxu0 %v21
  %v1365 = vpop.f32.mrf.mxu0
  %v1366 = vadd.f32 %v1322, %v1365
  %1367 = vmatmul.f32.gmra.mxu0 %v33
  %v1368 = vpop.f32.mrf.mxu0
  %v1369 = vadd.f32 %v1325, %v1368
  %1370 = vmatmul.f32.gmra.mxu0 %v45
  %v1371 = vpop.f32.mrf.mxu0
  %v1372 = vadd.f32 %v1328, %v1371
  %1373 = vmatmul.f32.gmra.mxu0 %v57
  %v1374 = vpop.f32.mrf.mxu0
  %v1375 = vadd.f32 %v1331, %v1374
  %1376 = vmatmul.f32.gmra.mxu0 %v69
  %v1377 = vpop.f32.mrf.mxu0
  %v1378 = vadd.f32 %v1334, %v1377
  %1379 = vmatmul.f32.gmra.mxu0 %v81
  %v1380 = vpop.f32.mrf.mxu0
  %v1381 = vadd.f32 %v1337, %v1380
  %1382 = vmatmul.f32.gmra.mxu0 %v93
  %v1383 = vpop.f32.mrf.mxu0
  %v1384 = vadd.f32 %v1340, %v1383
  %1385 = vmatmul.f32.gmra.mxu0 %v105
  %v1386 = vpop.f32.mrf.mxu0
  %v1387 = vadd.f32 %v1343, %v1386
  %1388 = vmatmul.f32.gmra.mxu0 %v117
  %v1389 = vpop.f32.mrf.mxu0
  %v1390 = vadd.f32 %v1346, %v1389
  %1391 = vdwg.mxu0
  %1392 = vmatpush.msra.mxu0 %v409
  %1393 = vmatpush.msra.mxu0 %v407
  %1394 = vmatpush.msra.mxu0 %v405
  %1395 = vmatpush.msra.mxu0 %v403
  %1396 = vmatpush.msra.mxu0 %v401
  %1397 = vmatpush.msra.mxu0 %v399
  %1398 = vmatpush.msra.mxu0 %v397
  %1399 = vmatpush.msra.mxu0 %v395
  %1400 = vmatpush.msra.mxu0 %v393
  %1401 = vmatpush.msra.mxu0 %v391
  %1402 = vmatpush.msra.mxu0 %v389
  %1403 = vmatpush.msra.mxu0 %v387
  %1404 = vmatpush.msra.mxu0 %v385
  %1405 = vmatpush.msra.mxu0 %v383
  %1406 = vmatpush.msra.mxu0 %v381
  %1407 = vmatpush.msra.mxu0 %v379
  %1408 = vmatmul.f32.gmra.mxu0 %v22
  %v1409 = vpop.f32.mrf.mxu0
  %v1410 = vadd.f32 %v1366, %v1409
  %1411 = vmatmul.f32.gmra.mxu0 %v34
  %v1412 = vpop.f32.mrf.mxu0
  %v1413 = vadd.f32 %v1369, %v1412
  %1414 = vmatmul.f32.gmra.mxu0 %v46
  %v1415 = vpop.f32.mrf.mxu0
  %v1416 = vadd.f32 %v1372, %v1415
  %1417 = vmatmul.f32.gmra.mxu0 %v58
  %v1418 = vpop.f32.mrf.mxu0
  %v1419 = vadd.f32 %v1375, %v1418
  %1420 = vmatmul.f32.gmra.mxu0 %v70
  %v1421 = vpop.f32.mrf.mxu0
  %v1422 = vadd.f32 %v1378, %v1421
  %1423 = vmatmul.f32.gmra.mxu0 %v82
  %v1424 = vpop.f32.mrf.mxu0
  %v1425 = vadd.f32 %v1381, %v1424
  %1426 = vmatmul.f32.gmra.mxu0 %v94
  %v1427 = vpop.f32.mrf.mxu0
  %v1428 = vadd.f32 %v1384, %v1427
  %1429 = vmatmul.f32.gmra.mxu0 %v106
  %v1430 = vpop.f32.mrf.mxu0
  %v1431 = vadd.f32 %v1387, %v1430
  %1432 = vmatmul.f32.gmra.mxu0 %v118
  %v1433 = vpop.f32.mrf.mxu0
  %v1434 = vadd.f32 %v1390, %v1433
  %1435 = vdwg.mxu0
  %1436 = vmatpush.msra.mxu0 %v441
  %1437 = vmatpush.msra.mxu0 %v439
  %1438 = vmatpush.msra.mxu0 %v437
  %1439 = vmatpush.msra.mxu0 %v435
  %1440 = vmatpush.msra.mxu0 %v433
  %1441 = vmatpush.msra.mxu0 %v431
  %1442 = vmatpush.msra.mxu0 %v429
  %1443 = vmatpush.msra.mxu0 %v427
  %1444 = vmatpush.msra.mxu0 %v425
  %1445 = vmatpush.msra.mxu0 %v423
  %1446 = vmatpush.msra.mxu0 %v421
  %1447 = vmatpush.msra.mxu0 %v419
  %1448 = vmatpush.msra.mxu0 %v417
  %1449 = vmatpush.msra.mxu0 %v415
  %1450 = vmatpush.msra.mxu0 %v413
  %1451 = vmatpush.msra.mxu0 %v411
  %1452 = vmatmul.f32.gmra.mxu0 %v23
  %v1453 = vpop.f32.mrf.mxu0
  %v1454 = vadd.f32 %v1410, %v1453
  %1455 = vmatmul.f32.gmra.mxu0 %v35
  %v1456 = vpop.f32.mrf.mxu0
  %v1457 = vadd.f32 %v1413, %v1456
  %1458 = vmatmul.f32.gmra.mxu0 %v47
  %v1459 = vpop.f32.mrf.mxu0
  %v1460 = vadd.f32 %v1416, %v1459
  %1461 = vmatmul.f32.gmra.mxu0 %v59
  %v1462 = vpop.f32.mrf.mxu0
  %v1463 = vadd.f32 %v1419, %v1462
  %1464 = vmatmul.f32.gmra.mxu0 %v71
  %v1465 = vpop.f32.mrf.mxu0
  %v1466 = vadd.f32 %v1422, %v1465
  %1467 = vmatmul.f32.gmra.mxu0 %v83
  %v1468 = vpop.f32.mrf.mxu0
  %v1469 = vadd.f32 %v1425, %v1468
  %1470 = vmatmul.f32.gmra.mxu0 %v95
  %v1471 = vpop.f32.mrf.mxu0
  %v1472 = vadd.f32 %v1428, %v1471
  %1473 = vmatmul.f32.gmra.mxu0 %v107
  %v1474 = vpop.f32.mrf.mxu0
  %v1475 = vadd.f32 %v1431, %v1474
  %1476 = vmatmul.f32.gmra.mxu0 %v119
  %v1477 = vpop.f32.mrf.mxu0
  %v1478 = vadd.f32 %v1434, %v1477
  %1479 = vdwg.mxu0
  %1480 = vmatpush.msra.mxu0 %v473
  %1481 = vmatpush.msra.mxu0 %v471
  %1482 = vmatpush.msra.mxu0 %v469
  %1483 = vmatpush.msra.mxu0 %v467
  %1484 = vmatpush.msra.mxu0 %v465
  %1485 = vmatpush.msra.mxu0 %v463
  %1486 = vmatpush.msra.mxu0 %v461
  %1487 = vmatpush.msra.mxu0 %v459
  %1488 = vmatpush.msra.mxu0 %v457
  %1489 = vmatpush.msra.mxu0 %v455
  %1490 = vmatpush.msra.mxu0 %v453
  %1491 = vmatpush.msra.mxu0 %v451
  %1492 = vmatpush.msra.mxu0 %v449
  %1493 = vmatpush.msra.mxu0 %v447
  %1494 = vmatpush.msra.mxu0 %v445
  %1495 = vmatpush.msra.mxu0 %v443
  %1496 = vmatmul.f32.gmra.mxu0 %v24
  %v1497 = vpop.f32.mrf.mxu0
  %v1498 = vadd.f32 %v1454, %v1497
  %1499 = vmatmul.f32.gmra.mxu0 %v36
  %v1500 = vpop.f32.mrf.mxu0
  %v1501 = vadd.f32 %v1457, %v1500
  %1502 = vmatmul.f32.gmra.mxu0 %v48
  %v1503 = vpop.f32.mrf.mxu0
  %v1504 = vadd.f32 %v1460, %v1503
  %1505 = vmatmul.f32.gmra.mxu0 %v60
  %v1506 = vpop.f32.mrf.mxu0
  %v1507 = vadd.f32 %v1463, %v1506
  %1508 = vmatmul.f32.gmra.mxu0 %v72
  %v1509 = vpop.f32.mrf.mxu0
  %v1510 = vadd.f32 %v1466, %v1509
  %1511 = vmatmul.f32.gmra.mxu0 %v84
  %v1512 = vpop.f32.mrf.mxu0
  %v1513 = vadd.f32 %v1469, %v1512
  %1514 = vmatmul.f32.gmra.mxu0 %v96
  %v1515 = vpop.f32.mrf.mxu0
  %v1516 = vadd.f32 %v1472, %v1515
  %1517 = vmatmul.f32.gmra.mxu0 %v108
  %v1518 = vpop.f32.mrf.mxu0
  %v1519 = vadd.f32 %v1475, %v1518
  %1520 = vmatmul.f32.gmra.mxu0 %v120
  %v1521 = vpop.f32.mrf.mxu0
  %v1522 = vadd.f32 %v1478, %v1521
  %1523 = vdwg.mxu0
  %1524 = vmatpush.msra.mxu0 %v505
  %1525 = vmatpush.msra.mxu0 %v503
  %1526 = vmatpush.msra.mxu0 %v501
  %1527 = vmatpush.msra.mxu0 %v499
  %1528 = vmatpush.msra.mxu0 %v497
  %1529 = vmatpush.msra.mxu0 %v495
  %1530 = vmatpush.msra.mxu0 %v493
  %1531 = vmatpush.msra.mxu0 %v491
  %1532 = vmatpush.msra.mxu0 %v489
  %1533 = vmatpush.msra.mxu0 %v487
  %1534 = vmatpush.msra.mxu0 %v485
  %1535 = vmatpush.msra.mxu0 %v483
  %1536 = vmatpush.msra.mxu0 %v481
  %1537 = vmatpush.msra.mxu0 %v479
  %1538 = vmatpush.msra.mxu0 %v477
  %1539 = vmatpush.msra.mxu0 %v475
  %1540 = vmatmul.f32.gmra.mxu0 %v25
  %v1541 = vpop.f32.mrf.mxu0
  %v1542 = vadd.f32 %v1498, %v1541
  %1543 = vmatmul.f32.gmra.mxu0 %v37
  %v1544 = vpop.f32.mrf.mxu0
  %v1545 = vadd.f32 %v1501, %v1544
  %1546 = vmatmul.f32.gmra.mxu0 %v49
  %v1547 = vpop.f32.mrf.mxu0
  %v1548 = vadd.f32 %v1504, %v1547
  %1549 = vmatmul.f32.gmra.mxu0 %v61
  %v1550 = vpop.f32.mrf.mxu0
  %v1551 = vadd.f32 %v1507, %v1550
  %1552 = vmatmul.f32.gmra.mxu0 %v73
  %v1553 = vpop.f32.mrf.mxu0
  %v1554 = vadd.f32 %v1510, %v1553
  %1555 = vmatmul.f32.gmra.mxu0 %v85
  %v1556 = vpop.f32.mrf.mxu0
  %v1557 = vadd.f32 %v1513, %v1556
  %1558 = vmatmul.f32.gmra.mxu0 %v97
  %v1559 = vpop.f32.mrf.mxu0
  %v1560 = vadd.f32 %v1516, %v1559
  %1561 = vmatmul.f32.gmra.mxu0 %v109
  %v1562 = vpop.f32.mrf.mxu0
  %v1563 = vadd.f32 %v1519, %v1562
  %1564 = vmatmul.f32.gmra.mxu0 %v121
  %v1565 = vpop.f32.mrf.mxu0
  %v1566 = vadd.f32 %v1522, %v1565
  %1567 = vdwg.mxu0
  %vm1568 = vcmp.gt.f32.partialorder %v1014, 0.0
  %vm1569 = vcmp.gt.f32.partialorder %v1542, 0.0
  %vm1570 = vcmp.gt.f32.partialorder %v1017, 0.0
  %vm1571 = vcmp.gt.f32.partialorder %v1545, 0.0
  %vm1572 = vcmp.gt.f32.partialorder %v1020, 0.0
  %vm1573 = vcmp.gt.f32.partialorder %v1548, 0.0
  %vm1574 = vcmp.gt.f32.partialorder %v1023, 0.0
  %vm1575 = vcmp.gt.f32.partialorder %v1551, 0.0
  %vm1576 = vcmp.gt.f32.partialorder %v1026, 0.0
  %vm1577 = vcmp.gt.f32.partialorder %v1554, 0.0
  %vm1578 = vcmp.gt.f32.partialorder %v1029, 0.0
  %vm1579 = vcmp.gt.f32.partialorder %v1557, 0.0
  %vm1580 = vcmp.gt.f32.partialorder %v1032, 0.0
  %vm1581 = vcmp.gt.f32.partialorder %v1560, 0.0
  %vm1582 = vcmp.gt.f32.partialorder %v1035, 0.0
  %vm1583 = vcmp.gt.f32.partialorder %v1563, 0.0
  %vm1584 = vcmp.gt.f32.partialorder %v1038, 0.0
  %vm1585 = vcmp.gt.f32.partialorder %v1566, 0.0
  %v1586 = vmin.f32 %v1014, 0.0
  %v1587 = vmin.f32 %v1542, 0.0
  %v1588 = vmin.f32 %v1017, 0.0
  %v1589 = vmin.f32 %v1545, 0.0
  %v1590 = vmin.f32 %v1020, 0.0
  %v1591 = vmin.f32 %v1548, 0.0
  %v1592 = vmin.f32 %v1023, 0.0
  %v1593 = vmin.f32 %v1551, 0.0
  %v1594 = vmin.f32 %v1026, 0.0
  %v1595 = vmin.f32 %v1554, 0.0
  %v1596 = vmin.f32 %v1029, 0.0
  %v1597 = vmin.f32 %v1557, 0.0
  %v1598 = vmin.f32 %v1032, 0.0
  %v1599 = vmin.f32 %v1560, 0.0
  %v1600 = vmin.f32 %v1035, 0.0
  %v1601 = vmin.f32 %v1563, 0.0
  %v1602 = vmin.f32 %v1038, 0.0
  %v1603 = vmin.f32 %v1566, 0.0
  %v1604 = vmul.f32 %v1586, 1.442695
  %v1605 = vpow.pop %v1604
  %v1606 = vmul.f32 %v1587, 1.442695
  %v1607 = vpow.pop %v1606
  %v1608 = vmul.f32 %v1588, 1.442695
  %v1609 = vpow.pop %v1608
  %v1610 = vmul.f32 %v1589, 1.442695
  %v1611 = vpow.pop %v1610
  %v1612 = vmul.f32 %v1590, 1.442695
  %v1613 = vpow.pop %v1612
  %v1614 = vmul.f32 %v1591, 1.442695
  %v1615 = vpow.pop %v1614
  %v1616 = vmul.f32 %v1592, 1.442695
  %v1617 = vpow.pop %v1616
  %v1618 = vmul.f32 %v1593, 1.442695
  %v1619 = vpow.pop %v1618
  %v1620 = vmul.f32 %v1594, 1.442695
  %v1621 = vpow.pop %v1620
  %v1622 = vmul.f32 %v1595, 1.442695
  %v1623 = vpow.pop %v1622
  %v1624 = vmul.f32 %v1596, 1.442695
  %v1625 = vpow.pop %v1624
  %v1626 = vmul.f32 %v1597, 1.442695
  %v1627 = vpow.pop %v1626
  %v1628 = vmul.f32 %v1598, 1.442695
  %v1629 = vpow.pop %v1628
  %v1630 = vmul.f32 %v1599, 1.442695
  %v1631 = vpow.pop %v1630
  %v1632 = vmul.f32 %v1600, 1.442695
  %v1633 = vpow.pop %v1632
  %v1634 = vmul.f32 %v1601, 1.442695
  %v1635 = vpow.pop %v1634
  %v1636 = vmul.f32 %v1602, 1.442695
  %v1637 = vpow.pop %v1636
  %v1638 = vmul.f32 %v1603, 1.442695
  %v1639 = vpow.pop %v1638
  %v1640 = vsub.f32 %v1605, 1.0
  %v1641 = vsub.f32 %v1607, 1.0
  %v1642 = vsub.f32 %v1609, 1.0
  %v1643 = vsub.f32 %v1611, 1.0
  %v1644 = vsub.f32 %v1613, 1.0
  %v1645 = vsub.f32 %v1615, 1.0
  %v1646 = vsub.f32 %v1617, 1.0
  %v1647 = vsub.f32 %v1619, 1.0
  %v1648 = vsub.f32 %v1621, 1.0
  %v1649 = vsub.f32 %v1623, 1.0
  %v1650 = vsub.f32 %v1625, 1.0
  %v1651 = vsub.f32 %v1627, 1.0
  %v1652 = vsub.f32 %v1629, 1.0
  %v1653 = vsub.f32 %v1631, 1.0
  %v1654 = vsub.f32 %v1633, 1.0
  %v1655 = vsub.f32 %v1635, 1.0
  %v1656 = vsub.f32 %v1637, 1.0
  %v1657 = vsub.f32 %v1639, 1.0
  %v1658 = vsel %vm1568, %v1014, %v1640
  %v1659 = vsel %vm1569, %v1542, %v1641
  %v1660 = vsel %vm1570, %v1017, %v1642
  %v1661 = vsel %vm1571, %v1545, %v1643
  %v1662 = vsel %vm1572, %v1020, %v1644
  %v1663 = vsel %vm1573, %v1548, %v1645
  %v1664 = vsel %vm1574, %v1023, %v1646
  %v1665 = vsel %vm1575, %v1551, %v1647
  %v1666 = vsel %vm1576, %v1026, %v1648
  %v1667 = vsel %vm1577, %v1554, %v1649
  %v1668 = vsel %vm1578, %v1029, %v1650
  %v1669 = vsel %vm1579, %v1557, %v1651
  %v1670 = vsel %vm1580, %v1032, %v1652
  %v1671 = vsel %vm1581, %v1560, %v1653
  %v1672 = vsel %vm1582, %v1035, %v1654
  %v1673 = vsel %vm1583, %v1563, %v1655
  %v1674 = vsel %vm1584, %v1038, %v1656
  %v1675 = vsel %vm1585, %v1566, %v1657
  %1676 = vst [vmem:[%s3] sm:$0xff] %v1658
  %vm1677 = vcmask 523264
  %1678 = vst.msk [vmem:[%s3 + $0x8] sm:$0xff] %vm1677, %v1659
  %1679 = vst [vmem:[%s3 + $0x10] sm:$0xff] %v1660
  %1680 = vst.msk [vmem:[%s3 + $0x18] sm:$0xff] %vm1677, %v1661
  %1681 = vst [vmem:[%s3 + $0x20] sm:$0xff] %v1662
  %1682 = vst.msk [vmem:[%s3 + $0x28] sm:$0xff] %vm1677, %v1663
  %1683 = vst [vmem:[%s3 + $0x30] sm:$0xff] %v1664
  %1684 = vst.msk [vmem:[%s3 + $0x38] sm:$0xff] %vm1677, %v1665
  %1685 = vst [vmem:[%s3 + $0x40] sm:$0xff] %v1666
  %1686 = vst.msk [vmem:[%s3 + $0x48] sm:$0xff] %vm1677, %v1667
  %1687 = vst [vmem:[%s3 + $0x50] sm:$0xff] %v1668
  %1688 = vst.msk [vmem:[%s3 + $0x58] sm:$0xff] %vm1677, %v1669
  %1689 = vst [vmem:[%s3 + $0x60] sm:$0xff] %v1670
  %1690 = vst.msk [vmem:[%s3 + $0x68] sm:$0xff] %vm1677, %v1671
  %1691 = vst [vmem:[%s3 + $0x70] sm:$0xff] %v1672
  %1692 = vst.msk [vmem:[%s3 + $0x78] sm:$0xff] %vm1677, %v1673
  %1693 = vst [vmem:[%s3 + $0x80] sm:$0xff] %v1674
  %1694 = vst.msk [vmem:[%s3 + $0x88] sm:$0xff] %vm1677, %v1675
  // Predicated region
  $region14: #{encoder_forward.6} parent=0 // pred_check
    _
  $region15: #{encoder_forward.6} parent=0 // pred_check_branch
    %1696 = sbr.rel (0) target = $region17
  $region16: #{encoder_forward.6} parent=0 // pred_region
    _
  $region17: #{encoder_forward.6} parent=0 // pred_fallthru
    _
  // Predicated region
  $region18: #{encoder_forward.6} parent=0 // pred_check
    _
  $region19: #{encoder_forward.6} parent=0 // pred_check_branch
    %1698 = sbr.rel (0) target = $region21
  $region20: #{encoder_forward.6} parent=0 // pred_region
    _
  $region21: #{encoder_forward.6} parent=0 // pred_fallthru
    _

// kernel: encoder_forward.7
$region0: #{encoder_forward.7}
  #allocation0 [shape = 'u32[]', space=smem, size = 0x4, offset = 0x4, fixed_abs, tag = 'smem constant byte address 0x4 - core index']
  #allocation1 [shape = 'u32[72,128]{1,0:T(1,128)}', space=vmem, size = 0x9000, scoped, tag = 'internal scratch']
  %s0 = inlined_call_operand.vmem [shape: f32[8,3072], index: 0, kind: input, shape index: {}]
  %s1 = inlined_call_operand.vmem [shape: f32[3072,384], index: 1, kind: input, shape index: {}]
  %s2 = inlined_call_operand.vmem [shape: f32[1,384], index: 2, kind: input, shape index: {}]
  %s3 = inlined_call_operand.vmem [shape: f32[8,384], index: 3, kind: output, shape index: {}]
  %s4 = sld [smem:[#allocation0]]
  $region22: #{encoder_forward.7} parent=0
    _
  %s6 = ssub.s32 1, %s4
  %s7 = scalar_select 0, %s6, %s4
  // Predicated region
  $region2: #{encoder_forward.7} parent=0 // pred_check
    _
  $region3: #{encoder_forward.7} parent=0 // pred_check_branch
    %9 = sbr.rel (0) target = $region5
  $region4: #{encoder_forward.7} parent=0 // pred_region
    _
  $region5: #{encoder_forward.7} parent=0 // pred_fallthru
    _
  // Predicated region
  $region6: #{encoder_forward.7} parent=0 // pred_check
    _
  $region7: #{encoder_forward.7} parent=0 // pred_check_branch
    %11 = sbr.rel (0) target = $region9
  $region8: #{encoder_forward.7} parent=0 // pred_region
    _
  $region9: #{encoder_forward.7} parent=0 // pred_fallthru
    _
  // Predicated region
  $region10: #{encoder_forward.7} parent=0 // pred_check
    _
  $region11: #{encoder_forward.7} parent=0 // pred_check_branch
    %13 = sbr.rel (0) target = $region13
  $region12: #{encoder_forward.7} parent=0 // pred_region
    _
  $region13: #{encoder_forward.7} parent=0 // pred_fallthru
    _
  %v14 = vld [vmem:[%s0] sm:$0xff]
  %v15 = vld [vmem:[%s0 + $0x8] sm:$0xff]
  %v16 = vld [vmem:[%s0 + $0x10] sm:$0xff]
  %v17 = vld [vmem:[%s0 + $0x18] sm:$0xff]
  %v18 = vld [vmem:[%s0 + $0x20] sm:$0xff]
  %v19 = vld [vmem:[%s0 + $0x28] sm:$0xff]
  %v20 = vld [vmem:[%s0 + $0x30] sm:$0xff]
  %v21 = vld [vmem:[%s0 + $0x38] sm:$0xff]
  %v22 = vld [vmem:[%s0 + $0x40] sm:$0xff]
  %v23 = vld [vmem:[%s0 + $0x48] sm:$0xff]
  %v24 = vld [vmem:[%s0 + $0x50] sm:$0xff]
  %v25 = vld [vmem:[%s0 + $0x58] sm:$0xff]
  %v26 = vld [vmem:[%s0 + $0x60] sm:$0xff]
  %v27 = vld [vmem:[%s0 + $0x68] sm:$0xff]
  %v28 = vld [vmem:[%s0 + $0x70] sm:$0xff]
  %v29 = vld [vmem:[%s0 + $0x78] sm:$0xff]
  %v30 = vld [vmem:[%s0 + $0x80] sm:$0xff]
  %v31 = vld [vmem:[%s0 + $0x88] sm:$0xff]
  %v32 = vld [vmem:[%s0 + $0x90] sm:$0xff]
  %v33 = vld [vmem:[%s0 + $0x98] sm:$0xff]
  %v34 = vld [vmem:[%s0 + $0xa0] sm:$0xff]
  %v35 = vld [vmem:[%s0 + $0xa8] sm:$0xff]
  %v36 = vld [vmem:[%s0 + $0xb0] sm:$0xff]
  %v37 = vld [vmem:[%s0 + $0xb8] sm:$0xff]
  %v38 = vld [vmem:[%s1] sm:$0xff]
  %v39 = vld [vmem:[%s1 + $0x8] sm:$0xff]
  %v40 = vld [vmem:[%s1 + $0x10] sm:$0xff]
  %v41 = vld [vmem:[%s1 + $0x18] sm:$0xff]
  %v42 = vld [vmem:[%s1 + $0x20] sm:$0xff]
  %v43 = vld [vmem:[%s1 + $0x28] sm:$0xff]
  %v44 = vld [vmem:[%s1 + $0x30] sm:$0xff]
  %v45 = vld [vmem:[%s1 + $0x38] sm:$0xff]
  %v46 = vld [vmem:[%s1 + $0x40] sm:$0xff]
  %v47 = vld [vmem:[%s1 + $0x48] sm:$0xff]
  %v48 = vld [vmem:[%s1 + $0x50] sm:$0xff]
  %v49 = vld [vmem:[%s1 + $0x58] sm:$0xff]
  %v50 = vld [vmem:[%s1 + $0x60] sm:$0xff]
  %v51 = vld [vmem:[%s1 + $0x68] sm:$0xff]
  %v52 = vld [vmem:[%s1 + $0x70] sm:$0xff]
  %v53 = vld [vmem:[%s1 + $0x78] sm:$0xff]
  %v54 = vld [vmem:[%s1 + $0x80] sm:$0xff]
  %v55 = vld [vmem:[%s1 + $0x88] sm:$0xff]
  %v56 = vld [vmem:[%s1 + $0x90] sm:$0xff]
  %v57 = vld [vmem:[%s1 + $0x98] sm:$0xff]
  %v58 = vld [vmem:[%s1 + $0xa0] sm:$0xff]
  %v59 = vld [vmem:[%s1 + $0xa8] sm:$0xff]
  %v60 = vld [vmem:[%s1 + $0xb0] sm:$0xff]
  %v61 = vld [vmem:[%s1 + $0xb8] sm:$0xff]
  %v62 = vld [vmem:[%s1 + $0xc0] sm:$0xff]
  %v63 = vld [vmem:[%s1 + $0xc8] sm:$0xff]
  %v64 = vld [vmem:[%s1 + $0xd0] sm:$0xff]
  %v65 = vld [vmem:[%s1 + $0xd8] sm:$0xff]
  %v66 = vld [vmem:[%s1 + $0xe0] sm:$0xff]
  %v67 = vld [vmem:[%s1 + $0xe8] sm:$0xff]
  %v68 = vld [vmem:[%s1 + $0xf0] sm:$0xff]
  %v69 = vld [vmem:[%s1 + $0xf8] sm:$0xff]
  %v70 = vld [vmem:[%s1 + $0x100] sm:$0xff]
  %v71 = vld [vmem:[%s1 + $0x108] sm:$0xff]
  %v72 = vld [vmem:[%s1 + $0x110] sm:$0xff]
  %v73 = vld [vmem:[%s1 + $0x118] sm:$0xff]
  %v74 = vld [vmem:[%s1 + $0x120] sm:$0xff]
  %v75 = vld [vmem:[%s1 + $0x128] sm:$0xff]
  %v76 = vld [vmem:[%s1 + $0x130] sm:$0xff]
  %v77 = vld [vmem:[%s1 + $0x138] sm:$0xff]
  %v78 = vld [vmem:[%s1 + $0x140] sm:$0xff]
  %v79 = vld [vmem:[%s1 + $0x148] sm:$0xff]
  %v80 = vld [vmem:[%s1 + $0x150] sm:$0xff]
  %v81 = vld [vmem:[%s1 + $0x158] sm:$0xff]
  %v82 = vld [vmem:[%s1 + $0x160] sm:$0xff]
  %v83 = vld [vmem:[%s1 + $0x168] sm:$0xff]
  %v84 = vld [vmem:[%s1 + $0x170] sm:$0xff]
  %v85 = vld [vmem:[%s1 + $0x178] sm:$0xff]
  %v86 = vld [vmem:[%s1 + $0x180] sm:$0xff]
  %v87 = vld [vmem:[%s1 + $0x188] sm:$0xff]
  %v88 = vld [vmem:[%s1 + $0x190] sm:$0xff]
  %v89 = vld [vmem:[%s1 + $0x198] sm:$0xff]
  %v90 = vld [vmem:[%s1 + $0x1a0] sm:$0xff]
  %v91 = vld [vmem:[%s1 + $0x1a8] sm:$0xff]
  %v92 = vld [vmem:[%s1 + $0x1b0] sm:$0xff]
  %v93 = vld [vmem:[%s1 + $0x1b8] sm:$0xff]
  %v94 = vld [vmem:[%s1 + $0x1c0] sm:$0xff]
  %v95 = vld [vmem:[%s1 + $0x1c8] sm:$0xff]
  %v96 = vld [vmem:[%s1 + $0x1d0] sm:$0xff]
  %v97 = vld [vmem:[%s1 + $0x1d8] sm:$0xff]
  %v98 = vld [vmem:[%s1 + $0x1e0] sm:$0xff]
  %v99 = vld [vmem:[%s1 + $0x1e8] sm:$0xff]
  %v100 = vld [vmem:[%s1 + $0x1f0] sm:$0xff]
  %v101 = vld [vmem:[%s1 + $0x1f8] sm:$0xff]
  %v102 = vld [vmem:[%s1 + $0x200] sm:$0xff]
  %v103 = vld [vmem:[%s1 + $0x208] sm:$0xff]
  %v104 = vld [vmem:[%s1 + $0x210] sm:$0xff]
  %v105 = vld [vmem:[%s1 + $0x218] sm:$0xff]
  %v106 = vld [vmem:[%s1 + $0x220] sm:$0xff]
  %v107 = vld [vmem:[%s1 + $0x228] sm:$0xff]
  %v108 = vld [vmem:[%s1 + $0x230] sm:$0xff]
  %v109 = vld [vmem:[%s1 + $0x238] sm:$0xff]
  %v110 = vld [vmem:[%s1 + $0x240] sm:$0xff]
  %v111 = vld [vmem:[%s1 + $0x248] sm:$0xff]
  %v112 = vld [vmem:[%s1 + $0x250] sm:$0xff]
  %v113 = vld [vmem:[%s1 + $0x258] sm:$0xff]
  %v114 = vld [vmem:[%s1 + $0x260] sm:$0xff]
  %v115 = vld [vmem:[%s1 + $0x268] sm:$0xff]
  %v116 = vld [vmem:[%s1 + $0x270] sm:$0xff]
  %v117 = vld [vmem:[%s1 + $0x278] sm:$0xff]
  %v118 = vld [vmem:[%s1 + $0x280] sm:$0xff]
  %v119 = vld [vmem:[%s1 + $0x288] sm:$0xff]
  %v120 = vld [vmem:[%s1 + $0x290] sm:$0xff]
  %v121 = vld [vmem:[%s1 + $0x298] sm:$0xff]
  %v122 = vld [vmem:[%s1 + $0x2a0] sm:$0xff]
  %v123 = vld [vmem:[%s1 + $0x2a8] sm:$0xff]
  %v124 = vld [vmem:[%s1 + $0x2b0] sm:$0xff]
  %v125 = vld [vmem:[%s1 + $0x2b8] sm:$0xff]
  %v126 = vld [vmem:[%s1 + $0x2c0] sm:$0xff]
  %v127 = vld [vmem:[%s1 + $0x2c8] sm:$0xff]
  %v128 = vld [vmem:[%s1 + $0x2d0] sm:$0xff]
  %v129 = vld [vmem:[%s1 + $0x2d8] sm:$0xff]
  %v130 = vld [vmem:[%s1 + $0x2e0] sm:$0xff]
  %v131 = vld [vmem:[%s1 + $0x2e8] sm:$0xff]
  %v132 = vld [vmem:[%s1 + $0x2f0] sm:$0xff]
  %v133 = vld [vmem:[%s1 + $0x2f8] sm:$0xff]
  %v134 = vld [vmem:[%s1 + $0x300] sm:$0xff]
  %v135 = vld [vmem:[%s1 + $0x308] sm:$0xff]
  %v136 = vld [vmem:[%s1 + $0x310] sm:$0xff]
  %v137 = vld [vmem:[%s1 + $0x318] sm:$0xff]
  %v138 = vld [vmem:[%s1 + $0x320] sm:$0xff]
  %v139 = vld [vmem:[%s1 + $0x328] sm:$0xff]
  %v140 = vld [vmem:[%s1 + $0x330] sm:$0xff]
  %v141 = vld [vmem:[%s1 + $0x338] sm:$0xff]
  %v142 = vld [vmem:[%s1 + $0x340] sm:$0xff]
  %v143 = vld [vmem:[%s1 + $0x348] sm:$0xff]
  %v144 = vld [vmem:[%s1 + $0x350] sm:$0xff]
  %v145 = vld [vmem:[%s1 + $0x358] sm:$0xff]
  %v146 = vld [vmem:[%s1 + $0x360] sm:$0xff]
  %v147 = vld [vmem:[%s1 + $0x368] sm:$0xff]
  %v148 = vld [vmem:[%s1 + $0x370] sm:$0xff]
  %v149 = vld [vmem:[%s1 + $0x378] sm:$0xff]
  %v150 = vld [vmem:[%s1 + $0x380] sm:$0xff]
  %v151 = vld [vmem:[%s1 + $0x388] sm:$0xff]
  %v152 = vld [vmem:[%s1 + $0x390] sm:$0xff]
  %v153 = vld [vmem:[%s1 + $0x398] sm:$0xff]
  %v154 = vld [vmem:[%s1 + $0x3a0] sm:$0xff]
  %v155 = vld [vmem:[%s1 + $0x3a8] sm:$0xff]
  %v156 = vld [vmem:[%s1 + $0x3b0] sm:$0xff]
  %v157 = vld [vmem:[%s1 + $0x3b8] sm:$0xff]
  %v158 = vld [vmem:[%s1 + $0x3c0] sm:$0xff]
  %v159 = vld [vmem:[%s1 + $0x3c8] sm:$0xff]
  %v160 = vld [vmem:[%s1 + $0x3d0] sm:$0xff]
  %v161 = vld [vmem:[%s1 + $0x3d8] sm:$0xff]
  %v162 = vld [vmem:[%s1 + $0x3e0] sm:$0xff]
  %v163 = vld [vmem:[%s1 + $0x3e8] sm:$0xff]
  %v164 = vld [vmem:[%s1 + $0x3f0] sm:$0xff]
  %v165 = vld [vmem:[%s1 + $0x3f8] sm:$0xff]
  %v166 = vld [vmem:[%s1 + $0x400] sm:$0xff]
  %v167 = vld [vmem:[%s1 + $0x408] sm:$0xff]
  %v168 = vld [vmem:[%s1 + $0x410] sm:$0xff]
  %v169 = vld [vmem:[%s1 + $0x418] sm:$0xff]
  %v170 = vld [vmem:[%s1 + $0x420] sm:$0xff]
  %v171 = vld [vmem:[%s1 + $0x428] sm:$0xff]
  %v172 = vld [vmem:[%s1 + $0x430] sm:$0xff]
  %v173 = vld [vmem:[%s1 + $0x438] sm:$0xff]
  %v174 = vld [vmem:[%s1 + $0x440] sm:$0xff]
  %v175 = vld [vmem:[%s1 + $0x448] sm:$0xff]
  %v176 = vld [vmem:[%s1 + $0x450] sm:$0xff]
  %v177 = vld [vmem:[%s1 + $0x458] sm:$0xff]
  %v178 = vld [vmem:[%s1 + $0x460] sm:$0xff]
  %v179 = vld [vmem:[%s1 + $0x468] sm:$0xff]
  %v180 = vld [vmem:[%s1 + $0x470] sm:$0xff]
  %v181 = vld [vmem:[%s1 + $0x478] sm:$0xff]
  %v182 = vld [vmem:[%s1 + $0x480] sm:$0xff]
  %v183 = vld [vmem:[%s1 + $0x488] sm:$0xff]
  %v184 = vld [vmem:[%s1 + $0x490] sm:$0xff]
  %v185 = vld [vmem:[%s1 + $0x498] sm:$0xff]
  %v186 = vld [vmem:[%s1 + $0x4a0] sm:$0xff]
  %v187 = vld [vmem:[%s1 + $0x4a8] sm:$0xff]
  %v188 = vld [vmem:[%s1 + $0x4b0] sm:$0xff]
  %v189 = vld [vmem:[%s1 + $0x4b8] sm:$0xff]
  %v190 = vld [vmem:[%s1 + $0x4c0] sm:$0xff]
  %v191 = vld [vmem:[%s1 + $0x4c8] sm:$0xff]
  %v192 = vld [vmem:[%s1 + $0x4d0] sm:$0xff]
  %v193 = vld [vmem:[%s1 + $0x4d8] sm:$0xff]
  %v194 = vld [vmem:[%s1 + $0x4e0] sm:$0xff]
  %v195 = vld [vmem:[%s1 + $0x4e8] sm:$0xff]
  %v196 = vld [vmem:[%s1 + $0x4f0] sm:$0xff]
  %v197 = vld [vmem:[%s1 + $0x4f8] sm:$0xff]
  %v198 = vld [vmem:[%s1 + $0x500] sm:$0xff]
  %v199 = vld [vmem:[%s1 + $0x508] sm:$0xff]
  %v200 = vld [vmem:[%s1 + $0x510] sm:$0xff]
  %v201 = vld [vmem:[%s1 + $0x518] sm:$0xff]
  %v202 = vld [vmem:[%s1 + $0x520] sm:$0xff]
  %v203 = vld [vmem:[%s1 + $0x528] sm:$0xff]
  %v204 = vld [vmem:[%s1 + $0x530] sm:$0xff]
  %v205 = vld [vmem:[%s1 + $0x538] sm:$0xff]
  %v206 = vld [vmem:[%s1 + $0x540] sm:$0xff]
  %v207 = vld [vmem:[%s1 + $0x548] sm:$0xff]
  %v208 = vld [vmem:[%s1 + $0x550] sm:$0xff]
  %v209 = vld [vmem:[%s1 + $0x558] sm:$0xff]
  %v210 = vld [vmem:[%s1 + $0x560] sm:$0xff]
  %v211 = vld [vmem:[%s1 + $0x568] sm:$0xff]
  %v212 = vld [vmem:[%s1 + $0x570] sm:$0xff]
  %v213 = vld [vmem:[%s1 + $0x578] sm:$0xff]
  %v214 = vld [vmem:[%s1 + $0x580] sm:$0xff]
  %v215 = vld [vmem:[%s1 + $0x588] sm:$0xff]
  %v216 = vld [vmem:[%s1 + $0x590] sm:$0xff]
  %v217 = vld [vmem:[%s1 + $0x598] sm:$0xff]
  %v218 = vld [vmem:[%s1 + $0x5a0] sm:$0xff]
  %v219 = vld [vmem:[%s1 + $0x5a8] sm:$0xff]
  %v220 = vld [vmem:[%s1 + $0x5b0] sm:$0xff]
  %v221 = vld [vmem:[%s1 + $0x5b8] sm:$0xff]
  %v222 = vld [vmem:[%s1 + $0x5c0] sm:$0xff]
  %v223 = vld [vmem:[%s1 + $0x5c8] sm:$0xff]
  %v224 = vld [vmem:[%s1 + $0x5d0] sm:$0xff]
  %v225 = vld [vmem:[%s1 + $0x5d8] sm:$0xff]
  %v226 = vld [vmem:[%s1 + $0x5e0] sm:$0xff]
  %v227 = vld [vmem:[%s1 + $0x5e8] sm:$0xff]
  %v228 = vld [vmem:[%s1 + $0x5f0] sm:$0xff]
  %v229 = vld [vmem:[%s1 + $0x5f8] sm:$0xff]
  %v230 = vld [vmem:[%s1 + $0x600] sm:$0xff]
  %v231 = vld [vmem:[%s1 + $0x608] sm:$0xff]
  %v232 = vld [vmem:[%s1 + $0x610] sm:$0xff]
  %v233 = vld [vmem:[%s1 + $0x618] sm:$0xff]
  %v234 = vld [vmem:[%s1 + $0x620] sm:$0xff]
  %v235 = vld [vmem:[%s1 + $0x628] sm:$0xff]
  %v236 = vld [vmem:[%s1 + $0x630] sm:$0xff]
  %v237 = vld [vmem:[%s1 + $0x638] sm:$0xff]
  %v238 = vld [vmem:[%s1 + $0x640] sm:$0xff]
  %v239 = vld [vmem:[%s1 + $0x648] sm:$0xff]
  %v240 = vld [vmem:[%s1 + $0x650] sm:$0xff]
  %v241 = vld [vmem:[%s1 + $0x658] sm:$0xff]
  %v242 = vld [vmem:[%s1 + $0x660] sm:$0xff]
  %v243 = vld [vmem:[%s1 + $0x668] sm:$0xff]
  %v244 = vld [vmem:[%s1 + $0x670] sm:$0xff]
  %v245 = vld [vmem:[%s1 + $0x678] sm:$0xff]
  %v246 = vld [vmem:[%s1 + $0x680] sm:$0xff]
  %v247 = vld [vmem:[%s1 + $0x688] sm:$0xff]
  %v248 = vld [vmem:[%s1 + $0x690] sm:$0xff]
  %v249 = vld [vmem:[%s1 + $0x698] sm:$0xff]
  %v250 = vld [vmem:[%s1 + $0x6a0] sm:$0xff]
  %v251 = vld [vmem:[%s1 + $0x6a8] sm:$0xff]
  %v252 = vld [vmem:[%s1 + $0x6b0] sm:$0xff]
  %v253 = vld [vmem:[%s1 + $0x6b8] sm:$0xff]
  %v254 = vld [vmem:[%s1 + $0x6c0] sm:$0xff]
  %v255 = vld [vmem:[%s1 + $0x6c8] sm:$0xff]
  %v256 = vld [vmem:[%s1 + $0x6d0] sm:$0xff]
  %v257 = vld [vmem:[%s1 + $0x6d8] sm:$0xff]
  %v258 = vld [vmem:[%s1 + $0x6e0] sm:$0xff]
  %v259 = vld [vmem:[%s1 + $0x6e8] sm:$0xff]
  %v260 = vld [vmem:[%s1 + $0x6f0] sm:$0xff]
  %v261 = vld [vmem:[%s1 + $0x6f8] sm:$0xff]
  %v262 = vld [vmem:[%s1 + $0x700] sm:$0xff]
  %v263 = vld [vmem:[%s1 + $0x708] sm:$0xff]
  %v264 = vld [vmem:[%s1 + $0x710] sm:$0xff]
  %v265 = vld [vmem:[%s1 + $0x718] sm:$0xff]
  %v266 = vld [vmem:[%s1 + $0x720] sm:$0xff]
  %v267 = vld [vmem:[%s1 + $0x728] sm:$0xff]
  %v268 = vld [vmem:[%s1 + $0x730] sm:$0xff]
  %v269 = vld [vmem:[%s1 + $0x738] sm:$0xff]
  %v270 = vld [vmem:[%s1 + $0x740] sm:$0xff]
  %v271 = vld [vmem:[%s1 + $0x748] sm:$0xff]
  %v272 = vld [vmem:[%s1 + $0x750] sm:$0xff]
  %v273 = vld [vmem:[%s1 + $0x758] sm:$0xff]
  %v274 = vld [vmem:[%s1 + $0x760] sm:$0xff]
  %v275 = vld [vmem:[%s1 + $0x768] sm:$0xff]
  %v276 = vld [vmem:[%s1 + $0x770] sm:$0xff]
  %v277 = vld [vmem:[%s1 + $0x778] sm:$0xff]
  %v278 = vld [vmem:[%s1 + $0x780] sm:$0xff]
  %v279 = vld [vmem:[%s1 + $0x788] sm:$0xff]
  %v280 = vld [vmem:[%s1 + $0x790] sm:$0xff]
  %v281 = vld [vmem:[%s1 + $0x798] sm:$0xff]
  %v282 = vld [vmem:[%s1 + $0x7a0] sm:$0xff]
  %v283 = vld [vmem:[%s1 + $0x7a8] sm:$0xff]
  %v284 = vld [vmem:[%s1 + $0x7b0] sm:$0xff]
  %v285 = vld [vmem:[%s1 + $0x7b8] sm:$0xff]
  %v286 = vld [vmem:[%s1 + $0x7c0] sm:$0xff]
  %v287 = vld [vmem:[%s1 + $0x7c8] sm:$0xff]
  %v288 = vld [vmem:[%s1 + $0x7d0] sm:$0xff]
  %v289 = vld [vmem:[%s1 + $0x7d8] sm:$0xff]
  %v290 = vld [vmem:[%s1 + $0x7e0] sm:$0xff]
  %v291 = vld [vmem:[%s1 + $0x7e8] sm:$0xff]
  %v292 = vld [vmem:[%s1 + $0x7f0] sm:$0xff]
  %v293 = vld [vmem:[%s1 + $0x7f8] sm:$0xff]
  %v294 = vld [vmem:[%s1 + $0x800] sm:$0xff]
  %v295 = vld [vmem:[%s1 + $0x808] sm:$0xff]
  %v296 = vld [vmem:[%s1 + $0x810] sm:$0xff]
  %v297 = vld [vmem:[%s1 + $0x818] sm:$0xff]
  %v298 = vld [vmem:[%s1 + $0x820] sm:$0xff]
  %v299 = vld [vmem:[%s1 + $0x828] sm:$0xff]
  %v300 = vld [vmem:[%s1 + $0x830] sm:$0xff]
  %v301 = vld [vmem:[%s1 + $0x838] sm:$0xff]
  %v302 = vld [vmem:[%s1 + $0x840] sm:$0xff]
  %v303 = vld [vmem:[%s1 + $0x848] sm:$0xff]
  %v304 = vld [vmem:[%s1 + $0x850] sm:$0xff]
  %v305 = vld [vmem:[%s1 + $0x858] sm:$0xff]
  %v306 = vld [vmem:[%s1 + $0x860] sm:$0xff]
  %v307 = vld [vmem:[%s1 + $0x868] sm:$0xff]
  %v308 = vld [vmem:[%s1 + $0x870] sm:$0xff]
  %v309 = vld [vmem:[%s1 + $0x878] sm:$0xff]
  %v310 = vld [vmem:[%s1 + $0x880] sm:$0xff]
  %v311 = vld [vmem:[%s1 + $0x888] sm:$0xff]
  %v312 = vld [vmem:[%s1 + $0x890] sm:$0xff]
  %v313 = vld [vmem:[%s1 + $0x898] sm:$0xff]
  %v314 = vld [vmem:[%s1 + $0x8a0] sm:$0xff]
  %v315 = vld [vmem:[%s1 + $0x8a8] sm:$0xff]
  %v316 = vld [vmem:[%s1 + $0x8b0] sm:$0xff]
  %v317 = vld [vmem:[%s1 + $0x8b8] sm:$0xff]
  %v318 = vld [vmem:[%s1 + $0x8c0] sm:$0xff]
  %v319 = vld [vmem:[%s1 + $0x8c8] sm:$0xff]
  %v320 = vld [vmem:[%s1 + $0x8d0] sm:$0xff]
  %v321 = vld [vmem:[%s1 + $0x8d8] sm:$0xff]
  %v322 = vld [vmem:[%s1 + $0x8e0] sm:$0xff]
  %v323 = vld [vmem:[%s1 + $0x8e8] sm:$0xff]
  %v324 = vld [vmem:[%s1 + $0x8f0] sm:$0xff]
  %v325 = vld [vmem:[%s1 + $0x8f8] sm:$0xff]
  %v326 = vld [vmem:[%s1 + $0x900] sm:$0xff]
  %v327 = vld [vmem:[%s1 + $0x908] sm:$0xff]
  %v328 = vld [vmem:[%s1 + $0x910] sm:$0xff]
  %v329 = vld [vmem:[%s1 + $0x918] sm:$0xff]
  %v330 = vld [vmem:[%s1 + $0x920] sm:$0xff]
  %v331 = vld [vmem:[%s1 + $0x928] sm:$0xff]
  %v332 = vld [vmem:[%s1 + $0x930] sm:$0xff]
  %v333 = vld [vmem:[%s1 + $0x938] sm:$0xff]
  %v334 = vld [vmem:[%s1 + $0x940] sm:$0xff]
  %v335 = vld [vmem:[%s1 + $0x948] sm:$0xff]
  %v336 = vld [vmem:[%s1 + $0x950] sm:$0xff]
  %v337 = vld [vmem:[%s1 + $0x958] sm:$0xff]
  %v338 = vld [vmem:[%s1 + $0x960] sm:$0xff]
  %v339 = vld [vmem:[%s1 + $0x968] sm:$0xff]
  %v340 = vld [vmem:[%s1 + $0x970] sm:$0xff]
  %v341 = vld [vmem:[%s1 + $0x978] sm:$0xff]
  %v342 = vld [vmem:[%s1 + $0x980] sm:$0xff]
  %v343 = vld [vmem:[%s1 + $0x988] sm:$0xff]
  %v344 = vld [vmem:[%s1 + $0x990] sm:$0xff]
  %v345 = vld [vmem:[%s1 + $0x998] sm:$0xff]
  %v346 = vld [vmem:[%s1 + $0x9a0] sm:$0xff]
  %v347 = vld [vmem:[%s1 + $0x9a8] sm:$0xff]
  %v348 = vld [vmem:[%s1 + $0x9b0] sm:$0xff]
  %v349 = vld [vmem:[%s1 + $0x9b8] sm:$0xff]
  %v350 = vld [vmem:[%s1 + $0x9c0] sm:$0xff]
  %v351 = vld [vmem:[%s1 + $0x9c8] sm:$0xff]
  %v352 = vld [vmem:[%s1 + $0x9d0] sm:$0xff]
  %v353 = vld [vmem:[%s1 + $0x9d8] sm:$0xff]
  %v354 = vld [vmem:[%s1 + $0x9e0] sm:$0xff]
  %v355 = vld [vmem:[%s1 + $0x9e8] sm:$0xff]
  %v356 = vld [vmem:[%s1 + $0x9f0] sm:$0xff]
  %v357 = vld [vmem:[%s1 + $0x9f8] sm:$0xff]
  %v358 = vld [vmem:[%s1 + $0xa00] sm:$0xff]
  %v359 = vld [vmem:[%s1 + $0xa08] sm:$0xff]
  %v360 = vld [vmem:[%s1 + $0xa10] sm:$0xff]
  %v361 = vld [vmem:[%s1 + $0xa18] sm:$0xff]
  %v362 = vld [vmem:[%s1 + $0xa20] sm:$0xff]
  %v363 = vld [vmem:[%s1 + $0xa28] sm:$0xff]
  %v364 = vld [vmem:[%s1 + $0xa30] sm:$0xff]
  %v365 = vld [vmem:[%s1 + $0xa38] sm:$0xff]
  %v366 = vld [vmem:[%s1 + $0xa40] sm:$0xff]
  %v367 = vld [vmem:[%s1 + $0xa48] sm:$0xff]
  %v368 = vld [vmem:[%s1 + $0xa50] sm:$0xff]
  %v369 = vld [vmem:[%s1 + $0xa58] sm:$0xff]
  %v370 = vld [vmem:[%s1 + $0xa60] sm:$0xff]
  %v371 = vld [vmem:[%s1 + $0xa68] sm:$0xff]
  %v372 = vld [vmem:[%s1 + $0xa70] sm:$0xff]
  %v373 = vld [vmem:[%s1 + $0xa78] sm:$0xff]
  %v374 = vld [vmem:[%s1 + $0xa80] sm:$0xff]
  %v375 = vld [vmem:[%s1 + $0xa88] sm:$0xff]
  %v376 = vld [vmem:[%s1 + $0xa90] sm:$0xff]
  %v377 = vld [vmem:[%s1 + $0xa98] sm:$0xff]
  %v378 = vld [vmem:[%s1 + $0xaa0] sm:$0xff]
  %v379 = vld [vmem:[%s1 + $0xaa8] sm:$0xff]
  %v380 = vld [vmem:[%s1 + $0xab0] sm:$0xff]
  %v381 = vld [vmem:[%s1 + $0xab8] sm:$0xff]
  %v382 = vld [vmem:[%s1 + $0xac0] sm:$0xff]
  %v383 = vld [vmem:[%s1 + $0xac8] sm:$0xff]
  %v384 = vld [vmem:[%s1 + $0xad0] sm:$0xff]
  %v385 = vld [vmem:[%s1 + $0xad8] sm:$0xff]
  %v386 = vld [vmem:[%s1 + $0xae0] sm:$0xff]
  %v387 = vld [vmem:[%s1 + $0xae8] sm:$0xff]
  %v388 = vld [vmem:[%s1 + $0xaf0] sm:$0xff]
  %v389 = vld [vmem:[%s1 + $0xaf8] sm:$0xff]
  %v390 = vld [vmem:[%s1 + $0xb00] sm:$0xff]
  %v391 = vld [vmem:[%s1 + $0xb08] sm:$0xff]
  %v392 = vld [vmem:[%s1 + $0xb10] sm:$0xff]
  %v393 = vld [vmem:[%s1 + $0xb18] sm:$0xff]
  %v394 = vld [vmem:[%s1 + $0xb20] sm:$0xff]
  %v395 = vld [vmem:[%s1 + $0xb28] sm:$0xff]
  %v396 = vld [vmem:[%s1 + $0xb30] sm:$0xff]
  %v397 = vld [vmem:[%s1 + $0xb38] sm:$0xff]
  %v398 = vld [vmem:[%s1 + $0xb40] sm:$0xff]
  %v399 = vld [vmem:[%s1 + $0xb48] sm:$0xff]
  %v400 = vld [vmem:[%s1 + $0xb50] sm:$0xff]
  %v401 = vld [vmem:[%s1 + $0xb58] sm:$0xff]
  %v402 = vld [vmem:[%s1 + $0xb60] sm:$0xff]
  %v403 = vld [vmem:[%s1 + $0xb68] sm:$0xff]
  %v404 = vld [vmem:[%s1 + $0xb70] sm:$0xff]
  %v405 = vld [vmem:[%s1 + $0xb78] sm:$0xff]
  %v406 = vld [vmem:[%s1 + $0xb80] sm:$0xff]
  %v407 = vld [vmem:[%s1 + $0xb88] sm:$0xff]
  %v408 = vld [vmem:[%s1 + $0xb90] sm:$0xff]
  %v409 = vld [vmem:[%s1 + $0xb98] sm:$0xff]
  %v410 = vld [vmem:[%s1 + $0xba0] sm:$0xff]
  %v411 = vld [vmem:[%s1 + $0xba8] sm:$0xff]
  %v412 = vld [vmem:[%s1 + $0xbb0] sm:$0xff]
  %v413 = vld [vmem:[%s1 + $0xbb8] sm:$0xff]
  %v414 = vld [vmem:[%s1 + $0xbc0] sm:$0xff]
  %v415 = vld [vmem:[%s1 + $0xbc8] sm:$0xff]
  %v416 = vld [vmem:[%s1 + $0xbd0] sm:$0xff]
  %v417 = vld [vmem:[%s1 + $0xbd8] sm:$0xff]
  %v418 = vld [vmem:[%s1 + $0xbe0] sm:$0xff]
  %v419 = vld [vmem:[%s1 + $0xbe8] sm:$0xff]
  %v420 = vld [vmem:[%s1 + $0xbf0] sm:$0xff]
  %v421 = vld [vmem:[%s1 + $0xbf8] sm:$0xff]
  %v422 = vld [vmem:[%s1 + $0xc00] sm:$0xff]
  %v423 = vld [vmem:[%s1 + $0xc08] sm:$0xff]
  %v424 = vld [vmem:[%s1 + $0xc10] sm:$0xff]
  %v425 = vld [vmem:[%s1 + $0xc18] sm:$0xff]
  %v426 = vld [vmem:[%s1 + $0xc20] sm:$0xff]
  %v427 = vld [vmem:[%s1 + $0xc28] sm:$0xff]
  %v428 = vld [vmem:[%s1 + $0xc30] sm:$0xff]
  %v429 = vld [vmem:[%s1 + $0xc38] sm:$0xff]
  %v430 = vld [vmem:[%s1 + $0xc40] sm:$0xff]
  %v431 = vld [vmem:[%s1 + $0xc48] sm:$0xff]
  %v432 = vld [vmem:[%s1 + $0xc50] sm:$0xff]
  %v433 = vld [vmem:[%s1 + $0xc58] sm:$0xff]
  %v434 = vld [vmem:[%s1 + $0xc60] sm:$0xff]
  %v435 = vld [vmem:[%s1 + $0xc68] sm:$0xff]
  %v436 = vld [vmem:[%s1 + $0xc70] sm:$0xff]
  %v437 = vld [vmem:[%s1 + $0xc78] sm:$0xff]
  %v438 = vld [vmem:[%s1 + $0xc80] sm:$0xff]
  %v439 = vld [vmem:[%s1 + $0xc88] sm:$0xff]
  %v440 = vld [vmem:[%s1 + $0xc90] sm:$0xff]
  %v441 = vld [vmem:[%s1 + $0xc98] sm:$0xff]
  %v442 = vld [vmem:[%s1 + $0xca0] sm:$0xff]
  %v443 = vld [vmem:[%s1 + $0xca8] sm:$0xff]
  %v444 = vld [vmem:[%s1 + $0xcb0] sm:$0xff]
  %v445 = vld [vmem:[%s1 + $0xcb8] sm:$0xff]
  %v446 = vld [vmem:[%s1 + $0xcc0] sm:$0xff]
  %v447 = vld [vmem:[%s1 + $0xcc8] sm:$0xff]
  %v448 = vld [vmem:[%s1 + $0xcd0] sm:$0xff]
  %v449 = vld [vmem:[%s1 + $0xcd8] sm:$0xff]
  %v450 = vld [vmem:[%s1 + $0xce0] sm:$0xff]
  %v451 = vld [vmem:[%s1 + $0xce8] sm:$0xff]
  %v452 = vld [vmem:[%s1 + $0xcf0] sm:$0xff]
  %v453 = vld [vmem:[%s1 + $0xcf8] sm:$0xff]
  %v454 = vld [vmem:[%s1 + $0xd00] sm:$0xff]
  %v455 = vld [vmem:[%s1 + $0xd08] sm:$0xff]
  %v456 = vld [vmem:[%s1 + $0xd10] sm:$0xff]
  %v457 = vld [vmem:[%s1 + $0xd18] sm:$0xff]
  %v458 = vld [vmem:[%s1 + $0xd20] sm:$0xff]
  %v459 = vld [vmem:[%s1 + $0xd28] sm:$0xff]
  %v460 = vld [vmem:[%s1 + $0xd30] sm:$0xff]
  %v461 = vld [vmem:[%s1 + $0xd38] sm:$0xff]
  %v462 = vld [vmem:[%s1 + $0xd40] sm:$0xff]
  %v463 = vld [vmem:[%s1 + $0xd48] sm:$0xff]
  %v464 = vld [vmem:[%s1 + $0xd50] sm:$0xff]
  %v465 = vld [vmem:[%s1 + $0xd58] sm:$0xff]
  %v466 = vld [vmem:[%s1 + $0xd60] sm:$0xff]
  %v467 = vld [vmem:[%s1 + $0xd68] sm:$0xff]
  %v468 = vld [vmem:[%s1 + $0xd70] sm:$0xff]
  %v469 = vld [vmem:[%s1 + $0xd78] sm:$0xff]
  %v470 = vld [vmem:[%s1 + $0xd80] sm:$0xff]
  %v471 = vld [vmem:[%s1 + $0xd88] sm:$0xff]
  %v472 = vld [vmem:[%s1 + $0xd90] sm:$0xff]
  %v473 = vld [vmem:[%s1 + $0xd98] sm:$0xff]
  %v474 = vld [vmem:[%s1 + $0xda0] sm:$0xff]
  %v475 = vld [vmem:[%s1 + $0xda8] sm:$0xff]
  %v476 = vld [vmem:[%s1 + $0xdb0] sm:$0xff]
  %v477 = vld [vmem:[%s1 + $0xdb8] sm:$0xff]
  %v478 = vld [vmem:[%s1 + $0xdc0] sm:$0xff]
  %v479 = vld [vmem:[%s1 + $0xdc8] sm:$0xff]
  %v480 = vld [vmem:[%s1 + $0xdd0] sm:$0xff]
  %v481 = vld [vmem:[%s1 + $0xdd8] sm:$0xff]
  %v482 = vld [vmem:[%s1 + $0xde0] sm:$0xff]
  %v483 = vld [vmem:[%s1 + $0xde8] sm:$0xff]
  %v484 = vld [vmem:[%s1 + $0xdf0] sm:$0xff]
  %v485 = vld [vmem:[%s1 + $0xdf8] sm:$0xff]
  %v486 = vld [vmem:[%s1 + $0xe00] sm:$0xff]
  %v487 = vld [vmem:[%s1 + $0xe08] sm:$0xff]
  %v488 = vld [vmem:[%s1 + $0xe10] sm:$0xff]
  %v489 = vld [vmem:[%s1 + $0xe18] sm:$0xff]
  %v490 = vld [vmem:[%s1 + $0xe20] sm:$0xff]
  %v491 = vld [vmem:[%s1 + $0xe28] sm:$0xff]
  %v492 = vld [vmem:[%s1 + $0xe30] sm:$0xff]
  %v493 = vld [vmem:[%s1 + $0xe38] sm:$0xff]
  %v494 = vld [vmem:[%s1 + $0xe40] sm:$0xff]
  %v495 = vld [vmem:[%s1 + $0xe48] sm:$0xff]
  %v496 = vld [vmem:[%s1 + $0xe50] sm:$0xff]
  %v497 = vld [vmem:[%s1 + $0xe58] sm:$0xff]
  %v498 = vld [vmem:[%s1 + $0xe60] sm:$0xff]
  %v499 = vld [vmem:[%s1 + $0xe68] sm:$0xff]
  %v500 = vld [vmem:[%s1 + $0xe70] sm:$0xff]
  %v501 = vld [vmem:[%s1 + $0xe78] sm:$0xff]
  %v502 = vld [vmem:[%s1 + $0xe80] sm:$0xff]
  %v503 = vld [vmem:[%s1 + $0xe88] sm:$0xff]
  %v504 = vld [vmem:[%s1 + $0xe90] sm:$0xff]
  %v505 = vld [vmem:[%s1 + $0xe98] sm:$0xff]
  %v506 = vld [vmem:[%s1 + $0xea0] sm:$0xff]
  %v507 = vld [vmem:[%s1 + $0xea8] sm:$0xff]
  %v508 = vld [vmem:[%s1 + $0xeb0] sm:$0xff]
  %v509 = vld [vmem:[%s1 + $0xeb8] sm:$0xff]
  %v510 = vld [vmem:[%s1 + $0xec0] sm:$0xff]
  %v511 = vld [vmem:[%s1 + $0xec8] sm:$0xff]
  %v512 = vld [vmem:[%s1 + $0xed0] sm:$0xff]
  %v513 = vld [vmem:[%s1 + $0xed8] sm:$0xff]
  %v514 = vld [vmem:[%s1 + $0xee0] sm:$0xff]
  %v515 = vld [vmem:[%s1 + $0xee8] sm:$0xff]
  %v516 = vld [vmem:[%s1 + $0xef0] sm:$0xff]
  %v517 = vld [vmem:[%s1 + $0xef8] sm:$0xff]
  %v518 = vld [vmem:[%s1 + $0xf00] sm:$0xff]
  %v519 = vld [vmem:[%s1 + $0xf08] sm:$0xff]
  %v520 = vld [vmem:[%s1 + $0xf10] sm:$0xff]
  %v521 = vld [vmem:[%s1 + $0xf18] sm:$0xff]
  %v522 = vld [vmem:[%s1 + $0xf20] sm:$0xff]
  %v523 = vld [vmem:[%s1 + $0xf28] sm:$0xff]
  %v524 = vld [vmem:[%s1 + $0xf30] sm:$0xff]
  %v525 = vld [vmem:[%s1 + $0xf38] sm:$0xff]
  %v526 = vld [vmem:[%s1 + $0xf40] sm:$0xff]
  %v527 = vld [vmem:[%s1 + $0xf48] sm:$0xff]
  %v528 = vld [vmem:[%s1 + $0xf50] sm:$0xff]
  %v529 = vld [vmem:[%s1 + $0xf58] sm:$0xff]
  %v530 = vld [vmem:[%s1 + $0xf60] sm:$0xff]
  %v531 = vld [vmem:[%s1 + $0xf68] sm:$0xff]
  %v532 = vld [vmem:[%s1 + $0xf70] sm:$0xff]
  %v533 = vld [vmem:[%s1 + $0xf78] sm:$0xff]
  %v534 = vld [vmem:[%s1 + $0xf80] sm:$0xff]
  %v535 = vld [vmem:[%s1 + $0xf88] sm:$0xff]
  %v536 = vld [vmem:[%s1 + $0xf90] sm:$0xff]
  %v537 = vld [vmem:[%s1 + $0xf98] sm:$0xff]
  %v538 = vld [vmem:[%s1 + $0xfa0] sm:$0xff]
  %v539 = vld [vmem:[%s1 + $0xfa8] sm:$0xff]
  %v540 = vld [vmem:[%s1 + $0xfb0] sm:$0xff]
  %v541 = vld [vmem:[%s1 + $0xfb8] sm:$0xff]
  %v542 = vld [vmem:[%s1 + $0xfc0] sm:$0xff]
  %v543 = vld [vmem:[%s1 + $0xfc8] sm:$0xff]
  %v544 = vld [vmem:[%s1 + $0xfd0] sm:$0xff]
  %v545 = vld [vmem:[%s1 + $0xfd8] sm:$0xff]
  %v546 = vld [vmem:[%s1 + $0xfe0] sm:$0xff]
  %v547 = vld [vmem:[%s1 + $0xfe8] sm:$0xff]
  %v548 = vld [vmem:[%s1 + $0xff0] sm:$0xff]
  %v549 = vld [vmem:[%s1 + $0xff8] sm:$0xff]
  %v550 = vld [vmem:[%s1 + $0x1000] sm:$0xff]
  %v551 = vld [vmem:[%s1 + $0x1008] sm:$0xff]
  %v552 = vld [vmem:[%s1 + $0x1010] sm:$0xff]
  %v553 = vld [vmem:[%s1 + $0x1018] sm:$0xff]
  %v554 = vld [vmem:[%s1 + $0x1020] sm:$0xff]
  %v555 = vld [vmem:[%s1 + $0x1028] sm:$0xff]
  %v556 = vld [vmem:[%s1 + $0x1030] sm:$0xff]
  %v557 = vld [vmem:[%s1 + $0x1038] sm:$0xff]
  %v558 = vld [vmem:[%s1 + $0x1040] sm:$0xff]
  %v559 = vld [vmem:[%s1 + $0x1048] sm:$0xff]
  %v560 = vld [vmem:[%s1 + $0x1050] sm:$0xff]
  %v561 = vld [vmem:[%s1 + $0x1058] sm:$0xff]
  %v562 = vld [vmem:[%s1 + $0x1060] sm:$0xff]
  %v563 = vld [vmem:[%s1 + $0x1068] sm:$0xff]
  %v564 = vld [vmem:[%s1 + $0x1070] sm:$0xff]
  %v565 = vld [vmem:[%s1 + $0x1078] sm:$0xff]
  %v566 = vld [vmem:[%s1 + $0x1080] sm:$0xff]
  %v567 = vld [vmem:[%s1 + $0x1088] sm:$0xff]
  %v568 = vld [vmem:[%s1 + $0x1090] sm:$0xff]
  %v569 = vld [vmem:[%s1 + $0x1098] sm:$0xff]
  %v570 = vld [vmem:[%s1 + $0x10a0] sm:$0xff]
  %v571 = vld [vmem:[%s1 + $0x10a8] sm:$0xff]
  %v572 = vld [vmem:[%s1 + $0x10b0] sm:$0xff]
  %v573 = vld [vmem:[%s1 + $0x10b8] sm:$0xff]
  %v574 = vld [vmem:[%s1 + $0x10c0] sm:$0xff]
  %v575 = vld [vmem:[%s1 + $0x10c8] sm:$0xff]
  %v576 = vld [vmem:[%s1 + $0x10d0] sm:$0xff]
  %v577 = vld [vmem:[%s1 + $0x10d8] sm:$0xff]
  %v578 = vld [vmem:[%s1 + $0x10e0] sm:$0xff]
  %v579 = vld [vmem:[%s1 + $0x10e8] sm:$0xff]
  %v580 = vld [vmem:[%s1 + $0x10f0] sm:$0xff]
  %v581 = vld [vmem:[%s1 + $0x10f8] sm:$0xff]
  %v582 = vld [vmem:[%s1 + $0x1100] sm:$0xff]
  %v583 = vld [vmem:[%s1 + $0x1108] sm:$0xff]
  %v584 = vld [vmem:[%s1 + $0x1110] sm:$0xff]
  %v585 = vld [vmem:[%s1 + $0x1118] sm:$0xff]
  %v586 = vld [vmem:[%s1 + $0x1120] sm:$0xff]
  %v587 = vld [vmem:[%s1 + $0x1128] sm:$0xff]
  %v588 = vld [vmem:[%s1 + $0x1130] sm:$0xff]
  %v589 = vld [vmem:[%s1 + $0x1138] sm:$0xff]
  %v590 = vld [vmem:[%s1 + $0x1140] sm:$0xff]
  %v591 = vld [vmem:[%s1 + $0x1148] sm:$0xff]
  %v592 = vld [vmem:[%s1 + $0x1150] sm:$0xff]
  %v593 = vld [vmem:[%s1 + $0x1158] sm:$0xff]
  %v594 = vld [vmem:[%s1 + $0x1160] sm:$0xff]
  %v595 = vld [vmem:[%s1 + $0x1168] sm:$0xff]
  %v596 = vld [vmem:[%s1 + $0x1170] sm:$0xff]
  %v597 = vld [vmem:[%s1 + $0x1178] sm:$0xff]
  %v598 = vld [vmem:[%s1 + $0x1180] sm:$0xff]
  %v599 = vld [vmem:[%s1 + $0x1188] sm:$0xff]
  %v600 = vld [vmem:[%s1 + $0x1190] sm:$0xff]
  %v601 = vld [vmem:[%s1 + $0x1198] sm:$0xff]
  %v602 = vld [vmem:[%s1 + $0x11a0] sm:$0xff]
  %v603 = vld [vmem:[%s1 + $0x11a8] sm:$0xff]
  %v604 = vld [vmem:[%s1 + $0x11b0] sm:$0xff]
  %v605 = vld [vmem:[%s1 + $0x11b8] sm:$0xff]
  %v606 = vld [vmem:[%s1 + $0x11c0] sm:$0xff]
  %v607 = vld [vmem:[%s1 + $0x11c8] sm:$0xff]
  %v608 = vld [vmem:[%s1 + $0x11d0] sm:$0xff]
  %v609 = vld [vmem:[%s1 + $0x11d8] sm:$0xff]
  %v610 = vld [vmem:[%s1 + $0x11e0] sm:$0xff]
  %v611 = vld [vmem:[%s1 + $0x11e8] sm:$0xff]
  %v612 = vld [vmem:[%s1 + $0x11f0] sm:$0xff]
  %v613 = vld [vmem:[%s1 + $0x11f8] sm:$0xff]
  %v614 = vld [vmem:[%s1 + $0x1200] sm:$0xff]
  %v615 = vld [vmem:[%s1 + $0x1208] sm:$0xff]
  %v616 = vld [vmem:[%s1 + $0x1210] sm:$0xff]
  %v617 = vld [vmem:[%s1 + $0x1218] sm:$0xff]
  %v618 = vld [vmem:[%s1 + $0x1220] sm:$0xff]
  %v619 = vld [vmem:[%s1 + $0x1228] sm:$0xff]
  %v620 = vld [vmem:[%s1 + $0x1230] sm:$0xff]
  %v621 = vld [vmem:[%s1 + $0x1238] sm:$0xff]
  %v622 = vld [vmem:[%s1 + $0x1240] sm:$0xff]
  %v623 = vld [vmem:[%s1 + $0x1248] sm:$0xff]
  %v624 = vld [vmem:[%s1 + $0x1250] sm:$0xff]
  %v625 = vld [vmem:[%s1 + $0x1258] sm:$0xff]
  %v626 = vld [vmem:[%s1 + $0x1260] sm:$0xff]
  %v627 = vld [vmem:[%s1 + $0x1268] sm:$0xff]
  %v628 = vld [vmem:[%s1 + $0x1270] sm:$0xff]
  %v629 = vld [vmem:[%s1 + $0x1278] sm:$0xff]
  %v630 = vld [vmem:[%s1 + $0x1280] sm:$0xff]
  %v631 = vld [vmem:[%s1 + $0x1288] sm:$0xff]
  %v632 = vld [vmem:[%s1 + $0x1290] sm:$0xff]
  %v633 = vld [vmem:[%s1 + $0x1298] sm:$0xff]
  %v634 = vld [vmem:[%s1 + $0x12a0] sm:$0xff]
  %v635 = vld [vmem:[%s1 + $0x12a8] sm:$0xff]
  %v636 = vld [vmem:[%s1 + $0x12b0] sm:$0xff]
  %v637 = vld [vmem:[%s1 + $0x12b8] sm:$0xff]
  %v638 = vld [vmem:[%s1 + $0x12c0] sm:$0xff]
  %v639 = vld [vmem:[%s1 + $0x12c8] sm:$0xff]
  %v640 = vld [vmem:[%s1 + $0x12d0] sm:$0xff]
  %v641 = vld [vmem:[%s1 + $0x12d8] sm:$0xff]
  %v642 = vld [vmem:[%s1 + $0x12e0] sm:$0xff]
  %v643 = vld [vmem:[%s1 + $0x12e8] sm:$0xff]
  %v644 = vld [vmem:[%s1 + $0x12f0] sm:$0xff]
  %v645 = vld [vmem:[%s1 + $0x12f8] sm:$0xff]
  %v646 = vld [vmem:[%s1 + $0x1300] sm:$0xff]
  %v647 = vld [vmem:[%s1 + $0x1308] sm:$0xff]
  %v648 = vld [vmem:[%s1 + $0x1310] sm:$0xff]
  %v649 = vld [vmem:[%s1 + $0x1318] sm:$0xff]
  %v650 = vld [vmem:[%s1 + $0x1320] sm:$0xff]
  %v651 = vld [vmem:[%s1 + $0x1328] sm:$0xff]
  %v652 = vld [vmem:[%s1 + $0x1330] sm:$0xff]
  %v653 = vld [vmem:[%s1 + $0x1338] sm:$0xff]
  %v654 = vld [vmem:[%s1 + $0x1340] sm:$0xff]
  %v655 = vld [vmem:[%s1 + $0x1348] sm:$0xff]
  %v656 = vld [vmem:[%s1 + $0x1350] sm:$0xff]
  %v657 = vld [vmem:[%s1 + $0x1358] sm:$0xff]
  %v658 = vld [vmem:[%s1 + $0x1360] sm:$0xff]
  %v659 = vld [vmem:[%s1 + $0x1368] sm:$0xff]
  %v660 = vld [vmem:[%s1 + $0x1370] sm:$0xff]
  %v661 = vld [vmem:[%s1 + $0x1378] sm:$0xff]
  %v662 = vld [vmem:[%s1 + $0x1380] sm:$0xff]
  %v663 = vld [vmem:[%s1 + $0x1388] sm:$0xff]
  %v664 = vld [vmem:[%s1 + $0x1390] sm:$0xff]
  %v665 = vld [vmem:[%s1 + $0x1398] sm:$0xff]
  %v666 = vld [vmem:[%s1 + $0x13a0] sm:$0xff]
  %v667 = vld [vmem:[%s1 + $0x13a8] sm:$0xff]
  %v668 = vld [vmem:[%s1 + $0x13b0] sm:$0xff]
  %v669 = vld [vmem:[%s1 + $0x13b8] sm:$0xff]
  %v670 = vld [vmem:[%s1 + $0x13c0] sm:$0xff]
  %v671 = vld [vmem:[%s1 + $0x13c8] sm:$0xff]
  %v672 = vld [vmem:[%s1 + $0x13d0] sm:$0xff]
  %v673 = vld [vmem:[%s1 + $0x13d8] sm:$0xff]
  %v674 = vld [vmem:[%s1 + $0x13e0] sm:$0xff]
  %v675 = vld [vmem:[%s1 + $0x13e8] sm:$0xff]
  %v676 = vld [vmem:[%s1 + $0x13f0] sm:$0xff]
  %v677 = vld [vmem:[%s1 + $0x13f8] sm:$0xff]
  %v678 = vld [vmem:[%s1 + $0x1400] sm:$0xff]
  %v679 = vld [vmem:[%s1 + $0x1408] sm:$0xff]
  %v680 = vld [vmem:[%s1 + $0x1410] sm:$0xff]
  %v681 = vld [vmem:[%s1 + $0x1418] sm:$0xff]
  %v682 = vld [vmem:[%s1 + $0x1420] sm:$0xff]
  %v683 = vld [vmem:[%s1 + $0x1428] sm:$0xff]
  %v684 = vld [vmem:[%s1 + $0x1430] sm:$0xff]
  %v685 = vld [vmem:[%s1 + $0x1438] sm:$0xff]
  %v686 = vld [vmem:[%s1 + $0x1440] sm:$0xff]
  %v687 = vld [vmem:[%s1 + $0x1448] sm:$0xff]
  %v688 = vld [vmem:[%s1 + $0x1450] sm:$0xff]
  %v689 = vld [vmem:[%s1 + $0x1458] sm:$0xff]
  %v690 = vld [vmem:[%s1 + $0x1460] sm:$0xff]
  %v691 = vld [vmem:[%s1 + $0x1468] sm:$0xff]
  %v692 = vld [vmem:[%s1 + $0x1470] sm:$0xff]
  %v693 = vld [vmem:[%s1 + $0x1478] sm:$0xff]
  %v694 = vld [vmem:[%s1 + $0x1480] sm:$0xff]
  %v695 = vld [vmem:[%s1 + $0x1488] sm:$0xff]
  %v696 = vld [vmem:[%s1 + $0x1490] sm:$0xff]
  %v697 = vld [vmem:[%s1 + $0x1498] sm:$0xff]
  %v698 = vld [vmem:[%s1 + $0x14a0] sm:$0xff]
  %v699 = vld [vmem:[%s1 + $0x14a8] sm:$0xff]
  %v700 = vld [vmem:[%s1 + $0x14b0] sm:$0xff]
  %v701 = vld [vmem:[%s1 + $0x14b8] sm:$0xff]
  %v702 = vld [vmem:[%s1 + $0x14c0] sm:$0xff]
  %v703 = vld [vmem:[%s1 + $0x14c8] sm:$0xff]
  %v704 = vld [vmem:[%s1 + $0x14d0] sm:$0xff]
  %v705 = vld [vmem:[%s1 + $0x14d8] sm:$0xff]
  %v706 = vld [vmem:[%s1 + $0x14e0] sm:$0xff]
  %v707 = vld [vmem:[%s1 + $0x14e8] sm:$0xff]
  %v708 = vld [vmem:[%s1 + $0x14f0] sm:$0xff]
  %v709 = vld [vmem:[%s1 + $0x14f8] sm:$0xff]
  %v710 = vld [vmem:[%s1 + $0x1500] sm:$0xff]
  %v711 = vld [vmem:[%s1 + $0x1508] sm:$0xff]
  %v712 = vld [vmem:[%s1 + $0x1510] sm:$0xff]
  %v713 = vld [vmem:[%s1 + $0x1518] sm:$0xff]
  %v714 = vld [vmem:[%s1 + $0x1520] sm:$0xff]
  %v715 = vld [vmem:[%s1 + $0x1528] sm:$0xff]
  %v716 = vld [vmem:[%s1 + $0x1530] sm:$0xff]
  %v717 = vld [vmem:[%s1 + $0x1538] sm:$0xff]
  %v718 = vld [vmem:[%s1 + $0x1540] sm:$0xff]
  %v719 = vld [vmem:[%s1 + $0x1548] sm:$0xff]
  %v720 = vld [vmem:[%s1 + $0x1550] sm:$0xff]
  %v721 = vld [vmem:[%s1 + $0x1558] sm:$0xff]
  %v722 = vld [vmem:[%s1 + $0x1560] sm:$0xff]
  %v723 = vld [vmem:[%s1 + $0x1568] sm:$0xff]
  %v724 = vld [vmem:[%s1 + $0x1570] sm:$0xff]
  %v725 = vld [vmem:[%s1 + $0x1578] sm:$0xff]
  %v726 = vld [vmem:[%s1 + $0x1580] sm:$0xff]
  %v727 = vld [vmem:[%s1 + $0x1588] sm:$0xff]
  %v728 = vld [vmem:[%s1 + $0x1590] sm:$0xff]
  %v729 = vld [vmem:[%s1 + $0x1598] sm:$0xff]
  %v730 = vld [vmem:[%s1 + $0x15a0] sm:$0xff]
  %v731 = vld [vmem:[%s1 + $0x15a8] sm:$0xff]
  %v732 = vld [vmem:[%s1 + $0x15b0] sm:$0xff]
  %v733 = vld [vmem:[%s1 + $0x15b8] sm:$0xff]
  %v734 = vld [vmem:[%s1 + $0x15c0] sm:$0xff]
  %v735 = vld [vmem:[%s1 + $0x15c8] sm:$0xff]
  %v736 = vld [vmem:[%s1 + $0x15d0] sm:$0xff]
  %v737 = vld [vmem:[%s1 + $0x15d8] sm:$0xff]
  %v738 = vld [vmem:[%s1 + $0x15e0] sm:$0xff]
  %v739 = vld [vmem:[%s1 + $0x15e8] sm:$0xff]
  %v740 = vld [vmem:[%s1 + $0x15f0] sm:$0xff]
  %v741 = vld [vmem:[%s1 + $0x15f8] sm:$0xff]
  %v742 = vld [vmem:[%s1 + $0x1600] sm:$0xff]
  %v743 = vld [vmem:[%s1 + $0x1608] sm:$0xff]
  %v744 = vld [vmem:[%s1 + $0x1610] sm:$0xff]
  %v745 = vld [vmem:[%s1 + $0x1618] sm:$0xff]
  %v746 = vld [vmem:[%s1 + $0x1620] sm:$0xff]
  %v747 = vld [vmem:[%s1 + $0x1628] sm:$0xff]
  %v748 = vld [vmem:[%s1 + $0x1630] sm:$0xff]
  %v749 = vld [vmem:[%s1 + $0x1638] sm:$0xff]
  %v750 = vld [vmem:[%s1 + $0x1640] sm:$0xff]
  %v751 = vld [vmem:[%s1 + $0x1648] sm:$0xff]
  %v752 = vld [vmem:[%s1 + $0x1650] sm:$0xff]
  %v753 = vld [vmem:[%s1 + $0x1658] sm:$0xff]
  %v754 = vld [vmem:[%s1 + $0x1660] sm:$0xff]
  %v755 = vld [vmem:[%s1 + $0x1668] sm:$0xff]
  %v756 = vld [vmem:[%s1 + $0x1670] sm:$0xff]
  %v757 = vld [vmem:[%s1 + $0x1678] sm:$0xff]
  %v758 = vld [vmem:[%s1 + $0x1680] sm:$0xff]
  %v759 = vld [vmem:[%s1 + $0x1688] sm:$0xff]
  %v760 = vld [vmem:[%s1 + $0x1690] sm:$0xff]
  %v761 = vld [vmem:[%s1 + $0x1698] sm:$0xff]
  %v762 = vld [vmem:[%s1 + $0x16a0] sm:$0xff]
  %v763 = vld [vmem:[%s1 + $0x16a8] sm:$0xff]
  %v764 = vld [vmem:[%s1 + $0x16b0] sm:$0xff]
  %v765 = vld [vmem:[%s1 + $0x16b8] sm:$0xff]
  %v766 = vld [vmem:[%s1 + $0x16c0] sm:$0xff]
  %v767 = vld [vmem:[%s1 + $0x16c8] sm:$0xff]
  %v768 = vld [vmem:[%s1 + $0x16d0] sm:$0xff]
  %v769 = vld [vmem:[%s1 + $0x16d8] sm:$0xff]
  %v770 = vld [vmem:[%s1 + $0x16e0] sm:$0xff]
  %v771 = vld [vmem:[%s1 + $0x16e8] sm:$0xff]
  %v772 = vld [vmem:[%s1 + $0x16f0] sm:$0xff]
  %v773 = vld [vmem:[%s1 + $0x16f8] sm:$0xff]
  %v774 = vld [vmem:[%s1 + $0x1700] sm:$0xff]
  %v775 = vld [vmem:[%s1 + $0x1708] sm:$0xff]
  %v776 = vld [vmem:[%s1 + $0x1710] sm:$0xff]
  %v777 = vld [vmem:[%s1 + $0x1718] sm:$0xff]
  %v778 = vld [vmem:[%s1 + $0x1720] sm:$0xff]
  %v779 = vld [vmem:[%s1 + $0x1728] sm:$0xff]
  %v780 = vld [vmem:[%s1 + $0x1730] sm:$0xff]
  %v781 = vld [vmem:[%s1 + $0x1738] sm:$0xff]
  %v782 = vld [vmem:[%s1 + $0x1740] sm:$0xff]
  %v783 = vld [vmem:[%s1 + $0x1748] sm:$0xff]
  %v784 = vld [vmem:[%s1 + $0x1750] sm:$0xff]
  %v785 = vld [vmem:[%s1 + $0x1758] sm:$0xff]
  %v786 = vld [vmem:[%s1 + $0x1760] sm:$0xff]
  %v787 = vld [vmem:[%s1 + $0x1768] sm:$0xff]
  %v788 = vld [vmem:[%s1 + $0x1770] sm:$0xff]
  %v789 = vld [vmem:[%s1 + $0x1778] sm:$0xff]
  %v790 = vld [vmem:[%s1 + $0x1780] sm:$0xff]
  %v791 = vld [vmem:[%s1 + $0x1788] sm:$0xff]
  %v792 = vld [vmem:[%s1 + $0x1790] sm:$0xff]
  %v793 = vld [vmem:[%s1 + $0x1798] sm:$0xff]
  %v794 = vld [vmem:[%s1 + $0x17a0] sm:$0xff]
  %v795 = vld [vmem:[%s1 + $0x17a8] sm:$0xff]
  %v796 = vld [vmem:[%s1 + $0x17b0] sm:$0xff]
  %v797 = vld [vmem:[%s1 + $0x17b8] sm:$0xff]
  %v798 = vld [vmem:[%s1 + $0x17c0] sm:$0xff]
  %v799 = vld [vmem:[%s1 + $0x17c8] sm:$0xff]
  %v800 = vld [vmem:[%s1 + $0x17d0] sm:$0xff]
  %v801 = vld [vmem:[%s1 + $0x17d8] sm:$0xff]
  %v802 = vld [vmem:[%s1 + $0x17e0] sm:$0xff]
  %v803 = vld [vmem:[%s1 + $0x17e8] sm:$0xff]
  %v804 = vld [vmem:[%s1 + $0x17f0] sm:$0xff]
  %v805 = vld [vmem:[%s1 + $0x17f8] sm:$0xff]
  %v806 = vld [vmem:[%s1 + $0x1800] sm:$0xff]
  %v807 = vld [vmem:[%s1 + $0x1808] sm:$0xff]
  %v808 = vld [vmem:[%s1 + $0x1810] sm:$0xff]
  %v809 = vld [vmem:[%s1 + $0x1818] sm:$0xff]
  %v810 = vld [vmem:[%s1 + $0x1820] sm:$0xff]
  %v811 = vld [vmem:[%s1 + $0x1828] sm:$0xff]
  %v812 = vld [vmem:[%s1 + $0x1830] sm:$0xff]
  %v813 = vld [vmem:[%s1 + $0x1838] sm:$0xff]
  %v814 = vld [vmem:[%s1 + $0x1840] sm:$0xff]
  %v815 = vld [vmem:[%s1 + $0x1848] sm:$0xff]
  %v816 = vld [vmem:[%s1 + $0x1850] sm:$0xff]
  %v817 = vld [vmem:[%s1 + $0x1858] sm:$0xff]
  %v818 = vld [vmem:[%s1 + $0x1860] sm:$0xff]
  %v819 = vld [vmem:[%s1 + $0x1868] sm:$0xff]
  %v820 = vld [vmem:[%s1 + $0x1870] sm:$0xff]
  %v821 = vld [vmem:[%s1 + $0x1878] sm:$0xff]
  %v822 = vld [vmem:[%s1 + $0x1880] sm:$0xff]
  %v823 = vld [vmem:[%s1 + $0x1888] sm:$0xff]
  %v824 = vld [vmem:[%s1 + $0x1890] sm:$0xff]
  %v825 = vld [vmem:[%s1 + $0x1898] sm:$0xff]
  %v826 = vld [vmem:[%s1 + $0x18a0] sm:$0xff]
  %v827 = vld [vmem:[%s1 + $0x18a8] sm:$0xff]
  %v828 = vld [vmem:[%s1 + $0x18b0] sm:$0xff]
  %v829 = vld [vmem:[%s1 + $0x18b8] sm:$0xff]
  %v830 = vld [vmem:[%s1 + $0x18c0] sm:$0xff]
  %v831 = vld [vmem:[%s1 + $0x18c8] sm:$0xff]
  %v832 = vld [vmem:[%s1 + $0x18d0] sm:$0xff]
  %v833 = vld [vmem:[%s1 + $0x18d8] sm:$0xff]
  %v834 = vld [vmem:[%s1 + $0x18e0] sm:$0xff]
  %v835 = vld [vmem:[%s1 + $0x18e8] sm:$0xff]
  %v836 = vld [vmem:[%s1 + $0x18f0] sm:$0xff]
  %v837 = vld [vmem:[%s1 + $0x18f8] sm:$0xff]
  %v838 = vld [vmem:[%s1 + $0x1900] sm:$0xff]
  %v839 = vld [vmem:[%s1 + $0x1908] sm:$0xff]
  %v840 = vld [vmem:[%s1 + $0x1910] sm:$0xff]
  %v841 = vld [vmem:[%s1 + $0x1918] sm:$0xff]
  %v842 = vld [vmem:[%s1 + $0x1920] sm:$0xff]
  %v843 = vld [vmem:[%s1 + $0x1928] sm:$0xff]
  %v844 = vld [vmem:[%s1 + $0x1930] sm:$0xff]
  %v845 = vld [vmem:[%s1 + $0x1938] sm:$0xff]
  %v846 = vld [vmem:[%s1 + $0x1940] sm:$0xff]
  %v847 = vld [vmem:[%s1 + $0x1948] sm:$0xff]
  %v848 = vld [vmem:[%s1 + $0x1950] sm:$0xff]
  %v849 = vld [vmem:[%s1 + $0x1958] sm:$0xff]
  %v850 = vld [vmem:[%s1 + $0x1960] sm:$0xff]
  %v851 = vld [vmem:[%s1 + $0x1968] sm:$0xff]
  %v852 = vld [vmem:[%s1 + $0x1970] sm:$0xff]
  %v853 = vld [vmem:[%s1 + $0x1978] sm:$0xff]
  %v854 = vld [vmem:[%s1 + $0x1980] sm:$0xff]
  %v855 = vld [vmem:[%s1 + $0x1988] sm:$0xff]
  %v856 = vld [vmem:[%s1 + $0x1990] sm:$0xff]
  %v857 = vld [vmem:[%s1 + $0x1998] sm:$0xff]
  %v858 = vld [vmem:[%s1 + $0x19a0] sm:$0xff]
  %v859 = vld [vmem:[%s1 + $0x19a8] sm:$0xff]
  %v860 = vld [vmem:[%s1 + $0x19b0] sm:$0xff]
  %v861 = vld [vmem:[%s1 + $0x19b8] sm:$0xff]
  %v862 = vld [vmem:[%s1 + $0x19c0] sm:$0xff]
  %v863 = vld [vmem:[%s1 + $0x19c8] sm:$0xff]
  %v864 = vld [vmem:[%s1 + $0x19d0] sm:$0xff]
  %v865 = vld [vmem:[%s1 + $0x19d8] sm:$0xff]
  %v866 = vld [vmem:[%s1 + $0x19e0] sm:$0xff]
  %v867 = vld [vmem:[%s1 + $0x19e8] sm:$0xff]
  %v868 = vld [vmem:[%s1 + $0x19f0] sm:$0xff]
  %v869 = vld [vmem:[%s1 + $0x19f8] sm:$0xff]
  %v870 = vld [vmem:[%s1 + $0x1a00] sm:$0xff]
  %v871 = vld [vmem:[%s1 + $0x1a08] sm:$0xff]
  %v872 = vld [vmem:[%s1 + $0x1a10] sm:$0xff]
  %v873 = vld [vmem:[%s1 + $0x1a18] sm:$0xff]
  %v874 = vld [vmem:[%s1 + $0x1a20] sm:$0xff]
  %v875 = vld [vmem:[%s1 + $0x1a28] sm:$0xff]
  %v876 = vld [vmem:[%s1 + $0x1a30] sm:$0xff]
  %v877 = vld [vmem:[%s1 + $0x1a38] sm:$0xff]
  %v878 = vld [vmem:[%s1 + $0x1a40] sm:$0xff]
  %v879 = vld [vmem:[%s1 + $0x1a48] sm:$0xff]
  %v880 = vld [vmem:[%s1 + $0x1a50] sm:$0xff]
  %v881 = vld [vmem:[%s1 + $0x1a58] sm:$0xff]
  %v882 = vld [vmem:[%s1 + $0x1a60] sm:$0xff]
  %v883 = vld [vmem:[%s1 + $0x1a68] sm:$0xff]
  %v884 = vld [vmem:[%s1 + $0x1a70] sm:$0xff]
  %v885 = vld [vmem:[%s1 + $0x1a78] sm:$0xff]
  %v886 = vld [vmem:[%s1 + $0x1a80] sm:$0xff]
  %v887 = vld [vmem:[%s1 + $0x1a88] sm:$0xff]
  %v888 = vld [vmem:[%s1 + $0x1a90] sm:$0xff]
  %v889 = vld [vmem:[%s1 + $0x1a98] sm:$0xff]
  %v890 = vld [vmem:[%s1 + $0x1aa0] sm:$0xff]
  %v891 = vld [vmem:[%s1 + $0x1aa8] sm:$0xff]
  %v892 = vld [vmem:[%s1 + $0x1ab0] sm:$0xff]
  %v893 = vld [vmem:[%s1 + $0x1ab8] sm:$0xff]
  %v894 = vld [vmem:[%s1 + $0x1ac0] sm:$0xff]
  %v895 = vld [vmem:[%s1 + $0x1ac8] sm:$0xff]
  %v896 = vld [vmem:[%s1 + $0x1ad0] sm:$0xff]
  %v897 = vld [vmem:[%s1 + $0x1ad8] sm:$0xff]
  %v898 = vld [vmem:[%s1 + $0x1ae0] sm:$0xff]
  %v899 = vld [vmem:[%s1 + $0x1ae8] sm:$0xff]
  %v900 = vld [vmem:[%s1 + $0x1af0] sm:$0xff]
  %v901 = vld [vmem:[%s1 + $0x1af8] sm:$0xff]
  %v902 = vld [vmem:[%s1 + $0x1b00] sm:$0xff]
  %v903 = vld [vmem:[%s1 + $0x1b08] sm:$0xff]
  %v904 = vld [vmem:[%s1 + $0x1b10] sm:$0xff]
  %v905 = vld [vmem:[%s1 + $0x1b18] sm:$0xff]
  %v906 = vld [vmem:[%s1 + $0x1b20] sm:$0xff]
  %v907 = vld [vmem:[%s1 + $0x1b28] sm:$0xff]
  %v908 = vld [vmem:[%s1 + $0x1b30] sm:$0xff]
  %v909 = vld [vmem:[%s1 + $0x1b38] sm:$0xff]
  %v910 = vld [vmem:[%s1 + $0x1b40] sm:$0xff]
  %v911 = vld [vmem:[%s1 + $0x1b48] sm:$0xff]
  %v912 = vld [vmem:[%s1 + $0x1b50] sm:$0xff]
  %v913 = vld [vmem:[%s1 + $0x1b58] sm:$0xff]
  %v914 = vld [vmem:[%s1 + $0x1b60] sm:$0xff]
  %v915 = vld [vmem:[%s1 + $0x1b68] sm:$0xff]
  %v916 = vld [vmem:[%s1 + $0x1b70] sm:$0xff]
  %v917 = vld [vmem:[%s1 + $0x1b78] sm:$0xff]
  %v918 = vld [vmem:[%s1 + $0x1b80] sm:$0xff]
  %v919 = vld [vmem:[%s1 + $0x1b88] sm:$0xff]
  %v920 = vld [vmem:[%s1 + $0x1b90] sm:$0xff]
  %v921 = vld [vmem:[%s1 + $0x1b98] sm:$0xff]
  %v922 = vld [vmem:[%s1 + $0x1ba0] sm:$0xff]
  %v923 = vld [vmem:[%s1 + $0x1ba8] sm:$0xff]
  %v924 = vld [vmem:[%s1 + $0x1bb0] sm:$0xff]
  %v925 = vld [vmem:[%s1 + $0x1bb8] sm:$0xff]
  %v926 = vld [vmem:[%s1 + $0x1bc0] sm:$0xff]
  %v927 = vld [vmem:[%s1 + $0x1bc8] sm:$0xff]
  %v928 = vld [vmem:[%s1 + $0x1bd0] sm:$0xff]
  %v929 = vld [vmem:[%s1 + $0x1bd8] sm:$0xff]
  %v930 = vld [vmem:[%s1 + $0x1be0] sm:$0xff]
  %v931 = vld [vmem:[%s1 + $0x1be8] sm:$0xff]
  %v932 = vld [vmem:[%s1 + $0x1bf0] sm:$0xff]
  %v933 = vld [vmem:[%s1 + $0x1bf8] sm:$0xff]
  %v934 = vld [vmem:[%s1 + $0x1c00] sm:$0xff]
  %v935 = vld [vmem:[%s1 + $0x1c08] sm:$0xff]
  %v936 = vld [vmem:[%s1 + $0x1c10] sm:$0xff]
  %v937 = vld [vmem:[%s1 + $0x1c18] sm:$0xff]
  %v938 = vld [vmem:[%s1 + $0x1c20] sm:$0xff]
  %v939 = vld [vmem:[%s1 + $0x1c28] sm:$0xff]
  %v940 = vld [vmem:[%s1 + $0x1c30] sm:$0xff]
  %v941 = vld [vmem:[%s1 + $0x1c38] sm:$0xff]
  %v942 = vld [vmem:[%s1 + $0x1c40] sm:$0xff]
  %v943 = vld [vmem:[%s1 + $0x1c48] sm:$0xff]
  %v944 = vld [vmem:[%s1 + $0x1c50] sm:$0xff]
  %v945 = vld [vmem:[%s1 + $0x1c58] sm:$0xff]
  %v946 = vld [vmem:[%s1 + $0x1c60] sm:$0xff]
  %v947 = vld [vmem:[%s1 + $0x1c68] sm:$0xff]
  %v948 = vld [vmem:[%s1 + $0x1c70] sm:$0xff]
  %v949 = vld [vmem:[%s1 + $0x1c78] sm:$0xff]
  %v950 = vld [vmem:[%s1 + $0x1c80] sm:$0xff]
  %v951 = vld [vmem:[%s1 + $0x1c88] sm:$0xff]
  %v952 = vld [vmem:[%s1 + $0x1c90] sm:$0xff]
  %v953 = vld [vmem:[%s1 + $0x1c98] sm:$0xff]
  %v954 = vld [vmem:[%s1 + $0x1ca0] sm:$0xff]
  %v955 = vld [vmem:[%s1 + $0x1ca8] sm:$0xff]
  %v956 = vld [vmem:[%s1 + $0x1cb0] sm:$0xff]
  %v957 = vld [vmem:[%s1 + $0x1cb8] sm:$0xff]
  %v958 = vld [vmem:[%s1 + $0x1cc0] sm:$0xff]
  %v959 = vld [vmem:[%s1 + $0x1cc8] sm:$0xff]
  %v960 = vld [vmem:[%s1 + $0x1cd0] sm:$0xff]
  %v961 = vld [vmem:[%s1 + $0x1cd8] sm:$0xff]
  %v962 = vld [vmem:[%s1 + $0x1ce0] sm:$0xff]
  %v963 = vld [vmem:[%s1 + $0x1ce8] sm:$0xff]
  %v964 = vld [vmem:[%s1 + $0x1cf0] sm:$0xff]
  %v965 = vld [vmem:[%s1 + $0x1cf8] sm:$0xff]
  %v966 = vld [vmem:[%s1 + $0x1d00] sm:$0xff]
  %v967 = vld [vmem:[%s1 + $0x1d08] sm:$0xff]
  %v968 = vld [vmem:[%s1 + $0x1d10] sm:$0xff]
  %v969 = vld [vmem:[%s1 + $0x1d18] sm:$0xff]
  %v970 = vld [vmem:[%s1 + $0x1d20] sm:$0xff]
  %v971 = vld [vmem:[%s1 + $0x1d28] sm:$0xff]
  %v972 = vld [vmem:[%s1 + $0x1d30] sm:$0xff]
  %v973 = vld [vmem:[%s1 + $0x1d38] sm:$0xff]
  %v974 = vld [vmem:[%s1 + $0x1d40] sm:$0xff]
  %v975 = vld [vmem:[%s1 + $0x1d48] sm:$0xff]
  %v976 = vld [vmem:[%s1 + $0x1d50] sm:$0xff]
  %v977 = vld [vmem:[%s1 + $0x1d58] sm:$0xff]
  %v978 = vld [vmem:[%s1 + $0x1d60] sm:$0xff]
  %v979 = vld [vmem:[%s1 + $0x1d68] sm:$0xff]
  %v980 = vld [vmem:[%s1 + $0x1d70] sm:$0xff]
  %v981 = vld [vmem:[%s1 + $0x1d78] sm:$0xff]
  %v982 = vld [vmem:[%s1 + $0x1d80] sm:$0xff]
  %v983 = vld [vmem:[%s1 + $0x1d88] sm:$0xff]
  %v984 = vld [vmem:[%s1 + $0x1d90] sm:$0xff]
  %v985 = vld [vmem:[%s1 + $0x1d98] sm:$0xff]
  %v986 = vld [vmem:[%s1 + $0x1da0] sm:$0xff]
  %v987 = vld [vmem:[%s1 + $0x1da8] sm:$0xff]
  %v988 = vld [vmem:[%s1 + $0x1db0] sm:$0xff]
  %v989 = vld [vmem:[%s1 + $0x1db8] sm:$0xff]
  %v990 = vld [vmem:[%s1 + $0x1dc0] sm:$0xff]
  %v991 = vld [vmem:[%s1 + $0x1dc8] sm:$0xff]
  %v992 = vld [vmem:[%s1 + $0x1dd0] sm:$0xff]
  %v993 = vld [vmem:[%s1 + $0x1dd8] sm:$0xff]
  %v994 = vld [vmem:[%s1 + $0x1de0] sm:$0xff]
  %v995 = vld [vmem:[%s1 + $0x1de8] sm:$0xff]
  %v996 = vld [vmem:[%s1 + $0x1df0] sm:$0xff]
  %v997 = vld [vmem:[%s1 + $0x1df8] sm:$0xff]
  %v998 = vld [vmem:[%s1 + $0x1e00] sm:$0xff]
  %v999 = vld [vmem:[%s1 + $0x1e08] sm:$0xff]
  %v1000 = vld [vmem:[%s1 + $0x1e10] sm:$0xff]
  %v1001 = vld [vmem:[%s1 + $0x1e18] sm:$0xff]
  %v1002 = vld [vmem:[%s1 + $0x1e20] sm:$0xff]
  %v1003 = vld [vmem:[%s1 + $0x1e28] sm:$0xff]
  %v1004 = vld [vmem:[%s1 + $0x1e30] sm:$0xff]
  %v1005 = vld [vmem:[%s1 + $0x1e38] sm:$0xff]
  %v1006 = vld [vmem:[%s1 + $0x1e40] sm:$0xff]
  %v1007 = vld [vmem:[%s1 + $0x1e48] sm:$0xff]
  %v1008 = vld [vmem:[%s1 + $0x1e50] sm:$0xff]
  %v1009 = vld [vmem:[%s1 + $0x1e58] sm:$0xff]
  %v1010 = vld [vmem:[%s1 + $0x1e60] sm:$0xff]
  %v1011 = vld [vmem:[%s1 + $0x1e68] sm:$0xff]
  %v1012 = vld [vmem:[%s1 + $0x1e70] sm:$0xff]
  %v1013 = vld [vmem:[%s1 + $0x1e78] sm:$0xff]
  %v1014 = vld [vmem:[%s1 + $0x1e80] sm:$0xff]
  %v1015 = vld [vmem:[%s1 + $0x1e88] sm:$0xff]
  %v1016 = vld [vmem:[%s1 + $0x1e90] sm:$0xff]
  %v1017 = vld [vmem:[%s1 + $0x1e98] sm:$0xff]
  %v1018 = vld [vmem:[%s1 + $0x1ea0] sm:$0xff]
  %v1019 = vld [vmem:[%s1 + $0x1ea8] sm:$0xff]
  %v1020 = vld [vmem:[%s1 + $0x1eb0] sm:$0xff]
  %v1021 = vld [vmem:[%s1 + $0x1eb8] sm:$0xff]
  %v1022 = vld [vmem:[%s1 + $0x1ec0] sm:$0xff]
  %v1023 = vld [vmem:[%s1 + $0x1ec8] sm:$0xff]
  %v1024 = vld [vmem:[%s1 + $0x1ed0] sm:$0xff]
  %v1025 = vld [vmem:[%s1 + $0x1ed8] sm:$0xff]
  %v1026 = vld [vmem:[%s1 + $0x1ee0] sm:$0xff]
  %v1027 = vld [vmem:[%s1 + $0x1ee8] sm:$0xff]
  %v1028 = vld [vmem:[%s1 + $0x1ef0] sm:$0xff]
  %v1029 = vld [vmem:[%s1 + $0x1ef8] sm:$0xff]
  %v1030 = vld [vmem:[%s1 + $0x1f00] sm:$0xff]
  %v1031 = vld [vmem:[%s1 + $0x1f08] sm:$0xff]
  %v1032 = vld [vmem:[%s1 + $0x1f10] sm:$0xff]
  %v1033 = vld [vmem:[%s1 + $0x1f18] sm:$0xff]
  %v1034 = vld [vmem:[%s1 + $0x1f20] sm:$0xff]
  %v1035 = vld [vmem:[%s1 + $0x1f28] sm:$0xff]
  %v1036 = vld [vmem:[%s1 + $0x1f30] sm:$0xff]
  %v1037 = vld [vmem:[%s1 + $0x1f38] sm:$0xff]
  %v1038 = vld [vmem:[%s1 + $0x1f40] sm:$0xff]
  %v1039 = vld [vmem:[%s1 + $0x1f48] sm:$0xff]
  %v1040 = vld [vmem:[%s1 + $0x1f50] sm:$0xff]
  %v1041 = vld [vmem:[%s1 + $0x1f58] sm:$0xff]
  %v1042 = vld [vmem:[%s1 + $0x1f60] sm:$0xff]
  %v1043 = vld [vmem:[%s1 + $0x1f68] sm:$0xff]
  %v1044 = vld [vmem:[%s1 + $0x1f70] sm:$0xff]
  %v1045 = vld [vmem:[%s1 + $0x1f78] sm:$0xff]
  %v1046 = vld [vmem:[%s1 + $0x1f80] sm:$0xff]
  %v1047 = vld [vmem:[%s1 + $0x1f88] sm:$0xff]
  %v1048 = vld [vmem:[%s1 + $0x1f90] sm:$0xff]
  %v1049 = vld [vmem:[%s1 + $0x1f98] sm:$0xff]
  %v1050 = vld [vmem:[%s1 + $0x1fa0] sm:$0xff]
  %v1051 = vld [vmem:[%s1 + $0x1fa8] sm:$0xff]
  %v1052 = vld [vmem:[%s1 + $0x1fb0] sm:$0xff]
  %v1053 = vld [vmem:[%s1 + $0x1fb8] sm:$0xff]
  %v1054 = vld [vmem:[%s1 + $0x1fc0] sm:$0xff]
  %v1055 = vld [vmem:[%s1 + $0x1fc8] sm:$0xff]
  %v1056 = vld [vmem:[%s1 + $0x1fd0] sm:$0xff]
  %v1057 = vld [vmem:[%s1 + $0x1fd8] sm:$0xff]
  %v1058 = vld [vmem:[%s1 + $0x1fe0] sm:$0xff]
  %v1059 = vld [vmem:[%s1 + $0x1fe8] sm:$0xff]
  %v1060 = vld [vmem:[%s1 + $0x1ff0] sm:$0xff]
  %v1061 = vld [vmem:[%s1 + $0x1ff8] sm:$0xff]
  %v1062 = vld [vmem:[%s1 + $0x2000] sm:$0xff]
  %v1063 = vld [vmem:[%s1 + $0x2008] sm:$0xff]
  %v1064 = vld [vmem:[%s1 + $0x2010] sm:$0xff]
  %v1065 = vld [vmem:[%s1 + $0x2018] sm:$0xff]
  %v1066 = vld [vmem:[%s1 + $0x2020] sm:$0xff]
  %v1067 = vld [vmem:[%s1 + $0x2028] sm:$0xff]
  %v1068 = vld [vmem:[%s1 + $0x2030] sm:$0xff]
  %v1069 = vld [vmem:[%s1 + $0x2038] sm:$0xff]
  %v1070 = vld [vmem:[%s1 + $0x2040] sm:$0xff]
  %v1071 = vld [vmem:[%s1 + $0x2048] sm:$0xff]
  %v1072 = vld [vmem:[%s1 + $0x2050] sm:$0xff]
  %v1073 = vld [vmem:[%s1 + $0x2058] sm:$0xff]
  %v1074 = vld [vmem:[%s1 + $0x2060] sm:$0xff]
  %v1075 = vld [vmem:[%s1 + $0x2068] sm:$0xff]
  %v1076 = vld [vmem:[%s1 + $0x2070] sm:$0xff]
  %v1077 = vld [vmem:[%s1 + $0x2078] sm:$0xff]
  %v1078 = vld [vmem:[%s1 + $0x2080] sm:$0xff]
  %v1079 = vld [vmem:[%s1 + $0x2088] sm:$0xff]
  %v1080 = vld [vmem:[%s1 + $0x2090] sm:$0xff]
  %v1081 = vld [vmem:[%s1 + $0x2098] sm:$0xff]
  %v1082 = vld [vmem:[%s1 + $0x20a0] sm:$0xff]
  %v1083 = vld [vmem:[%s1 + $0x20a8] sm:$0xff]
  %v1084 = vld [vmem:[%s1 + $0x20b0] sm:$0xff]
  %v1085 = vld [vmem:[%s1 + $0x20b8] sm:$0xff]
  %v1086 = vld [vmem:[%s1 + $0x20c0] sm:$0xff]
  %v1087 = vld [vmem:[%s1 + $0x20c8] sm:$0xff]
  %v1088 = vld [vmem:[%s1 + $0x20d0] sm:$0xff]
  %v1089 = vld [vmem:[%s1 + $0x20d8] sm:$0xff]
  %v1090 = vld [vmem:[%s1 + $0x20e0] sm:$0xff]
  %v1091 = vld [vmem:[%s1 + $0x20e8] sm:$0xff]
  %v1092 = vld [vmem:[%s1 + $0x20f0] sm:$0xff]
  %v1093 = vld [vmem:[%s1 + $0x20f8] sm:$0xff]
  %v1094 = vld [vmem:[%s1 + $0x2100] sm:$0xff]
  %v1095 = vld [vmem:[%s1 + $0x2108] sm:$0xff]
  %v1096 = vld [vmem:[%s1 + $0x2110] sm:$0xff]
  %v1097 = vld [vmem:[%s1 + $0x2118] sm:$0xff]
  %v1098 = vld [vmem:[%s1 + $0x2120] sm:$0xff]
  %v1099 = vld [vmem:[%s1 + $0x2128] sm:$0xff]
  %v1100 = vld [vmem:[%s1 + $0x2130] sm:$0xff]
  %v1101 = vld [vmem:[%s1 + $0x2138] sm:$0xff]
  %v1102 = vld [vmem:[%s1 + $0x2140] sm:$0xff]
  %v1103 = vld [vmem:[%s1 + $0x2148] sm:$0xff]
  %v1104 = vld [vmem:[%s1 + $0x2150] sm:$0xff]
  %v1105 = vld [vmem:[%s1 + $0x2158] sm:$0xff]
  %v1106 = vld [vmem:[%s1 + $0x2160] sm:$0xff]
  %v1107 = vld [vmem:[%s1 + $0x2168] sm:$0xff]
  %v1108 = vld [vmem:[%s1 + $0x2170] sm:$0xff]
  %v1109 = vld [vmem:[%s1 + $0x2178] sm:$0xff]
  %v1110 = vld [vmem:[%s1 + $0x2180] sm:$0xff]
  %v1111 = vld [vmem:[%s1 + $0x2188] sm:$0xff]
  %v1112 = vld [vmem:[%s1 + $0x2190] sm:$0xff]
  %v1113 = vld [vmem:[%s1 + $0x2198] sm:$0xff]
  %v1114 = vld [vmem:[%s1 + $0x21a0] sm:$0xff]
  %v1115 = vld [vmem:[%s1 + $0x21a8] sm:$0xff]
  %v1116 = vld [vmem:[%s1 + $0x21b0] sm:$0xff]
  %v1117 = vld [vmem:[%s1 + $0x21b8] sm:$0xff]
  %v1118 = vld [vmem:[%s1 + $0x21c0] sm:$0xff]
  %v1119 = vld [vmem:[%s1 + $0x21c8] sm:$0xff]
  %v1120 = vld [vmem:[%s1 + $0x21d0] sm:$0xff]
  %v1121 = vld [vmem:[%s1 + $0x21d8] sm:$0xff]
  %v1122 = vld [vmem:[%s1 + $0x21e0] sm:$0xff]
  %v1123 = vld [vmem:[%s1 + $0x21e8] sm:$0xff]
  %v1124 = vld [vmem:[%s1 + $0x21f0] sm:$0xff]
  %v1125 = vld [vmem:[%s1 + $0x21f8] sm:$0xff]
  %v1126 = vld [vmem:[%s1 + $0x2200] sm:$0xff]
  %v1127 = vld [vmem:[%s1 + $0x2208] sm:$0xff]
  %v1128 = vld [vmem:[%s1 + $0x2210] sm:$0xff]
  %v1129 = vld [vmem:[%s1 + $0x2218] sm:$0xff]
  %v1130 = vld [vmem:[%s1 + $0x2220] sm:$0xff]
  %v1131 = vld [vmem:[%s1 + $0x2228] sm:$0xff]
  %v1132 = vld [vmem:[%s1 + $0x2230] sm:$0xff]
  %v1133 = vld [vmem:[%s1 + $0x2238] sm:$0xff]
  %v1134 = vld [vmem:[%s1 + $0x2240] sm:$0xff]
  %v1135 = vld [vmem:[%s1 + $0x2248] sm:$0xff]
  %v1136 = vld [vmem:[%s1 + $0x2250] sm:$0xff]
  %v1137 = vld [vmem:[%s1 + $0x2258] sm:$0xff]
  %v1138 = vld [vmem:[%s1 + $0x2260] sm:$0xff]
  %v1139 = vld [vmem:[%s1 + $0x2268] sm:$0xff]
  %v1140 = vld [vmem:[%s1 + $0x2270] sm:$0xff]
  %v1141 = vld [vmem:[%s1 + $0x2278] sm:$0xff]
  %v1142 = vld [vmem:[%s1 + $0x2280] sm:$0xff]
  %v1143 = vld [vmem:[%s1 + $0x2288] sm:$0xff]
  %v1144 = vld [vmem:[%s1 + $0x2290] sm:$0xff]
  %v1145 = vld [vmem:[%s1 + $0x2298] sm:$0xff]
  %v1146 = vld [vmem:[%s1 + $0x22a0] sm:$0xff]
  %v1147 = vld [vmem:[%s1 + $0x22a8] sm:$0xff]
  %v1148 = vld [vmem:[%s1 + $0x22b0] sm:$0xff]
  %v1149 = vld [vmem:[%s1 + $0x22b8] sm:$0xff]
  %v1150 = vld [vmem:[%s1 + $0x22c0] sm:$0xff]
  %v1151 = vld [vmem:[%s1 + $0x22c8] sm:$0xff]
  %v1152 = vld [vmem:[%s1 + $0x22d0] sm:$0xff]
  %v1153 = vld [vmem:[%s1 + $0x22d8] sm:$0xff]
  %v1154 = vld [vmem:[%s1 + $0x22e0] sm:$0xff]
  %v1155 = vld [vmem:[%s1 + $0x22e8] sm:$0xff]
  %v1156 = vld [vmem:[%s1 + $0x22f0] sm:$0xff]
  %v1157 = vld [vmem:[%s1 + $0x22f8] sm:$0xff]
  %v1158 = vld [vmem:[%s1 + $0x2300] sm:$0xff]
  %v1159 = vld [vmem:[%s1 + $0x2308] sm:$0xff]
  %v1160 = vld [vmem:[%s1 + $0x2310] sm:$0xff]
  %v1161 = vld [vmem:[%s1 + $0x2318] sm:$0xff]
  %v1162 = vld [vmem:[%s1 + $0x2320] sm:$0xff]
  %v1163 = vld [vmem:[%s1 + $0x2328] sm:$0xff]
  %v1164 = vld [vmem:[%s1 + $0x2330] sm:$0xff]
  %v1165 = vld [vmem:[%s1 + $0x2338] sm:$0xff]
  %v1166 = vld [vmem:[%s1 + $0x2340] sm:$0xff]
  %v1167 = vld [vmem:[%s1 + $0x2348] sm:$0xff]
  %v1168 = vld [vmem:[%s1 + $0x2350] sm:$0xff]
  %v1169 = vld [vmem:[%s1 + $0x2358] sm:$0xff]
  %v1170 = vld [vmem:[%s1 + $0x2360] sm:$0xff]
  %v1171 = vld [vmem:[%s1 + $0x2368] sm:$0xff]
  %v1172 = vld [vmem:[%s1 + $0x2370] sm:$0xff]
  %v1173 = vld [vmem:[%s1 + $0x2378] sm:$0xff]
  %v1174 = vld [vmem:[%s1 + $0x2380] sm:$0xff]
  %v1175 = vld [vmem:[%s1 + $0x2388] sm:$0xff]
  %v1176 = vld [vmem:[%s1 + $0x2390] sm:$0xff]
  %v1177 = vld [vmem:[%s1 + $0x2398] sm:$0xff]
  %v1178 = vld [vmem:[%s1 + $0x23a0] sm:$0xff]
  %v1179 = vld [vmem:[%s1 + $0x23a8] sm:$0xff]
  %v1180 = vld [vmem:[%s1 + $0x23b0] sm:$0xff]
  %v1181 = vld [vmem:[%s1 + $0x23b8] sm:$0xff]
  %v1182 = vld [vmem:[%s1 + $0x23c0] sm:$0xff]
  %v1183 = vld [vmem:[%s1 + $0x23c8] sm:$0xff]
  %v1184 = vld [vmem:[%s1 + $0x23d0] sm:$0xff]
  %v1185 = vld [vmem:[%s1 + $0x23d8] sm:$0xff]
  %v1186 = vld [vmem:[%s1 + $0x23e0] sm:$0xff]
  %v1187 = vld [vmem:[%s1 + $0x23e8] sm:$0xff]
  %v1188 = vld [vmem:[%s1 + $0x23f0] sm:$0xff]
  %v1189 = vld [vmem:[%s1 + $0x23f8] sm:$0xff]
  %v1190 = vld [vmem:[%s2] sm:$0x7]
  %v1192 = vperm.slane %v1190, 0
  %v1193 = vperm.slane %v1190, 1
  %v1194 = vperm.slane %v1190, 2
  %1198 = vmatpush.msra.mxu0 %v83
  %1199 = vmatpush.msra.mxu0 %v80
  %1200 = vmatpush.msra.mxu0 %v77
  %1201 = vmatpush.msra.mxu0 %v74
  %1202 = vmatpush.msra.mxu0 %v71
  %1203 = vmatpush.msra.mxu0 %v68
  %1204 = vmatpush.msra.mxu0 %v65
  %1205 = vmatpush.msra.mxu0 %v62
  %1206 = vmatpush.msra.mxu0 %v59
  %1207 = vmatpush.msra.mxu0 %v56
  %1208 = vmatpush.msra.mxu0 %v53
  %1209 = vmatpush.msra.mxu0 %v50
  %1210 = vmatpush.msra.mxu0 %v47
  %1211 = vmatpush.msra.mxu0 %v44
  %1212 = vmatpush.msra.mxu0 %v41
  %1213 = vmatpush.msra.mxu0 %v38
  %1214 = vmatmul.f32.gmra.mxu0 %v14
  %v1215 = vpop.f32.mrf.mxu0
  %v1216 = vadd.f32 %v1192, %v1215
  %1217 = vdwg.mxu0
  %1218 = vmatpush.msra.mxu0 %v131
  %1219 = vmatpush.msra.mxu0 %v128
  %1220 = vmatpush.msra.mxu0 %v125
  %1221 = vmatpush.msra.mxu0 %v122
  %1222 = vmatpush.msra.mxu0 %v119
  %1223 = vmatpush.msra.mxu0 %v116
  %1224 = vmatpush.msra.mxu0 %v113
  %1225 = vmatpush.msra.mxu0 %v110
  %1226 = vmatpush.msra.mxu0 %v107
  %1227 = vmatpush.msra.mxu0 %v104
  %1228 = vmatpush.msra.mxu0 %v101
  %1229 = vmatpush.msra.mxu0 %v98
  %1230 = vmatpush.msra.mxu0 %v95
  %1231 = vmatpush.msra.mxu0 %v92
  %1232 = vmatpush.msra.mxu0 %v89
  %1233 = vmatpush.msra.mxu0 %v86
  %1234 = vmatmul.f32.gmra.mxu0 %v15
  %v1235 = vpop.f32.mrf.mxu0
  %v1236 = vadd.f32 %v1216, %v1235
  %1237 = vdwg.mxu0
  %1238 = vmatpush.msra.mxu0 %v179
  %1239 = vmatpush.msra.mxu0 %v176
  %1240 = vmatpush.msra.mxu0 %v173
  %1241 = vmatpush.msra.mxu0 %v170
  %1242 = vmatpush.msra.mxu0 %v167
  %1243 = vmatpush.msra.mxu0 %v164
  %1244 = vmatpush.msra.mxu0 %v161
  %1245 = vmatpush.msra.mxu0 %v158
  %1246 = vmatpush.msra.mxu0 %v155
  %1247 = vmatpush.msra.mxu0 %v152
  %1248 = vmatpush.msra.mxu0 %v149
  %1249 = vmatpush.msra.mxu0 %v146
  %1250 = vmatpush.msra.mxu0 %v143
  %1251 = vmatpush.msra.mxu0 %v140
  %1252 = vmatpush.msra.mxu0 %v137
  %1253 = vmatpush.msra.mxu0 %v134
  %1254 = vmatmul.f32.gmra.mxu0 %v16
  %v1255 = vpop.f32.mrf.mxu0
  %v1256 = vadd.f32 %v1236, %v1255
  %1257 = vdwg.mxu0
  %1258 = vmatpush.msra.mxu0 %v227
  %1259 = vmatpush.msra.mxu0 %v224
  %1260 = vmatpush.msra.mxu0 %v221
  %1261 = vmatpush.msra.mxu0 %v218
  %1262 = vmatpush.msra.mxu0 %v215
  %1263 = vmatpush.msra.mxu0 %v212
  %1264 = vmatpush.msra.mxu0 %v209
  %1265 = vmatpush.msra.mxu0 %v206
  %1266 = vmatpush.msra.mxu0 %v203
  %1267 = vmatpush.msra.mxu0 %v200
  %1268 = vmatpush.msra.mxu0 %v197
  %1269 = vmatpush.msra.mxu0 %v194
  %1270 = vmatpush.msra.mxu0 %v191
  %1271 = vmatpush.msra.mxu0 %v188
  %1272 = vmatpush.msra.mxu0 %v185
  %1273 = vmatpush.msra.mxu0 %v182
  %1274 = vmatmul.f32.gmra.mxu0 %v17
  %v1275 = vpop.f32.mrf.mxu0
  %v1276 = vadd.f32 %v1256, %v1275
  %1277 = vdwg.mxu0
  %1278 = vmatpush.msra.mxu0 %v275
  %1279 = vmatpush.msra.mxu0 %v272
  %1280 = vmatpush.msra.mxu0 %v269
  %1281 = vmatpush.msra.mxu0 %v266
  %1282 = vmatpush.msra.mxu0 %v263
  %1283 = vmatpush.msra.mxu0 %v260
  %1284 = vmatpush.msra.mxu0 %v257
  %1285 = vmatpush.msra.mxu0 %v254
  %1286 = vmatpush.msra.mxu0 %v251
  %1287 = vmatpush.msra.mxu0 %v248
  %1288 = vmatpush.msra.mxu0 %v245
  %1289 = vmatpush.msra.mxu0 %v242
  %1290 = vmatpush.msra.mxu0 %v239
  %1291 = vmatpush.msra.mxu0 %v236
  %1292 = vmatpush.msra.mxu0 %v233
  %1293 = vmatpush.msra.mxu0 %v230
  %1294 = vmatmul.f32.gmra.mxu0 %v18
  %v1295 = vpop.f32.mrf.mxu0
  %v1296 = vadd.f32 %v1276, %v1295
  %1297 = vdwg.mxu0
  %1298 = vmatpush.msra.mxu0 %v323
  %1299 = vmatpush.msra.mxu0 %v320
  %1300 = vmatpush.msra.mxu0 %v317
  %1301 = vmatpush.msra.mxu0 %v314
  %1302 = vmatpush.msra.mxu0 %v311
  %1303 = vmatpush.msra.mxu0 %v308
  %1304 = vmatpush.msra.mxu0 %v305
  %1305 = vmatpush.msra.mxu0 %v302
  %1306 = vmatpush.msra.mxu0 %v299
  %1307 = vmatpush.msra.mxu0 %v296
  %1308 = vmatpush.msra.mxu0 %v293
  %1309 = vmatpush.msra.mxu0 %v290
  %1310 = vmatpush.msra.mxu0 %v287
  %1311 = vmatpush.msra.mxu0 %v284
  %1312 = vmatpush.msra.mxu0 %v281
  %1313 = vmatpush.msra.mxu0 %v278
  %1314 = vmatmul.f32.gmra.mxu0 %v19
  %v1315 = vpop.f32.mrf.mxu0
  %v1316 = vadd.f32 %v1296, %v1315
  %1317 = vdwg.mxu0
  %1318 = vmatpush.msra.mxu0 %v371
  %1319 = vmatpush.msra.mxu0 %v368
  %1320 = vmatpush.msra.mxu0 %v365
  %1321 = vmatpush.msra.mxu0 %v362
  %1322 = vmatpush.msra.mxu0 %v359
  %1323 = vmatpush.msra.mxu0 %v356
  %1324 = vmatpush.msra.mxu0 %v353
  %1325 = vmatpush.msra.mxu0 %v350
  %1326 = vmatpush.msra.mxu0 %v347
  %1327 = vmatpush.msra.mxu0 %v344
  %1328 = vmatpush.msra.mxu0 %v341
  %1329 = vmatpush.msra.mxu0 %v338
  %1330 = vmatpush.msra.mxu0 %v335
  %1331 = vmatpush.msra.mxu0 %v332
  %1332 = vmatpush.msra.mxu0 %v329
  %1333 = vmatpush.msra.mxu0 %v326
  %1334 = vmatmul.f32.gmra.mxu0 %v20
  %v1335 = vpop.f32.mrf.mxu0
  %v1336 = vadd.f32 %v1316, %v1335
  %1337 = vdwg.mxu0
  %1338 = vmatpush.msra.mxu0 %v419
  %1339 = vmatpush.msra.mxu0 %v416
  %1340 = vmatpush.msra.mxu0 %v413
  %1341 = vmatpush.msra.mxu0 %v410
  %1342 = vmatpush.msra.mxu0 %v407
  %1343 = vmatpush.msra.mxu0 %v404
  %1344 = vmatpush.msra.mxu0 %v401
  %1345 = vmatpush.msra.mxu0 %v398
  %1346 = vmatpush.msra.mxu0 %v395
  %1347 = vmatpush.msra.mxu0 %v392
  %1348 = vmatpush.msra.mxu0 %v389
  %1349 = vmatpush.msra.mxu0 %v386
  %1350 = vmatpush.msra.mxu0 %v383
  %1351 = vmatpush.msra.mxu0 %v380
  %1352 = vmatpush.msra.mxu0 %v377
  %1353 = vmatpush.msra.mxu0 %v374
  %1354 = vmatmul.f32.gmra.mxu0 %v21
  %v1355 = vpop.f32.mrf.mxu0
  %v1356 = vadd.f32 %v1336, %v1355
  %1357 = vdwg.mxu0
  %1358 = vmatpush.msra.mxu0 %v467
  %1359 = vmatpush.msra.mxu0 %v464
  %1360 = vmatpush.msra.mxu0 %v461
  %1361 = vmatpush.msra.mxu0 %v458
  %1362 = vmatpush.msra.mxu0 %v455
  %1363 = vmatpush.msra.mxu0 %v452
  %1364 = vmatpush.msra.mxu0 %v449
  %1365 = vmatpush.msra.mxu0 %v446
  %1366 = vmatpush.msra.mxu0 %v443
  %1367 = vmatpush.msra.mxu0 %v440
  %1368 = vmatpush.msra.mxu0 %v437
  %1369 = vmatpush.msra.mxu0 %v434
  %1370 = vmatpush.msra.mxu0 %v431
  %1371 = vmatpush.msra.mxu0 %v428
  %1372 = vmatpush.msra.mxu0 %v425
  %1373 = vmatpush.msra.mxu0 %v422
  %1374 = vmatmul.f32.gmra.mxu0 %v22
  %v1375 = vpop.f32.mrf.mxu0
  %v1376 = vadd.f32 %v1356, %v1375
  %1377 = vdwg.mxu0
  %1378 = vmatpush.msra.mxu0 %v515
  %1379 = vmatpush.msra.mxu0 %v512
  %1380 = vmatpush.msra.mxu0 %v509
  %1381 = vmatpush.msra.mxu0 %v506
  %1382 = vmatpush.msra.mxu0 %v503
  %1383 = vmatpush.msra.mxu0 %v500
  %1384 = vmatpush.msra.mxu0 %v497
  %1385 = vmatpush.msra.mxu0 %v494
  %1386 = vmatpush.msra.mxu0 %v491
  %1387 = vmatpush.msra.mxu0 %v488
  %1388 = vmatpush.msra.mxu0 %v485
  %1389 = vmatpush.msra.mxu0 %v482
  %1390 = vmatpush.msra.mxu0 %v479
  %1391 = vmatpush.msra.mxu0 %v476
  %1392 = vmatpush.msra.mxu0 %v473
  %1393 = vmatpush.msra.mxu0 %v470
  %1394 = vmatmul.f32.gmra.mxu0 %v23
  %v1395 = vpop.f32.mrf.mxu0
  %v1396 = vadd.f32 %v1376, %v1395
  %1397 = vdwg.mxu0
  %1398 = vmatpush.msra.mxu0 %v563
  %1399 = vmatpush.msra.mxu0 %v560
  %1400 = vmatpush.msra.mxu0 %v557
  %1401 = vmatpush.msra.mxu0 %v554
  %1402 = vmatpush.msra.mxu0 %v551
  %1403 = vmatpush.msra.mxu0 %v548
  %1404 = vmatpush.msra.mxu0 %v545
  %1405 = vmatpush.msra.mxu0 %v542
  %1406 = vmatpush.msra.mxu0 %v539
  %1407 = vmatpush.msra.mxu0 %v536
  %1408 = vmatpush.msra.mxu0 %v533
  %1409 = vmatpush.msra.mxu0 %v530
  %1410 = vmatpush.msra.mxu0 %v527
  %1411 = vmatpush.msra.mxu0 %v524
  %1412 = vmatpush.msra.mxu0 %v521
  %1413 = vmatpush.msra.mxu0 %v518
  %1414 = vmatmul.f32.gmra.mxu0 %v24
  %v1415 = vpop.f32.mrf.mxu0
  %v1416 = vadd.f32 %v1396, %v1415
  %1417 = vdwg.mxu0
  %1418 = vmatpush.msra.mxu0 %v611
  %1419 = vmatpush.msra.mxu0 %v608
  %1420 = vmatpush.msra.mxu0 %v605
  %1421 = vmatpush.msra.mxu0 %v602
  %1422 = vmatpush.msra.mxu0 %v599
  %1423 = vmatpush.msra.mxu0 %v596
  %1424 = vmatpush.msra.mxu0 %v593
  %1425 = vmatpush.msra.mxu0 %v590
  %1426 = vmatpush.msra.mxu0 %v587
  %1427 = vmatpush.msra.mxu0 %v584
  %1428 = vmatpush.msra.mxu0 %v581
  %1429 = vmatpush.msra.mxu0 %v578
  %1430 = vmatpush.msra.mxu0 %v575
  %1431 = vmatpush.msra.mxu0 %v572
  %1432 = vmatpush.msra.mxu0 %v569
  %1433 = vmatpush.msra.mxu0 %v566
  %1434 = vmatmul.f32.gmra.mxu0 %v25
  %v1435 = vpop.f32.mrf.mxu0
  %v1436 = vadd.f32 %v1416, %v1435
  %1437 = vdwg.mxu0
  %1438 = vmatpush.msra.mxu0 %v659
  %1439 = vmatpush.msra.mxu0 %v656
  %1440 = vmatpush.msra.mxu0 %v653
  %1441 = vmatpush.msra.mxu0 %v650
  %1442 = vmatpush.msra.mxu0 %v647
  %1443 = vmatpush.msra.mxu0 %v644
  %1444 = vmatpush.msra.mxu0 %v641
  %1445 = vmatpush.msra.mxu0 %v638
  %1446 = vmatpush.msra.mxu0 %v635
  %1447 = vmatpush.msra.mxu0 %v632
  %1448 = vmatpush.msra.mxu0 %v629
  %1449 = vmatpush.msra.mxu0 %v626
  %1450 = vmatpush.msra.mxu0 %v623
  %1451 = vmatpush.msra.mxu0 %v620
  %1452 = vmatpush.msra.mxu0 %v617
  %1453 = vmatpush.msra.mxu0 %v614
  %1454 = vmatmul.f32.gmra.mxu0 %v26
  %v1455 = vpop.f32.mrf.mxu0
  %v1456 = vadd.f32 %v1436, %v1455
  %1457 = vdwg.mxu0
  %1458 = vmatpush.msra.mxu0 %v707
  %1459 = vmatpush.msra.mxu0 %v704
  %1460 = vmatpush.msra.mxu0 %v701
  %1461 = vmatpush.msra.mxu0 %v698
  %1462 = vmatpush.msra.mxu0 %v695
  %1463 = vmatpush.msra.mxu0 %v692
  %1464 = vmatpush.msra.mxu0 %v689
  %1465 = vmatpush.msra.mxu0 %v686
  %1466 = vmatpush.msra.mxu0 %v683
  %1467 = vmatpush.msra.mxu0 %v680
  %1468 = vmatpush.msra.mxu0 %v677
  %1469 = vmatpush.msra.mxu0 %v674
  %1470 = vmatpush.msra.mxu0 %v671
  %1471 = vmatpush.msra.mxu0 %v668
  %1472 = vmatpush.msra.mxu0 %v665
  %1473 = vmatpush.msra.mxu0 %v662
  %1474 = vmatmul.f32.gmra.mxu0 %v27
  %v1475 = vpop.f32.mrf.mxu0
  %v1476 = vadd.f32 %v1456, %v1475
  %1477 = vdwg.mxu0
  %1478 = vmatpush.msra.mxu0 %v755
  %1479 = vmatpush.msra.mxu0 %v752
  %1480 = vmatpush.msra.mxu0 %v749
  %1481 = vmatpush.msra.mxu0 %v746
  %1482 = vmatpush.msra.mxu0 %v743
  %1483 = vmatpush.msra.mxu0 %v740
  %1484 = vmatpush.msra.mxu0 %v737
  %1485 = vmatpush.msra.mxu0 %v734
  %1486 = vmatpush.msra.mxu0 %v731
  %1487 = vmatpush.msra.mxu0 %v728
  %1488 = vmatpush.msra.mxu0 %v725
  %1489 = vmatpush.msra.mxu0 %v722
  %1490 = vmatpush.msra.mxu0 %v719
  %1491 = vmatpush.msra.mxu0 %v716
  %1492 = vmatpush.msra.mxu0 %v713
  %1493 = vmatpush.msra.mxu0 %v710
  %1494 = vmatmul.f32.gmra.mxu0 %v28
  %v1495 = vpop.f32.mrf.mxu0
  %v1496 = vadd.f32 %v1476, %v1495
  %1497 = vdwg.mxu0
  %1498 = vmatpush.msra.mxu0 %v803
  %1499 = vmatpush.msra.mxu0 %v800
  %1500 = vmatpush.msra.mxu0 %v797
  %1501 = vmatpush.msra.mxu0 %v794
  %1502 = vmatpush.msra.mxu0 %v791
  %1503 = vmatpush.msra.mxu0 %v788
  %1504 = vmatpush.msra.mxu0 %v785
  %1505 = vmatpush.msra.mxu0 %v782
  %1506 = vmatpush.msra.mxu0 %v779
  %1507 = vmatpush.msra.mxu0 %v776
  %1508 = vmatpush.msra.mxu0 %v773
  %1509 = vmatpush.msra.mxu0 %v770
  %1510 = vmatpush.msra.mxu0 %v767
  %1511 = vmatpush.msra.mxu0 %v764
  %1512 = vmatpush.msra.mxu0 %v761
  %1513 = vmatpush.msra.mxu0 %v758
  %1514 = vmatmul.f32.gmra.mxu0 %v29
  %v1515 = vpop.f32.mrf.mxu0
  %v1516 = vadd.f32 %v1496, %v1515
  %1517 = vdwg.mxu0
  %1518 = vmatpush.msra.mxu0 %v851
  %1519 = vmatpush.msra.mxu0 %v848
  %1520 = vmatpush.msra.mxu0 %v845
  %1521 = vmatpush.msra.mxu0 %v842
  %1522 = vmatpush.msra.mxu0 %v839
  %1523 = vmatpush.msra.mxu0 %v836
  %1524 = vmatpush.msra.mxu0 %v833
  %1525 = vmatpush.msra.mxu0 %v830
  %1526 = vmatpush.msra.mxu0 %v827
  %1527 = vmatpush.msra.mxu0 %v824
  %1528 = vmatpush.msra.mxu0 %v821
  %1529 = vmatpush.msra.mxu0 %v818
  %1530 = vmatpush.msra.mxu0 %v815
  %1531 = vmatpush.msra.mxu0 %v812
  %1532 = vmatpush.msra.mxu0 %v809
  %1533 = vmatpush.msra.mxu0 %v806
  %1534 = vmatmul.f32.gmra.mxu0 %v30
  %v1535 = vpop.f32.mrf.mxu0
  %v1536 = vadd.f32 %v1516, %v1535
  %1537 = vdwg.mxu0
  %1538 = vmatpush.msra.mxu0 %v899
  %1539 = vmatpush.msra.mxu0 %v896
  %1540 = vmatpush.msra.mxu0 %v893
  %1541 = vmatpush.msra.mxu0 %v890
  %1542 = vmatpush.msra.mxu0 %v887
  %1543 = vmatpush.msra.mxu0 %v884
  %1544 = vmatpush.msra.mxu0 %v881
  %1545 = vmatpush.msra.mxu0 %v878
  %1546 = vmatpush.msra.mxu0 %v875
  %1547 = vmatpush.msra.mxu0 %v872
  %1548 = vmatpush.msra.mxu0 %v869
  %1549 = vmatpush.msra.mxu0 %v866
  %1550 = vmatpush.msra.mxu0 %v863
  %1551 = vmatpush.msra.mxu0 %v860
  %1552 = vmatpush.msra.mxu0 %v857
  %1553 = vmatpush.msra.mxu0 %v854
  %1554 = vmatmul.f32.gmra.mxu0 %v31
  %v1555 = vpop.f32.mrf.mxu0
  %v1556 = vadd.f32 %v1536, %v1555
  %1557 = vdwg.mxu0
  %1558 = vmatpush.msra.mxu0 %v947
  %1559 = vmatpush.msra.mxu0 %v944
  %1560 = vmatpush.msra.mxu0 %v941
  %1561 = vmatpush.msra.mxu0 %v938
  %1562 = vmatpush.msra.mxu0 %v935
  %1563 = vmatpush.msra.mxu0 %v932
  %1564 = vmatpush.msra.mxu0 %v929
  %1565 = vmatpush.msra.mxu0 %v926
  %1566 = vmatpush.msra.mxu0 %v923
  %1567 = vmatpush.msra.mxu0 %v920
  %1568 = vmatpush.msra.mxu0 %v917
  %1569 = vmatpush.msra.mxu0 %v914
  %1570 = vmatpush.msra.mxu0 %v911
  %1571 = vmatpush.msra.mxu0 %v908
  %1572 = vmatpush.msra.mxu0 %v905
  %1573 = vmatpush.msra.mxu0 %v902
  %1574 = vmatmul.f32.gmra.mxu0 %v32
  %v1575 = vpop.f32.mrf.mxu0
  %v1576 = vadd.f32 %v1556, %v1575
  %1577 = vdwg.mxu0
  %1578 = vmatpush.msra.mxu0 %v995
  %1579 = vmatpush.msra.mxu0 %v992
  %1580 = vmatpush.msra.mxu0 %v989
  %1581 = vmatpush.msra.mxu0 %v986
  %1582 = vmatpush.msra.mxu0 %v983
  %1583 = vmatpush.msra.mxu0 %v980
  %1584 = vmatpush.msra.mxu0 %v977
  %1585 = vmatpush.msra.mxu0 %v974
  %1586 = vmatpush.msra.mxu0 %v971
  %1587 = vmatpush.msra.mxu0 %v968
  %1588 = vmatpush.msra.mxu0 %v965
  %1589 = vmatpush.msra.mxu0 %v962
  %1590 = vmatpush.msra.mxu0 %v959
  %1591 = vmatpush.msra.mxu0 %v956
  %1592 = vmatpush.msra.mxu0 %v953
  %1593 = vmatpush.msra.mxu0 %v950
  %1594 = vmatmul.f32.gmra.mxu0 %v33
  %v1595 = vpop.f32.mrf.mxu0
  %v1596 = vadd.f32 %v1576, %v1595
  %1597 = vdwg.mxu0
  %1598 = vmatpush.msra.mxu0 %v1043
  %1599 = vmatpush.msra.mxu0 %v1040
  %1600 = vmatpush.msra.mxu0 %v1037
  %1601 = vmatpush.msra.mxu0 %v1034
  %1602 = vmatpush.msra.mxu0 %v1031
  %1603 = vmatpush.msra.mxu0 %v1028
  %1604 = vmatpush.msra.mxu0 %v1025
  %1605 = vmatpush.msra.mxu0 %v1022
  %1606 = vmatpush.msra.mxu0 %v1019
  %1607 = vmatpush.msra.mxu0 %v1016
  %1608 = vmatpush.msra.mxu0 %v1013
  %1609 = vmatpush.msra.mxu0 %v1010
  %1610 = vmatpush.msra.mxu0 %v1007
  %1611 = vmatpush.msra.mxu0 %v1004
  %1612 = vmatpush.msra.mxu0 %v1001
  %1613 = vmatpush.msra.mxu0 %v998
  %1614 = vmatmul.f32.gmra.mxu0 %v34
  %v1615 = vpop.f32.mrf.mxu0
  %v1616 = vadd.f32 %v1596, %v1615
  %1617 = vdwg.mxu0
  %1618 = vmatpush.msra.mxu0 %v1091
  %1619 = vmatpush.msra.mxu0 %v1088
  %1620 = vmatpush.msra.mxu0 %v1085
  %1621 = vmatpush.msra.mxu0 %v1082
  %1622 = vmatpush.msra.mxu0 %v1079
  %1623 = vmatpush.msra.mxu0 %v1076
  %1624 = vmatpush.msra.mxu0 %v1073
  %1625 = vmatpush.msra.mxu0 %v1070
  %1626 = vmatpush.msra.mxu0 %v1067
  %1627 = vmatpush.msra.mxu0 %v1064
  %1628 = vmatpush.msra.mxu0 %v1061
  %1629 = vmatpush.msra.mxu0 %v1058
  %1630 = vmatpush.msra.mxu0 %v1055
  %1631 = vmatpush.msra.mxu0 %v1052
  %1632 = vmatpush.msra.mxu0 %v1049
  %1633 = vmatpush.msra.mxu0 %v1046
  %1634 = vmatmul.f32.gmra.mxu0 %v35
  %v1635 = vpop.f32.mrf.mxu0
  %v1636 = vadd.f32 %v1616, %v1635
  %1637 = vdwg.mxu0
  %1638 = vmatpush.msra.mxu0 %v1139
  %1639 = vmatpush.msra.mxu0 %v1136
  %1640 = vmatpush.msra.mxu0 %v1133
  %1641 = vmatpush.msra.mxu0 %v1130
  %1642 = vmatpush.msra.mxu0 %v1127
  %1643 = vmatpush.msra.mxu0 %v1124
  %1644 = vmatpush.msra.mxu0 %v1121
  %1645 = vmatpush.msra.mxu0 %v1118
  %1646 = vmatpush.msra.mxu0 %v1115
  %1647 = vmatpush.msra.mxu0 %v1112
  %1648 = vmatpush.msra.mxu0 %v1109
  %1649 = vmatpush.msra.mxu0 %v1106
  %1650 = vmatpush.msra.mxu0 %v1103
  %1651 = vmatpush.msra.mxu0 %v1100
  %1652 = vmatpush.msra.mxu0 %v1097
  %1653 = vmatpush.msra.mxu0 %v1094
  %1654 = vmatmul.f32.gmra.mxu0 %v36
  %v1655 = vpop.f32.mrf.mxu0
  %v1656 = vadd.f32 %v1636, %v1655
  %1657 = vdwg.mxu0
  %1658 = vmatpush.msra.mxu0 %v1187
  %1659 = vmatpush.msra.mxu0 %v1184
  %1660 = vmatpush.msra.mxu0 %v1181
  %1661 = vmatpush.msra.mxu0 %v1178
  %1662 = vmatpush.msra.mxu0 %v1175
  %1663 = vmatpush.msra.mxu0 %v1172
  %1664 = vmatpush.msra.mxu0 %v1169
  %1665 = vmatpush.msra.mxu0 %v1166
  %1666 = vmatpush.msra.mxu0 %v1163
  %1667 = vmatpush.msra.mxu0 %v1160
  %1668 = vmatpush.msra.mxu0 %v1157
  %1669 = vmatpush.msra.mxu0 %v1154
  %1670 = vmatpush.msra.mxu0 %v1151
  %1671 = vmatpush.msra.mxu0 %v1148
  %1672 = vmatpush.msra.mxu0 %v1145
  %1673 = vmatpush.msra.mxu0 %v1142
  %1674 = vmatmul.f32.gmra.mxu0 %v37
  %v1675 = vpop.f32.mrf.mxu0
  %v1676 = vadd.f32 %v1656, %v1675
  %1677 = vdwg.mxu0
  %1678 = vmatpush.msra.mxu0 %v84
  %1679 = vmatpush.msra.mxu0 %v81
  %1680 = vmatpush.msra.mxu0 %v78
  %1681 = vmatpush.msra.mxu0 %v75
  %1682 = vmatpush.msra.mxu0 %v72
  %1683 = vmatpush.msra.mxu0 %v69
  %1684 = vmatpush.msra.mxu0 %v66
  %1685 = vmatpush.msra.mxu0 %v63
  %1686 = vmatpush.msra.mxu0 %v60
  %1687 = vmatpush.msra.mxu0 %v57
  %1688 = vmatpush.msra.mxu0 %v54
  %1689 = vmatpush.msra.mxu0 %v51
  %1690 = vmatpush.msra.mxu0 %v48
  %1691 = vmatpush.msra.mxu0 %v45
  %1692 = vmatpush.msra.mxu0 %v42
  %1693 = vmatpush.msra.mxu0 %v39
  %1694 = vmatmul.f32.gmra.mxu0 %v14
  %v1695 = vpop.f32.mrf.mxu0
  %v1696 = vadd.f32 %v1193, %v1695
  %1697 = vdwg.mxu0
  %1698 = vmatpush.msra.mxu0 %v132
  %1699 = vmatpush.msra.mxu0 %v129
  %1700 = vmatpush.msra.mxu0 %v126
  %1701 = vmatpush.msra.mxu0 %v123
  %1702 = vmatpush.msra.mxu0 %v120
  %1703 = vmatpush.msra.mxu0 %v117
  %1704 = vmatpush.msra.mxu0 %v114
  %1705 = vmatpush.msra.mxu0 %v111
  %1706 = vmatpush.msra.mxu0 %v108
  %1707 = vmatpush.msra.mxu0 %v105
  %1708 = vmatpush.msra.mxu0 %v102
  %1709 = vmatpush.msra.mxu0 %v99
  %1710 = vmatpush.msra.mxu0 %v96
  %1711 = vmatpush.msra.mxu0 %v93
  %1712 = vmatpush.msra.mxu0 %v90
  %1713 = vmatpush.msra.mxu0 %v87
  %1714 = vmatmul.f32.gmra.mxu0 %v15
  %v1715 = vpop.f32.mrf.mxu0
  %v1716 = vadd.f32 %v1696, %v1715
  %1717 = vdwg.mxu0
  %1718 = vmatpush.msra.mxu0 %v180
  %1719 = vmatpush.msra.mxu0 %v177
  %1720 = vmatpush.msra.mxu0 %v174
  %1721 = vmatpush.msra.mxu0 %v171
  %1722 = vmatpush.msra.mxu0 %v168
  %1723 = vmatpush.msra.mxu0 %v165
  %1724 = vmatpush.msra.mxu0 %v162
  %1725 = vmatpush.msra.mxu0 %v159
  %1726 = vmatpush.msra.mxu0 %v156
  %1727 = vmatpush.msra.mxu0 %v153
  %1728 = vmatpush.msra.mxu0 %v150
  %1729 = vmatpush.msra.mxu0 %v147
  %1730 = vmatpush.msra.mxu0 %v144
  %1731 = vmatpush.msra.mxu0 %v141
  %1732 = vmatpush.msra.mxu0 %v138
  %1733 = vmatpush.msra.mxu0 %v135
  %1734 = vmatmul.f32.gmra.mxu0 %v16
  %v1735 = vpop.f32.mrf.mxu0
  %v1736 = vadd.f32 %v1716, %v1735
  %1737 = vdwg.mxu0
  %1738 = vmatpush.msra.mxu0 %v228
  %1739 = vmatpush.msra.mxu0 %v225
  %1740 = vmatpush.msra.mxu0 %v222
  %1741 = vmatpush.msra.mxu0 %v219
  %1742 = vmatpush.msra.mxu0 %v216
  %1743 = vmatpush.msra.mxu0 %v213
  %1744 = vmatpush.msra.mxu0 %v210
  %1745 = vmatpush.msra.mxu0 %v207
  %1746 = vmatpush.msra.mxu0 %v204
  %1747 = vmatpush.msra.mxu0 %v201
  %1748 = vmatpush.msra.mxu0 %v198
  %1749 = vmatpush.msra.mxu0 %v195
  %1750 = vmatpush.msra.mxu0 %v192
  %1751 = vmatpush.msra.mxu0 %v189
  %1752 = vmatpush.msra.mxu0 %v186
  %1753 = vmatpush.msra.mxu0 %v183
  %1754 = vmatmul.f32.gmra.mxu0 %v17
  %v1755 = vpop.f32.mrf.mxu0
  %v1756 = vadd.f32 %v1736, %v1755
  %1757 = vdwg.mxu0
  %1758 = vmatpush.msra.mxu0 %v276
  %1759 = vmatpush.msra.mxu0 %v273
  %1760 = vmatpush.msra.mxu0 %v270
  %1761 = vmatpush.msra.mxu0 %v267
  %1762 = vmatpush.msra.mxu0 %v264
  %1763 = vmatpush.msra.mxu0 %v261
  %1764 = vmatpush.msra.mxu0 %v258
  %1765 = vmatpush.msra.mxu0 %v255
  %1766 = vmatpush.msra.mxu0 %v252
  %1767 = vmatpush.msra.mxu0 %v249
  %1768 = vmatpush.msra.mxu0 %v246
  %1769 = vmatpush.msra.mxu0 %v243
  %1770 = vmatpush.msra.mxu0 %v240
  %1771 = vmatpush.msra.mxu0 %v237
  %1772 = vmatpush.msra.mxu0 %v234
  %1773 = vmatpush.msra.mxu0 %v231
  %1774 = vmatmul.f32.gmra.mxu0 %v18
  %v1775 = vpop.f32.mrf.mxu0
  %v1776 = vadd.f32 %v1756, %v1775
  %1777 = vdwg.mxu0
  %1778 = vmatpush.msra.mxu0 %v324
  %1779 = vmatpush.msra.mxu0 %v321
  %1780 = vmatpush.msra.mxu0 %v318
  %1781 = vmatpush.msra.mxu0 %v315
  %1782 = vmatpush.msra.mxu0 %v312
  %1783 = vmatpush.msra.mxu0 %v309
  %1784 = vmatpush.msra.mxu0 %v306
  %1785 = vmatpush.msra.mxu0 %v303
  %1786 = vmatpush.msra.mxu0 %v300
  %1787 = vmatpush.msra.mxu0 %v297
  %1788 = vmatpush.msra.mxu0 %v294
  %1789 = vmatpush.msra.mxu0 %v291
  %1790 = vmatpush.msra.mxu0 %v288
  %1791 = vmatpush.msra.mxu0 %v285
  %1792 = vmatpush.msra.mxu0 %v282
  %1793 = vmatpush.msra.mxu0 %v279
  %1794 = vmatmul.f32.gmra.mxu0 %v19
  %v1795 = vpop.f32.mrf.mxu0
  %v1796 = vadd.f32 %v1776, %v1795
  %1797 = vdwg.mxu0
  %1798 = vmatpush.msra.mxu0 %v372
  %1799 = vmatpush.msra.mxu0 %v369
  %1800 = vmatpush.msra.mxu0 %v366
  %1801 = vmatpush.msra.mxu0 %v363
  %1802 = vmatpush.msra.mxu0 %v360
  %1803 = vmatpush.msra.mxu0 %v357
  %1804 = vmatpush.msra.mxu0 %v354
  %1805 = vmatpush.msra.mxu0 %v351
  %1806 = vmatpush.msra.mxu0 %v348
  %1807 = vmatpush.msra.mxu0 %v345
  %1808 = vmatpush.msra.mxu0 %v342
  %1809 = vmatpush.msra.mxu0 %v339
  %1810 = vmatpush.msra.mxu0 %v336
  %1811 = vmatpush.msra.mxu0 %v333
  %1812 = vmatpush.msra.mxu0 %v330
  %1813 = vmatpush.msra.mxu0 %v327
  %1814 = vmatmul.f32.gmra.mxu0 %v20
  %v1815 = vpop.f32.mrf.mxu0
  %v1816 = vadd.f32 %v1796, %v1815
  %1817 = vdwg.mxu0
  %1818 = vmatpush.msra.mxu0 %v420
  %1819 = vmatpush.msra.mxu0 %v417
  %1820 = vmatpush.msra.mxu0 %v414
  %1821 = vmatpush.msra.mxu0 %v411
  %1822 = vmatpush.msra.mxu0 %v408
  %1823 = vmatpush.msra.mxu0 %v405
  %1824 = vmatpush.msra.mxu0 %v402
  %1825 = vmatpush.msra.mxu0 %v399
  %1826 = vmatpush.msra.mxu0 %v396
  %1827 = vmatpush.msra.mxu0 %v393
  %1828 = vmatpush.msra.mxu0 %v390
  %1829 = vmatpush.msra.mxu0 %v387
  %1830 = vmatpush.msra.mxu0 %v384
  %1831 = vmatpush.msra.mxu0 %v381
  %1832 = vmatpush.msra.mxu0 %v378
  %1833 = vmatpush.msra.mxu0 %v375
  %1834 = vmatmul.f32.gmra.mxu0 %v21
  %v1835 = vpop.f32.mrf.mxu0
  %v1836 = vadd.f32 %v1816, %v1835
  %1837 = vdwg.mxu0
  %1838 = vmatpush.msra.mxu0 %v468
  %1839 = vmatpush.msra.mxu0 %v465
  %1840 = vmatpush.msra.mxu0 %v462
  %1841 = vmatpush.msra.mxu0 %v459
  %1842 = vmatpush.msra.mxu0 %v456
  %1843 = vmatpush.msra.mxu0 %v453
  %1844 = vmatpush.msra.mxu0 %v450
  %1845 = vmatpush.msra.mxu0 %v447
  %1846 = vmatpush.msra.mxu0 %v444
  %1847 = vmatpush.msra.mxu0 %v441
  %1848 = vmatpush.msra.mxu0 %v438
  %1849 = vmatpush.msra.mxu0 %v435
  %1850 = vmatpush.msra.mxu0 %v432
  %1851 = vmatpush.msra.mxu0 %v429
  %1852 = vmatpush.msra.mxu0 %v426
  %1853 = vmatpush.msra.mxu0 %v423
  %1854 = vmatmul.f32.gmra.mxu0 %v22
  %v1855 = vpop.f32.mrf.mxu0
  %v1856 = vadd.f32 %v1836, %v1855
  %1857 = vdwg.mxu0
  %1858 = vmatpush.msra.mxu0 %v516
  %1859 = vmatpush.msra.mxu0 %v513
  %1860 = vmatpush.msra.mxu0 %v510
  %1861 = vmatpush.msra.mxu0 %v507
  %1862 = vmatpush.msra.mxu0 %v504
  %1863 = vmatpush.msra.mxu0 %v501
  %1864 = vmatpush.msra.mxu0 %v498
  %1865 = vmatpush.msra.mxu0 %v495
  %1866 = vmatpush.msra.mxu0 %v492
  %1867 = vmatpush.msra.mxu0 %v489
  %1868 = vmatpush.msra.mxu0 %v486
  %1869 = vmatpush.msra.mxu0 %v483
  %1870 = vmatpush.msra.mxu0 %v480
  %1871 = vmatpush.msra.mxu0 %v477
  %1872 = vmatpush.msra.mxu0 %v474
  %1873 = vmatpush.msra.mxu0 %v471
  %1874 = vmatmul.f32.gmra.mxu0 %v23
  %v1875 = vpop.f32.mrf.mxu0
  %v1876 = vadd.f32 %v1856, %v1875
  %1877 = vdwg.mxu0
  %1878 = vmatpush.msra.mxu0 %v564
  %1879 = vmatpush.msra.mxu0 %v561
  %1880 = vmatpush.msra.mxu0 %v558
  %1881 = vmatpush.msra.mxu0 %v555
  %1882 = vmatpush.msra.mxu0 %v552
  %1883 = vmatpush.msra.mxu0 %v549
  %1884 = vmatpush.msra.mxu0 %v546
  %1885 = vmatpush.msra.mxu0 %v543
  %1886 = vmatpush.msra.mxu0 %v540
  %1887 = vmatpush.msra.mxu0 %v537
  %1888 = vmatpush.msra.mxu0 %v534
  %1889 = vmatpush.msra.mxu0 %v531
  %1890 = vmatpush.msra.mxu0 %v528
  %1891 = vmatpush.msra.mxu0 %v525
  %1892 = vmatpush.msra.mxu0 %v522
  %1893 = vmatpush.msra.mxu0 %v519
  %1894 = vmatmul.f32.gmra.mxu0 %v24
  %v1895 = vpop.f32.mrf.mxu0
  %v1896 = vadd.f32 %v1876, %v1895
  %1897 = vdwg.mxu0
  %1898 = vmatpush.msra.mxu0 %v612
  %1899 = vmatpush.msra.mxu0 %v609
  %1900 = vmatpush.msra.mxu0 %v606
  %1901 = vmatpush.msra.mxu0 %v603
  %1902 = vmatpush.msra.mxu0 %v600
  %1903 = vmatpush.msra.mxu0 %v597
  %1904 = vmatpush.msra.mxu0 %v594
  %1905 = vmatpush.msra.mxu0 %v591
  %1906 = vmatpush.msra.mxu0 %v588
  %1907 = vmatpush.msra.mxu0 %v585
  %1908 = vmatpush.msra.mxu0 %v582
  %1909 = vmatpush.msra.mxu0 %v579
  %1910 = vmatpush.msra.mxu0 %v576
  %1911 = vmatpush.msra.mxu0 %v573
  %1912 = vmatpush.msra.mxu0 %v570
  %1913 = vmatpush.msra.mxu0 %v567
  %1914 = vmatmul.f32.gmra.mxu0 %v25
  %v1915 = vpop.f32.mrf.mxu0
  %v1916 = vadd.f32 %v1896, %v1915
  %1917 = vdwg.mxu0
  %1918 = vmatpush.msra.mxu0 %v660
  %1919 = vmatpush.msra.mxu0 %v657
  %1920 = vmatpush.msra.mxu0 %v654
  %1921 = vmatpush.msra.mxu0 %v651
  %1922 = vmatpush.msra.mxu0 %v648
  %1923 = vmatpush.msra.mxu0 %v645
  %1924 = vmatpush.msra.mxu0 %v642
  %1925 = vmatpush.msra.mxu0 %v639
  %1926 = vmatpush.msra.mxu0 %v636
  %1927 = vmatpush.msra.mxu0 %v633
  %1928 = vmatpush.msra.mxu0 %v630
  %1929 = vmatpush.msra.mxu0 %v627
  %1930 = vmatpush.msra.mxu0 %v624
  %1931 = vmatpush.msra.mxu0 %v621
  %1932 = vmatpush.msra.mxu0 %v618
  %1933 = vmatpush.msra.mxu0 %v615
  %1934 = vmatmul.f32.gmra.mxu0 %v26
  %v1935 = vpop.f32.mrf.mxu0
  %v1936 = vadd.f32 %v1916, %v1935
  %1937 = vdwg.mxu0
  %1938 = vmatpush.msra.mxu0 %v708
  %1939 = vmatpush.msra.mxu0 %v705
  %1940 = vmatpush.msra.mxu0 %v702
  %1941 = vmatpush.msra.mxu0 %v699
  %1942 = vmatpush.msra.mxu0 %v696
  %1943 = vmatpush.msra.mxu0 %v693
  %1944 = vmatpush.msra.mxu0 %v690
  %1945 = vmatpush.msra.mxu0 %v687
  %1946 = vmatpush.msra.mxu0 %v684
  %1947 = vmatpush.msra.mxu0 %v681
  %1948 = vmatpush.msra.mxu0 %v678
  %1949 = vmatpush.msra.mxu0 %v675
  %1950 = vmatpush.msra.mxu0 %v672
  %1951 = vmatpush.msra.mxu0 %v669
  %1952 = vmatpush.msra.mxu0 %v666
  %1953 = vmatpush.msra.mxu0 %v663
  %1954 = vmatmul.f32.gmra.mxu0 %v27
  %v1955 = vpop.f32.mrf.mxu0
  %v1956 = vadd.f32 %v1936, %v1955
  %1957 = vdwg.mxu0
  %1958 = vmatpush.msra.mxu0 %v756
  %1959 = vmatpush.msra.mxu0 %v753
  %1960 = vmatpush.msra.mxu0 %v750
  %1961 = vmatpush.msra.mxu0 %v747
  %1962 = vmatpush.msra.mxu0 %v744
  %1963 = vmatpush.msra.mxu0 %v741
  %1964 = vmatpush.msra.mxu0 %v738
  %1965 = vmatpush.msra.mxu0 %v735
  %1966 = vmatpush.msra.mxu0 %v732
  %1967 = vmatpush.msra.mxu0 %v729
  %1968 = vmatpush.msra.mxu0 %v726
  %1969 = vmatpush.msra.mxu0 %v723
  %1970 = vmatpush.msra.mxu0 %v720
  %1971 = vmatpush.msra.mxu0 %v717
  %1972 = vmatpush.msra.mxu0 %v714
  %1973 = vmatpush.msra.mxu0 %v711
  %1974 = vmatmul.f32.gmra.mxu0 %v28
  %v1975 = vpop.f32.mrf.mxu0
  %v1976 = vadd.f32 %v1956, %v1975
  %1977 = vdwg.mxu0
  %1978 = vmatpush.msra.mxu0 %v804
  %1979 = vmatpush.msra.mxu0 %v801
  %1980 = vmatpush.msra.mxu0 %v798
  %1981 = vmatpush.msra.mxu0 %v795
  %1982 = vmatpush.msra.mxu0 %v792
  %1983 = vmatpush.msra.mxu0 %v789
  %1984 = vmatpush.msra.mxu0 %v786
  %1985 = vmatpush.msra.mxu0 %v783
  %1986 = vmatpush.msra.mxu0 %v780
  %1987 = vmatpush.msra.mxu0 %v777
  %1988 = vmatpush.msra.mxu0 %v774
  %1989 = vmatpush.msra.mxu0 %v771
  %1990 = vmatpush.msra.mxu0 %v768
  %1991 = vmatpush.msra.mxu0 %v765
  %1992 = vmatpush.msra.mxu0 %v762
  %1993 = vmatpush.msra.mxu0 %v759
  %1994 = vmatmul.f32.gmra.mxu0 %v29
  %v1995 = vpop.f32.mrf.mxu0
  %v1996 = vadd.f32 %v1976, %v1995
  %1997 = vdwg.mxu0
  %1998 = vmatpush.msra.mxu0 %v852
  %1999 = vmatpush.msra.mxu0 %v849
  %2000 = vmatpush.msra.mxu0 %v846
  %2001 = vmatpush.msra.mxu0 %v843
  %2002 = vmatpush.msra.mxu0 %v840
  %2003 = vmatpush.msra.mxu0 %v837
  %2004 = vmatpush.msra.mxu0 %v834
  %2005 = vmatpush.msra.mxu0 %v831
  %2006 = vmatpush.msra.mxu0 %v828
  %2007 = vmatpush.msra.mxu0 %v825
  %2008 = vmatpush.msra.mxu0 %v822
  %2009 = vmatpush.msra.mxu0 %v819
  %2010 = vmatpush.msra.mxu0 %v816
  %2011 = vmatpush.msra.mxu0 %v813
  %2012 = vmatpush.msra.mxu0 %v810
  %2013 = vmatpush.msra.mxu0 %v807
  %2014 = vmatmul.f32.gmra.mxu0 %v30
  %v2015 = vpop.f32.mrf.mxu0
  %v2016 = vadd.f32 %v1996, %v2015
  %2017 = vdwg.mxu0
  %2018 = vmatpush.msra.mxu0 %v900
  %2019 = vmatpush.msra.mxu0 %v897
  %2020 = vmatpush.msra.mxu0 %v894
  %2021 = vmatpush.msra.mxu0 %v891
  %2022 = vmatpush.msra.mxu0 %v888
  %2023 = vmatpush.msra.mxu0 %v885
  %2024 = vmatpush.msra.mxu0 %v882
  %2025 = vmatpush.msra.mxu0 %v879
  %2026 = vmatpush.msra.mxu0 %v876
  %2027 = vmatpush.msra.mxu0 %v873
  %2028 = vmatpush.msra.mxu0 %v870
  %2029 = vmatpush.msra.mxu0 %v867
  %2030 = vmatpush.msra.mxu0 %v864
  %2031 = vmatpush.msra.mxu0 %v861
  %2032 = vmatpush.msra.mxu0 %v858
  %2033 = vmatpush.msra.mxu0 %v855
  %2034 = vmatmul.f32.gmra.mxu0 %v31
  %v2035 = vpop.f32.mrf.mxu0
  %v2036 = vadd.f32 %v2016, %v2035
  %2037 = vdwg.mxu0
  %2038 = vmatpush.msra.mxu0 %v948
  %2039 = vmatpush.msra.mxu0 %v945
  %2040 = vmatpush.msra.mxu0 %v942
  %2041 = vmatpush.msra.mxu0 %v939
  %2042 = vmatpush.msra.mxu0 %v936
  %2043 = vmatpush.msra.mxu0 %v933
  %2044 = vmatpush.msra.mxu0 %v930
  %2045 = vmatpush.msra.mxu0 %v927
  %2046 = vmatpush.msra.mxu0 %v924
  %2047 = vmatpush.msra.mxu0 %v921
  %2048 = vmatpush.msra.mxu0 %v918
  %2049 = vmatpush.msra.mxu0 %v915
  %2050 = vmatpush.msra.mxu0 %v912
  %2051 = vmatpush.msra.mxu0 %v909
  %2052 = vmatpush.msra.mxu0 %v906
  %2053 = vmatpush.msra.mxu0 %v903
  %2054 = vmatmul.f32.gmra.mxu0 %v32
  %v2055 = vpop.f32.mrf.mxu0
  %v2056 = vadd.f32 %v2036, %v2055
  %2057 = vdwg.mxu0
  %2058 = vmatpush.msra.mxu0 %v996
  %2059 = vmatpush.msra.mxu0 %v993
  %2060 = vmatpush.msra.mxu0 %v990
  %2061 = vmatpush.msra.mxu0 %v987
  %2062 = vmatpush.msra.mxu0 %v984
  %2063 = vmatpush.msra.mxu0 %v981
  %2064 = vmatpush.msra.mxu0 %v978
  %2065 = vmatpush.msra.mxu0 %v975
  %2066 = vmatpush.msra.mxu0 %v972
  %2067 = vmatpush.msra.mxu0 %v969
  %2068 = vmatpush.msra.mxu0 %v966
  %2069 = vmatpush.msra.mxu0 %v963
  %2070 = vmatpush.msra.mxu0 %v960
  %2071 = vmatpush.msra.mxu0 %v957
  %2072 = vmatpush.msra.mxu0 %v954
  %2073 = vmatpush.msra.mxu0 %v951
  %2074 = vmatmul.f32.gmra.mxu0 %v33
  %v2075 = vpop.f32.mrf.mxu0
  %v2076 = vadd.f32 %v2056, %v2075
  %2077 = vdwg.mxu0
  %2078 = vmatpush.msra.mxu0 %v1044
  %2079 = vmatpush.msra.mxu0 %v1041
  %2080 = vmatpush.msra.mxu0 %v1038
  %2081 = vmatpush.msra.mxu0 %v1035
  %2082 = vmatpush.msra.mxu0 %v1032
  %2083 = vmatpush.msra.mxu0 %v1029
  %2084 = vmatpush.msra.mxu0 %v1026
  %2085 = vmatpush.msra.mxu0 %v1023
  %2086 = vmatpush.msra.mxu0 %v1020
  %2087 = vmatpush.msra.mxu0 %v1017
  %2088 = vmatpush.msra.mxu0 %v1014
  %2089 = vmatpush.msra.mxu0 %v1011
  %2090 = vmatpush.msra.mxu0 %v1008
  %2091 = vmatpush.msra.mxu0 %v1005
  %2092 = vmatpush.msra.mxu0 %v1002
  %2093 = vmatpush.msra.mxu0 %v999
  %2094 = vmatmul.f32.gmra.mxu0 %v34
  %v2095 = vpop.f32.mrf.mxu0
  %v2096 = vadd.f32 %v2076, %v2095
  %2097 = vdwg.mxu0
  %2098 = vmatpush.msra.mxu0 %v1092
  %2099 = vmatpush.msra.mxu0 %v1089
  %2100 = vmatpush.msra.mxu0 %v1086
  %2101 = vmatpush.msra.mxu0 %v1083
  %2102 = vmatpush.msra.mxu0 %v1080
  %2103 = vmatpush.msra.mxu0 %v1077
  %2104 = vmatpush.msra.mxu0 %v1074
  %2105 = vmatpush.msra.mxu0 %v1071
  %2106 = vmatpush.msra.mxu0 %v1068
  %2107 = vmatpush.msra.mxu0 %v1065
  %2108 = vmatpush.msra.mxu0 %v1062
  %2109 = vmatpush.msra.mxu0 %v1059
  %2110 = vmatpush.msra.mxu0 %v1056
  %2111 = vmatpush.msra.mxu0 %v1053
  %2112 = vmatpush.msra.mxu0 %v1050
  %2113 = vmatpush.msra.mxu0 %v1047
  %2114 = vmatmul.f32.gmra.mxu0 %v35
  %v2115 = vpop.f32.mrf.mxu0
  %v2116 = vadd.f32 %v2096, %v2115
  %2117 = vdwg.mxu0
  %2118 = vmatpush.msra.mxu0 %v1140
  %2119 = vmatpush.msra.mxu0 %v1137
  %2120 = vmatpush.msra.mxu0 %v1134
  %2121 = vmatpush.msra.mxu0 %v1131
  %2122 = vmatpush.msra.mxu0 %v1128
  %2123 = vmatpush.msra.mxu0 %v1125
  %2124 = vmatpush.msra.mxu0 %v1122
  %2125 = vmatpush.msra.mxu0 %v1119
  %2126 = vmatpush.msra.mxu0 %v1116
  %2127 = vmatpush.msra.mxu0 %v1113
  %2128 = vmatpush.msra.mxu0 %v1110
  %2129 = vmatpush.msra.mxu0 %v1107
  %2130 = vmatpush.msra.mxu0 %v1104
  %2131 = vmatpush.msra.mxu0 %v1101
  %2132 = vmatpush.msra.mxu0 %v1098
  %2133 = vmatpush.msra.mxu0 %v1095
  %2134 = vmatmul.f32.gmra.mxu0 %v36
  %v2135 = vpop.f32.mrf.mxu0
  %v2136 = vadd.f32 %v2116, %v2135
  %2137 = vdwg.mxu0
  %2138 = vmatpush.msra.mxu0 %v1188
  %2139 = vmatpush.msra.mxu0 %v1185
  %2140 = vmatpush.msra.mxu0 %v1182
  %2141 = vmatpush.msra.mxu0 %v1179
  %2142 = vmatpush.msra.mxu0 %v1176
  %2143 = vmatpush.msra.mxu0 %v1173
  %2144 = vmatpush.msra.mxu0 %v1170
  %2145 = vmatpush.msra.mxu0 %v1167
  %2146 = vmatpush.msra.mxu0 %v1164
  %2147 = vmatpush.msra.mxu0 %v1161
  %2148 = vmatpush.msra.mxu0 %v1158
  %2149 = vmatpush.msra.mxu0 %v1155
  %2150 = vmatpush.msra.mxu0 %v1152
  %2151 = vmatpush.msra.mxu0 %v1149
  %2152 = vmatpush.msra.mxu0 %v1146
  %2153 = vmatpush.msra.mxu0 %v1143
  %2154 = vmatmul.f32.gmra.mxu0 %v37
  %v2155 = vpop.f32.mrf.mxu0
  %v2156 = vadd.f32 %v2136, %v2155
  %2157 = vdwg.mxu0
  %2158 = vmatpush.msra.mxu0 %v85
  %2159 = vmatpush.msra.mxu0 %v82
  %2160 = vmatpush.msra.mxu0 %v79
  %2161 = vmatpush.msra.mxu0 %v76
  %2162 = vmatpush.msra.mxu0 %v73
  %2163 = vmatpush.msra.mxu0 %v70
  %2164 = vmatpush.msra.mxu0 %v67
  %2165 = vmatpush.msra.mxu0 %v64
  %2166 = vmatpush.msra.mxu0 %v61
  %2167 = vmatpush.msra.mxu0 %v58
  %2168 = vmatpush.msra.mxu0 %v55
  %2169 = vmatpush.msra.mxu0 %v52
  %2170 = vmatpush.msra.mxu0 %v49
  %2171 = vmatpush.msra.mxu0 %v46
  %2172 = vmatpush.msra.mxu0 %v43
  %2173 = vmatpush.msra.mxu0 %v40
  %2174 = vmatmul.f32.gmra.mxu0 %v14
  %v2175 = vpop.f32.mrf.mxu0
  %v2176 = vadd.f32 %v1194, %v2175
  %2177 = vdwg.mxu0
  %2178 = vmatpush.msra.mxu0 %v133
  %2179 = vmatpush.msra.mxu0 %v130
  %2180 = vmatpush.msra.mxu0 %v127
  %2181 = vmatpush.msra.mxu0 %v124
  %2182 = vmatpush.msra.mxu0 %v121
  %2183 = vmatpush.msra.mxu0 %v118
  %2184 = vmatpush.msra.mxu0 %v115
  %2185 = vmatpush.msra.mxu0 %v112
  %2186 = vmatpush.msra.mxu0 %v109
  %2187 = vmatpush.msra.mxu0 %v106
  %2188 = vmatpush.msra.mxu0 %v103
  %2189 = vmatpush.msra.mxu0 %v100
  %2190 = vmatpush.msra.mxu0 %v97
  %2191 = vmatpush.msra.mxu0 %v94
  %2192 = vmatpush.msra.mxu0 %v91
  %2193 = vmatpush.msra.mxu0 %v88
  %2194 = vmatmul.f32.gmra.mxu0 %v15
  %v2195 = vpop.f32.mrf.mxu0
  %v2196 = vadd.f32 %v2176, %v2195
  %2197 = vdwg.mxu0
  %2198 = vmatpush.msra.mxu0 %v181
  %2199 = vmatpush.msra.mxu0 %v178
  %2200 = vmatpush.msra.mxu0 %v175
  %2201 = vmatpush.msra.mxu0 %v172
  %2202 = vmatpush.msra.mxu0 %v169
  %2203 = vmatpush.msra.mxu0 %v166
  %2204 = vmatpush.msra.mxu0 %v163
  %2205 = vmatpush.msra.mxu0 %v160
  %2206 = vmatpush.msra.mxu0 %v157
  %2207 = vmatpush.msra.mxu0 %v154
  %2208 = vmatpush.msra.mxu0 %v151
  %2209 = vmatpush.msra.mxu0 %v148
  %2210 = vmatpush.msra.mxu0 %v145
  %2211 = vmatpush.msra.mxu0 %v142
  %2212 = vmatpush.msra.mxu0 %v139
  %2213 = vmatpush.msra.mxu0 %v136
  %2214 = vmatmul.f32.gmra.mxu0 %v16
  %v2215 = vpop.f32.mrf.mxu0
  %v2216 = vadd.f32 %v2196, %v2215
  %2217 = vdwg.mxu0
  %2218 = vmatpush.msra.mxu0 %v229
  %2219 = vmatpush.msra.mxu0 %v226
  %2220 = vmatpush.msra.mxu0 %v223
  %2221 = vmatpush.msra.mxu0 %v220
  %2222 = vmatpush.msra.mxu0 %v217
  %2223 = vmatpush.msra.mxu0 %v214
  %2224 = vmatpush.msra.mxu0 %v211
  %2225 = vmatpush.msra.mxu0 %v208
  %2226 = vmatpush.msra.mxu0 %v205
  %2227 = vmatpush.msra.mxu0 %v202
  %2228 = vmatpush.msra.mxu0 %v199
  %2229 = vmatpush.msra.mxu0 %v196
  %2230 = vmatpush.msra.mxu0 %v193
  %2231 = vmatpush.msra.mxu0 %v190
  %2232 = vmatpush.msra.mxu0 %v187
  %2233 = vmatpush.msra.mxu0 %v184
  %2234 = vmatmul.f32.gmra.mxu0 %v17
  %v2235 = vpop.f32.mrf.mxu0
  %v2236 = vadd.f32 %v2216, %v2235
  %2237 = vdwg.mxu0
  %2238 = vmatpush.msra.mxu0 %v277
  %2239 = vmatpush.msra.mxu0 %v274
  %2240 = vmatpush.msra.mxu0 %v271
  %2241 = vmatpush.msra.mxu0 %v268
  %2242 = vmatpush.msra.mxu0 %v265
  %2243 = vmatpush.msra.mxu0 %v262
  %2244 = vmatpush.msra.mxu0 %v259
  %2245 = vmatpush.msra.mxu0 %v256
  %2246 = vmatpush.msra.mxu0 %v253
  %2247 = vmatpush.msra.mxu0 %v250
  %2248 = vmatpush.msra.mxu0 %v247
  %2249 = vmatpush.msra.mxu0 %v244
  %2250 = vmatpush.msra.mxu0 %v241
  %2251 = vmatpush.msra.mxu0 %v238
  %2252 = vmatpush.msra.mxu0 %v235
  %2253 = vmatpush.msra.mxu0 %v232
  %2254 = vmatmul.f32.gmra.mxu0 %v18
  %v2255 = vpop.f32.mrf.mxu0
  %v2256 = vadd.f32 %v2236, %v2255
  %2257 = vdwg.mxu0
  %2258 = vmatpush.msra.mxu0 %v325
  %2259 = vmatpush.msra.mxu0 %v322
  %2260 = vmatpush.msra.mxu0 %v319
  %2261 = vmatpush.msra.mxu0 %v316
  %2262 = vmatpush.msra.mxu0 %v313
  %2263 = vmatpush.msra.mxu0 %v310
  %2264 = vmatpush.msra.mxu0 %v307
  %2265 = vmatpush.msra.mxu0 %v304
  %2266 = vmatpush.msra.mxu0 %v301
  %2267 = vmatpush.msra.mxu0 %v298
  %2268 = vmatpush.msra.mxu0 %v295
  %2269 = vmatpush.msra.mxu0 %v292
  %2270 = vmatpush.msra.mxu0 %v289
  %2271 = vmatpush.msra.mxu0 %v286
  %2272 = vmatpush.msra.mxu0 %v283
  %2273 = vmatpush.msra.mxu0 %v280
  %2274 = vmatmul.f32.gmra.mxu0 %v19
  %v2275 = vpop.f32.mrf.mxu0
  %v2276 = vadd.f32 %v2256, %v2275
  %2277 = vdwg.mxu0
  %2278 = vmatpush.msra.mxu0 %v373
  %2279 = vmatpush.msra.mxu0 %v370
  %2280 = vmatpush.msra.mxu0 %v367
  %2281 = vmatpush.msra.mxu0 %v364
  %2282 = vmatpush.msra.mxu0 %v361
  %2283 = vmatpush.msra.mxu0 %v358
  %2284 = vmatpush.msra.mxu0 %v355
  %2285 = vmatpush.msra.mxu0 %v352
  %2286 = vmatpush.msra.mxu0 %v349
  %2287 = vmatpush.msra.mxu0 %v346
  %2288 = vmatpush.msra.mxu0 %v343
  %2289 = vmatpush.msra.mxu0 %v340
  %2290 = vmatpush.msra.mxu0 %v337
  %2291 = vmatpush.msra.mxu0 %v334
  %2292 = vmatpush.msra.mxu0 %v331
  %2293 = vmatpush.msra.mxu0 %v328
  %2294 = vmatmul.f32.gmra.mxu0 %v20
  %v2295 = vpop.f32.mrf.mxu0
  %v2296 = vadd.f32 %v2276, %v2295
  %2297 = vdwg.mxu0
  %2298 = vmatpush.msra.mxu0 %v421
  %2299 = vmatpush.msra.mxu0 %v418
  %2300 = vmatpush.msra.mxu0 %v415
  %2301 = vmatpush.msra.mxu0 %v412
  %2302 = vmatpush.msra.mxu0 %v409
  %2303 = vmatpush.msra.mxu0 %v406
  %2304 = vmatpush.msra.mxu0 %v403
  %2305 = vmatpush.msra.mxu0 %v400
  %2306 = vmatpush.msra.mxu0 %v397
  %2307 = vmatpush.msra.mxu0 %v394
  %2308 = vmatpush.msra.mxu0 %v391
  %2309 = vmatpush.msra.mxu0 %v388
  %2310 = vmatpush.msra.mxu0 %v385
  %2311 = vmatpush.msra.mxu0 %v382
  %2312 = vmatpush.msra.mxu0 %v379
  %2313 = vmatpush.msra.mxu0 %v376
  %2314 = vmatmul.f32.gmra.mxu0 %v21
  %v2315 = vpop.f32.mrf.mxu0
  %v2316 = vadd.f32 %v2296, %v2315
  %2317 = vdwg.mxu0
  %2318 = vmatpush.msra.mxu0 %v469
  %2319 = vmatpush.msra.mxu0 %v466
  %2320 = vmatpush.msra.mxu0 %v463
  %2321 = vmatpush.msra.mxu0 %v460
  %2322 = vmatpush.msra.mxu0 %v457
  %2323 = vmatpush.msra.mxu0 %v454
  %2324 = vmatpush.msra.mxu0 %v451
  %2325 = vmatpush.msra.mxu0 %v448
  %2326 = vmatpush.msra.mxu0 %v445
  %2327 = vmatpush.msra.mxu0 %v442
  %2328 = vmatpush.msra.mxu0 %v439
  %2329 = vmatpush.msra.mxu0 %v436
  %2330 = vmatpush.msra.mxu0 %v433
  %2331 = vmatpush.msra.mxu0 %v430
  %2332 = vmatpush.msra.mxu0 %v427
  %2333 = vmatpush.msra.mxu0 %v424
  %2334 = vmatmul.f32.gmra.mxu0 %v22
  %v2335 = vpop.f32.mrf.mxu0
  %v2336 = vadd.f32 %v2316, %v2335
  %2337 = vdwg.mxu0
  %2338 = vmatpush.msra.mxu0 %v517
  %2339 = vmatpush.msra.mxu0 %v514
  %2340 = vmatpush.msra.mxu0 %v511
  %2341 = vmatpush.msra.mxu0 %v508
  %2342 = vmatpush.msra.mxu0 %v505
  %2343 = vmatpush.msra.mxu0 %v502
  %2344 = vmatpush.msra.mxu0 %v499
  %2345 = vmatpush.msra.mxu0 %v496
  %2346 = vmatpush.msra.mxu0 %v493
  %2347 = vmatpush.msra.mxu0 %v490
  %2348 = vmatpush.msra.mxu0 %v487
  %2349 = vmatpush.msra.mxu0 %v484
  %2350 = vmatpush.msra.mxu0 %v481
  %2351 = vmatpush.msra.mxu0 %v478
  %2352 = vmatpush.msra.mxu0 %v475
  %2353 = vmatpush.msra.mxu0 %v472
  %2354 = vmatmul.f32.gmra.mxu0 %v23
  %v2355 = vpop.f32.mrf.mxu0
  %v2356 = vadd.f32 %v2336, %v2355
  %2357 = vdwg.mxu0
  %2358 = vmatpush.msra.mxu0 %v565
  %2359 = vmatpush.msra.mxu0 %v562
  %2360 = vmatpush.msra.mxu0 %v559
  %2361 = vmatpush.msra.mxu0 %v556
  %2362 = vmatpush.msra.mxu0 %v553
  %2363 = vmatpush.msra.mxu0 %v550
  %2364 = vmatpush.msra.mxu0 %v547
  %2365 = vmatpush.msra.mxu0 %v544
  %2366 = vmatpush.msra.mxu0 %v541
  %2367 = vmatpush.msra.mxu0 %v538
  %2368 = vmatpush.msra.mxu0 %v535
  %2369 = vmatpush.msra.mxu0 %v532
  %2370 = vmatpush.msra.mxu0 %v529
  %2371 = vmatpush.msra.mxu0 %v526
  %2372 = vmatpush.msra.mxu0 %v523
  %2373 = vmatpush.msra.mxu0 %v520
  %2374 = vmatmul.f32.gmra.mxu0 %v24
  %v2375 = vpop.f32.mrf.mxu0
  %v2376 = vadd.f32 %v2356, %v2375
  %2377 = vdwg.mxu0
  %2378 = vmatpush.msra.mxu0 %v613
  %2379 = vmatpush.msra.mxu0 %v610
  %2380 = vmatpush.msra.mxu0 %v607
  %2381 = vmatpush.msra.mxu0 %v604
  %2382 = vmatpush.msra.mxu0 %v601
  %2383 = vmatpush.msra.mxu0 %v598
  %2384 = vmatpush.msra.mxu0 %v595
  %2385 = vmatpush.msra.mxu0 %v592
  %2386 = vmatpush.msra.mxu0 %v589
  %2387 = vmatpush.msra.mxu0 %v586
  %2388 = vmatpush.msra.mxu0 %v583
  %2389 = vmatpush.msra.mxu0 %v580
  %2390 = vmatpush.msra.mxu0 %v577
  %2391 = vmatpush.msra.mxu0 %v574
  %2392 = vmatpush.msra.mxu0 %v571
  %2393 = vmatpush.msra.mxu0 %v568
  %2394 = vmatmul.f32.gmra.mxu0 %v25
  %v2395 = vpop.f32.mrf.mxu0
  %v2396 = vadd.f32 %v2376, %v2395
  %2397 = vdwg.mxu0
  %2398 = vmatpush.msra.mxu0 %v661
  %2399 = vmatpush.msra.mxu0 %v658
  %2400 = vmatpush.msra.mxu0 %v655
  %2401 = vmatpush.msra.mxu0 %v652
  %2402 = vmatpush.msra.mxu0 %v649
  %2403 = vmatpush.msra.mxu0 %v646
  %2404 = vmatpush.msra.mxu0 %v643
  %2405 = vmatpush.msra.mxu0 %v640
  %2406 = vmatpush.msra.mxu0 %v637
  %2407 = vmatpush.msra.mxu0 %v634
  %2408 = vmatpush.msra.mxu0 %v631
  %2409 = vmatpush.msra.mxu0 %v628
  %2410 = vmatpush.msra.mxu0 %v625
  %2411 = vmatpush.msra.mxu0 %v622
  %2412 = vmatpush.msra.mxu0 %v619
  %2413 = vmatpush.msra.mxu0 %v616
  %2414 = vmatmul.f32.gmra.mxu0 %v26
  %v2415 = vpop.f32.mrf.mxu0
  %v2416 = vadd.f32 %v2396, %v2415
  %2417 = vdwg.mxu0
  %2418 = vmatpush.msra.mxu0 %v709
  %2419 = vmatpush.msra.mxu0 %v706
  %2420 = vmatpush.msra.mxu0 %v703
  %2421 = vmatpush.msra.mxu0 %v700
  %2422 = vmatpush.msra.mxu0 %v697
  %2423 = vmatpush.msra.mxu0 %v694
  %2424 = vmatpush.msra.mxu0 %v691
  %2425 = vmatpush.msra.mxu0 %v688
  %2426 = vmatpush.msra.mxu0 %v685
  %2427 = vmatpush.msra.mxu0 %v682
  %2428 = vmatpush.msra.mxu0 %v679
  %2429 = vmatpush.msra.mxu0 %v676
  %2430 = vmatpush.msra.mxu0 %v673
  %2431 = vmatpush.msra.mxu0 %v670
  %2432 = vmatpush.msra.mxu0 %v667
  %2433 = vmatpush.msra.mxu0 %v664
  %2434 = vmatmul.f32.gmra.mxu0 %v27
  %v2435 = vpop.f32.mrf.mxu0
  %v2436 = vadd.f32 %v2416, %v2435
  %2437 = vdwg.mxu0
  %2438 = vmatpush.msra.mxu0 %v757
  %2439 = vmatpush.msra.mxu0 %v754
  %2440 = vmatpush.msra.mxu0 %v751
  %2441 = vmatpush.msra.mxu0 %v748
  %2442 = vmatpush.msra.mxu0 %v745
  %2443 = vmatpush.msra.mxu0 %v742
  %2444 = vmatpush.msra.mxu0 %v739
  %2445 = vmatpush.msra.mxu0 %v736
  %2446 = vmatpush.msra.mxu0 %v733
  %2447 = vmatpush.msra.mxu0 %v730
  %2448 = vmatpush.msra.mxu0 %v727
  %2449 = vmatpush.msra.mxu0 %v724
  %2450 = vmatpush.msra.mxu0 %v721
  %2451 = vmatpush.msra.mxu0 %v718
  %2452 = vmatpush.msra.mxu0 %v715
  %2453 = vmatpush.msra.mxu0 %v712
  %2454 = vmatmul.f32.gmra.mxu0 %v28
  %v2455 = vpop.f32.mrf.mxu0
  %v2456 = vadd.f32 %v2436, %v2455
  %2457 = vdwg.mxu0
  %2458 = vmatpush.msra.mxu0 %v805
  %2459 = vmatpush.msra.mxu0 %v802
  %2460 = vmatpush.msra.mxu0 %v799
  %2461 = vmatpush.msra.mxu0 %v796
  %2462 = vmatpush.msra.mxu0 %v793
  %2463 = vmatpush.msra.mxu0 %v790
  %2464 = vmatpush.msra.mxu0 %v787
  %2465 = vmatpush.msra.mxu0 %v784
  %2466 = vmatpush.msra.mxu0 %v781
  %2467 = vmatpush.msra.mxu0 %v778
  %2468 = vmatpush.msra.mxu0 %v775
  %2469 = vmatpush.msra.mxu0 %v772
  %2470 = vmatpush.msra.mxu0 %v769
  %2471 = vmatpush.msra.mxu0 %v766
  %2472 = vmatpush.msra.mxu0 %v763
  %2473 = vmatpush.msra.mxu0 %v760
  %2474 = vmatmul.f32.gmra.mxu0 %v29
  %v2475 = vpop.f32.mrf.mxu0
  %v2476 = vadd.f32 %v2456, %v2475
  %2477 = vdwg.mxu0
  %2478 = vmatpush.msra.mxu0 %v853
  %2479 = vmatpush.msra.mxu0 %v850
  %2480 = vmatpush.msra.mxu0 %v847
  %2481 = vmatpush.msra.mxu0 %v844
  %2482 = vmatpush.msra.mxu0 %v841
  %2483 = vmatpush.msra.mxu0 %v838
  %2484 = vmatpush.msra.mxu0 %v835
  %2485 = vmatpush.msra.mxu0 %v832
  %2486 = vmatpush.msra.mxu0 %v829
  %2487 = vmatpush.msra.mxu0 %v826
  %2488 = vmatpush.msra.mxu0 %v823
  %2489 = vmatpush.msra.mxu0 %v820
  %2490 = vmatpush.msra.mxu0 %v817
  %2491 = vmatpush.msra.mxu0 %v814
  %2492 = vmatpush.msra.mxu0 %v811
  %2493 = vmatpush.msra.mxu0 %v808
  %2494 = vmatmul.f32.gmra.mxu0 %v30
  %v2495 = vpop.f32.mrf.mxu0
  %v2496 = vadd.f32 %v2476, %v2495
  %2497 = vdwg.mxu0
  %2498 = vmatpush.msra.mxu0 %v901
  %2499 = vmatpush.msra.mxu0 %v898
  %2500 = vmatpush.msra.mxu0 %v895
  %2501 = vmatpush.msra.mxu0 %v892
  %2502 = vmatpush.msra.mxu0 %v889
  %2503 = vmatpush.msra.mxu0 %v886
  %2504 = vmatpush.msra.mxu0 %v883
  %2505 = vmatpush.msra.mxu0 %v880
  %2506 = vmatpush.msra.mxu0 %v877
  %2507 = vmatpush.msra.mxu0 %v874
  %2508 = vmatpush.msra.mxu0 %v871
  %2509 = vmatpush.msra.mxu0 %v868
  %2510 = vmatpush.msra.mxu0 %v865
  %2511 = vmatpush.msra.mxu0 %v862
  %2512 = vmatpush.msra.mxu0 %v859
  %2513 = vmatpush.msra.mxu0 %v856
  %2514 = vmatmul.f32.gmra.mxu0 %v31
  %v2515 = vpop.f32.mrf.mxu0
  %v2516 = vadd.f32 %v2496, %v2515
  %2517 = vdwg.mxu0
  %2518 = vmatpush.msra.mxu0 %v949
  %2519 = vmatpush.msra.mxu0 %v946
  %2520 = vmatpush.msra.mxu0 %v943
  %2521 = vmatpush.msra.mxu0 %v940
  %2522 = vmatpush.msra.mxu0 %v937
  %2523 = vmatpush.msra.mxu0 %v934
  %2524 = vmatpush.msra.mxu0 %v931
  %2525 = vmatpush.msra.mxu0 %v928
  %2526 = vmatpush.msra.mxu0 %v925
  %2527 = vmatpush.msra.mxu0 %v922
  %2528 = vmatpush.msra.mxu0 %v919
  %2529 = vmatpush.msra.mxu0 %v916
  %2530 = vmatpush.msra.mxu0 %v913
  %2531 = vmatpush.msra.mxu0 %v910
  %2532 = vmatpush.msra.mxu0 %v907
  %2533 = vmatpush.msra.mxu0 %v904
  %2534 = vmatmul.f32.gmra.mxu0 %v32
  %v2535 = vpop.f32.mrf.mxu0
  %v2536 = vadd.f32 %v2516, %v2535
  %2537 = vdwg.mxu0
  %2538 = vmatpush.msra.mxu0 %v997
  %2539 = vmatpush.msra.mxu0 %v994
  %2540 = vmatpush.msra.mxu0 %v991
  %2541 = vmatpush.msra.mxu0 %v988
  %2542 = vmatpush.msra.mxu0 %v985
  %2543 = vmatpush.msra.mxu0 %v982
  %2544 = vmatpush.msra.mxu0 %v979
  %2545 = vmatpush.msra.mxu0 %v976
  %2546 = vmatpush.msra.mxu0 %v973
  %2547 = vmatpush.msra.mxu0 %v970
  %2548 = vmatpush.msra.mxu0 %v967
  %2549 = vmatpush.msra.mxu0 %v964
  %2550 = vmatpush.msra.mxu0 %v961
  %2551 = vmatpush.msra.mxu0 %v958
  %2552 = vmatpush.msra.mxu0 %v955
  %2553 = vmatpush.msra.mxu0 %v952
  %2554 = vmatmul.f32.gmra.mxu0 %v33
  %v2555 = vpop.f32.mrf.mxu0
  %v2556 = vadd.f32 %v2536, %v2555
  %2557 = vdwg.mxu0
  %2558 = vmatpush.msra.mxu0 %v1045
  %2559 = vmatpush.msra.mxu0 %v1042
  %2560 = vmatpush.msra.mxu0 %v1039
  %2561 = vmatpush.msra.mxu0 %v1036
  %2562 = vmatpush.msra.mxu0 %v1033
  %2563 = vmatpush.msra.mxu0 %v1030
  %2564 = vmatpush.msra.mxu0 %v1027
  %2565 = vmatpush.msra.mxu0 %v1024
  %2566 = vmatpush.msra.mxu0 %v1021
  %2567 = vmatpush.msra.mxu0 %v1018
  %2568 = vmatpush.msra.mxu0 %v1015
  %2569 = vmatpush.msra.mxu0 %v1012
  %2570 = vmatpush.msra.mxu0 %v1009
  %2571 = vmatpush.msra.mxu0 %v1006
  %2572 = vmatpush.msra.mxu0 %v1003
  %2573 = vmatpush.msra.mxu0 %v1000
  %2574 = vmatmul.f32.gmra.mxu0 %v34
  %v2575 = vpop.f32.mrf.mxu0
  %v2576 = vadd.f32 %v2556, %v2575
  %2577 = vdwg.mxu0
  %2578 = vmatpush.msra.mxu0 %v1093
  %2579 = vmatpush.msra.mxu0 %v1090
  %2580 = vmatpush.msra.mxu0 %v1087
  %2581 = vmatpush.msra.mxu0 %v1084
  %2582 = vmatpush.msra.mxu0 %v1081
  %2583 = vmatpush.msra.mxu0 %v1078
  %2584 = vmatpush.msra.mxu0 %v1075
  %2585 = vmatpush.msra.mxu0 %v1072
  %2586 = vmatpush.msra.mxu0 %v1069
  %2587 = vmatpush.msra.mxu0 %v1066
  %2588 = vmatpush.msra.mxu0 %v1063
  %2589 = vmatpush.msra.mxu0 %v1060
  %2590 = vmatpush.msra.mxu0 %v1057
  %2591 = vmatpush.msra.mxu0 %v1054
  %2592 = vmatpush.msra.mxu0 %v1051
  %2593 = vmatpush.msra.mxu0 %v1048
  %2594 = vmatmul.f32.gmra.mxu0 %v35
  %v2595 = vpop.f32.mrf.mxu0
  %v2596 = vadd.f32 %v2576, %v2595
  %2597 = vdwg.mxu0
  %2598 = vmatpush.msra.mxu0 %v1141
  %2599 = vmatpush.msra.mxu0 %v1138
  %2600 = vmatpush.msra.mxu0 %v1135
  %2601 = vmatpush.msra.mxu0 %v1132
  %2602 = vmatpush.msra.mxu0 %v1129
  %2603 = vmatpush.msra.mxu0 %v1126
  %2604 = vmatpush.msra.mxu0 %v1123
  %2605 = vmatpush.msra.mxu0 %v1120
  %2606 = vmatpush.msra.mxu0 %v1117
  %2607 = vmatpush.msra.mxu0 %v1114
  %2608 = vmatpush.msra.mxu0 %v1111
  %2609 = vmatpush.msra.mxu0 %v1108
  %2610 = vmatpush.msra.mxu0 %v1105
  %2611 = vmatpush.msra.mxu0 %v1102
  %2612 = vmatpush.msra.mxu0 %v1099
  %2613 = vmatpush.msra.mxu0 %v1096
  %2614 = vmatmul.f32.gmra.mxu0 %v36
  %v2615 = vpop.f32.mrf.mxu0
  %v2616 = vadd.f32 %v2596, %v2615
  %2617 = vdwg.mxu0
  %2618 = vmatpush.msra.mxu0 %v1189
  %2619 = vmatpush.msra.mxu0 %v1186
  %2620 = vmatpush.msra.mxu0 %v1183
  %2621 = vmatpush.msra.mxu0 %v1180
  %2622 = vmatpush.msra.mxu0 %v1177
  %2623 = vmatpush.msra.mxu0 %v1174
  %2624 = vmatpush.msra.mxu0 %v1171
  %2625 = vmatpush.msra.mxu0 %v1168
  %2626 = vmatpush.msra.mxu0 %v1165
  %2627 = vmatpush.msra.mxu0 %v1162
  %2628 = vmatpush.msra.mxu0 %v1159
  %2629 = vmatpush.msra.mxu0 %v1156
  %2630 = vmatpush.msra.mxu0 %v1153
  %2631 = vmatpush.msra.mxu0 %v1150
  %2632 = vmatpush.msra.mxu0 %v1147
  %2633 = vmatpush.msra.mxu0 %v1144
  %2634 = vmatmul.f32.gmra.mxu0 %v37
  %v2635 = vpop.f32.mrf.mxu0
  %v2636 = vadd.f32 %v2616, %v2635
  %2637 = vdwg.mxu0
  %vm2638 = vcmp.gt.f32.partialorder %v1676, 0.0
  %vm2639 = vcmp.gt.f32.partialorder %v2156, 0.0
  %vm2640 = vcmp.gt.f32.partialorder %v2636, 0.0
  %v2641 = vmin.f32 %v1676, 0.0
  %v2642 = vmin.f32 %v2156, 0.0
  %v2643 = vmin.f32 %v2636, 0.0
  %v2644 = vmul.f32 %v2641, 1.442695
  %v2645 = vpow.pop %v2644
  %v2646 = vmul.f32 %v2642, 1.442695
  %v2647 = vpow.pop %v2646
  %v2648 = vmul.f32 %v2643, 1.442695
  %v2649 = vpow.pop %v2648
  %v2650 = vsub.f32 %v2645, 1.0
  %v2651 = vsub.f32 %v2647, 1.0
  %v2652 = vsub.f32 %v2649, 1.0
  %v2653 = vsel %vm2638, %v1676, %v2650
  %v2654 = vsel %vm2639, %v2156, %v2651
  %v2655 = vsel %vm2640, %v2636, %v2652
  %2656 = vst [vmem:[%s3] sm:$0xff] %v2653
  %2657 = vst [vmem:[%s3 + $0x8] sm:$0xff] %v2654
  %2658 = vst [vmem:[%s3 + $0x10] sm:$0xff] %v2655
  // Predicated region
  $region14: #{encoder_forward.7} parent=0 // pred_check
    _
  $region15: #{encoder_forward.7} parent=0 // pred_check_branch
    %2660 = sbr.rel (0) target = $region17
  $region16: #{encoder_forward.7} parent=0 // pred_region
    _
  $region17: #{encoder_forward.7} parent=0 // pred_fallthru
    _
  // Predicated region
  $region18: #{encoder_forward.7} parent=0 // pred_check
    _
  $region19: #{encoder_forward.7} parent=0 // pred_check_branch
    %2662 = sbr.rel (0) target = $region21
  $region20: #{encoder_forward.7} parent=0 // pred_region
    _
  $region21: #{encoder_forward.7} parent=0 // pred_fallthru
    _

</llo_original>
